<compile_context>
chip_gen: v7x
topology: tpu7x:2x2x1
jax: 0.10.0
libtpu: 0.0.40
codegen_flags: <defaults>
</compile_context>

<pallas_src>
import jax
import jax.numpy as jnp
from jax import lax
from jax.experimental import pallas as pl
from jax.experimental.pallas import tpu as pltpu

EPS = 1e-5


def _resnet_block_kernel(x_ref, w1_ref, b1_ref, w2_ref, b2_ref, o_ref,
                         xpad_s, hpad_s):
    # Shapes (per grid step / batch element):
    #   x_ref  : (1, H, W, C)    unpadded input (also used for the residual)
    #   w*_ref : (3, 3, C, C)    conv weights (HWIO)
    #   b*_ref : (1, C)          conv biases
    #   o_ref  : (1, H, W, C)
    #   xpad_s, hpad_s : (H+2, W+2, C) f32 VMEM scratch (reflect-padded bufs)
    H = o_ref.shape[1]
    W = o_ref.shape[2]
    C = o_ref.shape[3]
    inv_n = 1.0 / float(H * W)

    def reflect_pad_into(dst_ref, v):
        # v: (H, W, C) -> dst_ref: (H+2, W+2, C), boundary-only extra writes.
        dst_ref[1:H + 1, 1:W + 1, :] = v
        # reflect rows (row 0 <- v row 1, row H+1 <- v row H-2)
        dst_ref[0:1, 1:W + 1, :] = v[1:2, :, :]
        dst_ref[H + 1:H + 2, 1:W + 1, :] = v[H - 2:H - 1, :, :]
        # reflect columns, corners included (col 0 <- col 2, col W+1 <- col W-1)
        dst_ref[:, 0:1, :] = dst_ref[:, 2:3, :]
        dst_ref[:, W + 1:W + 2, :] = dst_ref[:, W - 1:W, :]

    def conv3x3(src_ref, w_ref, b_ref):
        # src_ref: (H+2, W+2, C) padded scratch -> (H*W, C) f32 via 9 matmuls.
        acc = None
        for ky in range(3):
            for kx in range(3):
                slab = src_ref[ky:ky + H, kx:kx + W, :].reshape(H * W, C)
                part = jnp.dot(slab, w_ref[ky, kx],
                               preferred_element_type=jnp.float32)
                acc = part if acc is None else acc + part
        return acc + b_ref[...].astype(jnp.float32)

    def instance_norm(z):
        # z: (H*W, C); one-pass stats: var = E[z^2] - E[z]^2 (biased, eps in).
        s1 = jnp.sum(z, axis=0, keepdims=True)
        s2 = jnp.sum(z * z, axis=0, keepdims=True)
        mean = s1 * inv_n
        var = s2 * inv_n - mean * mean
        return (z - mean) * lax.rsqrt(var + EPS)

    x = x_ref[0].astype(jnp.float32)                       # (H, W, C)

    # --- reflect pad -> conv1 -> InstanceNorm -> ReLU -----------------------
    reflect_pad_into(xpad_s, x)
    z1 = conv3x3(xpad_s, w1_ref, b1_ref)
    h1 = jnp.maximum(instance_norm(z1), 0.0).reshape(H, W, C)

    # --- reflect pad -> conv2 -> InstanceNorm -------------------------------
    reflect_pad_into(hpad_s, h1)
    z2 = conv3x3(hpad_s, w2_ref, b2_ref)
    h2 = instance_norm(z2).reshape(H, W, C)

    # --- residual add --------------------------------------------------------
    o_ref[0] = (x + h2).astype(o_ref.dtype)


def resnet_block_pallas(x_nchw, w1, b1, w2, b2):
    """x_nchw: (N, C, H, W) f32; w*: HWIO (3,3,C,C); b*: (C,)."""
    N, C, H, W = x_nchw.shape
    # Glue only: in a real deployment keep activations NHWC across the model.
    x = jnp.transpose(x_nchw, (0, 2, 3, 1))                # NHWC
    b1_2d = b1.reshape(1, C)
    b2_2d = b2.reshape(1, C)

    bpe = 4  # f32
    est = (2 * 2 * H * W * C * bpe            # x + out blocks, double-buffered
           + 2 * 2 * 9 * C * C * bpe          # two weight sets, double-buffered
           + 2 * (H + 2) * (W + 2) * C * bpe  # two padded scratch buffers
           + 3 * H * W * C * bpe)             # in-kernel f32 temporaries
    vmem_limit = int(min(max(4 * est, 32 * 1024 * 1024), 64 * 1024 * 1024))

    out_nhwc = pl.pallas_call(
        _resnet_block_kernel,
        out_shape=jax.ShapeDtypeStruct((N, H, W, C), x.dtype),
        grid_spec=pltpu.PrefetchScalarGridSpec(
            num_scalar_prefetch=0,
            grid=(N,),
            in_specs=[
                pl.BlockSpec((1, H, W, C), lambda n: (n, 0, 0, 0)),
                pl.BlockSpec((3, 3, C, C), lambda n: (0, 0, 0, 0)),
                pl.BlockSpec((1, C), lambda n: (0, 0)),
                pl.BlockSpec((3, 3, C, C), lambda n: (0, 0, 0, 0)),
                pl.BlockSpec((1, C), lambda n: (0, 0)),
            ],
            out_specs=pl.BlockSpec((1, H, W, C), lambda n: (n, 0, 0, 0)),
            scratch_shapes=[
                pltpu.VMEM((H + 2, W + 2, C), jnp.float32),
                pltpu.VMEM((H + 2, W + 2, C), jnp.float32),
            ],
        ),
        compiler_params=pltpu.CompilerParams(
            dimension_semantics=("parallel",),
            vmem_limit_bytes=vmem_limit),
    )(x, w1, b1_2d, w2, b2_2d)

    return jnp.transpose(out_nhwc, (0, 3, 1, 2))           # back to NCHW


# ---------------------------------------------------------------------------
# Pure-JAX reference (correctness check).
# ---------------------------------------------------------------------------
def _ref_conv(x_nhwc, w_hwio, b):
    y = lax.conv_general_dilated(
        x_nhwc, w_hwio, window_strides=(1, 1), padding="VALID",
        dimension_numbers=("NHWC", "HWIO", "NHWC"))
    return y + b[None, None, None, :]


def _ref_inorm(y_nhwc):
    mean = jnp.mean(y_nhwc, axis=(1, 2), keepdims=True)
    var = jnp.mean((y_nhwc - mean) ** 2, axis=(1, 2), keepdims=True)
    return (y_nhwc - mean) * lax.rsqrt(var + EPS)


def resnet_block_ref(x_nchw, w1, b1, w2, b2):
    x = jnp.transpose(x_nchw, (0, 2, 3, 1))
    h = jnp.pad(x, ((0, 0), (1, 1), (1, 1), (0, 0)), mode="reflect")
    h = jnp.maximum(_ref_inorm(_ref_conv(h, w1, b1)), 0.0)
    h = jnp.pad(h, ((0, 0), (1, 1), (1, 1), (0, 0)), mode="reflect")
    h = _ref_inorm(_ref_conv(h, w2, b2))
    return jnp.transpose(x + h, (0, 3, 1, 2))


if __name__ == "__main__":
    N, C, H, W = 2, 4, 16, 16
    key = jax.random.PRNGKey(0)
    kx, k1, kb1, k2, kb2 = jax.random.split(key, 5)

    x = jax.random.normal(kx, (N, C, H, W), jnp.float32)
    w1 = jax.random.normal(k1, (3, 3, C, C), jnp.float32) * 0.1   # HWIO
    b1 = jax.random.normal(kb1, (C,), jnp.float32) * 0.1
    w2 = jax.random.normal(k2, (3, 3, C, C), jnp.float32) * 0.1
    b2 = jax.random.normal(kb2, (C,), jnp.float32) * 0.1

    out = jax.block_until_ready(resnet_block_pallas(x, w1, b1, w2, b2))
    ref = jax.block_until_ready(resnet_block_ref(x, w1, b1, w2, b2))

    assert out.shape == (N, C, H, W)
    assert jnp.allclose(out, ref, atol=1e-4, rtol=1e-4), (
        float(jnp.max(jnp.abs(out - ref))))
    print("KERNEL_OK")
</pallas_src>

<mosaic_0001>
module attributes {stable_mosaic.version = 11 : i64} {
  func.func @_resnet_block_kernel(%arg0: i32, %arg1: memref<1x16x16x4xf32, #tpu.memory_space<vmem>>, %arg2: memref<3x3x4x4xf32, #tpu.memory_space<vmem>>, %arg3: memref<1x4xf32, #tpu.memory_space<vmem>>, %arg4: memref<3x3x4x4xf32, #tpu.memory_space<vmem>>, %arg5: memref<1x4xf32, #tpu.memory_space<vmem>>, %arg6: memref<1x16x16x4xf32, #tpu.memory_space<vmem>>, %arg7: memref<18x18x4xf32, #tpu.memory_space<vmem>>, %arg8: memref<18x18x4xf32, #tpu.memory_space<vmem>>) attributes {dimension_semantics = [#tpu.dimension_semantics<parallel>], iteration_bounds = array<i64: 2>, scalar_prefetch = 0 : i64, scratch_operands = 2 : i64, tpu.core_type = #tpu.core_type<tc>, window_params = [{transform_indices = @transform_0, window_bounds = array<i64: 1, 16, 16, 4>}, {pipeline_mode = #tpu.pipeline_mode<synchronous>, transform_indices = @transform_1, window_bounds = array<i64: 3, 3, 4, 4>}, {pipeline_mode = #tpu.pipeline_mode<synchronous>, transform_indices = @transform_2, window_bounds = array<i64: 1, 4>}, {pipeline_mode = #tpu.pipeline_mode<synchronous>, transform_indices = @transform_3, window_bounds = array<i64: 3, 3, 4, 4>}, {pipeline_mode = #tpu.pipeline_mode<synchronous>, transform_indices = @transform_4, window_bounds = array<i64: 1, 4>}, {transform_indices = @transform_5, window_bounds = array<i64: 1, 16, 16, 4>}]} {
    %c0 = arith.constant 0 : index
    %c0_0 = arith.constant 0 : index
    %c0_1 = arith.constant 0 : index
    %c0_2 = arith.constant 0 : index
    %0 = vector.load %arg1[%c0, %c0_0, %c0_1, %c0_2] : memref<1x16x16x4xf32, #tpu.memory_space<vmem>>, vector<1x16x16x4xf32>
    %1 = vector.shape_cast %0 : vector<1x16x16x4xf32> to vector<16x16x4xf32>
    %c1 = arith.constant 1 : index
    %c1_3 = arith.constant 1 : index
    %c0_4 = arith.constant 0 : index
    %2 = vector.load %arg7[%c1, %c1_3, %c0_4] : memref<18x18x4xf32, #tpu.memory_space<vmem>>, vector<16x16x4xf32>
    tpu.vector_store %arg7[%c1, %c1_3, %c0_4], %1 {strides = array<i32>} : memref<18x18x4xf32, #tpu.memory_space<vmem>>, vector<16x16x4xf32>,
    %3 = vector.extract_strided_slice %1 {offsets = [1, 0, 0], sizes = [1, 16, 4], strides = [1, 1, 1]} : vector<16x16x4xf32> to vector<1x16x4xf32>
    %c0_5 = arith.constant 0 : index
    %c1_6 = arith.constant 1 : index
    %c0_7 = arith.constant 0 : index
    %4 = vector.load %arg7[%c0_5, %c1_6, %c0_7] : memref<18x18x4xf32, #tpu.memory_space<vmem>>, vector<1x16x4xf32>
    tpu.vector_store %arg7[%c0_5, %c1_6, %c0_7], %3 {strides = array<i32>} : memref<18x18x4xf32, #tpu.memory_space<vmem>>, vector<1x16x4xf32>,
    %5 = vector.extract_strided_slice %1 {offsets = [14, 0, 0], sizes = [1, 16, 4], strides = [1, 1, 1]} : vector<16x16x4xf32> to vector<1x16x4xf32>
    %c17 = arith.constant 17 : index
    %c1_8 = arith.constant 1 : index
    %c0_9 = arith.constant 0 : index
    %6 = vector.load %arg7[%c17, %c1_8, %c0_9] : memref<18x18x4xf32, #tpu.memory_space<vmem>>, vector<1x16x4xf32>
    tpu.vector_store %arg7[%c17, %c1_8, %c0_9], %5 {strides = array<i32>} : memref<18x18x4xf32, #tpu.memory_space<vmem>>, vector<1x16x4xf32>,
    %c0_10 = arith.constant 0 : index
    %c2 = arith.constant 2 : index
    %c0_11 = arith.constant 0 : index
    %7 = vector.load %arg7[%c0_10, %c2, %c0_11] : memref<18x18x4xf32, #tpu.memory_space<vmem>>, vector<18x1x4xf32>
    %c0_12 = arith.constant 0 : index
    %c0_13 = arith.constant 0 : index
    %c0_14 = arith.constant 0 : index
    %8 = vector.load %arg7[%c0_12, %c0_13, %c0_14] : memref<18x18x4xf32, #tpu.memory_space<vmem>>, vector<18x1x4xf32>
    tpu.vector_store %arg7[%c0_12, %c0_13, %c0_14], %7 {strides = array<i32>} : memref<18x18x4xf32, #tpu.memory_space<vmem>>, vector<18x1x4xf32>,
    %c0_15 = arith.constant 0 : index
    %c15 = arith.constant 15 : index
    %c0_16 = arith.constant 0 : index
    %9 = vector.load %arg7[%c0_15, %c15, %c0_16] : memref<18x18x4xf32, #tpu.memory_space<vmem>>, vector<18x1x4xf32>
    %c0_17 = arith.constant 0 : index
    %c17_18 = arith.constant 17 : index
    %c0_19 = arith.constant 0 : index
    %10 = vector.load %arg7[%c0_17, %c17_18, %c0_19] : memref<18x18x4xf32, #tpu.memory_space<vmem>>, vector<18x1x4xf32>
    tpu.vector_store %arg7[%c0_17, %c17_18, %c0_19], %9 {strides = array<i32>} : memref<18x18x4xf32, #tpu.memory_space<vmem>>, vector<18x1x4xf32>,
    %c0_20 = arith.constant 0 : index
    %c0_21 = arith.constant 0 : index
    %c0_22 = arith.constant 0 : index
    %11 = vector.load %arg7[%c0_20, %c0_21, %c0_22] : memref<18x18x4xf32, #tpu.memory_space<vmem>>, vector<16x16x4xf32>
    %12 = vector.shape_cast %11 : vector<16x16x4xf32> to vector<256x4xf32>
    %c0_23 = arith.constant 0 : index
    %c0_24 = arith.constant 0 : index
    %c0_25 = arith.constant 0 : index
    %c0_26 = arith.constant 0 : index
    %13 = vector.load %arg2[%c0_23, %c0_24, %c0_25, %c0_26] : memref<3x3x4x4xf32, #tpu.memory_space<vmem>>, vector<1x1x4x4xf32>
    %14 = vector.shape_cast %13 : vector<1x1x4x4xf32> to vector<4x4xf32>
    %cst = arith.constant dense<0.000000e+00> : vector<256x4xf32>
    %15 = tpu.matmul %12, %14, %cst {dimension_numbers = #tpu.dot_dimension_numbers<[1], [0], [0], [1], [0, 0, 1, 1], [], []>} : vector<256x4xf32>, vector<4x4xf32>, vector<256x4xf32> -> vector<256x4xf32>
    %c0_27 = arith.constant 0 : index
    %c1_28 = arith.constant 1 : index
    %c0_29 = arith.constant 0 : index
    %16 = vector.load %arg7[%c0_27, %c1_28, %c0_29] : memref<18x18x4xf32, #tpu.memory_space<vmem>>, vector<16x16x4xf32>
    %17 = vector.shape_cast %16 : vector<16x16x4xf32> to vector<256x4xf32>
    %c0_30 = arith.constant 0 : index
    %c1_31 = arith.constant 1 : index
    %c0_32 = arith.constant 0 : index
    %c0_33 = arith.constant 0 : index
    %18 = vector.load %arg2[%c0_30, %c1_31, %c0_32, %c0_33] : memref<3x3x4x4xf32, #tpu.memory_space<vmem>>, vector<1x1x4x4xf32>
    %19 = vector.shape_cast %18 : vector<1x1x4x4xf32> to vector<4x4xf32>
    %cst_34 = arith.constant dense<0.000000e+00> : vector<256x4xf32>
    %20 = tpu.matmul %17, %19, %cst_34 {dimension_numbers = #tpu.dot_dimension_numbers<[1], [0], [0], [1], [0, 0, 1, 1], [], []>} : vector<256x4xf32>, vector<4x4xf32>, vector<256x4xf32> -> vector<256x4xf32>
    %21 = arith.addf %15, %20 : vector<256x4xf32>
    %c0_35 = arith.constant 0 : index
    %c2_36 = arith.constant 2 : index
    %c0_37 = arith.constant 0 : index
    %22 = vector.load %arg7[%c0_35, %c2_36, %c0_37] : memref<18x18x4xf32, #tpu.memory_space<vmem>>, vector<16x16x4xf32>
    %23 = vector.shape_cast %22 : vector<16x16x4xf32> to vector<256x4xf32>
    %c0_38 = arith.constant 0 : index
    %c2_39 = arith.constant 2 : index
    %c0_40 = arith.constant 0 : index
    %c0_41 = arith.constant 0 : index
    %24 = vector.load %arg2[%c0_38, %c2_39, %c0_40, %c0_41] : memref<3x3x4x4xf32, #tpu.memory_space<vmem>>, vector<1x1x4x4xf32>
    %25 = vector.shape_cast %24 : vector<1x1x4x4xf32> to vector<4x4xf32>
    %cst_42 = arith.constant dense<0.000000e+00> : vector<256x4xf32>
    %26 = tpu.matmul %23, %25, %cst_42 {dimension_numbers = #tpu.dot_dimension_numbers<[1], [0], [0], [1], [0, 0, 1, 1], [], []>} : vector<256x4xf32>, vector<4x4xf32>, vector<256x4xf32> -> vector<256x4xf32>
    %27 = arith.addf %21, %26 : vector<256x4xf32>
    %c1_43 = arith.constant 1 : index
    %c0_44 = arith.constant 0 : index
    %c0_45 = arith.constant 0 : index
    %28 = vector.load %arg7[%c1_43, %c0_44, %c0_45] : memref<18x18x4xf32, #tpu.memory_space<vmem>>, vector<16x16x4xf32>
    %29 = vector.shape_cast %28 : vector<16x16x4xf32> to vector<256x4xf32>
    %c1_46 = arith.constant 1 : index
    %c0_47 = arith.constant 0 : index
    %c0_48 = arith.constant 0 : index
    %c0_49 = arith.constant 0 : index
    %30 = vector.load %arg2[%c1_46, %c0_47, %c0_48, %c0_49] : memref<3x3x4x4xf32, #tpu.memory_space<vmem>>, vector<1x1x4x4xf32>
    %31 = vector.shape_cast %30 : vector<1x1x4x4xf32> to vector<4x4xf32>
    %cst_50 = arith.constant dense<0.000000e+00> : vector<256x4xf32>
    %32 = tpu.matmul %29, %31, %cst_50 {dimension_numbers = #tpu.dot_dimension_numbers<[1], [0], [0], [1], [0, 0, 1, 1], [], []>} : vector<256x4xf32>, vector<4x4xf32>, vector<256x4xf32> -> vector<256x4xf32>
    %33 = arith.addf %27, %32 : vector<256x4xf32>
    %c1_51 = arith.constant 1 : index
    %c1_52 = arith.constant 1 : index
    %c0_53 = arith.constant 0 : index
    %34 = vector.load %arg7[%c1_51, %c1_52, %c0_53] : memref<18x18x4xf32, #tpu.memory_space<vmem>>, vector<16x16x4xf32>
    %35 = vector.shape_cast %34 : vector<16x16x4xf32> to vector<256x4xf32>
    %c1_54 = arith.constant 1 : index
    %c1_55 = arith.constant 1 : index
    %c0_56 = arith.constant 0 : index
    %c0_57 = arith.constant 0 : index
    %36 = vector.load %arg2[%c1_54, %c1_55, %c0_56, %c0_57] : memref<3x3x4x4xf32, #tpu.memory_space<vmem>>, vector<1x1x4x4xf32>
    %37 = vector.shape_cast %36 : vector<1x1x4x4xf32> to vector<4x4xf32>
    %cst_58 = arith.constant dense<0.000000e+00> : vector<256x4xf32>
    %38 = tpu.matmul %35, %37, %cst_58 {dimension_numbers = #tpu.dot_dimension_numbers<[1], [0], [0], [1], [0, 0, 1, 1], [], []>} : vector<256x4xf32>, vector<4x4xf32>, vector<256x4xf32> -> vector<256x4xf32>
    %39 = arith.addf %33, %38 : vector<256x4xf32>
    %c1_59 = arith.constant 1 : index
    %c2_60 = arith.constant 2 : index
    %c0_61 = arith.constant 0 : index
    %40 = vector.load %arg7[%c1_59, %c2_60, %c0_61] : memref<18x18x4xf32, #tpu.memory_space<vmem>>, vector<16x16x4xf32>
    %41 = vector.shape_cast %40 : vector<16x16x4xf32> to vector<256x4xf32>
    %c1_62 = arith.constant 1 : index
    %c2_63 = arith.constant 2 : index
    %c0_64 = arith.constant 0 : index
    %c0_65 = arith.constant 0 : index
    %42 = vector.load %arg2[%c1_62, %c2_63, %c0_64, %c0_65] : memref<3x3x4x4xf32, #tpu.memory_space<vmem>>, vector<1x1x4x4xf32>
    %43 = vector.shape_cast %42 : vector<1x1x4x4xf32> to vector<4x4xf32>
    %cst_66 = arith.constant dense<0.000000e+00> : vector<256x4xf32>
    %44 = tpu.matmul %41, %43, %cst_66 {dimension_numbers = #tpu.dot_dimension_numbers<[1], [0], [0], [1], [0, 0, 1, 1], [], []>} : vector<256x4xf32>, vector<4x4xf32>, vector<256x4xf32> -> vector<256x4xf32>
    %45 = arith.addf %39, %44 : vector<256x4xf32>
    %c2_67 = arith.constant 2 : index
    %c0_68 = arith.constant 0 : index
    %c0_69 = arith.constant 0 : index
    %46 = vector.load %arg7[%c2_67, %c0_68, %c0_69] : memref<18x18x4xf32, #tpu.memory_space<vmem>>, vector<16x16x4xf32>
    %47 = vector.shape_cast %46 : vector<16x16x4xf32> to vector<256x4xf32>
    %c2_70 = arith.constant 2 : index
    %c0_71 = arith.constant 0 : index
    %c0_72 = arith.constant 0 : index
    %c0_73 = arith.constant 0 : index
    %48 = vector.load %arg2[%c2_70, %c0_71, %c0_72, %c0_73] : memref<3x3x4x4xf32, #tpu.memory_space<vmem>>, vector<1x1x4x4xf32>
    %49 = vector.shape_cast %48 : vector<1x1x4x4xf32> to vector<4x4xf32>
    %cst_74 = arith.constant dense<0.000000e+00> : vector<256x4xf32>
    %50 = tpu.matmul %47, %49, %cst_74 {dimension_numbers = #tpu.dot_dimension_numbers<[1], [0], [0], [1], [0, 0, 1, 1], [], []>} : vector<256x4xf32>, vector<4x4xf32>, vector<256x4xf32> -> vector<256x4xf32>
    %51 = arith.addf %45, %50 : vector<256x4xf32>
    %c2_75 = arith.constant 2 : index
    %c1_76 = arith.constant 1 : index
    %c0_77 = arith.constant 0 : index
    %52 = vector.load %arg7[%c2_75, %c1_76, %c0_77] : memref<18x18x4xf32, #tpu.memory_space<vmem>>, vector<16x16x4xf32>
    %53 = vector.shape_cast %52 : vector<16x16x4xf32> to vector<256x4xf32>
    %c2_78 = arith.constant 2 : index
    %c1_79 = arith.constant 1 : index
    %c0_80 = arith.constant 0 : index
    %c0_81 = arith.constant 0 : index
    %54 = vector.load %arg2[%c2_78, %c1_79, %c0_80, %c0_81] : memref<3x3x4x4xf32, #tpu.memory_space<vmem>>, vector<1x1x4x4xf32>
    %55 = vector.shape_cast %54 : vector<1x1x4x4xf32> to vector<4x4xf32>
    %cst_82 = arith.constant dense<0.000000e+00> : vector<256x4xf32>
    %56 = tpu.matmul %53, %55, %cst_82 {dimension_numbers = #tpu.dot_dimension_numbers<[1], [0], [0], [1], [0, 0, 1, 1], [], []>} : vector<256x4xf32>, vector<4x4xf32>, vector<256x4xf32> -> vector<256x4xf32>
    %57 = arith.addf %51, %56 : vector<256x4xf32>
    %c2_83 = arith.constant 2 : index
    %c2_84 = arith.constant 2 : index
    %c0_85 = arith.constant 0 : index
    %58 = vector.load %arg7[%c2_83, %c2_84, %c0_85] : memref<18x18x4xf32, #tpu.memory_space<vmem>>, vector<16x16x4xf32>
    %59 = vector.shape_cast %58 : vector<16x16x4xf32> to vector<256x4xf32>
    %c2_86 = arith.constant 2 : index
    %c2_87 = arith.constant 2 : index
    %c0_88 = arith.constant 0 : index
    %c0_89 = arith.constant 0 : index
    %60 = vector.load %arg2[%c2_86, %c2_87, %c0_88, %c0_89] : memref<3x3x4x4xf32, #tpu.memory_space<vmem>>, vector<1x1x4x4xf32>
    %61 = vector.shape_cast %60 : vector<1x1x4x4xf32> to vector<4x4xf32>
    %cst_90 = arith.constant dense<0.000000e+00> : vector<256x4xf32>
    %62 = tpu.matmul %59, %61, %cst_90 {dimension_numbers = #tpu.dot_dimension_numbers<[1], [0], [0], [1], [0, 0, 1, 1], [], []>} : vector<256x4xf32>, vector<4x4xf32>, vector<256x4xf32> -> vector<256x4xf32>
    %63 = arith.addf %57, %62 : vector<256x4xf32>
    %c0_91 = arith.constant 0 : index
    %c0_92 = arith.constant 0 : index
    %64 = vector.load %arg3[%c0_91, %c0_92] : memref<1x4xf32, #tpu.memory_space<vmem>>, vector<1x4xf32>
    %65 = vector.broadcast %64 : vector<1x4xf32> to vector<256x4xf32>
    %66 = arith.addf %63, %65 : vector<256x4xf32>
    %cst_93 = arith.constant dense<0.000000e+00> : vector<4xf32>
    %67 = vector.multi_reduction <add>, %66, %cst_93 [0] : vector<256x4xf32> to vector<4xf32>
    %68 = vector.shape_cast %67 : vector<4xf32> to vector<1x4xf32>
    %69 = arith.mulf %66, %66 : vector<256x4xf32>
    %cst_94 = arith.constant dense<0.000000e+00> : vector<4xf32>
    %70 = vector.multi_reduction <add>, %69, %cst_94 [0] : vector<256x4xf32> to vector<4xf32>
    %71 = vector.shape_cast %70 : vector<4xf32> to vector<1x4xf32>
    %cst_95 = arith.constant 3.906250e-03 : f32
    %72 = vector.broadcast %cst_95 : f32 to vector<1x4xf32>
    %73 = arith.mulf %68, %72 : vector<1x4xf32>
    %cst_96 = arith.constant 3.906250e-03 : f32
    %74 = vector.broadcast %cst_96 : f32 to vector<1x4xf32>
    %75 = arith.mulf %71, %74 : vector<1x4xf32>
    %76 = arith.mulf %73, %73 : vector<1x4xf32>
    %77 = arith.subf %75, %76 : vector<1x4xf32>
    %78 = vector.broadcast %73 : vector<1x4xf32> to vector<256x4xf32>
    %79 = arith.subf %66, %78 : vector<256x4xf32>
    %cst_97 = arith.constant 9.99999974E-6 : f32
    %80 = vector.broadcast %cst_97 : f32 to vector<1x4xf32>
    %81 = arith.addf %77, %80 : vector<1x4xf32>
    %82 = math.rsqrt %81 : vector<1x4xf32>
    %83 = vector.broadcast %82 : vector<1x4xf32> to vector<256x4xf32>
    %84 = arith.mulf %79, %83 : vector<256x4xf32>
    %cst_98 = arith.constant 0.000000e+00 : f32
    %85 = vector.broadcast %cst_98 : f32 to vector<256x4xf32>
    %86 = arith.maximumf %84, %85 : vector<256x4xf32>
    %87 = vector.shape_cast %86 : vector<256x4xf32> to vector<16x16x4xf32>
    %c1_99 = arith.constant 1 : index
    %c1_100 = arith.constant 1 : index
    %c0_101 = arith.constant 0 : index
    %88 = vector.load %arg8[%c1_99, %c1_100, %c0_101] : memref<18x18x4xf32, #tpu.memory_space<vmem>>, vector<16x16x4xf32>
    tpu.vector_store %arg8[%c1_99, %c1_100, %c0_101], %87 {strides = array<i32>} : memref<18x18x4xf32, #tpu.memory_space<vmem>>, vector<16x16x4xf32>,
    %89 = vector.extract_strided_slice %87 {offsets = [1, 0, 0], sizes = [1, 16, 4], strides = [1, 1, 1]} : vector<16x16x4xf32> to vector<1x16x4xf32>
    %c0_102 = arith.constant 0 : index
    %c1_103 = arith.constant 1 : index
    %c0_104 = arith.constant 0 : index
    %90 = vector.load %arg8[%c0_102, %c1_103, %c0_104] : memref<18x18x4xf32, #tpu.memory_space<vmem>>, vector<1x16x4xf32>
    tpu.vector_store %arg8[%c0_102, %c1_103, %c0_104], %89 {strides = array<i32>} : memref<18x18x4xf32, #tpu.memory_space<vmem>>, vector<1x16x4xf32>,
    %91 = vector.extract_strided_slice %87 {offsets = [14, 0, 0], sizes = [1, 16, 4], strides = [1, 1, 1]} : vector<16x16x4xf32> to vector<1x16x4xf32>
    %c17_105 = arith.constant 17 : index
    %c1_106 = arith.constant 1 : index
    %c0_107 = arith.constant 0 : index
    %92 = vector.load %arg8[%c17_105, %c1_106, %c0_107] : memref<18x18x4xf32, #tpu.memory_space<vmem>>, vector<1x16x4xf32>
    tpu.vector_store %arg8[%c17_105, %c1_106, %c0_107], %91 {strides = array<i32>} : memref<18x18x4xf32, #tpu.memory_space<vmem>>, vector<1x16x4xf32>,
    %c0_108 = arith.constant 0 : index
    %c2_109 = arith.constant 2 : index
    %c0_110 = arith.constant 0 : index
    %93 = vector.load %arg8[%c0_108, %c2_109, %c0_110] : memref<18x18x4xf32, #tpu.memory_space<vmem>>, vector<18x1x4xf32>
    %c0_111 = arith.constant 0 : index
    %c0_112 = arith.constant 0 : index
    %c0_113 = arith.constant 0 : index
    %94 = vector.load %arg8[%c0_111, %c0_112, %c0_113] : memref<18x18x4xf32, #tpu.memory_space<vmem>>, vector<18x1x4xf32>
    tpu.vector_store %arg8[%c0_111, %c0_112, %c0_113], %93 {strides = array<i32>} : memref<18x18x4xf32, #tpu.memory_space<vmem>>, vector<18x1x4xf32>,
    %c0_114 = arith.constant 0 : index
    %c15_115 = arith.constant 15 : index
    %c0_116 = arith.constant 0 : index
    %95 = vector.load %arg8[%c0_114, %c15_115, %c0_116] : memref<18x18x4xf32, #tpu.memory_space<vmem>>, vector<18x1x4xf32>
    %c0_117 = arith.constant 0 : index
    %c17_118 = arith.constant 17 : index
    %c0_119 = arith.constant 0 : index
    %96 = vector.load %arg8[%c0_117, %c17_118, %c0_119] : memref<18x18x4xf32, #tpu.memory_space<vmem>>, vector<18x1x4xf32>
    tpu.vector_store %arg8[%c0_117, %c17_118, %c0_119], %95 {strides = array<i32>} : memref<18x18x4xf32, #tpu.memory_space<vmem>>, vector<18x1x4xf32>,
    %c0_120 = arith.constant 0 : index
    %c0_121 = arith.constant 0 : index
    %c0_122 = arith.constant 0 : index
    %97 = vector.load %arg8[%c0_120, %c0_121, %c0_122] : memref<18x18x4xf32, #tpu.memory_space<vmem>>, vector<16x16x4xf32>
    %98 = vector.shape_cast %97 : vector<16x16x4xf32> to vector<256x4xf32>
    %c0_123 = arith.constant 0 : index
    %c0_124 = arith.constant 0 : index
    %c0_125 = arith.constant 0 : index
    %c0_126 = arith.constant 0 : index
    %99 = vector.load %arg4[%c0_123, %c0_124, %c0_125, %c0_126] : memref<3x3x4x4xf32, #tpu.memory_space<vmem>>, vector<1x1x4x4xf32>
    %100 = vector.shape_cast %99 : vector<1x1x4x4xf32> to vector<4x4xf32>
    %cst_127 = arith.constant dense<0.000000e+00> : vector<256x4xf32>
    %101 = tpu.matmul %98, %100, %cst_127 {dimension_numbers = #tpu.dot_dimension_numbers<[1], [0], [0], [1], [0, 0, 1, 1], [], []>} : vector<256x4xf32>, vector<4x4xf32>, vector<256x4xf32> -> vector<256x4xf32>
    %c0_128 = arith.constant 0 : index
    %c1_129 = arith.constant 1 : index
    %c0_130 = arith.constant 0 : index
    %102 = vector.load %arg8[%c0_128, %c1_129, %c0_130] : memref<18x18x4xf32, #tpu.memory_space<vmem>>, vector<16x16x4xf32>
    %103 = vector.shape_cast %102 : vector<16x16x4xf32> to vector<256x4xf32>
    %c0_131 = arith.constant 0 : index
    %c1_132 = arith.constant 1 : index
    %c0_133 = arith.constant 0 : index
    %c0_134 = arith.constant 0 : index
    %104 = vector.load %arg4[%c0_131, %c1_132, %c0_133, %c0_134] : memref<3x3x4x4xf32, #tpu.memory_space<vmem>>, vector<1x1x4x4xf32>
    %105 = vector.shape_cast %104 : vector<1x1x4x4xf32> to vector<4x4xf32>
    %cst_135 = arith.constant dense<0.000000e+00> : vector<256x4xf32>
    %106 = tpu.matmul %103, %105, %cst_135 {dimension_numbers = #tpu.dot_dimension_numbers<[1], [0], [0], [1], [0, 0, 1, 1], [], []>} : vector<256x4xf32>, vector<4x4xf32>, vector<256x4xf32> -> vector<256x4xf32>
    %107 = arith.addf %101, %106 : vector<256x4xf32>
    %c0_136 = arith.constant 0 : index
    %c2_137 = arith.constant 2 : index
    %c0_138 = arith.constant 0 : index
    %108 = vector.load %arg8[%c0_136, %c2_137, %c0_138] : memref<18x18x4xf32, #tpu.memory_space<vmem>>, vector<16x16x4xf32>
    %109 = vector.shape_cast %108 : vector<16x16x4xf32> to vector<256x4xf32>
    %c0_139 = arith.constant 0 : index
    %c2_140 = arith.constant 2 : index
    %c0_141 = arith.constant 0 : index
    %c0_142 = arith.constant 0 : index
    %110 = vector.load %arg4[%c0_139, %c2_140, %c0_141, %c0_142] : memref<3x3x4x4xf32, #tpu.memory_space<vmem>>, vector<1x1x4x4xf32>
    %111 = vector.shape_cast %110 : vector<1x1x4x4xf32> to vector<4x4xf32>
    %cst_143 = arith.constant dense<0.000000e+00> : vector<256x4xf32>
    %112 = tpu.matmul %109, %111, %cst_143 {dimension_numbers = #tpu.dot_dimension_numbers<[1], [0], [0], [1], [0, 0, 1, 1], [], []>} : vector<256x4xf32>, vector<4x4xf32>, vector<256x4xf32> -> vector<256x4xf32>
    %113 = arith.addf %107, %112 : vector<256x4xf32>
    %c1_144 = arith.constant 1 : index
    %c0_145 = arith.constant 0 : index
    %c0_146 = arith.constant 0 : index
    %114 = vector.load %arg8[%c1_144, %c0_145, %c0_146] : memref<18x18x4xf32, #tpu.memory_space<vmem>>, vector<16x16x4xf32>
    %115 = vector.shape_cast %114 : vector<16x16x4xf32> to vector<256x4xf32>
    %c1_147 = arith.constant 1 : index
    %c0_148 = arith.constant 0 : index
    %c0_149 = arith.constant 0 : index
    %c0_150 = arith.constant 0 : index
    %116 = vector.load %arg4[%c1_147, %c0_148, %c0_149, %c0_150] : memref<3x3x4x4xf32, #tpu.memory_space<vmem>>, vector<1x1x4x4xf32>
    %117 = vector.shape_cast %116 : vector<1x1x4x4xf32> to vector<4x4xf32>
    %cst_151 = arith.constant dense<0.000000e+00> : vector<256x4xf32>
    %118 = tpu.matmul %115, %117, %cst_151 {dimension_numbers = #tpu.dot_dimension_numbers<[1], [0], [0], [1], [0, 0, 1, 1], [], []>} : vector<256x4xf32>, vector<4x4xf32>, vector<256x4xf32> -> vector<256x4xf32>
    %119 = arith.addf %113, %118 : vector<256x4xf32>
    %c1_152 = arith.constant 1 : index
    %c1_153 = arith.constant 1 : index
    %c0_154 = arith.constant 0 : index
    %120 = vector.load %arg8[%c1_152, %c1_153, %c0_154] : memref<18x18x4xf32, #tpu.memory_space<vmem>>, vector<16x16x4xf32>
    %121 = vector.shape_cast %120 : vector<16x16x4xf32> to vector<256x4xf32>
    %c1_155 = arith.constant 1 : index
    %c1_156 = arith.constant 1 : index
    %c0_157 = arith.constant 0 : index
    %c0_158 = arith.constant 0 : index
    %122 = vector.load %arg4[%c1_155, %c1_156, %c0_157, %c0_158] : memref<3x3x4x4xf32, #tpu.memory_space<vmem>>, vector<1x1x4x4xf32>
    %123 = vector.shape_cast %122 : vector<1x1x4x4xf32> to vector<4x4xf32>
    %cst_159 = arith.constant dense<0.000000e+00> : vector<256x4xf32>
    %124 = tpu.matmul %121, %123, %cst_159 {dimension_numbers = #tpu.dot_dimension_numbers<[1], [0], [0], [1], [0, 0, 1, 1], [], []>} : vector<256x4xf32>, vector<4x4xf32>, vector<256x4xf32> -> vector<256x4xf32>
    %125 = arith.addf %119, %124 : vector<256x4xf32>
    %c1_160 = arith.constant 1 : index
    %c2_161 = arith.constant 2 : index
    %c0_162 = arith.constant 0 : index
    %126 = vector.load %arg8[%c1_160, %c2_161, %c0_162] : memref<18x18x4xf32, #tpu.memory_space<vmem>>, vector<16x16x4xf32>
    %127 = vector.shape_cast %126 : vector<16x16x4xf32> to vector<256x4xf32>
    %c1_163 = arith.constant 1 : index
    %c2_164 = arith.constant 2 : index
    %c0_165 = arith.constant 0 : index
    %c0_166 = arith.constant 0 : index
    %128 = vector.load %arg4[%c1_163, %c2_164, %c0_165, %c0_166] : memref<3x3x4x4xf32, #tpu.memory_space<vmem>>, vector<1x1x4x4xf32>
    %129 = vector.shape_cast %128 : vector<1x1x4x4xf32> to vector<4x4xf32>
    %cst_167 = arith.constant dense<0.000000e+00> : vector<256x4xf32>
    %130 = tpu.matmul %127, %129, %cst_167 {dimension_numbers = #tpu.dot_dimension_numbers<[1], [0], [0], [1], [0, 0, 1, 1], [], []>} : vector<256x4xf32>, vector<4x4xf32>, vector<256x4xf32> -> vector<256x4xf32>
    %131 = arith.addf %125, %130 : vector<256x4xf32>
    %c2_168 = arith.constant 2 : index
    %c0_169 = arith.constant 0 : index
    %c0_170 = arith.constant 0 : index
    %132 = vector.load %arg8[%c2_168, %c0_169, %c0_170] : memref<18x18x4xf32, #tpu.memory_space<vmem>>, vector<16x16x4xf32>
    %133 = vector.shape_cast %132 : vector<16x16x4xf32> to vector<256x4xf32>
    %c2_171 = arith.constant 2 : index
    %c0_172 = arith.constant 0 : index
    %c0_173 = arith.constant 0 : index
    %c0_174 = arith.constant 0 : index
    %134 = vector.load %arg4[%c2_171, %c0_172, %c0_173, %c0_174] : memref<3x3x4x4xf32, #tpu.memory_space<vmem>>, vector<1x1x4x4xf32>
    %135 = vector.shape_cast %134 : vector<1x1x4x4xf32> to vector<4x4xf32>
    %cst_175 = arith.constant dense<0.000000e+00> : vector<256x4xf32>
    %136 = tpu.matmul %133, %135, %cst_175 {dimension_numbers = #tpu.dot_dimension_numbers<[1], [0], [0], [1], [0, 0, 1, 1], [], []>} : vector<256x4xf32>, vector<4x4xf32>, vector<256x4xf32> -> vector<256x4xf32>
    %137 = arith.addf %131, %136 : vector<256x4xf32>
    %c2_176 = arith.constant 2 : index
    %c1_177 = arith.constant 1 : index
    %c0_178 = arith.constant 0 : index
    %138 = vector.load %arg8[%c2_176, %c1_177, %c0_178] : memref<18x18x4xf32, #tpu.memory_space<vmem>>, vector<16x16x4xf32>
    %139 = vector.shape_cast %138 : vector<16x16x4xf32> to vector<256x4xf32>
    %c2_179 = arith.constant 2 : index
    %c1_180 = arith.constant 1 : index
    %c0_181 = arith.constant 0 : index
    %c0_182 = arith.constant 0 : index
    %140 = vector.load %arg4[%c2_179, %c1_180, %c0_181, %c0_182] : memref<3x3x4x4xf32, #tpu.memory_space<vmem>>, vector<1x1x4x4xf32>
    %141 = vector.shape_cast %140 : vector<1x1x4x4xf32> to vector<4x4xf32>
    %cst_183 = arith.constant dense<0.000000e+00> : vector<256x4xf32>
    %142 = tpu.matmul %139, %141, %cst_183 {dimension_numbers = #tpu.dot_dimension_numbers<[1], [0], [0], [1], [0, 0, 1, 1], [], []>} : vector<256x4xf32>, vector<4x4xf32>, vector<256x4xf32> -> vector<256x4xf32>
    %143 = arith.addf %137, %142 : vector<256x4xf32>
    %c2_184 = arith.constant 2 : index
    %c2_185 = arith.constant 2 : index
    %c0_186 = arith.constant 0 : index
    %144 = vector.load %arg8[%c2_184, %c2_185, %c0_186] : memref<18x18x4xf32, #tpu.memory_space<vmem>>, vector<16x16x4xf32>
    %145 = vector.shape_cast %144 : vector<16x16x4xf32> to vector<256x4xf32>
    %c2_187 = arith.constant 2 : index
    %c2_188 = arith.constant 2 : index
    %c0_189 = arith.constant 0 : index
    %c0_190 = arith.constant 0 : index
    %146 = vector.load %arg4[%c2_187, %c2_188, %c0_189, %c0_190] : memref<3x3x4x4xf32, #tpu.memory_space<vmem>>, vector<1x1x4x4xf32>
    %147 = vector.shape_cast %146 : vector<1x1x4x4xf32> to vector<4x4xf32>
    %cst_191 = arith.constant dense<0.000000e+00> : vector<256x4xf32>
    %148 = tpu.matmul %145, %147, %cst_191 {dimension_numbers = #tpu.dot_dimension_numbers<[1], [0], [0], [1], [0, 0, 1, 1], [], []>} : vector<256x4xf32>, vector<4x4xf32>, vector<256x4xf32> -> vector<256x4xf32>
    %149 = arith.addf %143, %148 : vector<256x4xf32>
    %c0_192 = arith.constant 0 : index
    %c0_193 = arith.constant 0 : index
    %150 = vector.load %arg5[%c0_192, %c0_193] : memref<1x4xf32, #tpu.memory_space<vmem>>, vector<1x4xf32>
    %151 = vector.broadcast %150 : vector<1x4xf32> to vector<256x4xf32>
    %152 = arith.addf %149, %151 : vector<256x4xf32>
    %cst_194 = arith.constant dense<0.000000e+00> : vector<4xf32>
    %153 = vector.multi_reduction <add>, %152, %cst_194 [0] : vector<256x4xf32> to vector<4xf32>
    %154 = vector.shape_cast %153 : vector<4xf32> to vector<1x4xf32>
    %155 = arith.mulf %152, %152 : vector<256x4xf32>
    %cst_195 = arith.constant dense<0.000000e+00> : vector<4xf32>
    %156 = vector.multi_reduction <add>, %155, %cst_195 [0] : vector<256x4xf32> to vector<4xf32>
    %157 = vector.shape_cast %156 : vector<4xf32> to vector<1x4xf32>
    %cst_196 = arith.constant 3.906250e-03 : f32
    %158 = vector.broadcast %cst_196 : f32 to vector<1x4xf32>
    %159 = arith.mulf %154, %158 : vector<1x4xf32>
    %cst_197 = arith.constant 3.906250e-03 : f32
    %160 = vector.broadcast %cst_197 : f32 to vector<1x4xf32>
    %161 = arith.mulf %157, %160 : vector<1x4xf32>
    %162 = arith.mulf %159, %159 : vector<1x4xf32>
    %163 = arith.subf %161, %162 : vector<1x4xf32>
    %164 = vector.broadcast %159 : vector<1x4xf32> to vector<256x4xf32>
    %165 = arith.subf %152, %164 : vector<256x4xf32>
    %cst_198 = arith.constant 9.99999974E-6 : f32
    %166 = vector.broadcast %cst_198 : f32 to vector<1x4xf32>
    %167 = arith.addf %163, %166 : vector<1x4xf32>
    %168 = math.rsqrt %167 : vector<1x4xf32>
    %169 = vector.broadcast %168 : vector<1x4xf32> to vector<256x4xf32>
    %170 = arith.mulf %165, %169 : vector<256x4xf32>
    %171 = vector.shape_cast %170 : vector<256x4xf32> to vector<16x16x4xf32>
    %172 = arith.addf %1, %171 : vector<16x16x4xf32>
    %c0_199 = arith.constant 0 : index
    %c0_200 = arith.constant 0 : index
    %c0_201 = arith.constant 0 : index
    %c0_202 = arith.constant 0 : index
    %173 = vector.load %arg6[%c0_199, %c0_200, %c0_201, %c0_202] : memref<1x16x16x4xf32, #tpu.memory_space<vmem>>, vector<1x16x16x4xf32>
    %174 = vector.shape_cast %173 : vector<1x16x16x4xf32> to vector<16x16x4xf32>
    %175 = vector.shape_cast %172 : vector<16x16x4xf32> to vector<1x16x16x4xf32>
    tpu.vector_store %arg6[%c0_199, %c0_200, %c0_201, %c0_202], %175 {strides = array<i32>} : memref<1x16x16x4xf32, #tpu.memory_space<vmem>>, vector<1x16x16x4xf32>,
    return
  }
  func.func @transform_0(%arg0: i32) -> (i32, i32, i32, i32) {
    %c0_i32 = arith.constant 0 : i32
    %c0_i32_0 = arith.constant 0 : i32
    %c0_i32_1 = arith.constant 0 : i32
    %c0_i32_2 = arith.constant 0 : i32
    return %arg0, %c0_i32, %c0_i32_0, %c0_i32_1 : i32, i32, i32, i32
  }
  func.func @transform_1(%arg0: i32) -> (i32, i32, i32, i32) {
    %c0_i32 = arith.constant 0 : i32
    %c0_i32_0 = arith.constant 0 : i32
    %c0_i32_1 = arith.constant 0 : i32
    %c0_i32_2 = arith.constant 0 : i32
    %c0_i32_3 = arith.constant 0 : i32
    return %c0_i32, %c0_i32_0, %c0_i32_1, %c0_i32_2 : i32, i32, i32, i32
  }
  func.func @transform_2(%arg0: i32) -> (i32, i32) {
    %c0_i32 = arith.constant 0 : i32
    %c0_i32_0 = arith.constant 0 : i32
    %c0_i32_1 = arith.constant 0 : i32
    return %c0_i32, %c0_i32_0 : i32, i32
  }
  func.func @transform_3(%arg0: i32) -> (i32, i32, i32, i32) {
    %c0_i32 = arith.constant 0 : i32
    %c0_i32_0 = arith.constant 0 : i32
    %c0_i32_1 = arith.constant 0 : i32
    %c0_i32_2 = arith.constant 0 : i32
    %c0_i32_3 = arith.constant 0 : i32
    return %c0_i32, %c0_i32_0, %c0_i32_1, %c0_i32_2 : i32, i32, i32, i32
  }
  func.func @transform_4(%arg0: i32) -> (i32, i32) {
    %c0_i32 = arith.constant 0 : i32
    %c0_i32_0 = arith.constant 0 : i32
    %c0_i32_1 = arith.constant 0 : i32
    return %c0_i32, %c0_i32_0 : i32, i32
  }
  func.func @transform_5(%arg0: i32) -> (i32, i32, i32, i32) {
    %c0_i32 = arith.constant 0 : i32
    %c0_i32_0 = arith.constant 0 : i32
    %c0_i32_1 = arith.constant 0 : i32
    %c0_i32_2 = arith.constant 0 : i32
    return %arg0, %c0_i32, %c0_i32_0, %c0_i32_1 : i32, i32, i32, i32
  }
}

</mosaic_0001>

<llo_original>
// kernel: tpu_custom_call.1
$region0: #{tpu_custom_call.1}
  #allocation0 [shape = 'u32[]', space=smem, size = 0x4, offset = 0x4, fixed_abs, tag = 'smem constant byte address 0x4 - core index']
  #allocation1 [shape = 'u32[144,128]{1,0:T(1,128)}', space=vmem, size = 0x12000, scoped, tag = 'internal scratch']
  #allocation2 [shape = 'f32[18,18,4]{2,1,0:T(8,128)}', space=vmem, size = 0x36000, scoped, tag = 'scratch operand']
  #allocation3 [shape = 'f32[18,18,4]{2,1,0:T(8,128)}', space=vmem, size = 0x36000, scoped, tag = 'scratch operand']
  %s0 = inlined_call_operand.vmem [shape: f32[2,16,16,4], index: 0, kind: input, shape index: {}]
  %s1 = inlined_call_operand.vmem [shape: f32[3,3,4,4], index: 1, kind: input, shape index: {}]
  %s2 = inlined_call_operand.vmem [shape: f32[1,4], index: 2, kind: input, shape index: {}]
  %s3 = inlined_call_operand.vmem [shape: f32[3,3,4,4], index: 3, kind: input, shape index: {}]
  %s4 = inlined_call_operand.vmem [shape: f32[1,4], index: 4, kind: input, shape index: {}]
  %s5 = inlined_call_operand.vmem [shape: f32[2,16,16,4], index: 5, kind: output, shape index: {}]
  %s6 = sld [smem:[#allocation0]]
  $region53: #{tpu_custom_call.1} parent=0
    _
  %s8 = ssub.s32 1, %s6
  %s9 = scalar_select 0, %s8, %s6
  loop: start=0, step=1, limit=4
  $region2: #{tpu_custom_call.1} parent=0 // loop_pre_header
    _
  $region3: #{tpu_custom_call.1} parent=0 // loop_header
    %s11 = sphi 0, %s15
    %p12 = scmp.ge.s32.totalorder %s11, 4
    %s21 = sphi 0, %s23
    %s24 = sphi 0, %s21
    %s25 = sphi 0, %s24
    %s41 = sphi 0, %s25
    %s45 = sphi 0, %s45
    %s47 = sphi 0, %s45
    %s48 = sphi 0, %s47
    %s62 = sphi 0, %s48
    %s66 = sphi 0, %s66
    %s68 = sphi 0, %s66
    %s69 = sphi 0, %s68
    %s83 = sphi 0, %s69
    %s87 = sphi 0, %s87
    %s89 = sphi 0, %s87
    %s90 = sphi 0, %s89
    %s104 = sphi 0, %s90
    %s108 = sphi 0, %s108
    %s110 = sphi 0, %s108
    %s111 = sphi 0, %s110
    %s125 = sphi 0, %s111
    %s131 = sphi 0, %s133
    %s134 = sphi 0, %s131
    %s135 = sphi 0, %s134
    %s151 = sphi 0, %s135
  $region4: #{tpu_custom_call.1} parent=0 // loop_header_branch
    %14 = sbr.rel (%p12) target = $region8
  $region5: #{tpu_custom_call.1} parent=0 // loop_body
    %s16 = ssub.s32 %s11, 1
    %s17 = ssub.s32 %s11, 2
    %s18 = sadd.s32 %s11, 1
    %s19 = ssub.s32 %s11, %s18
    %p20 = scmp.eq.s32.totalorder %s19, 0
    %s22 = sadd.s32 %s21, 1
    %s23 = scalar_select %p20, %s21, %s22
    %p26 = pneg %p20
    %p27 = scmp.eq.s32.totalorder %s11, 1
    %p28 = por %p26, %p27
    %p29 = scmp.ne.s32.totalorder %s21, %s24
    %p30 = scmp.eq.s32.totalorder %s11, 0
    %p31 = por %p29, %p30
    %p32 = scmp.ne.s32.totalorder %s21, %s24
    %p33 = scmp.eq.s32.totalorder %s16, 1
    %p34 = por %p32, %p33
    %p35 = scmp.ne.s32.totalorder %s24, %s25
    %p36 = scmp.eq.s32.totalorder %s16, 0
    %p37 = por %p35, %p36
    %p38 = scmp.ne.s32.totalorder %s24, %s25
    %p39 = scmp.eq.s32.totalorder %s17, 1
    %p40 = por %p38, %p39
    %p42 = scmp.ne.s32.totalorder %s25, %s41
    %p43 = scmp.eq.s32.totalorder %s17, 0
    %p44 = por %p42, %p43
    %s46 = sadd.s32 %s45, 1
    %p49 = scmp.eq.s32.totalorder %s11, 1
    %p50 = scmp.ne.s32.totalorder %s45, %s47
    %p51 = scmp.eq.s32.totalorder %s11, 0
    %p52 = por %p50, %p51
    %p53 = scmp.ne.s32.totalorder %s45, %s47
    %p54 = scmp.eq.s32.totalorder %s16, 1
    %p55 = por %p53, %p54
    %p56 = scmp.ne.s32.totalorder %s47, %s48
    %p57 = scmp.eq.s32.totalorder %s16, 0
    %p58 = por %p56, %p57
    %p59 = scmp.ne.s32.totalorder %s47, %s48
    %p60 = scmp.eq.s32.totalorder %s17, 1
    %p61 = por %p59, %p60
    %p63 = scmp.ne.s32.totalorder %s48, %s62
    %p64 = scmp.eq.s32.totalorder %s17, 0
    %p65 = por %p63, %p64
    %s67 = sadd.s32 %s66, 1
    %p70 = scmp.eq.s32.totalorder %s11, 1
    %p71 = scmp.ne.s32.totalorder %s66, %s68
    %p72 = scmp.eq.s32.totalorder %s11, 0
    %p73 = por %p71, %p72
    %p74 = scmp.ne.s32.totalorder %s66, %s68
    %p75 = scmp.eq.s32.totalorder %s16, 1
    %p76 = por %p74, %p75
    %p77 = scmp.ne.s32.totalorder %s68, %s69
    %p78 = scmp.eq.s32.totalorder %s16, 0
    %p79 = por %p77, %p78
    %p80 = scmp.ne.s32.totalorder %s68, %s69
    %p81 = scmp.eq.s32.totalorder %s17, 1
    %p82 = por %p80, %p81
    %p84 = scmp.ne.s32.totalorder %s69, %s83
    %p85 = scmp.eq.s32.totalorder %s17, 0
    %p86 = por %p84, %p85
    %s88 = sadd.s32 %s87, 1
    %p91 = scmp.eq.s32.totalorder %s11, 1
    %p92 = scmp.ne.s32.totalorder %s87, %s89
    %p93 = scmp.eq.s32.totalorder %s11, 0
    %p94 = por %p92, %p93
    %p95 = scmp.ne.s32.totalorder %s87, %s89
    %p96 = scmp.eq.s32.totalorder %s16, 1
    %p97 = por %p95, %p96
    %p98 = scmp.ne.s32.totalorder %s89, %s90
    %p99 = scmp.eq.s32.totalorder %s16, 0
    %p100 = por %p98, %p99
    %p101 = scmp.ne.s32.totalorder %s89, %s90
    %p102 = scmp.eq.s32.totalorder %s17, 1
    %p103 = por %p101, %p102
    %p105 = scmp.ne.s32.totalorder %s90, %s104
    %p106 = scmp.eq.s32.totalorder %s17, 0
    %p107 = por %p105, %p106
    %s109 = sadd.s32 %s108, 1
    %p112 = scmp.eq.s32.totalorder %s11, 1
    %p113 = scmp.ne.s32.totalorder %s108, %s110
    %p114 = scmp.eq.s32.totalorder %s11, 0
    %p115 = por %p113, %p114
    %p116 = scmp.ne.s32.totalorder %s108, %s110
    %p117 = scmp.eq.s32.totalorder %s16, 1
    %p118 = por %p116, %p117
    %p119 = scmp.ne.s32.totalorder %s110, %s111
    %p120 = scmp.eq.s32.totalorder %s16, 0
    %p121 = por %p119, %p120
    %p122 = scmp.ne.s32.totalorder %s110, %s111
    %p123 = scmp.eq.s32.totalorder %s17, 1
    %p124 = por %p122, %p123
    %p126 = scmp.ne.s32.totalorder %s111, %s125
    %p127 = scmp.eq.s32.totalorder %s17, 0
    %p128 = por %p126, %p127
    %s129 = ssub.s32 %s11, %s18
    %p130 = scmp.eq.s32.totalorder %s129, 0
    %s132 = sadd.s32 %s131, 1
    %s133 = scalar_select %p130, %s131, %s132
    %p136 = pneg %p130
    %p137 = scmp.eq.s32.totalorder %s11, 1
    %p138 = por %p136, %p137
    %p139 = scmp.ne.s32.totalorder %s131, %s134
    %p140 = scmp.eq.s32.totalorder %s11, 0
    %p141 = por %p139, %p140
    %p142 = scmp.ne.s32.totalorder %s131, %s134
    %p143 = scmp.eq.s32.totalorder %s16, 1
    %p144 = por %p142, %p143
    %p145 = scmp.ne.s32.totalorder %s134, %s135
    %p146 = scmp.eq.s32.totalorder %s16, 0
    %p147 = por %p145, %p146
    %p148 = scmp.ne.s32.totalorder %s134, %s135
    %p149 = scmp.eq.s32.totalorder %s17, 1
    %p150 = por %p148, %p149
    %p152 = scmp.ne.s32.totalorder %s135, %s151
    %p153 = scmp.eq.s32.totalorder %s17, 0
    %p154 = por %p152, %p153
    %p155 = scmp.le.s32.totalorder 1, %s11
    %p156 = scmp.lt.s32.totalorder %s11, 3
    %p157 = pnand %p155, %p156
    %p158 = pneg %p157
    // Predicated region
    $region9: #{tpu_custom_call.1} parent=5 // pred_check
      _
    $region10: #{tpu_custom_call.1} parent=5 // pred_check_branch
      %160 = sbr.rel (%p157) target = $region12
    $region11: #{tpu_custom_call.1} parent=5 // pred_region
      %s161 = ssub.s32 %s11, 1
      // Predicated region
      $region13: #{tpu_custom_call.1} parent=11 // pred_check
        %p162 = pneg %p58
      $region14: #{tpu_custom_call.1} parent=11 // pred_check_branch
        %164 = sbr.rel (%p162) target = $region16
      $region15: #{tpu_custom_call.1} parent=11 // pred_region
        _
      $region16: #{tpu_custom_call.1} parent=11 // pred_fallthru
        _
      // Predicated region
      $region17: #{tpu_custom_call.1} parent=11 // pred_check
        %p165 = pneg %p79
      $region18: #{tpu_custom_call.1} parent=11 // pred_check_branch
        %167 = sbr.rel (%p165) target = $region20
      $region19: #{tpu_custom_call.1} parent=11 // pred_region
        _
      $region20: #{tpu_custom_call.1} parent=11 // pred_fallthru
        _
      // Predicated region
      $region21: #{tpu_custom_call.1} parent=11 // pred_check
        %p168 = pneg %p100
      $region22: #{tpu_custom_call.1} parent=11 // pred_check_branch
        %170 = sbr.rel (%p168) target = $region24
      $region23: #{tpu_custom_call.1} parent=11 // pred_region
        _
      $region24: #{tpu_custom_call.1} parent=11 // pred_fallthru
        _
      // Predicated region
      $region25: #{tpu_custom_call.1} parent=11 // pred_check
        %p171 = pneg %p121
      $region26: #{tpu_custom_call.1} parent=11 // pred_check_branch
        %173 = sbr.rel (%p171) target = $region28
      $region27: #{tpu_custom_call.1} parent=11 // pred_region
        _
      $region28: #{tpu_custom_call.1} parent=11 // pred_fallthru
        _
    $region12: #{tpu_custom_call.1} parent=5 // pred_fallthru
      _
    %p174 = scmp.lt.s32.totalorder %s11, 2
    // Predicated region
    $region29: #{tpu_custom_call.1} parent=5 // pred_check
      %p175 = pneg %p174
    $region30: #{tpu_custom_call.1} parent=5 // pred_check_branch
      %177 = sbr.rel (%p175) target = $region32
    $region31: #{tpu_custom_call.1} parent=5 // pred_region
      // Predicated region
      $region33: #{tpu_custom_call.1} parent=31 // pred_check
        %p178 = pneg %p31
      $region34: #{tpu_custom_call.1} parent=31 // pred_check_branch
        %180 = sbr.rel (%p178) target = $region36
      $region35: #{tpu_custom_call.1} parent=31 // pred_region
        %p181 = scmp.lt.s32.totalorder %s11, 1
        %s182 = scalar_select %p181, %s11, 1
        %s183 = smul.addr %s182, 32
        %s184 = smul.addr %s183, 8
        %s185 = scalar_lea.vmem %s0, %s184
      $region36: #{tpu_custom_call.1} parent=31 // pred_fallthru
        _
    $region32: #{tpu_custom_call.1} parent=5 // pred_fallthru
      _
    %p186 = scmp.le.s32.totalorder 1, %s11
    %p187 = scmp.lt.s32.totalorder %s11, 3
    %p188 = pnand %p186, %p187
    %p189 = pneg %p188
    // Predicated region
    $region37: #{tpu_custom_call.1} parent=5 // pred_check
      _
    $region38: #{tpu_custom_call.1} parent=5 // pred_check_branch
      %191 = sbr.rel (%p188) target = $region40
    $region39: #{tpu_custom_call.1} parent=5 // pred_region
      %s192 = ssub.s32 %s11, 1
      %p193 = scmp.lt.s32.totalorder %s16, 1
      %s194 = scalar_select %p193, %s16, 1
      %s195 = smul.addr %s194, 32
      %s196 = smul.addr %s195, 8
      %s197 = scalar_lea.vmem %s0, %s196
      %p198 = pneg %p37
      %p199 = pneg %p34
      %p200 = pneg %p58
      %p201 = pneg %p55
      %p202 = pneg %p79
      %p203 = pneg %p76
      %p204 = pneg %p100
      %p205 = pneg %p97
      %p206 = pneg %p121
      %p207 = pneg %p118
      %p208 = pneg %p147
      %p209 = pneg %p144
      %p210 = scmp.lt.s32.totalorder %s16, 1
      %s211 = scalar_select %p210, %s16, 1
      %s212 = smul.addr %s211, 32
      %s213 = smul.addr %s212, 8
      %s214 = scalar_lea.vmem %s5, %s213
      %p215 = scmp.lt.s32.totalorder %s16, 1
      %s216 = scalar_select %p215, %s16, 1
      %s217 = smul.addr %s216, 32
      %s218 = smul.addr %s217, 8
      %s219 = scalar_lea.vmem %s0, %s218
      %p220 = scmp.lt.s32.totalorder %s16, 1
      %s221 = scalar_select %p220, %s16, 1
      %s222 = smul.addr %s221, 32
      %s223 = smul.addr %s222, 8
      %s224 = scalar_lea.vmem %s5, %s223
      %v225 = vld [vmem:[%s219] sm:$0xff]
      %v226 = vld [vmem:[%s219 + $0x8] sm:$0xff]
      %v227 = vld [vmem:[%s219 + $0x10] sm:$0xff]
      %v228 = vld [vmem:[%s219 + $0x18] sm:$0xff]
      %v229 = vld [vmem:[%s219 + $0x20] sm:$0xff]
      %v230 = vld [vmem:[%s219 + $0x28] sm:$0xff]
      %v231 = vld [vmem:[%s219 + $0x30] sm:$0xff]
      %v232 = vld [vmem:[%s219 + $0x38] sm:$0xff]
      %v233 = vld [vmem:[%s219 + $0x40] sm:$0xff]
      %v234 = vld [vmem:[%s219 + $0x48] sm:$0xff]
      %v235 = vld [vmem:[%s219 + $0x50] sm:$0xff]
      %v236 = vld [vmem:[%s219 + $0x58] sm:$0xff]
      %v237 = vld [vmem:[%s219 + $0x60] sm:$0xff]
      %v238 = vld [vmem:[%s219 + $0x68] sm:$0xff]
      %v239 = vld [vmem:[%s219 + $0x70] sm:$0xff]
      %v240 = vld [vmem:[%s219 + $0x78] sm:$0xff]
      %v241 = vld [vmem:[%s219 + $0x80] sm:$0xff]
      %v242 = vld [vmem:[%s219 + $0x88] sm:$0xff]
      %v243 = vld [vmem:[%s219 + $0x90] sm:$0xff]
      %v244 = vld [vmem:[%s219 + $0x98] sm:$0xff]
      %v245 = vld [vmem:[%s219 + $0xa0] sm:$0xff]
      %v246 = vld [vmem:[%s219 + $0xa8] sm:$0xff]
      %v247 = vld [vmem:[%s219 + $0xb0] sm:$0xff]
      %v248 = vld [vmem:[%s219 + $0xb8] sm:$0xff]
      %v249 = vld [vmem:[%s219 + $0xc0] sm:$0xff]
      %v250 = vld [vmem:[%s219 + $0xc8] sm:$0xff]
      %v251 = vld [vmem:[%s219 + $0xd0] sm:$0xff]
      %v252 = vld [vmem:[%s219 + $0xd8] sm:$0xff]
      %v253 = vld [vmem:[%s219 + $0xe0] sm:$0xff]
      %v254 = vld [vmem:[%s219 + $0xe8] sm:$0xff]
      %v255 = vld [vmem:[%s219 + $0xf0] sm:$0xff]
      %v256 = vld [vmem:[%s219 + $0xf8] sm:$0xff]
      %s257 = scalar_lea.vmem [#allocation2], 24
      %vm258 = vcmask 31744
      %259 = vst.msk [vmem:[%s257 + $0x1] sm:$0xff] %vm258, %v225
      %260 = vst.msk [vmem:[%s257 + $0x9] sm:$0xff] %vm258, %v226
      %261 = vst.msk [vmem:[%s257 + $0x19] sm:$0xff] %vm258, %v227
      %262 = vst.msk [vmem:[%s257 + $0x21] sm:$0xff] %vm258, %v228
      %263 = vst.msk [vmem:[%s257 + $0x31] sm:$0xff] %vm258, %v229
      %264 = vst.msk [vmem:[%s257 + $0x39] sm:$0xff] %vm258, %v230
      %265 = vst.msk [vmem:[%s257 + $0x49] sm:$0xff] %vm258, %v231
      %266 = vst.msk [vmem:[%s257 + $0x51] sm:$0xff] %vm258, %v232
      %267 = vst.msk [vmem:[%s257 + $0x61] sm:$0xff] %vm258, %v233
      %268 = vst.msk [vmem:[%s257 + $0x69] sm:$0xff] %vm258, %v234
      %269 = vst.msk [vmem:[%s257 + $0x79] sm:$0xff] %vm258, %v235
      %270 = vst.msk [vmem:[%s257 + $0x81] sm:$0xff] %vm258, %v236
      %271 = vst.msk [vmem:[%s257 + $0x91] sm:$0xff] %vm258, %v237
      %272 = vst.msk [vmem:[%s257 + $0x99] sm:$0xff] %vm258, %v238
      %273 = vst.msk [vmem:[%s257 + $0xa9] sm:$0xff] %vm258, %v239
      %274 = vst.msk [vmem:[%s257 + $0xb1] sm:$0xff] %vm258, %v240
      %275 = vst.msk [vmem:[%s257 + $0xc1] sm:$0xff] %vm258, %v241
      %276 = vst.msk [vmem:[%s257 + $0xc9] sm:$0xff] %vm258, %v242
      %277 = vst.msk [vmem:[%s257 + $0xd9] sm:$0xff] %vm258, %v243
      %278 = vst.msk [vmem:[%s257 + $0xe1] sm:$0xff] %vm258, %v244
      %279 = vst.msk [vmem:[%s257 + $0xf1] sm:$0xff] %vm258, %v245
      %280 = vst.msk [vmem:[%s257 + $0xf9] sm:$0xff] %vm258, %v246
      %281 = vst.msk [vmem:[%s257 + $0x109] sm:$0xff] %vm258, %v247
      %282 = vst.msk [vmem:[%s257 + $0x111] sm:$0xff] %vm258, %v248
      %283 = vst.msk [vmem:[%s257 + $0x121] sm:$0xff] %vm258, %v249
      %284 = vst.msk [vmem:[%s257 + $0x129] sm:$0xff] %vm258, %v250
      %285 = vst.msk [vmem:[%s257 + $0x139] sm:$0xff] %vm258, %v251
      %286 = vst.msk [vmem:[%s257 + $0x141] sm:$0xff] %vm258, %v252
      %287 = vst.msk [vmem:[%s257 + $0x151] sm:$0xff] %vm258, %v253
      %288 = vst.msk [vmem:[%s257 + $0x159] sm:$0xff] %vm258, %v254
      %289 = vst.msk [vmem:[%s257 + $0x169] sm:$0xff] %vm258, %v255
      %290 = vst.msk [vmem:[%s257 + $0x171] sm:$0xff] %vm258, %v256
      %291 = vst.msk [vmem:[#allocation2 + $0x1] sm:$0xff] %vm258, %v227
      %292 = vst.msk [vmem:[#allocation2 + $0x9] sm:$0xff] %vm258, %v228
      %s293 = scalar_lea.vmem [#allocation2], 408
      %294 = vst.msk [vmem:[%s293 + $0x1] sm:$0xff] %vm258, %v253
      %295 = vst.msk [vmem:[%s293 + $0x9] sm:$0xff] %vm258, %v254
      %v296 = vld [vmem:[#allocation2 + $0x2] sm:$0x1]
      %v297 = vld [vmem:[#allocation2 + $0x1a] sm:$0x1]
      %v298 = vld [vmem:[#allocation2 + $0x32] sm:$0x1]
      %v299 = vld [vmem:[#allocation2 + $0x4a] sm:$0x1]
      %v300 = vld [vmem:[#allocation2 + $0x62] sm:$0x1]
      %v301 = vld [vmem:[#allocation2 + $0x7a] sm:$0x1]
      %v302 = vld [vmem:[#allocation2 + $0x92] sm:$0x1]
      %v303 = vld [vmem:[#allocation2 + $0xaa] sm:$0x1]
      %v304 = vld [vmem:[#allocation2 + $0xc2] sm:$0x1]
      %v305 = vld [vmem:[#allocation2 + $0xda] sm:$0x1]
      %v306 = vld [vmem:[#allocation2 + $0xf2] sm:$0x1]
      %v307 = vld [vmem:[#allocation2 + $0x10a] sm:$0x1]
      %v308 = vld [vmem:[#allocation2 + $0x122] sm:$0x1]
      %v309 = vld [vmem:[#allocation2 + $0x13a] sm:$0x1]
      %v310 = vld [vmem:[#allocation2 + $0x152] sm:$0x1]
      %v311 = vld [vmem:[#allocation2 + $0x16a] sm:$0x1]
      %v312 = vld [vmem:[#allocation2 + $0x182] sm:$0x1]
      %v313 = vld [vmem:[#allocation2 + $0x19a] sm:$0x1]
      %vm314 = vcmask 24576
      %315 = vst.msk [vmem:[#allocation2] sm:$0x1] %vm314, %v296
      %316 = vst.msk [vmem:[#allocation2 + $0x18] sm:$0x1] %vm314, %v297
      %317 = vst.msk [vmem:[#allocation2 + $0x30] sm:$0x1] %vm314, %v298
      %318 = vst.msk [vmem:[#allocation2 + $0x48] sm:$0x1] %vm314, %v299
      %319 = vst.msk [vmem:[#allocation2 + $0x60] sm:$0x1] %vm314, %v300
      %320 = vst.msk [vmem:[#allocation2 + $0x78] sm:$0x1] %vm314, %v301
      %321 = vst.msk [vmem:[#allocation2 + $0x90] sm:$0x1] %vm314, %v302
      %322 = vst.msk [vmem:[#allocation2 + $0xa8] sm:$0x1] %vm314, %v303
      %323 = vst.msk [vmem:[#allocation2 + $0xc0] sm:$0x1] %vm314, %v304
      %324 = vst.msk [vmem:[#allocation2 + $0xd8] sm:$0x1] %vm314, %v305
      %325 = vst.msk [vmem:[#allocation2 + $0xf0] sm:$0x1] %vm314, %v306
      %326 = vst.msk [vmem:[#allocation2 + $0x108] sm:$0x1] %vm314, %v307
      %327 = vst.msk [vmem:[#allocation2 + $0x120] sm:$0x1] %vm314, %v308
      %328 = vst.msk [vmem:[#allocation2 + $0x138] sm:$0x1] %vm314, %v309
      %329 = vst.msk [vmem:[#allocation2 + $0x150] sm:$0x1] %vm314, %v310
      %330 = vst.msk [vmem:[#allocation2 + $0x168] sm:$0x1] %vm314, %v311
      %331 = vst.msk [vmem:[#allocation2 + $0x180] sm:$0x1] %vm314, %v312
      %332 = vst.msk [vmem:[#allocation2 + $0x198] sm:$0x1] %vm314, %v313
      %v333 = vld [vmem:[#allocation2 + $0xf] sm:$0x1]
      %v334 = vld [vmem:[#allocation2 + $0x27] sm:$0x1]
      %v335 = vld [vmem:[#allocation2 + $0x3f] sm:$0x1]
      %v336 = vld [vmem:[#allocation2 + $0x57] sm:$0x1]
      %v337 = vld [vmem:[#allocation2 + $0x6f] sm:$0x1]
      %v338 = vld [vmem:[#allocation2 + $0x87] sm:$0x1]
      %v339 = vld [vmem:[#allocation2 + $0x9f] sm:$0x1]
      %v340 = vld [vmem:[#allocation2 + $0xb7] sm:$0x1]
      %v341 = vld [vmem:[#allocation2 + $0xcf] sm:$0x1]
      %v342 = vld [vmem:[#allocation2 + $0xe7] sm:$0x1]
      %v343 = vld [vmem:[#allocation2 + $0xff] sm:$0x1]
      %v344 = vld [vmem:[#allocation2 + $0x117] sm:$0x1]
      %v345 = vld [vmem:[#allocation2 + $0x12f] sm:$0x1]
      %v346 = vld [vmem:[#allocation2 + $0x147] sm:$0x1]
      %v347 = vld [vmem:[#allocation2 + $0x15f] sm:$0x1]
      %v348 = vld [vmem:[#allocation2 + $0x177] sm:$0x1]
      %v349 = vld [vmem:[#allocation2 + $0x18f] sm:$0x1]
      %v350 = vld [vmem:[#allocation2 + $0x1a7] sm:$0x1]
      %351 = vst.msk [vmem:[#allocation2 + $0x11] sm:$0x1] %vm314, %v333
      %352 = vst.msk [vmem:[#allocation2 + $0x29] sm:$0x1] %vm314, %v334
      %353 = vst.msk [vmem:[#allocation2 + $0x41] sm:$0x1] %vm314, %v335
      %354 = vst.msk [vmem:[#allocation2 + $0x59] sm:$0x1] %vm314, %v336
      %355 = vst.msk [vmem:[#allocation2 + $0x71] sm:$0x1] %vm314, %v337
      %356 = vst.msk [vmem:[#allocation2 + $0x89] sm:$0x1] %vm314, %v338
      %357 = vst.msk [vmem:[#allocation2 + $0xa1] sm:$0x1] %vm314, %v339
      %358 = vst.msk [vmem:[#allocation2 + $0xb9] sm:$0x1] %vm314, %v340
      %359 = vst.msk [vmem:[#allocation2 + $0xd1] sm:$0x1] %vm314, %v341
      %360 = vst.msk [vmem:[#allocation2 + $0xe9] sm:$0x1] %vm314, %v342
      %361 = vst.msk [vmem:[#allocation2 + $0x101] sm:$0x1] %vm314, %v343
      %362 = vst.msk [vmem:[#allocation2 + $0x119] sm:$0x1] %vm314, %v344
      %363 = vst.msk [vmem:[#allocation2 + $0x131] sm:$0x1] %vm314, %v345
      %364 = vst.msk [vmem:[#allocation2 + $0x149] sm:$0x1] %vm314, %v346
      %365 = vst.msk [vmem:[#allocation2 + $0x161] sm:$0x1] %vm314, %v347
      %366 = vst.msk [vmem:[#allocation2 + $0x179] sm:$0x1] %vm314, %v348
      %367 = vst.msk [vmem:[#allocation2 + $0x191] sm:$0x1] %vm314, %v349
      %368 = vst.msk [vmem:[#allocation2 + $0x1a9] sm:$0x1] %vm314, %v350
      %v369 = vld [vmem:[#allocation2] sm:$0xff]
      %v370 = vld [vmem:[#allocation2 + $0x8] sm:$0xff]
      %v371 = vld [vmem:[#allocation2 + $0x18] sm:$0xff]
      %v372 = vld [vmem:[#allocation2 + $0x20] sm:$0xff]
      %v373 = vld [vmem:[#allocation2 + $0x30] sm:$0xff]
      %v374 = vld [vmem:[#allocation2 + $0x38] sm:$0xff]
      %v375 = vld [vmem:[#allocation2 + $0x48] sm:$0xff]
      %v376 = vld [vmem:[#allocation2 + $0x50] sm:$0xff]
      %v377 = vld [vmem:[#allocation2 + $0x60] sm:$0xff]
      %v378 = vld [vmem:[#allocation2 + $0x68] sm:$0xff]
      %v379 = vld [vmem:[#allocation2 + $0x78] sm:$0xff]
      %v380 = vld [vmem:[#allocation2 + $0x80] sm:$0xff]
      %v381 = vld [vmem:[#allocation2 + $0x90] sm:$0xff]
      %v382 = vld [vmem:[#allocation2 + $0x98] sm:$0xff]
      %v383 = vld [vmem:[#allocation2 + $0xa8] sm:$0xff]
      %v384 = vld [vmem:[#allocation2 + $0xb0] sm:$0xff]
      %v385 = vld [vmem:[#allocation2 + $0xc0] sm:$0xff]
      %v386 = vld [vmem:[#allocation2 + $0xc8] sm:$0xff]
      %v387 = vld [vmem:[#allocation2 + $0xd8] sm:$0xff]
      %v388 = vld [vmem:[#allocation2 + $0xe0] sm:$0xff]
      %v389 = vld [vmem:[#allocation2 + $0xf0] sm:$0xff]
      %v390 = vld [vmem:[#allocation2 + $0xf8] sm:$0xff]
      %v391 = vld [vmem:[#allocation2 + $0x108] sm:$0xff]
      %v392 = vld [vmem:[#allocation2 + $0x110] sm:$0xff]
      %v393 = vld [vmem:[#allocation2 + $0x120] sm:$0xff]
      %v394 = vld [vmem:[#allocation2 + $0x128] sm:$0xff]
      %v395 = vld [vmem:[#allocation2 + $0x138] sm:$0xff]
      %v396 = vld [vmem:[#allocation2 + $0x140] sm:$0xff]
      %v397 = vld [vmem:[#allocation2 + $0x150] sm:$0xff]
      %v398 = vld [vmem:[#allocation2 + $0x158] sm:$0xff]
      %v399 = vld [vmem:[#allocation2 + $0x168] sm:$0xff]
      %v400 = vld [vmem:[#allocation2 + $0x170] sm:$0xff]
      %v401 = vld [vmem:[%s1] sm:$0xf]
      %v402 = vld [vmem:[#allocation2 + $0x1] sm:$0xff]
      %v403 = vld [vmem:[#allocation2 + $0x9] sm:$0xff]
      %v404 = vld [vmem:[#allocation2 + $0x19] sm:$0xff]
      %v405 = vld [vmem:[#allocation2 + $0x21] sm:$0xff]
      %v406 = vld [vmem:[#allocation2 + $0x31] sm:$0xff]
      %v407 = vld [vmem:[#allocation2 + $0x39] sm:$0xff]
      %v408 = vld [vmem:[#allocation2 + $0x49] sm:$0xff]
      %v409 = vld [vmem:[#allocation2 + $0x51] sm:$0xff]
      %v410 = vld [vmem:[#allocation2 + $0x61] sm:$0xff]
      %v411 = vld [vmem:[#allocation2 + $0x69] sm:$0xff]
      %v412 = vld [vmem:[#allocation2 + $0x79] sm:$0xff]
      %v413 = vld [vmem:[#allocation2 + $0x81] sm:$0xff]
      %v414 = vld [vmem:[#allocation2 + $0x91] sm:$0xff]
      %v415 = vld [vmem:[#allocation2 + $0x99] sm:$0xff]
      %v416 = vld [vmem:[#allocation2 + $0xa9] sm:$0xff]
      %v417 = vld [vmem:[#allocation2 + $0xb1] sm:$0xff]
      %v418 = vld [vmem:[#allocation2 + $0xc1] sm:$0xff]
      %v419 = vld [vmem:[#allocation2 + $0xc9] sm:$0xff]
      %v420 = vld [vmem:[#allocation2 + $0xd9] sm:$0xff]
      %v421 = vld [vmem:[#allocation2 + $0xe1] sm:$0xff]
      %v422 = vld [vmem:[#allocation2 + $0xf1] sm:$0xff]
      %v423 = vld [vmem:[#allocation2 + $0xf9] sm:$0xff]
      %v424 = vld [vmem:[#allocation2 + $0x109] sm:$0xff]
      %v425 = vld [vmem:[#allocation2 + $0x111] sm:$0xff]
      %v426 = vld [vmem:[#allocation2 + $0x121] sm:$0xff]
      %v427 = vld [vmem:[#allocation2 + $0x129] sm:$0xff]
      %v428 = vld [vmem:[#allocation2 + $0x139] sm:$0xff]
      %v429 = vld [vmem:[#allocation2 + $0x141] sm:$0xff]
      %v430 = vld [vmem:[#allocation2 + $0x151] sm:$0xff]
      %v431 = vld [vmem:[#allocation2 + $0x159] sm:$0xff]
      %v432 = vld [vmem:[#allocation2 + $0x169] sm:$0xff]
      %v433 = vld [vmem:[#allocation2 + $0x171] sm:$0xff]
      %s434 = scalar_lea.vmem %s1, 4
      %v435 = vld [vmem:[%s434] sm:$0xf]
      %v437 = vsel %vm258, %v402, 0
      %v440 = vsel %vm258, %v403, 0
      %v443 = vsel %vm258, %v404, 0
      %v446 = vsel %vm258, %v405, 0
      %v449 = vsel %vm258, %v406, 0
      %v452 = vsel %vm258, %v407, 0
      %v455 = vsel %vm258, %v408, 0
      %v458 = vsel %vm258, %v409, 0
      %v461 = vsel %vm258, %v410, 0
      %v464 = vsel %vm258, %v411, 0
      %v467 = vsel %vm258, %v412, 0
      %v470 = vsel %vm258, %v413, 0
      %v473 = vsel %vm258, %v414, 0
      %v476 = vsel %vm258, %v415, 0
      %v479 = vsel %vm258, %v416, 0
      %v482 = vsel %vm258, %v417, 0
      %v485 = vsel %vm258, %v418, 0
      %v488 = vsel %vm258, %v419, 0
      %v491 = vsel %vm258, %v420, 0
      %v494 = vsel %vm258, %v421, 0
      %v497 = vsel %vm258, %v422, 0
      %v500 = vsel %vm258, %v423, 0
      %v503 = vsel %vm258, %v424, 0
      %v506 = vsel %vm258, %v425, 0
      %v509 = vsel %vm258, %v426, 0
      %v512 = vsel %vm258, %v427, 0
      %v515 = vsel %vm258, %v428, 0
      %v518 = vsel %vm258, %v429, 0
      %v521 = vsel %vm258, %v430, 0
      %v524 = vsel %vm258, %v431, 0
      %v527 = vsel %vm258, %v432, 0
      %v530 = vsel %vm258, %v433, 0
      %vm532 = vcmask 1043456
      %v534 = vsel %vm532, %v435, 0
      %536 = vmatprep.subr.mxu0 0.0
      %537 = vmatpush1.msra.mxu0 %v534
      %538 = vmatprep.subr.mxu0 0.0
      %539 = vmatpush1.msra.mxu0 0.0
      %540 = vmatprep.subr.mxu0 0.0
      %541 = vmatpush1.msra.mxu0 0.0
      %542 = vmatprep.subr.mxu0 0.0
      %543 = vmatpush1.msra.mxu0 0.0
      %544 = vmatprep.subr.mxu0 0.0
      %545 = vmatpush1.msra.mxu0 0.0
      %546 = vmatprep.subr.mxu0 0.0
      %547 = vmatpush1.msra.mxu0 0.0
      %548 = vmatprep.subr.mxu0 0.0
      %549 = vmatpush1.msra.mxu0 0.0
      %550 = vmatprep.subr.mxu0 0.0
      %551 = vmatpush1.msra.mxu0 0.0
      %552 = vmatprep.subr.mxu0 0.0
      %553 = vmatpush1.msra.mxu0 0.0
      %554 = vmatprep.subr.mxu0 0.0
      %555 = vmatpush1.msra.mxu0 0.0
      %556 = vmatprep.subr.mxu0 0.0
      %557 = vmatpush1.msra.mxu0 0.0
      %558 = vmatprep.subr.mxu0 0.0
      %559 = vmatpush1.msra.mxu0 0.0
      %560 = vmatprep.subr.mxu0 0.0
      %561 = vmatpush1.msra.mxu0 0.0
      %562 = vmatprep.subr.mxu0 0.0
      %563 = vmatpush1.msra.mxu0 0.0
      %564 = vmatprep.subr.mxu0 0.0
      %565 = vmatpush1.msra.mxu0 0.0
      %566 = vmatprep.subr.mxu0 0.0
      %567 = vmatpush1.msra.mxu0 0.0
      %568 = vmatprep.subr.mxu0 0.0
      %569 = vmatpush1.msra.mxu0 0.0
      %570 = vmatprep.subr.mxu0 0.0
      %571 = vmatpush1.msra.mxu0 0.0
      %572 = vmatprep.subr.mxu0 0.0
      %573 = vmatpush1.msra.mxu0 0.0
      %574 = vmatprep.subr.mxu0 0.0
      %575 = vmatpush1.msra.mxu0 0.0
      %576 = vmatprep.subr.mxu0 0.0
      %577 = vmatpush1.msra.mxu0 0.0
      %578 = vmatprep.subr.mxu0 0.0
      %579 = vmatpush1.msra.mxu0 0.0
      %580 = vmatprep.subr.mxu0 0.0
      %581 = vmatpush1.msra.mxu0 0.0
      %582 = vmatprep.subr.mxu0 0.0
      %583 = vmatpush1.msra.mxu0 0.0
      %584 = vmatprep.subr.mxu0 0.0
      %585 = vmatpush1.msra.mxu0 0.0
      %586 = vmatprep.subr.mxu0 0.0
      %587 = vmatpush1.msra.mxu0 0.0
      %588 = vmatprep.subr.mxu0 0.0
      %589 = vmatpush1.msra.mxu0 0.0
      %590 = vmatprep.subr.mxu0 0.0
      %591 = vmatpush1.msra.mxu0 0.0
      %592 = vmatprep.subr.mxu0 0.0
      %593 = vmatpush1.msra.mxu0 0.0
      %594 = vmatprep.subr.mxu0 0.0
      %595 = vmatpush1.msra.mxu0 0.0
      %596 = vmatprep.subr.mxu0 0.0
      %597 = vmatpush1.msra.mxu0 0.0
      %598 = vmatprep.subr.mxu0 0.0
      %599 = vmatpush1.msra.mxu0 0.0
      %600 = vmatprep.mubr.f32.mxu0 0.0
      %601 = vmatmul.mubr.f32.gmra.mrb[0].mxu0 %v437
      %v602 = vpop.f32.mrb[0].mxu0
      %v603 = vadd.f32 0.0, %v602
      %v604 = vpop.f32.mrb[0].mxu0
      %605 = vmatprep.mubr.f32.mxu0 0.0
      %606 = vmatmul.mubr.f32.gmra.mrb[0].mxu0 %v440
      %v607 = vpop.f32.mrb[0].mxu0
      %v608 = vadd.f32 0.0, %v607
      %v609 = vpop.f32.mrb[0].mxu0
      %610 = vmatprep.mubr.f32.mxu0 0.0
      %611 = vmatmul.mubr.f32.gmra.mrb[0].mxu0 %v443
      %v612 = vpop.f32.mrb[0].mxu0
      %v613 = vadd.f32 0.0, %v612
      %v614 = vpop.f32.mrb[0].mxu0
      %615 = vmatprep.mubr.f32.mxu0 0.0
      %616 = vmatmul.mubr.f32.gmra.mrb[0].mxu0 %v446
      %v617 = vpop.f32.mrb[0].mxu0
      %v618 = vadd.f32 0.0, %v617
      %v619 = vpop.f32.mrb[0].mxu0
      %620 = vmatprep.mubr.f32.mxu0 0.0
      %621 = vmatmul.mubr.f32.gmra.mrb[0].mxu0 %v449
      %v622 = vpop.f32.mrb[0].mxu0
      %v623 = vadd.f32 0.0, %v622
      %v624 = vpop.f32.mrb[0].mxu0
      %625 = vmatprep.mubr.f32.mxu0 0.0
      %626 = vmatmul.mubr.f32.gmra.mrb[0].mxu0 %v452
      %v627 = vpop.f32.mrb[0].mxu0
      %v628 = vadd.f32 0.0, %v627
      %v629 = vpop.f32.mrb[0].mxu0
      %630 = vmatprep.mubr.f32.mxu0 0.0
      %631 = vmatmul.mubr.f32.gmra.mrb[0].mxu0 %v455
      %v632 = vpop.f32.mrb[0].mxu0
      %v633 = vadd.f32 0.0, %v632
      %v634 = vpop.f32.mrb[0].mxu0
      %635 = vmatprep.mubr.f32.mxu0 0.0
      %636 = vmatmul.mubr.f32.gmra.mrb[0].mxu0 %v458
      %v637 = vpop.f32.mrb[0].mxu0
      %v638 = vadd.f32 0.0, %v637
      %v639 = vpop.f32.mrb[0].mxu0
      %640 = vmatprep.mubr.f32.mxu0 0.0
      %641 = vmatmul.mubr.f32.gmra.mrb[0].mxu0 %v461
      %v642 = vpop.f32.mrb[0].mxu0
      %v643 = vadd.f32 0.0, %v642
      %v644 = vpop.f32.mrb[0].mxu0
      %645 = vmatprep.mubr.f32.mxu0 0.0
      %646 = vmatmul.mubr.f32.gmra.mrb[0].mxu0 %v464
      %v647 = vpop.f32.mrb[0].mxu0
      %v648 = vadd.f32 0.0, %v647
      %v649 = vpop.f32.mrb[0].mxu0
      %650 = vmatprep.mubr.f32.mxu0 0.0
      %651 = vmatmul.mubr.f32.gmra.mrb[0].mxu0 %v467
      %v652 = vpop.f32.mrb[0].mxu0
      %v653 = vadd.f32 0.0, %v652
      %v654 = vpop.f32.mrb[0].mxu0
      %655 = vmatprep.mubr.f32.mxu0 0.0
      %656 = vmatmul.mubr.f32.gmra.mrb[0].mxu0 %v470
      %v657 = vpop.f32.mrb[0].mxu0
      %v658 = vadd.f32 0.0, %v657
      %v659 = vpop.f32.mrb[0].mxu0
      %660 = vmatprep.mubr.f32.mxu0 0.0
      %661 = vmatmul.mubr.f32.gmra.mrb[0].mxu0 %v473
      %v662 = vpop.f32.mrb[0].mxu0
      %v663 = vadd.f32 0.0, %v662
      %v664 = vpop.f32.mrb[0].mxu0
      %665 = vmatprep.mubr.f32.mxu0 0.0
      %666 = vmatmul.mubr.f32.gmra.mrb[0].mxu0 %v476
      %v667 = vpop.f32.mrb[0].mxu0
      %v668 = vadd.f32 0.0, %v667
      %v669 = vpop.f32.mrb[0].mxu0
      %670 = vmatprep.mubr.f32.mxu0 0.0
      %671 = vmatmul.mubr.f32.gmra.mrb[0].mxu0 %v479
      %v672 = vpop.f32.mrb[0].mxu0
      %v673 = vadd.f32 0.0, %v672
      %v674 = vpop.f32.mrb[0].mxu0
      %675 = vmatprep.mubr.f32.mxu0 0.0
      %676 = vmatmul.mubr.f32.gmra.mrb[0].mxu0 %v482
      %v677 = vpop.f32.mrb[0].mxu0
      %v678 = vadd.f32 0.0, %v677
      %v679 = vpop.f32.mrb[0].mxu0
      %680 = vmatprep.mubr.f32.mxu0 0.0
      %681 = vmatmul.mubr.f32.gmra.mrb[0].mxu0 %v485
      %v682 = vpop.f32.mrb[0].mxu0
      %v683 = vadd.f32 0.0, %v682
      %v684 = vpop.f32.mrb[0].mxu0
      %685 = vmatprep.mubr.f32.mxu0 0.0
      %686 = vmatmul.mubr.f32.gmra.mrb[0].mxu0 %v488
      %v687 = vpop.f32.mrb[0].mxu0
      %v688 = vadd.f32 0.0, %v687
      %v689 = vpop.f32.mrb[0].mxu0
      %690 = vmatprep.mubr.f32.mxu0 0.0
      %691 = vmatmul.mubr.f32.gmra.mrb[0].mxu0 %v491
      %v692 = vpop.f32.mrb[0].mxu0
      %v693 = vadd.f32 0.0, %v692
      %v694 = vpop.f32.mrb[0].mxu0
      %695 = vmatprep.mubr.f32.mxu0 0.0
      %696 = vmatmul.mubr.f32.gmra.mrb[0].mxu0 %v494
      %v697 = vpop.f32.mrb[0].mxu0
      %v698 = vadd.f32 0.0, %v697
      %v699 = vpop.f32.mrb[0].mxu0
      %700 = vmatprep.mubr.f32.mxu0 0.0
      %701 = vmatmul.mubr.f32.gmra.mrb[0].mxu0 %v497
      %v702 = vpop.f32.mrb[0].mxu0
      %v703 = vadd.f32 0.0, %v702
      %v704 = vpop.f32.mrb[0].mxu0
      %705 = vmatprep.mubr.f32.mxu0 0.0
      %706 = vmatmul.mubr.f32.gmra.mrb[0].mxu0 %v500
      %v707 = vpop.f32.mrb[0].mxu0
      %v708 = vadd.f32 0.0, %v707
      %v709 = vpop.f32.mrb[0].mxu0
      %710 = vmatprep.mubr.f32.mxu0 0.0
      %711 = vmatmul.mubr.f32.gmra.mrb[0].mxu0 %v503
      %v712 = vpop.f32.mrb[0].mxu0
      %v713 = vadd.f32 0.0, %v712
      %v714 = vpop.f32.mrb[0].mxu0
      %715 = vmatprep.mubr.f32.mxu0 0.0
      %716 = vmatmul.mubr.f32.gmra.mrb[0].mxu0 %v506
      %v717 = vpop.f32.mrb[0].mxu0
      %v718 = vadd.f32 0.0, %v717
      %v719 = vpop.f32.mrb[0].mxu0
      %720 = vmatprep.mubr.f32.mxu0 0.0
      %721 = vmatmul.mubr.f32.gmra.mrb[0].mxu0 %v509
      %v722 = vpop.f32.mrb[0].mxu0
      %v723 = vadd.f32 0.0, %v722
      %v724 = vpop.f32.mrb[0].mxu0
      %725 = vmatprep.mubr.f32.mxu0 0.0
      %726 = vmatmul.mubr.f32.gmra.mrb[0].mxu0 %v512
      %v727 = vpop.f32.mrb[0].mxu0
      %v728 = vadd.f32 0.0, %v727
      %v729 = vpop.f32.mrb[0].mxu0
      %730 = vmatprep.mubr.f32.mxu0 0.0
      %731 = vmatmul.mubr.f32.gmra.mrb[0].mxu0 %v515
      %v732 = vpop.f32.mrb[0].mxu0
      %v733 = vadd.f32 0.0, %v732
      %v734 = vpop.f32.mrb[0].mxu0
      %735 = vmatprep.mubr.f32.mxu0 0.0
      %736 = vmatmul.mubr.f32.gmra.mrb[0].mxu0 %v518
      %v737 = vpop.f32.mrb[0].mxu0
      %v738 = vadd.f32 0.0, %v737
      %v739 = vpop.f32.mrb[0].mxu0
      %740 = vmatprep.mubr.f32.mxu0 0.0
      %741 = vmatmul.mubr.f32.gmra.mrb[0].mxu0 %v521
      %v742 = vpop.f32.mrb[0].mxu0
      %v743 = vadd.f32 0.0, %v742
      %v744 = vpop.f32.mrb[0].mxu0
      %745 = vmatprep.mubr.f32.mxu0 0.0
      %746 = vmatmul.mubr.f32.gmra.mrb[0].mxu0 %v524
      %v747 = vpop.f32.mrb[0].mxu0
      %v748 = vadd.f32 0.0, %v747
      %v749 = vpop.f32.mrb[0].mxu0
      %750 = vmatprep.mubr.f32.mxu0 0.0
      %751 = vmatmul.mubr.f32.gmra.mrb[0].mxu0 %v527
      %v752 = vpop.f32.mrb[0].mxu0
      %v753 = vadd.f32 0.0, %v752
      %v754 = vpop.f32.mrb[0].mxu0
      %755 = vmatprep.mubr.f32.mxu0 0.0
      %756 = vmatmul.mubr.f32.gmra.mrb[0].mxu0 %v530
      %v757 = vpop.f32.mrb[0].mxu0
      %v758 = vadd.f32 0.0, %v757
      %v759 = vpop.f32.mrb[0].mxu0
      %760 = vdwg.mxu0
      %v762 = vsel %vm258, %v369, 0
      %v765 = vsel %vm258, %v370, 0
      %v768 = vsel %vm258, %v371, 0
      %v771 = vsel %vm258, %v372, 0
      %v774 = vsel %vm258, %v373, 0
      %v777 = vsel %vm258, %v374, 0
      %v780 = vsel %vm258, %v375, 0
      %v783 = vsel %vm258, %v376, 0
      %v786 = vsel %vm258, %v377, 0
      %v789 = vsel %vm258, %v378, 0
      %v792 = vsel %vm258, %v379, 0
      %v795 = vsel %vm258, %v380, 0
      %v798 = vsel %vm258, %v381, 0
      %v801 = vsel %vm258, %v382, 0
      %v804 = vsel %vm258, %v383, 0
      %v807 = vsel %vm258, %v384, 0
      %v810 = vsel %vm258, %v385, 0
      %v813 = vsel %vm258, %v386, 0
      %v816 = vsel %vm258, %v387, 0
      %v819 = vsel %vm258, %v388, 0
      %v822 = vsel %vm258, %v389, 0
      %v825 = vsel %vm258, %v390, 0
      %v828 = vsel %vm258, %v391, 0
      %v831 = vsel %vm258, %v392, 0
      %v834 = vsel %vm258, %v393, 0
      %v837 = vsel %vm258, %v394, 0
      %v840 = vsel %vm258, %v395, 0
      %v843 = vsel %vm258, %v396, 0
      %v846 = vsel %vm258, %v397, 0
      %v849 = vsel %vm258, %v398, 0
      %v852 = vsel %vm258, %v399, 0
      %v855 = vsel %vm258, %v400, 0
      %v858 = vsel %vm532, %v401, 0
      %860 = vmatprep.subr.mxu0 0.0
      %861 = vmatpush1.msra.mxu0 %v858
      %862 = vmatprep.subr.mxu0 0.0
      %863 = vmatpush1.msra.mxu0 0.0
      %864 = vmatprep.subr.mxu0 0.0
      %865 = vmatpush1.msra.mxu0 0.0
      %866 = vmatprep.subr.mxu0 0.0
      %867 = vmatpush1.msra.mxu0 0.0
      %868 = vmatprep.subr.mxu0 0.0
      %869 = vmatpush1.msra.mxu0 0.0
      %870 = vmatprep.subr.mxu0 0.0
      %871 = vmatpush1.msra.mxu0 0.0
      %872 = vmatprep.subr.mxu0 0.0
      %873 = vmatpush1.msra.mxu0 0.0
      %874 = vmatprep.subr.mxu0 0.0
      %875 = vmatpush1.msra.mxu0 0.0
      %876 = vmatprep.subr.mxu0 0.0
      %877 = vmatpush1.msra.mxu0 0.0
      %878 = vmatprep.subr.mxu0 0.0
      %879 = vmatpush1.msra.mxu0 0.0
      %880 = vmatprep.subr.mxu0 0.0
      %881 = vmatpush1.msra.mxu0 0.0
      %882 = vmatprep.subr.mxu0 0.0
      %883 = vmatpush1.msra.mxu0 0.0
      %884 = vmatprep.subr.mxu0 0.0
      %885 = vmatpush1.msra.mxu0 0.0
      %886 = vmatprep.subr.mxu0 0.0
      %887 = vmatpush1.msra.mxu0 0.0
      %888 = vmatprep.subr.mxu0 0.0
      %889 = vmatpush1.msra.mxu0 0.0
      %890 = vmatprep.subr.mxu0 0.0
      %891 = vmatpush1.msra.mxu0 0.0
      %892 = vmatprep.subr.mxu0 0.0
      %893 = vmatpush1.msra.mxu0 0.0
      %894 = vmatprep.subr.mxu0 0.0
      %895 = vmatpush1.msra.mxu0 0.0
      %896 = vmatprep.subr.mxu0 0.0
      %897 = vmatpush1.msra.mxu0 0.0
      %898 = vmatprep.subr.mxu0 0.0
      %899 = vmatpush1.msra.mxu0 0.0
      %900 = vmatprep.subr.mxu0 0.0
      %901 = vmatpush1.msra.mxu0 0.0
      %902 = vmatprep.subr.mxu0 0.0
      %903 = vmatpush1.msra.mxu0 0.0
      %904 = vmatprep.subr.mxu0 0.0
      %905 = vmatpush1.msra.mxu0 0.0
      %906 = vmatprep.subr.mxu0 0.0
      %907 = vmatpush1.msra.mxu0 0.0
      %908 = vmatprep.subr.mxu0 0.0
      %909 = vmatpush1.msra.mxu0 0.0
      %910 = vmatprep.subr.mxu0 0.0
      %911 = vmatpush1.msra.mxu0 0.0
      %912 = vmatprep.subr.mxu0 0.0
      %913 = vmatpush1.msra.mxu0 0.0
      %914 = vmatprep.subr.mxu0 0.0
      %915 = vmatpush1.msra.mxu0 0.0
      %916 = vmatprep.subr.mxu0 0.0
      %917 = vmatpush1.msra.mxu0 0.0
      %918 = vmatprep.subr.mxu0 0.0
      %919 = vmatpush1.msra.mxu0 0.0
      %920 = vmatprep.subr.mxu0 0.0
      %921 = vmatpush1.msra.mxu0 0.0
      %922 = vmatprep.subr.mxu0 0.0
      %923 = vmatpush1.msra.mxu0 0.0
      %924 = vmatprep.mubr.f32.mxu0 0.0
      %925 = vmatmul.mubr.f32.gmra.mrb[0].mxu0 %v762
      %v926 = vpop.f32.mrb[0].mxu0
      %v927 = vadd.f32 %v603, %v926
      %v928 = vpop.f32.mrb[0].mxu0
      %929 = vmatprep.mubr.f32.mxu0 0.0
      %930 = vmatmul.mubr.f32.gmra.mrb[0].mxu0 %v765
      %v931 = vpop.f32.mrb[0].mxu0
      %v932 = vadd.f32 %v608, %v931
      %v933 = vpop.f32.mrb[0].mxu0
      %934 = vmatprep.mubr.f32.mxu0 0.0
      %935 = vmatmul.mubr.f32.gmra.mrb[0].mxu0 %v768
      %v936 = vpop.f32.mrb[0].mxu0
      %v937 = vadd.f32 %v613, %v936
      %v938 = vpop.f32.mrb[0].mxu0
      %939 = vmatprep.mubr.f32.mxu0 0.0
      %940 = vmatmul.mubr.f32.gmra.mrb[0].mxu0 %v771
      %v941 = vpop.f32.mrb[0].mxu0
      %v942 = vadd.f32 %v618, %v941
      %v943 = vpop.f32.mrb[0].mxu0
      %944 = vmatprep.mubr.f32.mxu0 0.0
      %945 = vmatmul.mubr.f32.gmra.mrb[0].mxu0 %v774
      %v946 = vpop.f32.mrb[0].mxu0
      %v947 = vadd.f32 %v623, %v946
      %v948 = vpop.f32.mrb[0].mxu0
      %949 = vmatprep.mubr.f32.mxu0 0.0
      %950 = vmatmul.mubr.f32.gmra.mrb[0].mxu0 %v777
      %v951 = vpop.f32.mrb[0].mxu0
      %v952 = vadd.f32 %v628, %v951
      %v953 = vpop.f32.mrb[0].mxu0
      %954 = vmatprep.mubr.f32.mxu0 0.0
      %955 = vmatmul.mubr.f32.gmra.mrb[0].mxu0 %v780
      %v956 = vpop.f32.mrb[0].mxu0
      %v957 = vadd.f32 %v633, %v956
      %v958 = vpop.f32.mrb[0].mxu0
      %959 = vmatprep.mubr.f32.mxu0 0.0
      %960 = vmatmul.mubr.f32.gmra.mrb[0].mxu0 %v783
      %v961 = vpop.f32.mrb[0].mxu0
      %v962 = vadd.f32 %v638, %v961
      %v963 = vpop.f32.mrb[0].mxu0
      %964 = vmatprep.mubr.f32.mxu0 0.0
      %965 = vmatmul.mubr.f32.gmra.mrb[0].mxu0 %v786
      %v966 = vpop.f32.mrb[0].mxu0
      %v967 = vadd.f32 %v643, %v966
      %v968 = vpop.f32.mrb[0].mxu0
      %969 = vmatprep.mubr.f32.mxu0 0.0
      %970 = vmatmul.mubr.f32.gmra.mrb[0].mxu0 %v789
      %v971 = vpop.f32.mrb[0].mxu0
      %v972 = vadd.f32 %v648, %v971
      %v973 = vpop.f32.mrb[0].mxu0
      %974 = vmatprep.mubr.f32.mxu0 0.0
      %975 = vmatmul.mubr.f32.gmra.mrb[0].mxu0 %v792
      %v976 = vpop.f32.mrb[0].mxu0
      %v977 = vadd.f32 %v653, %v976
      %v978 = vpop.f32.mrb[0].mxu0
      %979 = vmatprep.mubr.f32.mxu0 0.0
      %980 = vmatmul.mubr.f32.gmra.mrb[0].mxu0 %v795
      %v981 = vpop.f32.mrb[0].mxu0
      %v982 = vadd.f32 %v658, %v981
      %v983 = vpop.f32.mrb[0].mxu0
      %984 = vmatprep.mubr.f32.mxu0 0.0
      %985 = vmatmul.mubr.f32.gmra.mrb[0].mxu0 %v798
      %v986 = vpop.f32.mrb[0].mxu0
      %v987 = vadd.f32 %v663, %v986
      %v988 = vpop.f32.mrb[0].mxu0
      %989 = vmatprep.mubr.f32.mxu0 0.0
      %990 = vmatmul.mubr.f32.gmra.mrb[0].mxu0 %v801
      %v991 = vpop.f32.mrb[0].mxu0
      %v992 = vadd.f32 %v668, %v991
      %v993 = vpop.f32.mrb[0].mxu0
      %994 = vmatprep.mubr.f32.mxu0 0.0
      %995 = vmatmul.mubr.f32.gmra.mrb[0].mxu0 %v804
      %v996 = vpop.f32.mrb[0].mxu0
      %v997 = vadd.f32 %v673, %v996
      %v998 = vpop.f32.mrb[0].mxu0
      %999 = vmatprep.mubr.f32.mxu0 0.0
      %1000 = vmatmul.mubr.f32.gmra.mrb[0].mxu0 %v807
      %v1001 = vpop.f32.mrb[0].mxu0
      %v1002 = vadd.f32 %v678, %v1001
      %v1003 = vpop.f32.mrb[0].mxu0
      %1004 = vmatprep.mubr.f32.mxu0 0.0
      %1005 = vmatmul.mubr.f32.gmra.mrb[0].mxu0 %v810
      %v1006 = vpop.f32.mrb[0].mxu0
      %v1007 = vadd.f32 %v683, %v1006
      %v1008 = vpop.f32.mrb[0].mxu0
      %1009 = vmatprep.mubr.f32.mxu0 0.0
      %1010 = vmatmul.mubr.f32.gmra.mrb[0].mxu0 %v813
      %v1011 = vpop.f32.mrb[0].mxu0
      %v1012 = vadd.f32 %v688, %v1011
      %v1013 = vpop.f32.mrb[0].mxu0
      %1014 = vmatprep.mubr.f32.mxu0 0.0
      %1015 = vmatmul.mubr.f32.gmra.mrb[0].mxu0 %v816
      %v1016 = vpop.f32.mrb[0].mxu0
      %v1017 = vadd.f32 %v693, %v1016
      %v1018 = vpop.f32.mrb[0].mxu0
      %1019 = vmatprep.mubr.f32.mxu0 0.0
      %1020 = vmatmul.mubr.f32.gmra.mrb[0].mxu0 %v819
      %v1021 = vpop.f32.mrb[0].mxu0
      %v1022 = vadd.f32 %v698, %v1021
      %v1023 = vpop.f32.mrb[0].mxu0
      %1024 = vmatprep.mubr.f32.mxu0 0.0
      %1025 = vmatmul.mubr.f32.gmra.mrb[0].mxu0 %v822
      %v1026 = vpop.f32.mrb[0].mxu0
      %v1027 = vadd.f32 %v703, %v1026
      %v1028 = vpop.f32.mrb[0].mxu0
      %1029 = vmatprep.mubr.f32.mxu0 0.0
      %1030 = vmatmul.mubr.f32.gmra.mrb[0].mxu0 %v825
      %v1031 = vpop.f32.mrb[0].mxu0
      %v1032 = vadd.f32 %v708, %v1031
      %v1033 = vpop.f32.mrb[0].mxu0
      %1034 = vmatprep.mubr.f32.mxu0 0.0
      %1035 = vmatmul.mubr.f32.gmra.mrb[0].mxu0 %v828
      %v1036 = vpop.f32.mrb[0].mxu0
      %v1037 = vadd.f32 %v713, %v1036
      %v1038 = vpop.f32.mrb[0].mxu0
      %1039 = vmatprep.mubr.f32.mxu0 0.0
      %1040 = vmatmul.mubr.f32.gmra.mrb[0].mxu0 %v831
      %v1041 = vpop.f32.mrb[0].mxu0
      %v1042 = vadd.f32 %v718, %v1041
      %v1043 = vpop.f32.mrb[0].mxu0
      %1044 = vmatprep.mubr.f32.mxu0 0.0
      %1045 = vmatmul.mubr.f32.gmra.mrb[0].mxu0 %v834
      %v1046 = vpop.f32.mrb[0].mxu0
      %v1047 = vadd.f32 %v723, %v1046
      %v1048 = vpop.f32.mrb[0].mxu0
      %1049 = vmatprep.mubr.f32.mxu0 0.0
      %1050 = vmatmul.mubr.f32.gmra.mrb[0].mxu0 %v837
      %v1051 = vpop.f32.mrb[0].mxu0
      %v1052 = vadd.f32 %v728, %v1051
      %v1053 = vpop.f32.mrb[0].mxu0
      %1054 = vmatprep.mubr.f32.mxu0 0.0
      %1055 = vmatmul.mubr.f32.gmra.mrb[0].mxu0 %v840
      %v1056 = vpop.f32.mrb[0].mxu0
      %v1057 = vadd.f32 %v733, %v1056
      %v1058 = vpop.f32.mrb[0].mxu0
      %1059 = vmatprep.mubr.f32.mxu0 0.0
      %1060 = vmatmul.mubr.f32.gmra.mrb[0].mxu0 %v843
      %v1061 = vpop.f32.mrb[0].mxu0
      %v1062 = vadd.f32 %v738, %v1061
      %v1063 = vpop.f32.mrb[0].mxu0
      %1064 = vmatprep.mubr.f32.mxu0 0.0
      %1065 = vmatmul.mubr.f32.gmra.mrb[0].mxu0 %v846
      %v1066 = vpop.f32.mrb[0].mxu0
      %v1067 = vadd.f32 %v743, %v1066
      %v1068 = vpop.f32.mrb[0].mxu0
      %1069 = vmatprep.mubr.f32.mxu0 0.0
      %1070 = vmatmul.mubr.f32.gmra.mrb[0].mxu0 %v849
      %v1071 = vpop.f32.mrb[0].mxu0
      %v1072 = vadd.f32 %v748, %v1071
      %v1073 = vpop.f32.mrb[0].mxu0
      %1074 = vmatprep.mubr.f32.mxu0 0.0
      %1075 = vmatmul.mubr.f32.gmra.mrb[0].mxu0 %v852
      %v1076 = vpop.f32.mrb[0].mxu0
      %v1077 = vadd.f32 %v753, %v1076
      %v1078 = vpop.f32.mrb[0].mxu0
      %1079 = vmatprep.mubr.f32.mxu0 0.0
      %1080 = vmatmul.mubr.f32.gmra.mrb[0].mxu0 %v855
      %v1081 = vpop.f32.mrb[0].mxu0
      %v1082 = vadd.f32 %v758, %v1081
      %v1083 = vpop.f32.mrb[0].mxu0
      %1084 = vdwg.mxu0
      %v1085 = vld [vmem:[#allocation2 + $0x2] sm:$0xff]
      %v1086 = vld [vmem:[#allocation2 + $0xa] sm:$0xff]
      %v1087 = vld [vmem:[#allocation2 + $0x1a] sm:$0xff]
      %v1088 = vld [vmem:[#allocation2 + $0x22] sm:$0xff]
      %v1089 = vld [vmem:[#allocation2 + $0x32] sm:$0xff]
      %v1090 = vld [vmem:[#allocation2 + $0x3a] sm:$0xff]
      %v1091 = vld [vmem:[#allocation2 + $0x4a] sm:$0xff]
      %v1092 = vld [vmem:[#allocation2 + $0x52] sm:$0xff]
      %v1093 = vld [vmem:[#allocation2 + $0x62] sm:$0xff]
      %v1094 = vld [vmem:[#allocation2 + $0x6a] sm:$0xff]
      %v1095 = vld [vmem:[#allocation2 + $0x7a] sm:$0xff]
      %v1096 = vld [vmem:[#allocation2 + $0x82] sm:$0xff]
      %v1097 = vld [vmem:[#allocation2 + $0x92] sm:$0xff]
      %v1098 = vld [vmem:[#allocation2 + $0x9a] sm:$0xff]
      %v1099 = vld [vmem:[#allocation2 + $0xaa] sm:$0xff]
      %v1100 = vld [vmem:[#allocation2 + $0xb2] sm:$0xff]
      %v1101 = vld [vmem:[#allocation2 + $0xc2] sm:$0xff]
      %v1102 = vld [vmem:[#allocation2 + $0xca] sm:$0xff]
      %v1103 = vld [vmem:[#allocation2 + $0xda] sm:$0xff]
      %v1104 = vld [vmem:[#allocation2 + $0xe2] sm:$0xff]
      %v1105 = vld [vmem:[#allocation2 + $0xf2] sm:$0xff]
      %v1106 = vld [vmem:[#allocation2 + $0xfa] sm:$0xff]
      %v1107 = vld [vmem:[#allocation2 + $0x10a] sm:$0xff]
      %v1108 = vld [vmem:[#allocation2 + $0x112] sm:$0xff]
      %v1109 = vld [vmem:[#allocation2 + $0x122] sm:$0xff]
      %v1110 = vld [vmem:[#allocation2 + $0x12a] sm:$0xff]
      %v1111 = vld [vmem:[#allocation2 + $0x13a] sm:$0xff]
      %v1112 = vld [vmem:[#allocation2 + $0x142] sm:$0xff]
      %v1113 = vld [vmem:[#allocation2 + $0x152] sm:$0xff]
      %v1114 = vld [vmem:[#allocation2 + $0x15a] sm:$0xff]
      %v1115 = vld [vmem:[#allocation2 + $0x16a] sm:$0xff]
      %v1116 = vld [vmem:[#allocation2 + $0x172] sm:$0xff]
      %s1117 = scalar_lea.vmem %s1, 8
      %v1118 = vld [vmem:[%s1117] sm:$0xf]
      %v1120 = vsel %vm258, %v1085, 0
      %v1123 = vsel %vm258, %v1086, 0
      %v1126 = vsel %vm258, %v1087, 0
      %v1129 = vsel %vm258, %v1088, 0
      %v1132 = vsel %vm258, %v1089, 0
      %v1135 = vsel %vm258, %v1090, 0
      %v1138 = vsel %vm258, %v1091, 0
      %v1141 = vsel %vm258, %v1092, 0
      %v1144 = vsel %vm258, %v1093, 0
      %v1147 = vsel %vm258, %v1094, 0
      %v1150 = vsel %vm258, %v1095, 0
      %v1153 = vsel %vm258, %v1096, 0
      %v1156 = vsel %vm258, %v1097, 0
      %v1159 = vsel %vm258, %v1098, 0
      %v1162 = vsel %vm258, %v1099, 0
      %v1165 = vsel %vm258, %v1100, 0
      %v1168 = vsel %vm258, %v1101, 0
      %v1171 = vsel %vm258, %v1102, 0
      %v1174 = vsel %vm258, %v1103, 0
      %v1177 = vsel %vm258, %v1104, 0
      %v1180 = vsel %vm258, %v1105, 0
      %v1183 = vsel %vm258, %v1106, 0
      %v1186 = vsel %vm258, %v1107, 0
      %v1189 = vsel %vm258, %v1108, 0
      %v1192 = vsel %vm258, %v1109, 0
      %v1195 = vsel %vm258, %v1110, 0
      %v1198 = vsel %vm258, %v1111, 0
      %v1201 = vsel %vm258, %v1112, 0
      %v1204 = vsel %vm258, %v1113, 0
      %v1207 = vsel %vm258, %v1114, 0
      %v1210 = vsel %vm258, %v1115, 0
      %v1213 = vsel %vm258, %v1116, 0
      %v1216 = vsel %vm532, %v1118, 0
      %1218 = vmatprep.subr.mxu0 0.0
      %1219 = vmatpush1.msra.mxu0 %v1216
      %1220 = vmatprep.subr.mxu0 0.0
      %1221 = vmatpush1.msra.mxu0 0.0
      %1222 = vmatprep.subr.mxu0 0.0
      %1223 = vmatpush1.msra.mxu0 0.0
      %1224 = vmatprep.subr.mxu0 0.0
      %1225 = vmatpush1.msra.mxu0 0.0
      %1226 = vmatprep.subr.mxu0 0.0
      %1227 = vmatpush1.msra.mxu0 0.0
      %1228 = vmatprep.subr.mxu0 0.0
      %1229 = vmatpush1.msra.mxu0 0.0
      %1230 = vmatprep.subr.mxu0 0.0
      %1231 = vmatpush1.msra.mxu0 0.0
      %1232 = vmatprep.subr.mxu0 0.0
      %1233 = vmatpush1.msra.mxu0 0.0
      %1234 = vmatprep.subr.mxu0 0.0
      %1235 = vmatpush1.msra.mxu0 0.0
      %1236 = vmatprep.subr.mxu0 0.0
      %1237 = vmatpush1.msra.mxu0 0.0
      %1238 = vmatprep.subr.mxu0 0.0
      %1239 = vmatpush1.msra.mxu0 0.0
      %1240 = vmatprep.subr.mxu0 0.0
      %1241 = vmatpush1.msra.mxu0 0.0
      %1242 = vmatprep.subr.mxu0 0.0
      %1243 = vmatpush1.msra.mxu0 0.0
      %1244 = vmatprep.subr.mxu0 0.0
      %1245 = vmatpush1.msra.mxu0 0.0
      %1246 = vmatprep.subr.mxu0 0.0
      %1247 = vmatpush1.msra.mxu0 0.0
      %1248 = vmatprep.subr.mxu0 0.0
      %1249 = vmatpush1.msra.mxu0 0.0
      %1250 = vmatprep.subr.mxu0 0.0
      %1251 = vmatpush1.msra.mxu0 0.0
      %1252 = vmatprep.subr.mxu0 0.0
      %1253 = vmatpush1.msra.mxu0 0.0
      %1254 = vmatprep.subr.mxu0 0.0
      %1255 = vmatpush1.msra.mxu0 0.0
      %1256 = vmatprep.subr.mxu0 0.0
      %1257 = vmatpush1.msra.mxu0 0.0
      %1258 = vmatprep.subr.mxu0 0.0
      %1259 = vmatpush1.msra.mxu0 0.0
      %1260 = vmatprep.subr.mxu0 0.0
      %1261 = vmatpush1.msra.mxu0 0.0
      %1262 = vmatprep.subr.mxu0 0.0
      %1263 = vmatpush1.msra.mxu0 0.0
      %1264 = vmatprep.subr.mxu0 0.0
      %1265 = vmatpush1.msra.mxu0 0.0
      %1266 = vmatprep.subr.mxu0 0.0
      %1267 = vmatpush1.msra.mxu0 0.0
      %1268 = vmatprep.subr.mxu0 0.0
      %1269 = vmatpush1.msra.mxu0 0.0
      %1270 = vmatprep.subr.mxu0 0.0
      %1271 = vmatpush1.msra.mxu0 0.0
      %1272 = vmatprep.subr.mxu0 0.0
      %1273 = vmatpush1.msra.mxu0 0.0
      %1274 = vmatprep.subr.mxu0 0.0
      %1275 = vmatpush1.msra.mxu0 0.0
      %1276 = vmatprep.subr.mxu0 0.0
      %1277 = vmatpush1.msra.mxu0 0.0
      %1278 = vmatprep.subr.mxu0 0.0
      %1279 = vmatpush1.msra.mxu0 0.0
      %1280 = vmatprep.subr.mxu0 0.0
      %1281 = vmatpush1.msra.mxu0 0.0
      %1282 = vmatprep.mubr.f32.mxu0 0.0
      %1283 = vmatmul.mubr.f32.gmra.mrb[0].mxu0 %v1120
      %v1284 = vpop.f32.mrb[0].mxu0
      %v1285 = vadd.f32 0.0, %v1284
      %v1286 = vpop.f32.mrb[0].mxu0
      %1287 = vmatprep.mubr.f32.mxu0 0.0
      %1288 = vmatmul.mubr.f32.gmra.mrb[0].mxu0 %v1123
      %v1289 = vpop.f32.mrb[0].mxu0
      %v1290 = vadd.f32 0.0, %v1289
      %v1291 = vpop.f32.mrb[0].mxu0
      %1292 = vmatprep.mubr.f32.mxu0 0.0
      %1293 = vmatmul.mubr.f32.gmra.mrb[0].mxu0 %v1126
      %v1294 = vpop.f32.mrb[0].mxu0
      %v1295 = vadd.f32 0.0, %v1294
      %v1296 = vpop.f32.mrb[0].mxu0
      %1297 = vmatprep.mubr.f32.mxu0 0.0
      %1298 = vmatmul.mubr.f32.gmra.mrb[0].mxu0 %v1129
      %v1299 = vpop.f32.mrb[0].mxu0
      %v1300 = vadd.f32 0.0, %v1299
      %v1301 = vpop.f32.mrb[0].mxu0
      %1302 = vmatprep.mubr.f32.mxu0 0.0
      %1303 = vmatmul.mubr.f32.gmra.mrb[0].mxu0 %v1132
      %v1304 = vpop.f32.mrb[0].mxu0
      %v1305 = vadd.f32 0.0, %v1304
      %v1306 = vpop.f32.mrb[0].mxu0
      %1307 = vmatprep.mubr.f32.mxu0 0.0
      %1308 = vmatmul.mubr.f32.gmra.mrb[0].mxu0 %v1135
      %v1309 = vpop.f32.mrb[0].mxu0
      %v1310 = vadd.f32 0.0, %v1309
      %v1311 = vpop.f32.mrb[0].mxu0
      %1312 = vmatprep.mubr.f32.mxu0 0.0
      %1313 = vmatmul.mubr.f32.gmra.mrb[0].mxu0 %v1138
      %v1314 = vpop.f32.mrb[0].mxu0
      %v1315 = vadd.f32 0.0, %v1314
      %v1316 = vpop.f32.mrb[0].mxu0
      %1317 = vmatprep.mubr.f32.mxu0 0.0
      %1318 = vmatmul.mubr.f32.gmra.mrb[0].mxu0 %v1141
      %v1319 = vpop.f32.mrb[0].mxu0
      %v1320 = vadd.f32 0.0, %v1319
      %v1321 = vpop.f32.mrb[0].mxu0
      %1322 = vmatprep.mubr.f32.mxu0 0.0
      %1323 = vmatmul.mubr.f32.gmra.mrb[0].mxu0 %v1144
      %v1324 = vpop.f32.mrb[0].mxu0
      %v1325 = vadd.f32 0.0, %v1324
      %v1326 = vpop.f32.mrb[0].mxu0
      %1327 = vmatprep.mubr.f32.mxu0 0.0
      %1328 = vmatmul.mubr.f32.gmra.mrb[0].mxu0 %v1147
      %v1329 = vpop.f32.mrb[0].mxu0
      %v1330 = vadd.f32 0.0, %v1329
      %v1331 = vpop.f32.mrb[0].mxu0
      %1332 = vmatprep.mubr.f32.mxu0 0.0
      %1333 = vmatmul.mubr.f32.gmra.mrb[0].mxu0 %v1150
      %v1334 = vpop.f32.mrb[0].mxu0
      %v1335 = vadd.f32 0.0, %v1334
      %v1336 = vpop.f32.mrb[0].mxu0
      %1337 = vmatprep.mubr.f32.mxu0 0.0
      %1338 = vmatmul.mubr.f32.gmra.mrb[0].mxu0 %v1153
      %v1339 = vpop.f32.mrb[0].mxu0
      %v1340 = vadd.f32 0.0, %v1339
      %v1341 = vpop.f32.mrb[0].mxu0
      %1342 = vmatprep.mubr.f32.mxu0 0.0
      %1343 = vmatmul.mubr.f32.gmra.mrb[0].mxu0 %v1156
      %v1344 = vpop.f32.mrb[0].mxu0
      %v1345 = vadd.f32 0.0, %v1344
      %v1346 = vpop.f32.mrb[0].mxu0
      %1347 = vmatprep.mubr.f32.mxu0 0.0
      %1348 = vmatmul.mubr.f32.gmra.mrb[0].mxu0 %v1159
      %v1349 = vpop.f32.mrb[0].mxu0
      %v1350 = vadd.f32 0.0, %v1349
      %v1351 = vpop.f32.mrb[0].mxu0
      %1352 = vmatprep.mubr.f32.mxu0 0.0
      %1353 = vmatmul.mubr.f32.gmra.mrb[0].mxu0 %v1162
      %v1354 = vpop.f32.mrb[0].mxu0
      %v1355 = vadd.f32 0.0, %v1354
      %v1356 = vpop.f32.mrb[0].mxu0
      %1357 = vmatprep.mubr.f32.mxu0 0.0
      %1358 = vmatmul.mubr.f32.gmra.mrb[0].mxu0 %v1165
      %v1359 = vpop.f32.mrb[0].mxu0
      %v1360 = vadd.f32 0.0, %v1359
      %v1361 = vpop.f32.mrb[0].mxu0
      %1362 = vmatprep.mubr.f32.mxu0 0.0
      %1363 = vmatmul.mubr.f32.gmra.mrb[0].mxu0 %v1168
      %v1364 = vpop.f32.mrb[0].mxu0
      %v1365 = vadd.f32 0.0, %v1364
      %v1366 = vpop.f32.mrb[0].mxu0
      %1367 = vmatprep.mubr.f32.mxu0 0.0
      %1368 = vmatmul.mubr.f32.gmra.mrb[0].mxu0 %v1171
      %v1369 = vpop.f32.mrb[0].mxu0
      %v1370 = vadd.f32 0.0, %v1369
      %v1371 = vpop.f32.mrb[0].mxu0
      %1372 = vmatprep.mubr.f32.mxu0 0.0
      %1373 = vmatmul.mubr.f32.gmra.mrb[0].mxu0 %v1174
      %v1374 = vpop.f32.mrb[0].mxu0
      %v1375 = vadd.f32 0.0, %v1374
      %v1376 = vpop.f32.mrb[0].mxu0
      %1377 = vmatprep.mubr.f32.mxu0 0.0
      %1378 = vmatmul.mubr.f32.gmra.mrb[0].mxu0 %v1177
      %v1379 = vpop.f32.mrb[0].mxu0
      %v1380 = vadd.f32 0.0, %v1379
      %v1381 = vpop.f32.mrb[0].mxu0
      %1382 = vmatprep.mubr.f32.mxu0 0.0
      %1383 = vmatmul.mubr.f32.gmra.mrb[0].mxu0 %v1180
      %v1384 = vpop.f32.mrb[0].mxu0
      %v1385 = vadd.f32 0.0, %v1384
      %v1386 = vpop.f32.mrb[0].mxu0
      %1387 = vmatprep.mubr.f32.mxu0 0.0
      %1388 = vmatmul.mubr.f32.gmra.mrb[0].mxu0 %v1183
      %v1389 = vpop.f32.mrb[0].mxu0
      %v1390 = vadd.f32 0.0, %v1389
      %v1391 = vpop.f32.mrb[0].mxu0
      %1392 = vmatprep.mubr.f32.mxu0 0.0
      %1393 = vmatmul.mubr.f32.gmra.mrb[0].mxu0 %v1186
      %v1394 = vpop.f32.mrb[0].mxu0
      %v1395 = vadd.f32 0.0, %v1394
      %v1396 = vpop.f32.mrb[0].mxu0
      %1397 = vmatprep.mubr.f32.mxu0 0.0
      %1398 = vmatmul.mubr.f32.gmra.mrb[0].mxu0 %v1189
      %v1399 = vpop.f32.mrb[0].mxu0
      %v1400 = vadd.f32 0.0, %v1399
      %v1401 = vpop.f32.mrb[0].mxu0
      %1402 = vmatprep.mubr.f32.mxu0 0.0
      %1403 = vmatmul.mubr.f32.gmra.mrb[0].mxu0 %v1192
      %v1404 = vpop.f32.mrb[0].mxu0
      %v1405 = vadd.f32 0.0, %v1404
      %v1406 = vpop.f32.mrb[0].mxu0
      %1407 = vmatprep.mubr.f32.mxu0 0.0
      %1408 = vmatmul.mubr.f32.gmra.mrb[0].mxu0 %v1195
      %v1409 = vpop.f32.mrb[0].mxu0
      %v1410 = vadd.f32 0.0, %v1409
      %v1411 = vpop.f32.mrb[0].mxu0
      %1412 = vmatprep.mubr.f32.mxu0 0.0
      %1413 = vmatmul.mubr.f32.gmra.mrb[0].mxu0 %v1198
      %v1414 = vpop.f32.mrb[0].mxu0
      %v1415 = vadd.f32 0.0, %v1414
      %v1416 = vpop.f32.mrb[0].mxu0
      %1417 = vmatprep.mubr.f32.mxu0 0.0
      %1418 = vmatmul.mubr.f32.gmra.mrb[0].mxu0 %v1201
      %v1419 = vpop.f32.mrb[0].mxu0
      %v1420 = vadd.f32 0.0, %v1419
      %v1421 = vpop.f32.mrb[0].mxu0
      %1422 = vmatprep.mubr.f32.mxu0 0.0
      %1423 = vmatmul.mubr.f32.gmra.mrb[0].mxu0 %v1204
      %v1424 = vpop.f32.mrb[0].mxu0
      %v1425 = vadd.f32 0.0, %v1424
      %v1426 = vpop.f32.mrb[0].mxu0
      %1427 = vmatprep.mubr.f32.mxu0 0.0
      %1428 = vmatmul.mubr.f32.gmra.mrb[0].mxu0 %v1207
      %v1429 = vpop.f32.mrb[0].mxu0
      %v1430 = vadd.f32 0.0, %v1429
      %v1431 = vpop.f32.mrb[0].mxu0
      %1432 = vmatprep.mubr.f32.mxu0 0.0
      %1433 = vmatmul.mubr.f32.gmra.mrb[0].mxu0 %v1210
      %v1434 = vpop.f32.mrb[0].mxu0
      %v1435 = vadd.f32 0.0, %v1434
      %v1436 = vpop.f32.mrb[0].mxu0
      %1437 = vmatprep.mubr.f32.mxu0 0.0
      %1438 = vmatmul.mubr.f32.gmra.mrb[0].mxu0 %v1213
      %v1439 = vpop.f32.mrb[0].mxu0
      %v1440 = vadd.f32 0.0, %v1439
      %v1441 = vpop.f32.mrb[0].mxu0
      %1442 = vdwg.mxu0
      %v1443 = vadd.f32 %v927, %v1285
      %v1444 = vadd.f32 %v932, %v1290
      %v1445 = vadd.f32 %v937, %v1295
      %v1446 = vadd.f32 %v942, %v1300
      %v1447 = vadd.f32 %v947, %v1305
      %v1448 = vadd.f32 %v952, %v1310
      %v1449 = vadd.f32 %v957, %v1315
      %v1450 = vadd.f32 %v962, %v1320
      %v1451 = vadd.f32 %v967, %v1325
      %v1452 = vadd.f32 %v972, %v1330
      %v1453 = vadd.f32 %v977, %v1335
      %v1454 = vadd.f32 %v982, %v1340
      %v1455 = vadd.f32 %v987, %v1345
      %v1456 = vadd.f32 %v992, %v1350
      %v1457 = vadd.f32 %v997, %v1355
      %v1458 = vadd.f32 %v1002, %v1360
      %v1459 = vadd.f32 %v1007, %v1365
      %v1460 = vadd.f32 %v1012, %v1370
      %v1461 = vadd.f32 %v1017, %v1375
      %v1462 = vadd.f32 %v1022, %v1380
      %v1463 = vadd.f32 %v1027, %v1385
      %v1464 = vadd.f32 %v1032, %v1390
      %v1465 = vadd.f32 %v1037, %v1395
      %v1466 = vadd.f32 %v1042, %v1400
      %v1467 = vadd.f32 %v1047, %v1405
      %v1468 = vadd.f32 %v1052, %v1410
      %v1469 = vadd.f32 %v1057, %v1415
      %v1470 = vadd.f32 %v1062, %v1420
      %v1471 = vadd.f32 %v1067, %v1425
      %v1472 = vadd.f32 %v1072, %v1430
      %v1473 = vadd.f32 %v1077, %v1435
      %v1474 = vadd.f32 %v1082, %v1440
      %v1475 = vld [vmem:[%s257] sm:$0xff]
      %v1476 = vld [vmem:[%s257 + $0x8] sm:$0xff]
      %v1477 = vld [vmem:[%s257 + $0x18] sm:$0xff]
      %v1478 = vld [vmem:[%s257 + $0x20] sm:$0xff]
      %v1479 = vld [vmem:[%s257 + $0x30] sm:$0xff]
      %v1480 = vld [vmem:[%s257 + $0x38] sm:$0xff]
      %v1481 = vld [vmem:[%s257 + $0x48] sm:$0xff]
      %v1482 = vld [vmem:[%s257 + $0x50] sm:$0xff]
      %v1483 = vld [vmem:[%s257 + $0x60] sm:$0xff]
      %v1484 = vld [vmem:[%s257 + $0x68] sm:$0xff]
      %v1485 = vld [vmem:[%s257 + $0x78] sm:$0xff]
      %v1486 = vld [vmem:[%s257 + $0x80] sm:$0xff]
      %v1487 = vld [vmem:[%s257 + $0x90] sm:$0xff]
      %v1488 = vld [vmem:[%s257 + $0x98] sm:$0xff]
      %v1489 = vld [vmem:[%s257 + $0xa8] sm:$0xff]
      %v1490 = vld [vmem:[%s257 + $0xb0] sm:$0xff]
      %v1491 = vld [vmem:[%s257 + $0xc0] sm:$0xff]
      %v1492 = vld [vmem:[%s257 + $0xc8] sm:$0xff]
      %v1493 = vld [vmem:[%s257 + $0xd8] sm:$0xff]
      %v1494 = vld [vmem:[%s257 + $0xe0] sm:$0xff]
      %v1495 = vld [vmem:[%s257 + $0xf0] sm:$0xff]
      %v1496 = vld [vmem:[%s257 + $0xf8] sm:$0xff]
      %v1497 = vld [vmem:[%s257 + $0x108] sm:$0xff]
      %v1498 = vld [vmem:[%s257 + $0x110] sm:$0xff]
      %v1499 = vld [vmem:[%s257 + $0x120] sm:$0xff]
      %v1500 = vld [vmem:[%s257 + $0x128] sm:$0xff]
      %v1501 = vld [vmem:[%s257 + $0x138] sm:$0xff]
      %v1502 = vld [vmem:[%s257 + $0x140] sm:$0xff]
      %v1503 = vld [vmem:[%s257 + $0x150] sm:$0xff]
      %v1504 = vld [vmem:[%s257 + $0x158] sm:$0xff]
      %v1505 = vld [vmem:[%s257 + $0x168] sm:$0xff]
      %v1506 = vld [vmem:[%s257 + $0x170] sm:$0xff]
      %s1507 = scalar_lea.vmem %s1, 12
      %v1508 = vld [vmem:[%s1507] sm:$0xf]
      %v1510 = vsel %vm258, %v1475, 0
      %v1513 = vsel %vm258, %v1476, 0
      %v1516 = vsel %vm258, %v1477, 0
      %v1519 = vsel %vm258, %v1478, 0
      %v1522 = vsel %vm258, %v1479, 0
      %v1525 = vsel %vm258, %v1480, 0
      %v1528 = vsel %vm258, %v1481, 0
      %v1531 = vsel %vm258, %v1482, 0
      %v1534 = vsel %vm258, %v1483, 0
      %v1537 = vsel %vm258, %v1484, 0
      %v1540 = vsel %vm258, %v1485, 0
      %v1543 = vsel %vm258, %v1486, 0
      %v1546 = vsel %vm258, %v1487, 0
      %v1549 = vsel %vm258, %v1488, 0
      %v1552 = vsel %vm258, %v1489, 0
      %v1555 = vsel %vm258, %v1490, 0
      %v1558 = vsel %vm258, %v1491, 0
      %v1561 = vsel %vm258, %v1492, 0
      %v1564 = vsel %vm258, %v1493, 0
      %v1567 = vsel %vm258, %v1494, 0
      %v1570 = vsel %vm258, %v1495, 0
      %v1573 = vsel %vm258, %v1496, 0
      %v1576 = vsel %vm258, %v1497, 0
      %v1579 = vsel %vm258, %v1498, 0
      %v1582 = vsel %vm258, %v1499, 0
      %v1585 = vsel %vm258, %v1500, 0
      %v1588 = vsel %vm258, %v1501, 0
      %v1591 = vsel %vm258, %v1502, 0
      %v1594 = vsel %vm258, %v1503, 0
      %v1597 = vsel %vm258, %v1504, 0
      %v1600 = vsel %vm258, %v1505, 0
      %v1603 = vsel %vm258, %v1506, 0
      %v1606 = vsel %vm532, %v1508, 0
      %1608 = vmatprep.subr.mxu0 0.0
      %1609 = vmatpush1.msra.mxu0 %v1606
      %1610 = vmatprep.subr.mxu0 0.0
      %1611 = vmatpush1.msra.mxu0 0.0
      %1612 = vmatprep.subr.mxu0 0.0
      %1613 = vmatpush1.msra.mxu0 0.0
      %1614 = vmatprep.subr.mxu0 0.0
      %1615 = vmatpush1.msra.mxu0 0.0
      %1616 = vmatprep.subr.mxu0 0.0
      %1617 = vmatpush1.msra.mxu0 0.0
      %1618 = vmatprep.subr.mxu0 0.0
      %1619 = vmatpush1.msra.mxu0 0.0
      %1620 = vmatprep.subr.mxu0 0.0
      %1621 = vmatpush1.msra.mxu0 0.0
      %1622 = vmatprep.subr.mxu0 0.0
      %1623 = vmatpush1.msra.mxu0 0.0
      %1624 = vmatprep.subr.mxu0 0.0
      %1625 = vmatpush1.msra.mxu0 0.0
      %1626 = vmatprep.subr.mxu0 0.0
      %1627 = vmatpush1.msra.mxu0 0.0
      %1628 = vmatprep.subr.mxu0 0.0
      %1629 = vmatpush1.msra.mxu0 0.0
      %1630 = vmatprep.subr.mxu0 0.0
      %1631 = vmatpush1.msra.mxu0 0.0
      %1632 = vmatprep.subr.mxu0 0.0
      %1633 = vmatpush1.msra.mxu0 0.0
      %1634 = vmatprep.subr.mxu0 0.0
      %1635 = vmatpush1.msra.mxu0 0.0
      %1636 = vmatprep.subr.mxu0 0.0
      %1637 = vmatpush1.msra.mxu0 0.0
      %1638 = vmatprep.subr.mxu0 0.0
      %1639 = vmatpush1.msra.mxu0 0.0
      %1640 = vmatprep.subr.mxu0 0.0
      %1641 = vmatpush1.msra.mxu0 0.0
      %1642 = vmatprep.subr.mxu0 0.0
      %1643 = vmatpush1.msra.mxu0 0.0
      %1644 = vmatprep.subr.mxu0 0.0
      %1645 = vmatpush1.msra.mxu0 0.0
      %1646 = vmatprep.subr.mxu0 0.0
      %1647 = vmatpush1.msra.mxu0 0.0
      %1648 = vmatprep.subr.mxu0 0.0
      %1649 = vmatpush1.msra.mxu0 0.0
      %1650 = vmatprep.subr.mxu0 0.0
      %1651 = vmatpush1.msra.mxu0 0.0
      %1652 = vmatprep.subr.mxu0 0.0
      %1653 = vmatpush1.msra.mxu0 0.0
      %1654 = vmatprep.subr.mxu0 0.0
      %1655 = vmatpush1.msra.mxu0 0.0
      %1656 = vmatprep.subr.mxu0 0.0
      %1657 = vmatpush1.msra.mxu0 0.0
      %1658 = vmatprep.subr.mxu0 0.0
      %1659 = vmatpush1.msra.mxu0 0.0
      %1660 = vmatprep.subr.mxu0 0.0
      %1661 = vmatpush1.msra.mxu0 0.0
      %1662 = vmatprep.subr.mxu0 0.0
      %1663 = vmatpush1.msra.mxu0 0.0
      %1664 = vmatprep.subr.mxu0 0.0
      %1665 = vmatpush1.msra.mxu0 0.0
      %1666 = vmatprep.subr.mxu0 0.0
      %1667 = vmatpush1.msra.mxu0 0.0
      %1668 = vmatprep.subr.mxu0 0.0
      %1669 = vmatpush1.msra.mxu0 0.0
      %1670 = vmatprep.subr.mxu0 0.0
      %1671 = vmatpush1.msra.mxu0 0.0
      %1672 = vmatprep.mubr.f32.mxu0 0.0
      %1673 = vmatmul.mubr.f32.gmra.mrb[0].mxu0 %v1510
      %v1674 = vpop.f32.mrb[0].mxu0
      %v1675 = vadd.f32 0.0, %v1674
      %v1676 = vpop.f32.mrb[0].mxu0
      %1677 = vmatprep.mubr.f32.mxu0 0.0
      %1678 = vmatmul.mubr.f32.gmra.mrb[0].mxu0 %v1513
      %v1679 = vpop.f32.mrb[0].mxu0
      %v1680 = vadd.f32 0.0, %v1679
      %v1681 = vpop.f32.mrb[0].mxu0
      %1682 = vmatprep.mubr.f32.mxu0 0.0
      %1683 = vmatmul.mubr.f32.gmra.mrb[0].mxu0 %v1516
      %v1684 = vpop.f32.mrb[0].mxu0
      %v1685 = vadd.f32 0.0, %v1684
      %v1686 = vpop.f32.mrb[0].mxu0
      %1687 = vmatprep.mubr.f32.mxu0 0.0
      %1688 = vmatmul.mubr.f32.gmra.mrb[0].mxu0 %v1519
      %v1689 = vpop.f32.mrb[0].mxu0
      %v1690 = vadd.f32 0.0, %v1689
      %v1691 = vpop.f32.mrb[0].mxu0
      %1692 = vmatprep.mubr.f32.mxu0 0.0
      %1693 = vmatmul.mubr.f32.gmra.mrb[0].mxu0 %v1522
      %v1694 = vpop.f32.mrb[0].mxu0
      %v1695 = vadd.f32 0.0, %v1694
      %v1696 = vpop.f32.mrb[0].mxu0
      %1697 = vmatprep.mubr.f32.mxu0 0.0
      %1698 = vmatmul.mubr.f32.gmra.mrb[0].mxu0 %v1525
      %v1699 = vpop.f32.mrb[0].mxu0
      %v1700 = vadd.f32 0.0, %v1699
      %v1701 = vpop.f32.mrb[0].mxu0
      %1702 = vmatprep.mubr.f32.mxu0 0.0
      %1703 = vmatmul.mubr.f32.gmra.mrb[0].mxu0 %v1528
      %v1704 = vpop.f32.mrb[0].mxu0
      %v1705 = vadd.f32 0.0, %v1704
      %v1706 = vpop.f32.mrb[0].mxu0
      %1707 = vmatprep.mubr.f32.mxu0 0.0
      %1708 = vmatmul.mubr.f32.gmra.mrb[0].mxu0 %v1531
      %v1709 = vpop.f32.mrb[0].mxu0
      %v1710 = vadd.f32 0.0, %v1709
      %v1711 = vpop.f32.mrb[0].mxu0
      %1712 = vmatprep.mubr.f32.mxu0 0.0
      %1713 = vmatmul.mubr.f32.gmra.mrb[0].mxu0 %v1534
      %v1714 = vpop.f32.mrb[0].mxu0
      %v1715 = vadd.f32 0.0, %v1714
      %v1716 = vpop.f32.mrb[0].mxu0
      %1717 = vmatprep.mubr.f32.mxu0 0.0
      %1718 = vmatmul.mubr.f32.gmra.mrb[0].mxu0 %v1537
      %v1719 = vpop.f32.mrb[0].mxu0
      %v1720 = vadd.f32 0.0, %v1719
      %v1721 = vpop.f32.mrb[0].mxu0
      %1722 = vmatprep.mubr.f32.mxu0 0.0
      %1723 = vmatmul.mubr.f32.gmra.mrb[0].mxu0 %v1540
      %v1724 = vpop.f32.mrb[0].mxu0
      %v1725 = vadd.f32 0.0, %v1724
      %v1726 = vpop.f32.mrb[0].mxu0
      %1727 = vmatprep.mubr.f32.mxu0 0.0
      %1728 = vmatmul.mubr.f32.gmra.mrb[0].mxu0 %v1543
      %v1729 = vpop.f32.mrb[0].mxu0
      %v1730 = vadd.f32 0.0, %v1729
      %v1731 = vpop.f32.mrb[0].mxu0
      %1732 = vmatprep.mubr.f32.mxu0 0.0
      %1733 = vmatmul.mubr.f32.gmra.mrb[0].mxu0 %v1546
      %v1734 = vpop.f32.mrb[0].mxu0
      %v1735 = vadd.f32 0.0, %v1734
      %v1736 = vpop.f32.mrb[0].mxu0
      %1737 = vmatprep.mubr.f32.mxu0 0.0
      %1738 = vmatmul.mubr.f32.gmra.mrb[0].mxu0 %v1549
      %v1739 = vpop.f32.mrb[0].mxu0
      %v1740 = vadd.f32 0.0, %v1739
      %v1741 = vpop.f32.mrb[0].mxu0
      %1742 = vmatprep.mubr.f32.mxu0 0.0
      %1743 = vmatmul.mubr.f32.gmra.mrb[0].mxu0 %v1552
      %v1744 = vpop.f32.mrb[0].mxu0
      %v1745 = vadd.f32 0.0, %v1744
      %v1746 = vpop.f32.mrb[0].mxu0
      %1747 = vmatprep.mubr.f32.mxu0 0.0
      %1748 = vmatmul.mubr.f32.gmra.mrb[0].mxu0 %v1555
      %v1749 = vpop.f32.mrb[0].mxu0
      %v1750 = vadd.f32 0.0, %v1749
      %v1751 = vpop.f32.mrb[0].mxu0
      %1752 = vmatprep.mubr.f32.mxu0 0.0
      %1753 = vmatmul.mubr.f32.gmra.mrb[0].mxu0 %v1558
      %v1754 = vpop.f32.mrb[0].mxu0
      %v1755 = vadd.f32 0.0, %v1754
      %v1756 = vpop.f32.mrb[0].mxu0
      %1757 = vmatprep.mubr.f32.mxu0 0.0
      %1758 = vmatmul.mubr.f32.gmra.mrb[0].mxu0 %v1561
      %v1759 = vpop.f32.mrb[0].mxu0
      %v1760 = vadd.f32 0.0, %v1759
      %v1761 = vpop.f32.mrb[0].mxu0
      %1762 = vmatprep.mubr.f32.mxu0 0.0
      %1763 = vmatmul.mubr.f32.gmra.mrb[0].mxu0 %v1564
      %v1764 = vpop.f32.mrb[0].mxu0
      %v1765 = vadd.f32 0.0, %v1764
      %v1766 = vpop.f32.mrb[0].mxu0
      %1767 = vmatprep.mubr.f32.mxu0 0.0
      %1768 = vmatmul.mubr.f32.gmra.mrb[0].mxu0 %v1567
      %v1769 = vpop.f32.mrb[0].mxu0
      %v1770 = vadd.f32 0.0, %v1769
      %v1771 = vpop.f32.mrb[0].mxu0
      %1772 = vmatprep.mubr.f32.mxu0 0.0
      %1773 = vmatmul.mubr.f32.gmra.mrb[0].mxu0 %v1570
      %v1774 = vpop.f32.mrb[0].mxu0
      %v1775 = vadd.f32 0.0, %v1774
      %v1776 = vpop.f32.mrb[0].mxu0
      %1777 = vmatprep.mubr.f32.mxu0 0.0
      %1778 = vmatmul.mubr.f32.gmra.mrb[0].mxu0 %v1573
      %v1779 = vpop.f32.mrb[0].mxu0
      %v1780 = vadd.f32 0.0, %v1779
      %v1781 = vpop.f32.mrb[0].mxu0
      %1782 = vmatprep.mubr.f32.mxu0 0.0
      %1783 = vmatmul.mubr.f32.gmra.mrb[0].mxu0 %v1576
      %v1784 = vpop.f32.mrb[0].mxu0
      %v1785 = vadd.f32 0.0, %v1784
      %v1786 = vpop.f32.mrb[0].mxu0
      %1787 = vmatprep.mubr.f32.mxu0 0.0
      %1788 = vmatmul.mubr.f32.gmra.mrb[0].mxu0 %v1579
      %v1789 = vpop.f32.mrb[0].mxu0
      %v1790 = vadd.f32 0.0, %v1789
      %v1791 = vpop.f32.mrb[0].mxu0
      %1792 = vmatprep.mubr.f32.mxu0 0.0
      %1793 = vmatmul.mubr.f32.gmra.mrb[0].mxu0 %v1582
      %v1794 = vpop.f32.mrb[0].mxu0
      %v1795 = vadd.f32 0.0, %v1794
      %v1796 = vpop.f32.mrb[0].mxu0
      %1797 = vmatprep.mubr.f32.mxu0 0.0
      %1798 = vmatmul.mubr.f32.gmra.mrb[0].mxu0 %v1585
      %v1799 = vpop.f32.mrb[0].mxu0
      %v1800 = vadd.f32 0.0, %v1799
      %v1801 = vpop.f32.mrb[0].mxu0
      %1802 = vmatprep.mubr.f32.mxu0 0.0
      %1803 = vmatmul.mubr.f32.gmra.mrb[0].mxu0 %v1588
      %v1804 = vpop.f32.mrb[0].mxu0
      %v1805 = vadd.f32 0.0, %v1804
      %v1806 = vpop.f32.mrb[0].mxu0
      %1807 = vmatprep.mubr.f32.mxu0 0.0
      %1808 = vmatmul.mubr.f32.gmra.mrb[0].mxu0 %v1591
      %v1809 = vpop.f32.mrb[0].mxu0
      %v1810 = vadd.f32 0.0, %v1809
      %v1811 = vpop.f32.mrb[0].mxu0
      %1812 = vmatprep.mubr.f32.mxu0 0.0
      %1813 = vmatmul.mubr.f32.gmra.mrb[0].mxu0 %v1594
      %v1814 = vpop.f32.mrb[0].mxu0
      %v1815 = vadd.f32 0.0, %v1814
      %v1816 = vpop.f32.mrb[0].mxu0
      %1817 = vmatprep.mubr.f32.mxu0 0.0
      %1818 = vmatmul.mubr.f32.gmra.mrb[0].mxu0 %v1597
      %v1819 = vpop.f32.mrb[0].mxu0
      %v1820 = vadd.f32 0.0, %v1819
      %v1821 = vpop.f32.mrb[0].mxu0
      %1822 = vmatprep.mubr.f32.mxu0 0.0
      %1823 = vmatmul.mubr.f32.gmra.mrb[0].mxu0 %v1600
      %v1824 = vpop.f32.mrb[0].mxu0
      %v1825 = vadd.f32 0.0, %v1824
      %v1826 = vpop.f32.mrb[0].mxu0
      %1827 = vmatprep.mubr.f32.mxu0 0.0
      %1828 = vmatmul.mubr.f32.gmra.mrb[0].mxu0 %v1603
      %v1829 = vpop.f32.mrb[0].mxu0
      %v1830 = vadd.f32 0.0, %v1829
      %v1831 = vpop.f32.mrb[0].mxu0
      %1832 = vdwg.mxu0
      %v1833 = vadd.f32 %v1443, %v1675
      %v1834 = vadd.f32 %v1444, %v1680
      %v1835 = vadd.f32 %v1445, %v1685
      %v1836 = vadd.f32 %v1446, %v1690
      %v1837 = vadd.f32 %v1447, %v1695
      %v1838 = vadd.f32 %v1448, %v1700
      %v1839 = vadd.f32 %v1449, %v1705
      %v1840 = vadd.f32 %v1450, %v1710
      %v1841 = vadd.f32 %v1451, %v1715
      %v1842 = vadd.f32 %v1452, %v1720
      %v1843 = vadd.f32 %v1453, %v1725
      %v1844 = vadd.f32 %v1454, %v1730
      %v1845 = vadd.f32 %v1455, %v1735
      %v1846 = vadd.f32 %v1456, %v1740
      %v1847 = vadd.f32 %v1457, %v1745
      %v1848 = vadd.f32 %v1458, %v1750
      %v1849 = vadd.f32 %v1459, %v1755
      %v1850 = vadd.f32 %v1460, %v1760
      %v1851 = vadd.f32 %v1461, %v1765
      %v1852 = vadd.f32 %v1462, %v1770
      %v1853 = vadd.f32 %v1463, %v1775
      %v1854 = vadd.f32 %v1464, %v1780
      %v1855 = vadd.f32 %v1465, %v1785
      %v1856 = vadd.f32 %v1466, %v1790
      %v1857 = vadd.f32 %v1467, %v1795
      %v1858 = vadd.f32 %v1468, %v1800
      %v1859 = vadd.f32 %v1469, %v1805
      %v1860 = vadd.f32 %v1470, %v1810
      %v1861 = vadd.f32 %v1471, %v1815
      %v1862 = vadd.f32 %v1472, %v1820
      %v1863 = vadd.f32 %v1473, %v1825
      %v1864 = vadd.f32 %v1474, %v1830
      %v1865 = vld [vmem:[%s257 + $0x1] sm:$0xff]
      %v1866 = vld [vmem:[%s257 + $0x9] sm:$0xff]
      %v1867 = vld [vmem:[%s257 + $0x19] sm:$0xff]
      %v1868 = vld [vmem:[%s257 + $0x21] sm:$0xff]
      %v1869 = vld [vmem:[%s257 + $0x31] sm:$0xff]
      %v1870 = vld [vmem:[%s257 + $0x39] sm:$0xff]
      %v1871 = vld [vmem:[%s257 + $0x49] sm:$0xff]
      %v1872 = vld [vmem:[%s257 + $0x51] sm:$0xff]
      %v1873 = vld [vmem:[%s257 + $0x61] sm:$0xff]
      %v1874 = vld [vmem:[%s257 + $0x69] sm:$0xff]
      %v1875 = vld [vmem:[%s257 + $0x79] sm:$0xff]
      %v1876 = vld [vmem:[%s257 + $0x81] sm:$0xff]
      %v1877 = vld [vmem:[%s257 + $0x91] sm:$0xff]
      %v1878 = vld [vmem:[%s257 + $0x99] sm:$0xff]
      %v1879 = vld [vmem:[%s257 + $0xa9] sm:$0xff]
      %v1880 = vld [vmem:[%s257 + $0xb1] sm:$0xff]
      %v1881 = vld [vmem:[%s257 + $0xc1] sm:$0xff]
      %v1882 = vld [vmem:[%s257 + $0xc9] sm:$0xff]
      %v1883 = vld [vmem:[%s257 + $0xd9] sm:$0xff]
      %v1884 = vld [vmem:[%s257 + $0xe1] sm:$0xff]
      %v1885 = vld [vmem:[%s257 + $0xf1] sm:$0xff]
      %v1886 = vld [vmem:[%s257 + $0xf9] sm:$0xff]
      %v1887 = vld [vmem:[%s257 + $0x109] sm:$0xff]
      %v1888 = vld [vmem:[%s257 + $0x111] sm:$0xff]
      %v1889 = vld [vmem:[%s257 + $0x121] sm:$0xff]
      %v1890 = vld [vmem:[%s257 + $0x129] sm:$0xff]
      %v1891 = vld [vmem:[%s257 + $0x139] sm:$0xff]
      %v1892 = vld [vmem:[%s257 + $0x141] sm:$0xff]
      %v1893 = vld [vmem:[%s257 + $0x151] sm:$0xff]
      %v1894 = vld [vmem:[%s257 + $0x159] sm:$0xff]
      %v1895 = vld [vmem:[%s257 + $0x169] sm:$0xff]
      %v1896 = vld [vmem:[%s257 + $0x171] sm:$0xff]
      %s1897 = scalar_lea.vmem %s1, 16
      %v1898 = vld [vmem:[%s1897] sm:$0xf]
      %v1900 = vsel %vm258, %v1865, 0
      %v1903 = vsel %vm258, %v1866, 0
      %v1906 = vsel %vm258, %v1867, 0
      %v1909 = vsel %vm258, %v1868, 0
      %v1912 = vsel %vm258, %v1869, 0
      %v1915 = vsel %vm258, %v1870, 0
      %v1918 = vsel %vm258, %v1871, 0
      %v1921 = vsel %vm258, %v1872, 0
      %v1924 = vsel %vm258, %v1873, 0
      %v1927 = vsel %vm258, %v1874, 0
      %v1930 = vsel %vm258, %v1875, 0
      %v1933 = vsel %vm258, %v1876, 0
      %v1936 = vsel %vm258, %v1877, 0
      %v1939 = vsel %vm258, %v1878, 0
      %v1942 = vsel %vm258, %v1879, 0
      %v1945 = vsel %vm258, %v1880, 0
      %v1948 = vsel %vm258, %v1881, 0
      %v1951 = vsel %vm258, %v1882, 0
      %v1954 = vsel %vm258, %v1883, 0
      %v1957 = vsel %vm258, %v1884, 0
      %v1960 = vsel %vm258, %v1885, 0
      %v1963 = vsel %vm258, %v1886, 0
      %v1966 = vsel %vm258, %v1887, 0
      %v1969 = vsel %vm258, %v1888, 0
      %v1972 = vsel %vm258, %v1889, 0
      %v1975 = vsel %vm258, %v1890, 0
      %v1978 = vsel %vm258, %v1891, 0
      %v1981 = vsel %vm258, %v1892, 0
      %v1984 = vsel %vm258, %v1893, 0
      %v1987 = vsel %vm258, %v1894, 0
      %v1990 = vsel %vm258, %v1895, 0
      %v1993 = vsel %vm258, %v1896, 0
      %v1996 = vsel %vm532, %v1898, 0
      %1998 = vmatprep.subr.mxu0 0.0
      %1999 = vmatpush1.msra.mxu0 %v1996
      %2000 = vmatprep.subr.mxu0 0.0
      %2001 = vmatpush1.msra.mxu0 0.0
      %2002 = vmatprep.subr.mxu0 0.0
      %2003 = vmatpush1.msra.mxu0 0.0
      %2004 = vmatprep.subr.mxu0 0.0
      %2005 = vmatpush1.msra.mxu0 0.0
      %2006 = vmatprep.subr.mxu0 0.0
      %2007 = vmatpush1.msra.mxu0 0.0
      %2008 = vmatprep.subr.mxu0 0.0
      %2009 = vmatpush1.msra.mxu0 0.0
      %2010 = vmatprep.subr.mxu0 0.0
      %2011 = vmatpush1.msra.mxu0 0.0
      %2012 = vmatprep.subr.mxu0 0.0
      %2013 = vmatpush1.msra.mxu0 0.0
      %2014 = vmatprep.subr.mxu0 0.0
      %2015 = vmatpush1.msra.mxu0 0.0
      %2016 = vmatprep.subr.mxu0 0.0
      %2017 = vmatpush1.msra.mxu0 0.0
      %2018 = vmatprep.subr.mxu0 0.0
      %2019 = vmatpush1.msra.mxu0 0.0
      %2020 = vmatprep.subr.mxu0 0.0
      %2021 = vmatpush1.msra.mxu0 0.0
      %2022 = vmatprep.subr.mxu0 0.0
      %2023 = vmatpush1.msra.mxu0 0.0
      %2024 = vmatprep.subr.mxu0 0.0
      %2025 = vmatpush1.msra.mxu0 0.0
      %2026 = vmatprep.subr.mxu0 0.0
      %2027 = vmatpush1.msra.mxu0 0.0
      %2028 = vmatprep.subr.mxu0 0.0
      %2029 = vmatpush1.msra.mxu0 0.0
      %2030 = vmatprep.subr.mxu0 0.0
      %2031 = vmatpush1.msra.mxu0 0.0
      %2032 = vmatprep.subr.mxu0 0.0
      %2033 = vmatpush1.msra.mxu0 0.0
      %2034 = vmatprep.subr.mxu0 0.0
      %2035 = vmatpush1.msra.mxu0 0.0
      %2036 = vmatprep.subr.mxu0 0.0
      %2037 = vmatpush1.msra.mxu0 0.0
      %2038 = vmatprep.subr.mxu0 0.0
      %2039 = vmatpush1.msra.mxu0 0.0
      %2040 = vmatprep.subr.mxu0 0.0
      %2041 = vmatpush1.msra.mxu0 0.0
      %2042 = vmatprep.subr.mxu0 0.0
      %2043 = vmatpush1.msra.mxu0 0.0
      %2044 = vmatprep.subr.mxu0 0.0
      %2045 = vmatpush1.msra.mxu0 0.0
      %2046 = vmatprep.subr.mxu0 0.0
      %2047 = vmatpush1.msra.mxu0 0.0
      %2048 = vmatprep.subr.mxu0 0.0
      %2049 = vmatpush1.msra.mxu0 0.0
      %2050 = vmatprep.subr.mxu0 0.0
      %2051 = vmatpush1.msra.mxu0 0.0
      %2052 = vmatprep.subr.mxu0 0.0
      %2053 = vmatpush1.msra.mxu0 0.0
      %2054 = vmatprep.subr.mxu0 0.0
      %2055 = vmatpush1.msra.mxu0 0.0
      %2056 = vmatprep.subr.mxu0 0.0
      %2057 = vmatpush1.msra.mxu0 0.0
      %2058 = vmatprep.subr.mxu0 0.0
      %2059 = vmatpush1.msra.mxu0 0.0
      %2060 = vmatprep.subr.mxu0 0.0
      %2061 = vmatpush1.msra.mxu0 0.0
      %2062 = vmatprep.mubr.f32.mxu0 0.0
      %2063 = vmatmul.mubr.f32.gmra.mrb[0].mxu0 %v1900
      %v2064 = vpop.f32.mrb[0].mxu0
      %v2065 = vadd.f32 0.0, %v2064
      %v2066 = vpop.f32.mrb[0].mxu0
      %2067 = vmatprep.mubr.f32.mxu0 0.0
      %2068 = vmatmul.mubr.f32.gmra.mrb[0].mxu0 %v1903
      %v2069 = vpop.f32.mrb[0].mxu0
      %v2070 = vadd.f32 0.0, %v2069
      %v2071 = vpop.f32.mrb[0].mxu0
      %2072 = vmatprep.mubr.f32.mxu0 0.0
      %2073 = vmatmul.mubr.f32.gmra.mrb[0].mxu0 %v1906
      %v2074 = vpop.f32.mrb[0].mxu0
      %v2075 = vadd.f32 0.0, %v2074
      %v2076 = vpop.f32.mrb[0].mxu0
      %2077 = vmatprep.mubr.f32.mxu0 0.0
      %2078 = vmatmul.mubr.f32.gmra.mrb[0].mxu0 %v1909
      %v2079 = vpop.f32.mrb[0].mxu0
      %v2080 = vadd.f32 0.0, %v2079
      %v2081 = vpop.f32.mrb[0].mxu0
      %2082 = vmatprep.mubr.f32.mxu0 0.0
      %2083 = vmatmul.mubr.f32.gmra.mrb[0].mxu0 %v1912
      %v2084 = vpop.f32.mrb[0].mxu0
      %v2085 = vadd.f32 0.0, %v2084
      %v2086 = vpop.f32.mrb[0].mxu0
      %2087 = vmatprep.mubr.f32.mxu0 0.0
      %2088 = vmatmul.mubr.f32.gmra.mrb[0].mxu0 %v1915
      %v2089 = vpop.f32.mrb[0].mxu0
      %v2090 = vadd.f32 0.0, %v2089
      %v2091 = vpop.f32.mrb[0].mxu0
      %2092 = vmatprep.mubr.f32.mxu0 0.0
      %2093 = vmatmul.mubr.f32.gmra.mrb[0].mxu0 %v1918
      %v2094 = vpop.f32.mrb[0].mxu0
      %v2095 = vadd.f32 0.0, %v2094
      %v2096 = vpop.f32.mrb[0].mxu0
      %2097 = vmatprep.mubr.f32.mxu0 0.0
      %2098 = vmatmul.mubr.f32.gmra.mrb[0].mxu0 %v1921
      %v2099 = vpop.f32.mrb[0].mxu0
      %v2100 = vadd.f32 0.0, %v2099
      %v2101 = vpop.f32.mrb[0].mxu0
      %2102 = vmatprep.mubr.f32.mxu0 0.0
      %2103 = vmatmul.mubr.f32.gmra.mrb[0].mxu0 %v1924
      %v2104 = vpop.f32.mrb[0].mxu0
      %v2105 = vadd.f32 0.0, %v2104
      %v2106 = vpop.f32.mrb[0].mxu0
      %2107 = vmatprep.mubr.f32.mxu0 0.0
      %2108 = vmatmul.mubr.f32.gmra.mrb[0].mxu0 %v1927
      %v2109 = vpop.f32.mrb[0].mxu0
      %v2110 = vadd.f32 0.0, %v2109
      %v2111 = vpop.f32.mrb[0].mxu0
      %2112 = vmatprep.mubr.f32.mxu0 0.0
      %2113 = vmatmul.mubr.f32.gmra.mrb[0].mxu0 %v1930
      %v2114 = vpop.f32.mrb[0].mxu0
      %v2115 = vadd.f32 0.0, %v2114
      %v2116 = vpop.f32.mrb[0].mxu0
      %2117 = vmatprep.mubr.f32.mxu0 0.0
      %2118 = vmatmul.mubr.f32.gmra.mrb[0].mxu0 %v1933
      %v2119 = vpop.f32.mrb[0].mxu0
      %v2120 = vadd.f32 0.0, %v2119
      %v2121 = vpop.f32.mrb[0].mxu0
      %2122 = vmatprep.mubr.f32.mxu0 0.0
      %2123 = vmatmul.mubr.f32.gmra.mrb[0].mxu0 %v1936
      %v2124 = vpop.f32.mrb[0].mxu0
      %v2125 = vadd.f32 0.0, %v2124
      %v2126 = vpop.f32.mrb[0].mxu0
      %2127 = vmatprep.mubr.f32.mxu0 0.0
      %2128 = vmatmul.mubr.f32.gmra.mrb[0].mxu0 %v1939
      %v2129 = vpop.f32.mrb[0].mxu0
      %v2130 = vadd.f32 0.0, %v2129
      %v2131 = vpop.f32.mrb[0].mxu0
      %2132 = vmatprep.mubr.f32.mxu0 0.0
      %2133 = vmatmul.mubr.f32.gmra.mrb[0].mxu0 %v1942
      %v2134 = vpop.f32.mrb[0].mxu0
      %v2135 = vadd.f32 0.0, %v2134
      %v2136 = vpop.f32.mrb[0].mxu0
      %2137 = vmatprep.mubr.f32.mxu0 0.0
      %2138 = vmatmul.mubr.f32.gmra.mrb[0].mxu0 %v1945
      %v2139 = vpop.f32.mrb[0].mxu0
      %v2140 = vadd.f32 0.0, %v2139
      %v2141 = vpop.f32.mrb[0].mxu0
      %2142 = vmatprep.mubr.f32.mxu0 0.0
      %2143 = vmatmul.mubr.f32.gmra.mrb[0].mxu0 %v1948
      %v2144 = vpop.f32.mrb[0].mxu0
      %v2145 = vadd.f32 0.0, %v2144
      %v2146 = vpop.f32.mrb[0].mxu0
      %2147 = vmatprep.mubr.f32.mxu0 0.0
      %2148 = vmatmul.mubr.f32.gmra.mrb[0].mxu0 %v1951
      %v2149 = vpop.f32.mrb[0].mxu0
      %v2150 = vadd.f32 0.0, %v2149
      %v2151 = vpop.f32.mrb[0].mxu0
      %2152 = vmatprep.mubr.f32.mxu0 0.0
      %2153 = vmatmul.mubr.f32.gmra.mrb[0].mxu0 %v1954
      %v2154 = vpop.f32.mrb[0].mxu0
      %v2155 = vadd.f32 0.0, %v2154
      %v2156 = vpop.f32.mrb[0].mxu0
      %2157 = vmatprep.mubr.f32.mxu0 0.0
      %2158 = vmatmul.mubr.f32.gmra.mrb[0].mxu0 %v1957
      %v2159 = vpop.f32.mrb[0].mxu0
      %v2160 = vadd.f32 0.0, %v2159
      %v2161 = vpop.f32.mrb[0].mxu0
      %2162 = vmatprep.mubr.f32.mxu0 0.0
      %2163 = vmatmul.mubr.f32.gmra.mrb[0].mxu0 %v1960
      %v2164 = vpop.f32.mrb[0].mxu0
      %v2165 = vadd.f32 0.0, %v2164
      %v2166 = vpop.f32.mrb[0].mxu0
      %2167 = vmatprep.mubr.f32.mxu0 0.0
      %2168 = vmatmul.mubr.f32.gmra.mrb[0].mxu0 %v1963
      %v2169 = vpop.f32.mrb[0].mxu0
      %v2170 = vadd.f32 0.0, %v2169
      %v2171 = vpop.f32.mrb[0].mxu0
      %2172 = vmatprep.mubr.f32.mxu0 0.0
      %2173 = vmatmul.mubr.f32.gmra.mrb[0].mxu0 %v1966
      %v2174 = vpop.f32.mrb[0].mxu0
      %v2175 = vadd.f32 0.0, %v2174
      %v2176 = vpop.f32.mrb[0].mxu0
      %2177 = vmatprep.mubr.f32.mxu0 0.0
      %2178 = vmatmul.mubr.f32.gmra.mrb[0].mxu0 %v1969
      %v2179 = vpop.f32.mrb[0].mxu0
      %v2180 = vadd.f32 0.0, %v2179
      %v2181 = vpop.f32.mrb[0].mxu0
      %2182 = vmatprep.mubr.f32.mxu0 0.0
      %2183 = vmatmul.mubr.f32.gmra.mrb[0].mxu0 %v1972
      %v2184 = vpop.f32.mrb[0].mxu0
      %v2185 = vadd.f32 0.0, %v2184
      %v2186 = vpop.f32.mrb[0].mxu0
      %2187 = vmatprep.mubr.f32.mxu0 0.0
      %2188 = vmatmul.mubr.f32.gmra.mrb[0].mxu0 %v1975
      %v2189 = vpop.f32.mrb[0].mxu0
      %v2190 = vadd.f32 0.0, %v2189
      %v2191 = vpop.f32.mrb[0].mxu0
      %2192 = vmatprep.mubr.f32.mxu0 0.0
      %2193 = vmatmul.mubr.f32.gmra.mrb[0].mxu0 %v1978
      %v2194 = vpop.f32.mrb[0].mxu0
      %v2195 = vadd.f32 0.0, %v2194
      %v2196 = vpop.f32.mrb[0].mxu0
      %2197 = vmatprep.mubr.f32.mxu0 0.0
      %2198 = vmatmul.mubr.f32.gmra.mrb[0].mxu0 %v1981
      %v2199 = vpop.f32.mrb[0].mxu0
      %v2200 = vadd.f32 0.0, %v2199
      %v2201 = vpop.f32.mrb[0].mxu0
      %2202 = vmatprep.mubr.f32.mxu0 0.0
      %2203 = vmatmul.mubr.f32.gmra.mrb[0].mxu0 %v1984
      %v2204 = vpop.f32.mrb[0].mxu0
      %v2205 = vadd.f32 0.0, %v2204
      %v2206 = vpop.f32.mrb[0].mxu0
      %2207 = vmatprep.mubr.f32.mxu0 0.0
      %2208 = vmatmul.mubr.f32.gmra.mrb[0].mxu0 %v1987
      %v2209 = vpop.f32.mrb[0].mxu0
      %v2210 = vadd.f32 0.0, %v2209
      %v2211 = vpop.f32.mrb[0].mxu0
      %2212 = vmatprep.mubr.f32.mxu0 0.0
      %2213 = vmatmul.mubr.f32.gmra.mrb[0].mxu0 %v1990
      %v2214 = vpop.f32.mrb[0].mxu0
      %v2215 = vadd.f32 0.0, %v2214
      %v2216 = vpop.f32.mrb[0].mxu0
      %2217 = vmatprep.mubr.f32.mxu0 0.0
      %2218 = vmatmul.mubr.f32.gmra.mrb[0].mxu0 %v1993
      %v2219 = vpop.f32.mrb[0].mxu0
      %v2220 = vadd.f32 0.0, %v2219
      %v2221 = vpop.f32.mrb[0].mxu0
      %2222 = vdwg.mxu0
      %v2223 = vadd.f32 %v1833, %v2065
      %v2224 = vadd.f32 %v1834, %v2070
      %v2225 = vadd.f32 %v1835, %v2075
      %v2226 = vadd.f32 %v1836, %v2080
      %v2227 = vadd.f32 %v1837, %v2085
      %v2228 = vadd.f32 %v1838, %v2090
      %v2229 = vadd.f32 %v1839, %v2095
      %v2230 = vadd.f32 %v1840, %v2100
      %v2231 = vadd.f32 %v1841, %v2105
      %v2232 = vadd.f32 %v1842, %v2110
      %v2233 = vadd.f32 %v1843, %v2115
      %v2234 = vadd.f32 %v1844, %v2120
      %v2235 = vadd.f32 %v1845, %v2125
      %v2236 = vadd.f32 %v1846, %v2130
      %v2237 = vadd.f32 %v1847, %v2135
      %v2238 = vadd.f32 %v1848, %v2140
      %v2239 = vadd.f32 %v1849, %v2145
      %v2240 = vadd.f32 %v1850, %v2150
      %v2241 = vadd.f32 %v1851, %v2155
      %v2242 = vadd.f32 %v1852, %v2160
      %v2243 = vadd.f32 %v1853, %v2165
      %v2244 = vadd.f32 %v1854, %v2170
      %v2245 = vadd.f32 %v1855, %v2175
      %v2246 = vadd.f32 %v1856, %v2180
      %v2247 = vadd.f32 %v1857, %v2185
      %v2248 = vadd.f32 %v1858, %v2190
      %v2249 = vadd.f32 %v1859, %v2195
      %v2250 = vadd.f32 %v1860, %v2200
      %v2251 = vadd.f32 %v1861, %v2205
      %v2252 = vadd.f32 %v1862, %v2210
      %v2253 = vadd.f32 %v1863, %v2215
      %v2254 = vadd.f32 %v1864, %v2220
      %v2255 = vld [vmem:[%s257 + $0x2] sm:$0xff]
      %v2256 = vld [vmem:[%s257 + $0xa] sm:$0xff]
      %v2257 = vld [vmem:[%s257 + $0x1a] sm:$0xff]
      %v2258 = vld [vmem:[%s257 + $0x22] sm:$0xff]
      %v2259 = vld [vmem:[%s257 + $0x32] sm:$0xff]
      %v2260 = vld [vmem:[%s257 + $0x3a] sm:$0xff]
      %v2261 = vld [vmem:[%s257 + $0x4a] sm:$0xff]
      %v2262 = vld [vmem:[%s257 + $0x52] sm:$0xff]
      %v2263 = vld [vmem:[%s257 + $0x62] sm:$0xff]
      %v2264 = vld [vmem:[%s257 + $0x6a] sm:$0xff]
      %v2265 = vld [vmem:[%s257 + $0x7a] sm:$0xff]
      %v2266 = vld [vmem:[%s257 + $0x82] sm:$0xff]
      %v2267 = vld [vmem:[%s257 + $0x92] sm:$0xff]
      %v2268 = vld [vmem:[%s257 + $0x9a] sm:$0xff]
      %v2269 = vld [vmem:[%s257 + $0xaa] sm:$0xff]
      %v2270 = vld [vmem:[%s257 + $0xb2] sm:$0xff]
      %v2271 = vld [vmem:[%s257 + $0xc2] sm:$0xff]
      %v2272 = vld [vmem:[%s257 + $0xca] sm:$0xff]
      %v2273 = vld [vmem:[%s257 + $0xda] sm:$0xff]
      %v2274 = vld [vmem:[%s257 + $0xe2] sm:$0xff]
      %v2275 = vld [vmem:[%s257 + $0xf2] sm:$0xff]
      %v2276 = vld [vmem:[%s257 + $0xfa] sm:$0xff]
      %v2277 = vld [vmem:[%s257 + $0x10a] sm:$0xff]
      %v2278 = vld [vmem:[%s257 + $0x112] sm:$0xff]
      %v2279 = vld [vmem:[%s257 + $0x122] sm:$0xff]
      %v2280 = vld [vmem:[%s257 + $0x12a] sm:$0xff]
      %v2281 = vld [vmem:[%s257 + $0x13a] sm:$0xff]
      %v2282 = vld [vmem:[%s257 + $0x142] sm:$0xff]
      %v2283 = vld [vmem:[%s257 + $0x152] sm:$0xff]
      %v2284 = vld [vmem:[%s257 + $0x15a] sm:$0xff]
      %v2285 = vld [vmem:[%s257 + $0x16a] sm:$0xff]
      %v2286 = vld [vmem:[%s257 + $0x172] sm:$0xff]
      %s2287 = scalar_lea.vmem %s1, 20
      %v2288 = vld [vmem:[%s2287] sm:$0xf]
      %v2290 = vsel %vm258, %v2255, 0
      %v2293 = vsel %vm258, %v2256, 0
      %v2296 = vsel %vm258, %v2257, 0
      %v2299 = vsel %vm258, %v2258, 0
      %v2302 = vsel %vm258, %v2259, 0
      %v2305 = vsel %vm258, %v2260, 0
      %v2308 = vsel %vm258, %v2261, 0
      %v2311 = vsel %vm258, %v2262, 0
      %v2314 = vsel %vm258, %v2263, 0
      %v2317 = vsel %vm258, %v2264, 0
      %v2320 = vsel %vm258, %v2265, 0
      %v2323 = vsel %vm258, %v2266, 0
      %v2326 = vsel %vm258, %v2267, 0
      %v2329 = vsel %vm258, %v2268, 0
      %v2332 = vsel %vm258, %v2269, 0
      %v2335 = vsel %vm258, %v2270, 0
      %v2338 = vsel %vm258, %v2271, 0
      %v2341 = vsel %vm258, %v2272, 0
      %v2344 = vsel %vm258, %v2273, 0
      %v2347 = vsel %vm258, %v2274, 0
      %v2350 = vsel %vm258, %v2275, 0
      %v2353 = vsel %vm258, %v2276, 0
      %v2356 = vsel %vm258, %v2277, 0
      %v2359 = vsel %vm258, %v2278, 0
      %v2362 = vsel %vm258, %v2279, 0
      %v2365 = vsel %vm258, %v2280, 0
      %v2368 = vsel %vm258, %v2281, 0
      %v2371 = vsel %vm258, %v2282, 0
      %v2374 = vsel %vm258, %v2283, 0
      %v2377 = vsel %vm258, %v2284, 0
      %v2380 = vsel %vm258, %v2285, 0
      %v2383 = vsel %vm258, %v2286, 0
      %v2386 = vsel %vm532, %v2288, 0
      %2388 = vmatprep.subr.mxu0 0.0
      %2389 = vmatpush1.msra.mxu0 %v2386
      %2390 = vmatprep.subr.mxu0 0.0
      %2391 = vmatpush1.msra.mxu0 0.0
      %2392 = vmatprep.subr.mxu0 0.0
      %2393 = vmatpush1.msra.mxu0 0.0
      %2394 = vmatprep.subr.mxu0 0.0
      %2395 = vmatpush1.msra.mxu0 0.0
      %2396 = vmatprep.subr.mxu0 0.0
      %2397 = vmatpush1.msra.mxu0 0.0
      %2398 = vmatprep.subr.mxu0 0.0
      %2399 = vmatpush1.msra.mxu0 0.0
      %2400 = vmatprep.subr.mxu0 0.0
      %2401 = vmatpush1.msra.mxu0 0.0
      %2402 = vmatprep.subr.mxu0 0.0
      %2403 = vmatpush1.msra.mxu0 0.0
      %2404 = vmatprep.subr.mxu0 0.0
      %2405 = vmatpush1.msra.mxu0 0.0
      %2406 = vmatprep.subr.mxu0 0.0
      %2407 = vmatpush1.msra.mxu0 0.0
      %2408 = vmatprep.subr.mxu0 0.0
      %2409 = vmatpush1.msra.mxu0 0.0
      %2410 = vmatprep.subr.mxu0 0.0
      %2411 = vmatpush1.msra.mxu0 0.0
      %2412 = vmatprep.subr.mxu0 0.0
      %2413 = vmatpush1.msra.mxu0 0.0
      %2414 = vmatprep.subr.mxu0 0.0
      %2415 = vmatpush1.msra.mxu0 0.0
      %2416 = vmatprep.subr.mxu0 0.0
      %2417 = vmatpush1.msra.mxu0 0.0
      %2418 = vmatprep.subr.mxu0 0.0
      %2419 = vmatpush1.msra.mxu0 0.0
      %2420 = vmatprep.subr.mxu0 0.0
      %2421 = vmatpush1.msra.mxu0 0.0
      %2422 = vmatprep.subr.mxu0 0.0
      %2423 = vmatpush1.msra.mxu0 0.0
      %2424 = vmatprep.subr.mxu0 0.0
      %2425 = vmatpush1.msra.mxu0 0.0
      %2426 = vmatprep.subr.mxu0 0.0
      %2427 = vmatpush1.msra.mxu0 0.0
      %2428 = vmatprep.subr.mxu0 0.0
      %2429 = vmatpush1.msra.mxu0 0.0
      %2430 = vmatprep.subr.mxu0 0.0
      %2431 = vmatpush1.msra.mxu0 0.0
      %2432 = vmatprep.subr.mxu0 0.0
      %2433 = vmatpush1.msra.mxu0 0.0
      %2434 = vmatprep.subr.mxu0 0.0
      %2435 = vmatpush1.msra.mxu0 0.0
      %2436 = vmatprep.subr.mxu0 0.0
      %2437 = vmatpush1.msra.mxu0 0.0
      %2438 = vmatprep.subr.mxu0 0.0
      %2439 = vmatpush1.msra.mxu0 0.0
      %2440 = vmatprep.subr.mxu0 0.0
      %2441 = vmatpush1.msra.mxu0 0.0
      %2442 = vmatprep.subr.mxu0 0.0
      %2443 = vmatpush1.msra.mxu0 0.0
      %2444 = vmatprep.subr.mxu0 0.0
      %2445 = vmatpush1.msra.mxu0 0.0
      %2446 = vmatprep.subr.mxu0 0.0
      %2447 = vmatpush1.msra.mxu0 0.0
      %2448 = vmatprep.subr.mxu0 0.0
      %2449 = vmatpush1.msra.mxu0 0.0
      %2450 = vmatprep.subr.mxu0 0.0
      %2451 = vmatpush1.msra.mxu0 0.0
      %2452 = vmatprep.mubr.f32.mxu0 0.0
      %2453 = vmatmul.mubr.f32.gmra.mrb[0].mxu0 %v2290
      %v2454 = vpop.f32.mrb[0].mxu0
      %v2455 = vadd.f32 0.0, %v2454
      %v2456 = vpop.f32.mrb[0].mxu0
      %2457 = vmatprep.mubr.f32.mxu0 0.0
      %2458 = vmatmul.mubr.f32.gmra.mrb[0].mxu0 %v2293
      %v2459 = vpop.f32.mrb[0].mxu0
      %v2460 = vadd.f32 0.0, %v2459
      %v2461 = vpop.f32.mrb[0].mxu0
      %2462 = vmatprep.mubr.f32.mxu0 0.0
      %2463 = vmatmul.mubr.f32.gmra.mrb[0].mxu0 %v2296
      %v2464 = vpop.f32.mrb[0].mxu0
      %v2465 = vadd.f32 0.0, %v2464
      %v2466 = vpop.f32.mrb[0].mxu0
      %2467 = vmatprep.mubr.f32.mxu0 0.0
      %2468 = vmatmul.mubr.f32.gmra.mrb[0].mxu0 %v2299
      %v2469 = vpop.f32.mrb[0].mxu0
      %v2470 = vadd.f32 0.0, %v2469
      %v2471 = vpop.f32.mrb[0].mxu0
      %2472 = vmatprep.mubr.f32.mxu0 0.0
      %2473 = vmatmul.mubr.f32.gmra.mrb[0].mxu0 %v2302
      %v2474 = vpop.f32.mrb[0].mxu0
      %v2475 = vadd.f32 0.0, %v2474
      %v2476 = vpop.f32.mrb[0].mxu0
      %2477 = vmatprep.mubr.f32.mxu0 0.0
      %2478 = vmatmul.mubr.f32.gmra.mrb[0].mxu0 %v2305
      %v2479 = vpop.f32.mrb[0].mxu0
      %v2480 = vadd.f32 0.0, %v2479
      %v2481 = vpop.f32.mrb[0].mxu0
      %2482 = vmatprep.mubr.f32.mxu0 0.0
      %2483 = vmatmul.mubr.f32.gmra.mrb[0].mxu0 %v2308
      %v2484 = vpop.f32.mrb[0].mxu0
      %v2485 = vadd.f32 0.0, %v2484
      %v2486 = vpop.f32.mrb[0].mxu0
      %2487 = vmatprep.mubr.f32.mxu0 0.0
      %2488 = vmatmul.mubr.f32.gmra.mrb[0].mxu0 %v2311
      %v2489 = vpop.f32.mrb[0].mxu0
      %v2490 = vadd.f32 0.0, %v2489
      %v2491 = vpop.f32.mrb[0].mxu0
      %2492 = vmatprep.mubr.f32.mxu0 0.0
      %2493 = vmatmul.mubr.f32.gmra.mrb[0].mxu0 %v2314
      %v2494 = vpop.f32.mrb[0].mxu0
      %v2495 = vadd.f32 0.0, %v2494
      %v2496 = vpop.f32.mrb[0].mxu0
      %2497 = vmatprep.mubr.f32.mxu0 0.0
      %2498 = vmatmul.mubr.f32.gmra.mrb[0].mxu0 %v2317
      %v2499 = vpop.f32.mrb[0].mxu0
      %v2500 = vadd.f32 0.0, %v2499
      %v2501 = vpop.f32.mrb[0].mxu0
      %2502 = vmatprep.mubr.f32.mxu0 0.0
      %2503 = vmatmul.mubr.f32.gmra.mrb[0].mxu0 %v2320
      %v2504 = vpop.f32.mrb[0].mxu0
      %v2505 = vadd.f32 0.0, %v2504
      %v2506 = vpop.f32.mrb[0].mxu0
      %2507 = vmatprep.mubr.f32.mxu0 0.0
      %2508 = vmatmul.mubr.f32.gmra.mrb[0].mxu0 %v2323
      %v2509 = vpop.f32.mrb[0].mxu0
      %v2510 = vadd.f32 0.0, %v2509
      %v2511 = vpop.f32.mrb[0].mxu0
      %2512 = vmatprep.mubr.f32.mxu0 0.0
      %2513 = vmatmul.mubr.f32.gmra.mrb[0].mxu0 %v2326
      %v2514 = vpop.f32.mrb[0].mxu0
      %v2515 = vadd.f32 0.0, %v2514
      %v2516 = vpop.f32.mrb[0].mxu0
      %2517 = vmatprep.mubr.f32.mxu0 0.0
      %2518 = vmatmul.mubr.f32.gmra.mrb[0].mxu0 %v2329
      %v2519 = vpop.f32.mrb[0].mxu0
      %v2520 = vadd.f32 0.0, %v2519
      %v2521 = vpop.f32.mrb[0].mxu0
      %2522 = vmatprep.mubr.f32.mxu0 0.0
      %2523 = vmatmul.mubr.f32.gmra.mrb[0].mxu0 %v2332
      %v2524 = vpop.f32.mrb[0].mxu0
      %v2525 = vadd.f32 0.0, %v2524
      %v2526 = vpop.f32.mrb[0].mxu0
      %2527 = vmatprep.mubr.f32.mxu0 0.0
      %2528 = vmatmul.mubr.f32.gmra.mrb[0].mxu0 %v2335
      %v2529 = vpop.f32.mrb[0].mxu0
      %v2530 = vadd.f32 0.0, %v2529
      %v2531 = vpop.f32.mrb[0].mxu0
      %2532 = vmatprep.mubr.f32.mxu0 0.0
      %2533 = vmatmul.mubr.f32.gmra.mrb[0].mxu0 %v2338
      %v2534 = vpop.f32.mrb[0].mxu0
      %v2535 = vadd.f32 0.0, %v2534
      %v2536 = vpop.f32.mrb[0].mxu0
      %2537 = vmatprep.mubr.f32.mxu0 0.0
      %2538 = vmatmul.mubr.f32.gmra.mrb[0].mxu0 %v2341
      %v2539 = vpop.f32.mrb[0].mxu0
      %v2540 = vadd.f32 0.0, %v2539
      %v2541 = vpop.f32.mrb[0].mxu0
      %2542 = vmatprep.mubr.f32.mxu0 0.0
      %2543 = vmatmul.mubr.f32.gmra.mrb[0].mxu0 %v2344
      %v2544 = vpop.f32.mrb[0].mxu0
      %v2545 = vadd.f32 0.0, %v2544
      %v2546 = vpop.f32.mrb[0].mxu0
      %2547 = vmatprep.mubr.f32.mxu0 0.0
      %2548 = vmatmul.mubr.f32.gmra.mrb[0].mxu0 %v2347
      %v2549 = vpop.f32.mrb[0].mxu0
      %v2550 = vadd.f32 0.0, %v2549
      %v2551 = vpop.f32.mrb[0].mxu0
      %2552 = vmatprep.mubr.f32.mxu0 0.0
      %2553 = vmatmul.mubr.f32.gmra.mrb[0].mxu0 %v2350
      %v2554 = vpop.f32.mrb[0].mxu0
      %v2555 = vadd.f32 0.0, %v2554
      %v2556 = vpop.f32.mrb[0].mxu0
      %2557 = vmatprep.mubr.f32.mxu0 0.0
      %2558 = vmatmul.mubr.f32.gmra.mrb[0].mxu0 %v2353
      %v2559 = vpop.f32.mrb[0].mxu0
      %v2560 = vadd.f32 0.0, %v2559
      %v2561 = vpop.f32.mrb[0].mxu0
      %2562 = vmatprep.mubr.f32.mxu0 0.0
      %2563 = vmatmul.mubr.f32.gmra.mrb[0].mxu0 %v2356
      %v2564 = vpop.f32.mrb[0].mxu0
      %v2565 = vadd.f32 0.0, %v2564
      %v2566 = vpop.f32.mrb[0].mxu0
      %2567 = vmatprep.mubr.f32.mxu0 0.0
      %2568 = vmatmul.mubr.f32.gmra.mrb[0].mxu0 %v2359
      %v2569 = vpop.f32.mrb[0].mxu0
      %v2570 = vadd.f32 0.0, %v2569
      %v2571 = vpop.f32.mrb[0].mxu0
      %2572 = vmatprep.mubr.f32.mxu0 0.0
      %2573 = vmatmul.mubr.f32.gmra.mrb[0].mxu0 %v2362
      %v2574 = vpop.f32.mrb[0].mxu0
      %v2575 = vadd.f32 0.0, %v2574
      %v2576 = vpop.f32.mrb[0].mxu0
      %2577 = vmatprep.mubr.f32.mxu0 0.0
      %2578 = vmatmul.mubr.f32.gmra.mrb[0].mxu0 %v2365
      %v2579 = vpop.f32.mrb[0].mxu0
      %v2580 = vadd.f32 0.0, %v2579
      %v2581 = vpop.f32.mrb[0].mxu0
      %2582 = vmatprep.mubr.f32.mxu0 0.0
      %2583 = vmatmul.mubr.f32.gmra.mrb[0].mxu0 %v2368
      %v2584 = vpop.f32.mrb[0].mxu0
      %v2585 = vadd.f32 0.0, %v2584
      %v2586 = vpop.f32.mrb[0].mxu0
      %2587 = vmatprep.mubr.f32.mxu0 0.0
      %2588 = vmatmul.mubr.f32.gmra.mrb[0].mxu0 %v2371
      %v2589 = vpop.f32.mrb[0].mxu0
      %v2590 = vadd.f32 0.0, %v2589
      %v2591 = vpop.f32.mrb[0].mxu0
      %2592 = vmatprep.mubr.f32.mxu0 0.0
      %2593 = vmatmul.mubr.f32.gmra.mrb[0].mxu0 %v2374
      %v2594 = vpop.f32.mrb[0].mxu0
      %v2595 = vadd.f32 0.0, %v2594
      %v2596 = vpop.f32.mrb[0].mxu0
      %2597 = vmatprep.mubr.f32.mxu0 0.0
      %2598 = vmatmul.mubr.f32.gmra.mrb[0].mxu0 %v2377
      %v2599 = vpop.f32.mrb[0].mxu0
      %v2600 = vadd.f32 0.0, %v2599
      %v2601 = vpop.f32.mrb[0].mxu0
      %2602 = vmatprep.mubr.f32.mxu0 0.0
      %2603 = vmatmul.mubr.f32.gmra.mrb[0].mxu0 %v2380
      %v2604 = vpop.f32.mrb[0].mxu0
      %v2605 = vadd.f32 0.0, %v2604
      %v2606 = vpop.f32.mrb[0].mxu0
      %2607 = vmatprep.mubr.f32.mxu0 0.0
      %2608 = vmatmul.mubr.f32.gmra.mrb[0].mxu0 %v2383
      %v2609 = vpop.f32.mrb[0].mxu0
      %v2610 = vadd.f32 0.0, %v2609
      %v2611 = vpop.f32.mrb[0].mxu0
      %2612 = vdwg.mxu0
      %v2613 = vadd.f32 %v2223, %v2455
      %v2614 = vadd.f32 %v2224, %v2460
      %v2615 = vadd.f32 %v2225, %v2465
      %v2616 = vadd.f32 %v2226, %v2470
      %v2617 = vadd.f32 %v2227, %v2475
      %v2618 = vadd.f32 %v2228, %v2480
      %v2619 = vadd.f32 %v2229, %v2485
      %v2620 = vadd.f32 %v2230, %v2490
      %v2621 = vadd.f32 %v2231, %v2495
      %v2622 = vadd.f32 %v2232, %v2500
      %v2623 = vadd.f32 %v2233, %v2505
      %v2624 = vadd.f32 %v2234, %v2510
      %v2625 = vadd.f32 %v2235, %v2515
      %v2626 = vadd.f32 %v2236, %v2520
      %v2627 = vadd.f32 %v2237, %v2525
      %v2628 = vadd.f32 %v2238, %v2530
      %v2629 = vadd.f32 %v2239, %v2535
      %v2630 = vadd.f32 %v2240, %v2540
      %v2631 = vadd.f32 %v2241, %v2545
      %v2632 = vadd.f32 %v2242, %v2550
      %v2633 = vadd.f32 %v2243, %v2555
      %v2634 = vadd.f32 %v2244, %v2560
      %v2635 = vadd.f32 %v2245, %v2565
      %v2636 = vadd.f32 %v2246, %v2570
      %v2637 = vadd.f32 %v2247, %v2575
      %v2638 = vadd.f32 %v2248, %v2580
      %v2639 = vadd.f32 %v2249, %v2585
      %v2640 = vadd.f32 %v2250, %v2590
      %v2641 = vadd.f32 %v2251, %v2595
      %v2642 = vadd.f32 %v2252, %v2600
      %v2643 = vadd.f32 %v2253, %v2605
      %v2644 = vadd.f32 %v2254, %v2610
      %s2645 = scalar_lea.vmem [#allocation2], 48
      %v2646 = vld [vmem:[%s2645] sm:$0xff]
      %v2647 = vld [vmem:[%s2645 + $0x8] sm:$0xff]
      %v2648 = vld [vmem:[%s2645 + $0x18] sm:$0xff]
      %v2649 = vld [vmem:[%s2645 + $0x20] sm:$0xff]
      %v2650 = vld [vmem:[%s2645 + $0x30] sm:$0xff]
      %v2651 = vld [vmem:[%s2645 + $0x38] sm:$0xff]
      %v2652 = vld [vmem:[%s2645 + $0x48] sm:$0xff]
      %v2653 = vld [vmem:[%s2645 + $0x50] sm:$0xff]
      %v2654 = vld [vmem:[%s2645 + $0x60] sm:$0xff]
      %v2655 = vld [vmem:[%s2645 + $0x68] sm:$0xff]
      %v2656 = vld [vmem:[%s2645 + $0x78] sm:$0xff]
      %v2657 = vld [vmem:[%s2645 + $0x80] sm:$0xff]
      %v2658 = vld [vmem:[%s2645 + $0x90] sm:$0xff]
      %v2659 = vld [vmem:[%s2645 + $0x98] sm:$0xff]
      %v2660 = vld [vmem:[%s2645 + $0xa8] sm:$0xff]
      %v2661 = vld [vmem:[%s2645 + $0xb0] sm:$0xff]
      %v2662 = vld [vmem:[%s2645 + $0xc0] sm:$0xff]
      %v2663 = vld [vmem:[%s2645 + $0xc8] sm:$0xff]
      %v2664 = vld [vmem:[%s2645 + $0xd8] sm:$0xff]
      %v2665 = vld [vmem:[%s2645 + $0xe0] sm:$0xff]
      %v2666 = vld [vmem:[%s2645 + $0xf0] sm:$0xff]
      %v2667 = vld [vmem:[%s2645 + $0xf8] sm:$0xff]
      %v2668 = vld [vmem:[%s2645 + $0x108] sm:$0xff]
      %v2669 = vld [vmem:[%s2645 + $0x110] sm:$0xff]
      %v2670 = vld [vmem:[%s2645 + $0x120] sm:$0xff]
      %v2671 = vld [vmem:[%s2645 + $0x128] sm:$0xff]
      %v2672 = vld [vmem:[%s2645 + $0x138] sm:$0xff]
      %v2673 = vld [vmem:[%s2645 + $0x140] sm:$0xff]
      %v2674 = vld [vmem:[%s2645 + $0x150] sm:$0xff]
      %v2675 = vld [vmem:[%s2645 + $0x158] sm:$0xff]
      %v2676 = vld [vmem:[%s2645 + $0x168] sm:$0xff]
      %v2677 = vld [vmem:[%s2645 + $0x170] sm:$0xff]
      %s2678 = scalar_lea.vmem %s1, 24
      %v2679 = vld [vmem:[%s2678] sm:$0xf]
      %v2681 = vsel %vm258, %v2646, 0
      %v2684 = vsel %vm258, %v2647, 0
      %v2687 = vsel %vm258, %v2648, 0
      %v2690 = vsel %vm258, %v2649, 0
      %v2693 = vsel %vm258, %v2650, 0
      %v2696 = vsel %vm258, %v2651, 0
      %v2699 = vsel %vm258, %v2652, 0
      %v2702 = vsel %vm258, %v2653, 0
      %v2705 = vsel %vm258, %v2654, 0
      %v2708 = vsel %vm258, %v2655, 0
      %v2711 = vsel %vm258, %v2656, 0
      %v2714 = vsel %vm258, %v2657, 0
      %v2717 = vsel %vm258, %v2658, 0
      %v2720 = vsel %vm258, %v2659, 0
      %v2723 = vsel %vm258, %v2660, 0
      %v2726 = vsel %vm258, %v2661, 0
      %v2729 = vsel %vm258, %v2662, 0
      %v2732 = vsel %vm258, %v2663, 0
      %v2735 = vsel %vm258, %v2664, 0
      %v2738 = vsel %vm258, %v2665, 0
      %v2741 = vsel %vm258, %v2666, 0
      %v2744 = vsel %vm258, %v2667, 0
      %v2747 = vsel %vm258, %v2668, 0
      %v2750 = vsel %vm258, %v2669, 0
      %v2753 = vsel %vm258, %v2670, 0
      %v2756 = vsel %vm258, %v2671, 0
      %v2759 = vsel %vm258, %v2672, 0
      %v2762 = vsel %vm258, %v2673, 0
      %v2765 = vsel %vm258, %v2674, 0
      %v2768 = vsel %vm258, %v2675, 0
      %v2771 = vsel %vm258, %v2676, 0
      %v2774 = vsel %vm258, %v2677, 0
      %v2777 = vsel %vm532, %v2679, 0
      %2779 = vmatprep.subr.mxu0 0.0
      %2780 = vmatpush1.msra.mxu0 %v2777
      %2781 = vmatprep.subr.mxu0 0.0
      %2782 = vmatpush1.msra.mxu0 0.0
      %2783 = vmatprep.subr.mxu0 0.0
      %2784 = vmatpush1.msra.mxu0 0.0
      %2785 = vmatprep.subr.mxu0 0.0
      %2786 = vmatpush1.msra.mxu0 0.0
      %2787 = vmatprep.subr.mxu0 0.0
      %2788 = vmatpush1.msra.mxu0 0.0
      %2789 = vmatprep.subr.mxu0 0.0
      %2790 = vmatpush1.msra.mxu0 0.0
      %2791 = vmatprep.subr.mxu0 0.0
      %2792 = vmatpush1.msra.mxu0 0.0
      %2793 = vmatprep.subr.mxu0 0.0
      %2794 = vmatpush1.msra.mxu0 0.0
      %2795 = vmatprep.subr.mxu0 0.0
      %2796 = vmatpush1.msra.mxu0 0.0
      %2797 = vmatprep.subr.mxu0 0.0
      %2798 = vmatpush1.msra.mxu0 0.0
      %2799 = vmatprep.subr.mxu0 0.0
      %2800 = vmatpush1.msra.mxu0 0.0
      %2801 = vmatprep.subr.mxu0 0.0
      %2802 = vmatpush1.msra.mxu0 0.0
      %2803 = vmatprep.subr.mxu0 0.0
      %2804 = vmatpush1.msra.mxu0 0.0
      %2805 = vmatprep.subr.mxu0 0.0
      %2806 = vmatpush1.msra.mxu0 0.0
      %2807 = vmatprep.subr.mxu0 0.0
      %2808 = vmatpush1.msra.mxu0 0.0
      %2809 = vmatprep.subr.mxu0 0.0
      %2810 = vmatpush1.msra.mxu0 0.0
      %2811 = vmatprep.subr.mxu0 0.0
      %2812 = vmatpush1.msra.mxu0 0.0
      %2813 = vmatprep.subr.mxu0 0.0
      %2814 = vmatpush1.msra.mxu0 0.0
      %2815 = vmatprep.subr.mxu0 0.0
      %2816 = vmatpush1.msra.mxu0 0.0
      %2817 = vmatprep.subr.mxu0 0.0
      %2818 = vmatpush1.msra.mxu0 0.0
      %2819 = vmatprep.subr.mxu0 0.0
      %2820 = vmatpush1.msra.mxu0 0.0
      %2821 = vmatprep.subr.mxu0 0.0
      %2822 = vmatpush1.msra.mxu0 0.0
      %2823 = vmatprep.subr.mxu0 0.0
      %2824 = vmatpush1.msra.mxu0 0.0
      %2825 = vmatprep.subr.mxu0 0.0
      %2826 = vmatpush1.msra.mxu0 0.0
      %2827 = vmatprep.subr.mxu0 0.0
      %2828 = vmatpush1.msra.mxu0 0.0
      %2829 = vmatprep.subr.mxu0 0.0
      %2830 = vmatpush1.msra.mxu0 0.0
      %2831 = vmatprep.subr.mxu0 0.0
      %2832 = vmatpush1.msra.mxu0 0.0
      %2833 = vmatprep.subr.mxu0 0.0
      %2834 = vmatpush1.msra.mxu0 0.0
      %2835 = vmatprep.subr.mxu0 0.0
      %2836 = vmatpush1.msra.mxu0 0.0
      %2837 = vmatprep.subr.mxu0 0.0
      %2838 = vmatpush1.msra.mxu0 0.0
      %2839 = vmatprep.subr.mxu0 0.0
      %2840 = vmatpush1.msra.mxu0 0.0
      %2841 = vmatprep.subr.mxu0 0.0
      %2842 = vmatpush1.msra.mxu0 0.0
      %2843 = vmatprep.mubr.f32.mxu0 0.0
      %2844 = vmatmul.mubr.f32.gmra.mrb[0].mxu0 %v2681
      %v2845 = vpop.f32.mrb[0].mxu0
      %v2846 = vadd.f32 0.0, %v2845
      %v2847 = vpop.f32.mrb[0].mxu0
      %2848 = vmatprep.mubr.f32.mxu0 0.0
      %2849 = vmatmul.mubr.f32.gmra.mrb[0].mxu0 %v2684
      %v2850 = vpop.f32.mrb[0].mxu0
      %v2851 = vadd.f32 0.0, %v2850
      %v2852 = vpop.f32.mrb[0].mxu0
      %2853 = vmatprep.mubr.f32.mxu0 0.0
      %2854 = vmatmul.mubr.f32.gmra.mrb[0].mxu0 %v2687
      %v2855 = vpop.f32.mrb[0].mxu0
      %v2856 = vadd.f32 0.0, %v2855
      %v2857 = vpop.f32.mrb[0].mxu0
      %2858 = vmatprep.mubr.f32.mxu0 0.0
      %2859 = vmatmul.mubr.f32.gmra.mrb[0].mxu0 %v2690
      %v2860 = vpop.f32.mrb[0].mxu0
      %v2861 = vadd.f32 0.0, %v2860
      %v2862 = vpop.f32.mrb[0].mxu0
      %2863 = vmatprep.mubr.f32.mxu0 0.0
      %2864 = vmatmul.mubr.f32.gmra.mrb[0].mxu0 %v2693
      %v2865 = vpop.f32.mrb[0].mxu0
      %v2866 = vadd.f32 0.0, %v2865
      %v2867 = vpop.f32.mrb[0].mxu0
      %2868 = vmatprep.mubr.f32.mxu0 0.0
      %2869 = vmatmul.mubr.f32.gmra.mrb[0].mxu0 %v2696
      %v2870 = vpop.f32.mrb[0].mxu0
      %v2871 = vadd.f32 0.0, %v2870
      %v2872 = vpop.f32.mrb[0].mxu0
      %2873 = vmatprep.mubr.f32.mxu0 0.0
      %2874 = vmatmul.mubr.f32.gmra.mrb[0].mxu0 %v2699
      %v2875 = vpop.f32.mrb[0].mxu0
      %v2876 = vadd.f32 0.0, %v2875
      %v2877 = vpop.f32.mrb[0].mxu0
      %2878 = vmatprep.mubr.f32.mxu0 0.0
      %2879 = vmatmul.mubr.f32.gmra.mrb[0].mxu0 %v2702
      %v2880 = vpop.f32.mrb[0].mxu0
      %v2881 = vadd.f32 0.0, %v2880
      %v2882 = vpop.f32.mrb[0].mxu0
      %2883 = vmatprep.mubr.f32.mxu0 0.0
      %2884 = vmatmul.mubr.f32.gmra.mrb[0].mxu0 %v2705
      %v2885 = vpop.f32.mrb[0].mxu0
      %v2886 = vadd.f32 0.0, %v2885
      %v2887 = vpop.f32.mrb[0].mxu0
      %2888 = vmatprep.mubr.f32.mxu0 0.0
      %2889 = vmatmul.mubr.f32.gmra.mrb[0].mxu0 %v2708
      %v2890 = vpop.f32.mrb[0].mxu0
      %v2891 = vadd.f32 0.0, %v2890
      %v2892 = vpop.f32.mrb[0].mxu0
      %2893 = vmatprep.mubr.f32.mxu0 0.0
      %2894 = vmatmul.mubr.f32.gmra.mrb[0].mxu0 %v2711
      %v2895 = vpop.f32.mrb[0].mxu0
      %v2896 = vadd.f32 0.0, %v2895
      %v2897 = vpop.f32.mrb[0].mxu0
      %2898 = vmatprep.mubr.f32.mxu0 0.0
      %2899 = vmatmul.mubr.f32.gmra.mrb[0].mxu0 %v2714
      %v2900 = vpop.f32.mrb[0].mxu0
      %v2901 = vadd.f32 0.0, %v2900
      %v2902 = vpop.f32.mrb[0].mxu0
      %2903 = vmatprep.mubr.f32.mxu0 0.0
      %2904 = vmatmul.mubr.f32.gmra.mrb[0].mxu0 %v2717
      %v2905 = vpop.f32.mrb[0].mxu0
      %v2906 = vadd.f32 0.0, %v2905
      %v2907 = vpop.f32.mrb[0].mxu0
      %2908 = vmatprep.mubr.f32.mxu0 0.0
      %2909 = vmatmul.mubr.f32.gmra.mrb[0].mxu0 %v2720
      %v2910 = vpop.f32.mrb[0].mxu0
      %v2911 = vadd.f32 0.0, %v2910
      %v2912 = vpop.f32.mrb[0].mxu0
      %2913 = vmatprep.mubr.f32.mxu0 0.0
      %2914 = vmatmul.mubr.f32.gmra.mrb[0].mxu0 %v2723
      %v2915 = vpop.f32.mrb[0].mxu0
      %v2916 = vadd.f32 0.0, %v2915
      %v2917 = vpop.f32.mrb[0].mxu0
      %2918 = vmatprep.mubr.f32.mxu0 0.0
      %2919 = vmatmul.mubr.f32.gmra.mrb[0].mxu0 %v2726
      %v2920 = vpop.f32.mrb[0].mxu0
      %v2921 = vadd.f32 0.0, %v2920
      %v2922 = vpop.f32.mrb[0].mxu0
      %2923 = vmatprep.mubr.f32.mxu0 0.0
      %2924 = vmatmul.mubr.f32.gmra.mrb[0].mxu0 %v2729
      %v2925 = vpop.f32.mrb[0].mxu0
      %v2926 = vadd.f32 0.0, %v2925
      %v2927 = vpop.f32.mrb[0].mxu0
      %2928 = vmatprep.mubr.f32.mxu0 0.0
      %2929 = vmatmul.mubr.f32.gmra.mrb[0].mxu0 %v2732
      %v2930 = vpop.f32.mrb[0].mxu0
      %v2931 = vadd.f32 0.0, %v2930
      %v2932 = vpop.f32.mrb[0].mxu0
      %2933 = vmatprep.mubr.f32.mxu0 0.0
      %2934 = vmatmul.mubr.f32.gmra.mrb[0].mxu0 %v2735
      %v2935 = vpop.f32.mrb[0].mxu0
      %v2936 = vadd.f32 0.0, %v2935
      %v2937 = vpop.f32.mrb[0].mxu0
      %2938 = vmatprep.mubr.f32.mxu0 0.0
      %2939 = vmatmul.mubr.f32.gmra.mrb[0].mxu0 %v2738
      %v2940 = vpop.f32.mrb[0].mxu0
      %v2941 = vadd.f32 0.0, %v2940
      %v2942 = vpop.f32.mrb[0].mxu0
      %2943 = vmatprep.mubr.f32.mxu0 0.0
      %2944 = vmatmul.mubr.f32.gmra.mrb[0].mxu0 %v2741
      %v2945 = vpop.f32.mrb[0].mxu0
      %v2946 = vadd.f32 0.0, %v2945
      %v2947 = vpop.f32.mrb[0].mxu0
      %2948 = vmatprep.mubr.f32.mxu0 0.0
      %2949 = vmatmul.mubr.f32.gmra.mrb[0].mxu0 %v2744
      %v2950 = vpop.f32.mrb[0].mxu0
      %v2951 = vadd.f32 0.0, %v2950
      %v2952 = vpop.f32.mrb[0].mxu0
      %2953 = vmatprep.mubr.f32.mxu0 0.0
      %2954 = vmatmul.mubr.f32.gmra.mrb[0].mxu0 %v2747
      %v2955 = vpop.f32.mrb[0].mxu0
      %v2956 = vadd.f32 0.0, %v2955
      %v2957 = vpop.f32.mrb[0].mxu0
      %2958 = vmatprep.mubr.f32.mxu0 0.0
      %2959 = vmatmul.mubr.f32.gmra.mrb[0].mxu0 %v2750
      %v2960 = vpop.f32.mrb[0].mxu0
      %v2961 = vadd.f32 0.0, %v2960
      %v2962 = vpop.f32.mrb[0].mxu0
      %2963 = vmatprep.mubr.f32.mxu0 0.0
      %2964 = vmatmul.mubr.f32.gmra.mrb[0].mxu0 %v2753
      %v2965 = vpop.f32.mrb[0].mxu0
      %v2966 = vadd.f32 0.0, %v2965
      %v2967 = vpop.f32.mrb[0].mxu0
      %2968 = vmatprep.mubr.f32.mxu0 0.0
      %2969 = vmatmul.mubr.f32.gmra.mrb[0].mxu0 %v2756
      %v2970 = vpop.f32.mrb[0].mxu0
      %v2971 = vadd.f32 0.0, %v2970
      %v2972 = vpop.f32.mrb[0].mxu0
      %2973 = vmatprep.mubr.f32.mxu0 0.0
      %2974 = vmatmul.mubr.f32.gmra.mrb[0].mxu0 %v2759
      %v2975 = vpop.f32.mrb[0].mxu0
      %v2976 = vadd.f32 0.0, %v2975
      %v2977 = vpop.f32.mrb[0].mxu0
      %2978 = vmatprep.mubr.f32.mxu0 0.0
      %2979 = vmatmul.mubr.f32.gmra.mrb[0].mxu0 %v2762
      %v2980 = vpop.f32.mrb[0].mxu0
      %v2981 = vadd.f32 0.0, %v2980
      %v2982 = vpop.f32.mrb[0].mxu0
      %2983 = vmatprep.mubr.f32.mxu0 0.0
      %2984 = vmatmul.mubr.f32.gmra.mrb[0].mxu0 %v2765
      %v2985 = vpop.f32.mrb[0].mxu0
      %v2986 = vadd.f32 0.0, %v2985
      %v2987 = vpop.f32.mrb[0].mxu0
      %2988 = vmatprep.mubr.f32.mxu0 0.0
      %2989 = vmatmul.mubr.f32.gmra.mrb[0].mxu0 %v2768
      %v2990 = vpop.f32.mrb[0].mxu0
      %v2991 = vadd.f32 0.0, %v2990
      %v2992 = vpop.f32.mrb[0].mxu0
      %2993 = vmatprep.mubr.f32.mxu0 0.0
      %2994 = vmatmul.mubr.f32.gmra.mrb[0].mxu0 %v2771
      %v2995 = vpop.f32.mrb[0].mxu0
      %v2996 = vadd.f32 0.0, %v2995
      %v2997 = vpop.f32.mrb[0].mxu0
      %2998 = vmatprep.mubr.f32.mxu0 0.0
      %2999 = vmatmul.mubr.f32.gmra.mrb[0].mxu0 %v2774
      %v3000 = vpop.f32.mrb[0].mxu0
      %v3001 = vadd.f32 0.0, %v3000
      %v3002 = vpop.f32.mrb[0].mxu0
      %3003 = vdwg.mxu0
      %v3004 = vadd.f32 %v2613, %v2846
      %v3005 = vadd.f32 %v2614, %v2851
      %v3006 = vadd.f32 %v2615, %v2856
      %v3007 = vadd.f32 %v2616, %v2861
      %v3008 = vadd.f32 %v2617, %v2866
      %v3009 = vadd.f32 %v2618, %v2871
      %v3010 = vadd.f32 %v2619, %v2876
      %v3011 = vadd.f32 %v2620, %v2881
      %v3012 = vadd.f32 %v2621, %v2886
      %v3013 = vadd.f32 %v2622, %v2891
      %v3014 = vadd.f32 %v2623, %v2896
      %v3015 = vadd.f32 %v2624, %v2901
      %v3016 = vadd.f32 %v2625, %v2906
      %v3017 = vadd.f32 %v2626, %v2911
      %v3018 = vadd.f32 %v2627, %v2916
      %v3019 = vadd.f32 %v2628, %v2921
      %v3020 = vadd.f32 %v2629, %v2926
      %v3021 = vadd.f32 %v2630, %v2931
      %v3022 = vadd.f32 %v2631, %v2936
      %v3023 = vadd.f32 %v2632, %v2941
      %v3024 = vadd.f32 %v2633, %v2946
      %v3025 = vadd.f32 %v2634, %v2951
      %v3026 = vadd.f32 %v2635, %v2956
      %v3027 = vadd.f32 %v2636, %v2961
      %v3028 = vadd.f32 %v2637, %v2966
      %v3029 = vadd.f32 %v2638, %v2971
      %v3030 = vadd.f32 %v2639, %v2976
      %v3031 = vadd.f32 %v2640, %v2981
      %v3032 = vadd.f32 %v2641, %v2986
      %v3033 = vadd.f32 %v2642, %v2991
      %v3034 = vadd.f32 %v2643, %v2996
      %v3035 = vadd.f32 %v2644, %v3001
      %v3036 = vld [vmem:[%s2645 + $0x1] sm:$0xff]
      %v3037 = vld [vmem:[%s2645 + $0x9] sm:$0xff]
      %v3038 = vld [vmem:[%s2645 + $0x19] sm:$0xff]
      %v3039 = vld [vmem:[%s2645 + $0x21] sm:$0xff]
      %v3040 = vld [vmem:[%s2645 + $0x31] sm:$0xff]
      %v3041 = vld [vmem:[%s2645 + $0x39] sm:$0xff]
      %v3042 = vld [vmem:[%s2645 + $0x49] sm:$0xff]
      %v3043 = vld [vmem:[%s2645 + $0x51] sm:$0xff]
      %v3044 = vld [vmem:[%s2645 + $0x61] sm:$0xff]
      %v3045 = vld [vmem:[%s2645 + $0x69] sm:$0xff]
      %v3046 = vld [vmem:[%s2645 + $0x79] sm:$0xff]
      %v3047 = vld [vmem:[%s2645 + $0x81] sm:$0xff]
      %v3048 = vld [vmem:[%s2645 + $0x91] sm:$0xff]
      %v3049 = vld [vmem:[%s2645 + $0x99] sm:$0xff]
      %v3050 = vld [vmem:[%s2645 + $0xa9] sm:$0xff]
      %v3051 = vld [vmem:[%s2645 + $0xb1] sm:$0xff]
      %v3052 = vld [vmem:[%s2645 + $0xc1] sm:$0xff]
      %v3053 = vld [vmem:[%s2645 + $0xc9] sm:$0xff]
      %v3054 = vld [vmem:[%s2645 + $0xd9] sm:$0xff]
      %v3055 = vld [vmem:[%s2645 + $0xe1] sm:$0xff]
      %v3056 = vld [vmem:[%s2645 + $0xf1] sm:$0xff]
      %v3057 = vld [vmem:[%s2645 + $0xf9] sm:$0xff]
      %v3058 = vld [vmem:[%s2645 + $0x109] sm:$0xff]
      %v3059 = vld [vmem:[%s2645 + $0x111] sm:$0xff]
      %v3060 = vld [vmem:[%s2645 + $0x121] sm:$0xff]
      %v3061 = vld [vmem:[%s2645 + $0x129] sm:$0xff]
      %v3062 = vld [vmem:[%s2645 + $0x139] sm:$0xff]
      %v3063 = vld [vmem:[%s2645 + $0x141] sm:$0xff]
      %v3064 = vld [vmem:[%s2645 + $0x151] sm:$0xff]
      %v3065 = vld [vmem:[%s2645 + $0x159] sm:$0xff]
      %v3066 = vld [vmem:[%s2645 + $0x169] sm:$0xff]
      %v3067 = vld [vmem:[%s2645 + $0x171] sm:$0xff]
      %s3068 = scalar_lea.vmem %s1, 28
      %v3069 = vld [vmem:[%s3068] sm:$0xf]
      %v3071 = vsel %vm258, %v3036, 0
      %v3074 = vsel %vm258, %v3037, 0
      %v3077 = vsel %vm258, %v3038, 0
      %v3080 = vsel %vm258, %v3039, 0
      %v3083 = vsel %vm258, %v3040, 0
      %v3086 = vsel %vm258, %v3041, 0
      %v3089 = vsel %vm258, %v3042, 0
      %v3092 = vsel %vm258, %v3043, 0
      %v3095 = vsel %vm258, %v3044, 0
      %v3098 = vsel %vm258, %v3045, 0
      %v3101 = vsel %vm258, %v3046, 0
      %v3104 = vsel %vm258, %v3047, 0
      %v3107 = vsel %vm258, %v3048, 0
      %v3110 = vsel %vm258, %v3049, 0
      %v3113 = vsel %vm258, %v3050, 0
      %v3116 = vsel %vm258, %v3051, 0
      %v3119 = vsel %vm258, %v3052, 0
      %v3122 = vsel %vm258, %v3053, 0
      %v3125 = vsel %vm258, %v3054, 0
      %v3128 = vsel %vm258, %v3055, 0
      %v3131 = vsel %vm258, %v3056, 0
      %v3134 = vsel %vm258, %v3057, 0
      %v3137 = vsel %vm258, %v3058, 0
      %v3140 = vsel %vm258, %v3059, 0
      %v3143 = vsel %vm258, %v3060, 0
      %v3146 = vsel %vm258, %v3061, 0
      %v3149 = vsel %vm258, %v3062, 0
      %v3152 = vsel %vm258, %v3063, 0
      %v3155 = vsel %vm258, %v3064, 0
      %v3158 = vsel %vm258, %v3065, 0
      %v3161 = vsel %vm258, %v3066, 0
      %v3164 = vsel %vm258, %v3067, 0
      %v3167 = vsel %vm532, %v3069, 0
      %3169 = vmatprep.subr.mxu0 0.0
      %3170 = vmatpush1.msra.mxu0 %v3167
      %3171 = vmatprep.subr.mxu0 0.0
      %3172 = vmatpush1.msra.mxu0 0.0
      %3173 = vmatprep.subr.mxu0 0.0
      %3174 = vmatpush1.msra.mxu0 0.0
      %3175 = vmatprep.subr.mxu0 0.0
      %3176 = vmatpush1.msra.mxu0 0.0
      %3177 = vmatprep.subr.mxu0 0.0
      %3178 = vmatpush1.msra.mxu0 0.0
      %3179 = vmatprep.subr.mxu0 0.0
      %3180 = vmatpush1.msra.mxu0 0.0
      %3181 = vmatprep.subr.mxu0 0.0
      %3182 = vmatpush1.msra.mxu0 0.0
      %3183 = vmatprep.subr.mxu0 0.0
      %3184 = vmatpush1.msra.mxu0 0.0
      %3185 = vmatprep.subr.mxu0 0.0
      %3186 = vmatpush1.msra.mxu0 0.0
      %3187 = vmatprep.subr.mxu0 0.0
      %3188 = vmatpush1.msra.mxu0 0.0
      %3189 = vmatprep.subr.mxu0 0.0
      %3190 = vmatpush1.msra.mxu0 0.0
      %3191 = vmatprep.subr.mxu0 0.0
      %3192 = vmatpush1.msra.mxu0 0.0
      %3193 = vmatprep.subr.mxu0 0.0
      %3194 = vmatpush1.msra.mxu0 0.0
      %3195 = vmatprep.subr.mxu0 0.0
      %3196 = vmatpush1.msra.mxu0 0.0
      %3197 = vmatprep.subr.mxu0 0.0
      %3198 = vmatpush1.msra.mxu0 0.0
      %3199 = vmatprep.subr.mxu0 0.0
      %3200 = vmatpush1.msra.mxu0 0.0
      %3201 = vmatprep.subr.mxu0 0.0
      %3202 = vmatpush1.msra.mxu0 0.0
      %3203 = vmatprep.subr.mxu0 0.0
      %3204 = vmatpush1.msra.mxu0 0.0
      %3205 = vmatprep.subr.mxu0 0.0
      %3206 = vmatpush1.msra.mxu0 0.0
      %3207 = vmatprep.subr.mxu0 0.0
      %3208 = vmatpush1.msra.mxu0 0.0
      %3209 = vmatprep.subr.mxu0 0.0
      %3210 = vmatpush1.msra.mxu0 0.0
      %3211 = vmatprep.subr.mxu0 0.0
      %3212 = vmatpush1.msra.mxu0 0.0
      %3213 = vmatprep.subr.mxu0 0.0
      %3214 = vmatpush1.msra.mxu0 0.0
      %3215 = vmatprep.subr.mxu0 0.0
      %3216 = vmatpush1.msra.mxu0 0.0
      %3217 = vmatprep.subr.mxu0 0.0
      %3218 = vmatpush1.msra.mxu0 0.0
      %3219 = vmatprep.subr.mxu0 0.0
      %3220 = vmatpush1.msra.mxu0 0.0
      %3221 = vmatprep.subr.mxu0 0.0
      %3222 = vmatpush1.msra.mxu0 0.0
      %3223 = vmatprep.subr.mxu0 0.0
      %3224 = vmatpush1.msra.mxu0 0.0
      %3225 = vmatprep.subr.mxu0 0.0
      %3226 = vmatpush1.msra.mxu0 0.0
      %3227 = vmatprep.subr.mxu0 0.0
      %3228 = vmatpush1.msra.mxu0 0.0
      %3229 = vmatprep.subr.mxu0 0.0
      %3230 = vmatpush1.msra.mxu0 0.0
      %3231 = vmatprep.subr.mxu0 0.0
      %3232 = vmatpush1.msra.mxu0 0.0
      %3233 = vmatprep.mubr.f32.mxu0 0.0
      %3234 = vmatmul.mubr.f32.gmra.mrb[0].mxu0 %v3071
      %v3235 = vpop.f32.mrb[0].mxu0
      %v3236 = vadd.f32 0.0, %v3235
      %v3237 = vpop.f32.mrb[0].mxu0
      %3238 = vmatprep.mubr.f32.mxu0 0.0
      %3239 = vmatmul.mubr.f32.gmra.mrb[0].mxu0 %v3074
      %v3240 = vpop.f32.mrb[0].mxu0
      %v3241 = vadd.f32 0.0, %v3240
      %v3242 = vpop.f32.mrb[0].mxu0
      %3243 = vmatprep.mubr.f32.mxu0 0.0
      %3244 = vmatmul.mubr.f32.gmra.mrb[0].mxu0 %v3077
      %v3245 = vpop.f32.mrb[0].mxu0
      %v3246 = vadd.f32 0.0, %v3245
      %v3247 = vpop.f32.mrb[0].mxu0
      %3248 = vmatprep.mubr.f32.mxu0 0.0
      %3249 = vmatmul.mubr.f32.gmra.mrb[0].mxu0 %v3080
      %v3250 = vpop.f32.mrb[0].mxu0
      %v3251 = vadd.f32 0.0, %v3250
      %v3252 = vpop.f32.mrb[0].mxu0
      %3253 = vmatprep.mubr.f32.mxu0 0.0
      %3254 = vmatmul.mubr.f32.gmra.mrb[0].mxu0 %v3083
      %v3255 = vpop.f32.mrb[0].mxu0
      %v3256 = vadd.f32 0.0, %v3255
      %v3257 = vpop.f32.mrb[0].mxu0
      %3258 = vmatprep.mubr.f32.mxu0 0.0
      %3259 = vmatmul.mubr.f32.gmra.mrb[0].mxu0 %v3086
      %v3260 = vpop.f32.mrb[0].mxu0
      %v3261 = vadd.f32 0.0, %v3260
      %v3262 = vpop.f32.mrb[0].mxu0
      %3263 = vmatprep.mubr.f32.mxu0 0.0
      %3264 = vmatmul.mubr.f32.gmra.mrb[0].mxu0 %v3089
      %v3265 = vpop.f32.mrb[0].mxu0
      %v3266 = vadd.f32 0.0, %v3265
      %v3267 = vpop.f32.mrb[0].mxu0
      %3268 = vmatprep.mubr.f32.mxu0 0.0
      %3269 = vmatmul.mubr.f32.gmra.mrb[0].mxu0 %v3092
      %v3270 = vpop.f32.mrb[0].mxu0
      %v3271 = vadd.f32 0.0, %v3270
      %v3272 = vpop.f32.mrb[0].mxu0
      %3273 = vmatprep.mubr.f32.mxu0 0.0
      %3274 = vmatmul.mubr.f32.gmra.mrb[0].mxu0 %v3095
      %v3275 = vpop.f32.mrb[0].mxu0
      %v3276 = vadd.f32 0.0, %v3275
      %v3277 = vpop.f32.mrb[0].mxu0
      %3278 = vmatprep.mubr.f32.mxu0 0.0
      %3279 = vmatmul.mubr.f32.gmra.mrb[0].mxu0 %v3098
      %v3280 = vpop.f32.mrb[0].mxu0
      %v3281 = vadd.f32 0.0, %v3280
      %v3282 = vpop.f32.mrb[0].mxu0
      %3283 = vmatprep.mubr.f32.mxu0 0.0
      %3284 = vmatmul.mubr.f32.gmra.mrb[0].mxu0 %v3101
      %v3285 = vpop.f32.mrb[0].mxu0
      %v3286 = vadd.f32 0.0, %v3285
      %v3287 = vpop.f32.mrb[0].mxu0
      %3288 = vmatprep.mubr.f32.mxu0 0.0
      %3289 = vmatmul.mubr.f32.gmra.mrb[0].mxu0 %v3104
      %v3290 = vpop.f32.mrb[0].mxu0
      %v3291 = vadd.f32 0.0, %v3290
      %v3292 = vpop.f32.mrb[0].mxu0
      %3293 = vmatprep.mubr.f32.mxu0 0.0
      %3294 = vmatmul.mubr.f32.gmra.mrb[0].mxu0 %v3107
      %v3295 = vpop.f32.mrb[0].mxu0
      %v3296 = vadd.f32 0.0, %v3295
      %v3297 = vpop.f32.mrb[0].mxu0
      %3298 = vmatprep.mubr.f32.mxu0 0.0
      %3299 = vmatmul.mubr.f32.gmra.mrb[0].mxu0 %v3110
      %v3300 = vpop.f32.mrb[0].mxu0
      %v3301 = vadd.f32 0.0, %v3300
      %v3302 = vpop.f32.mrb[0].mxu0
      %3303 = vmatprep.mubr.f32.mxu0 0.0
      %3304 = vmatmul.mubr.f32.gmra.mrb[0].mxu0 %v3113
      %v3305 = vpop.f32.mrb[0].mxu0
      %v3306 = vadd.f32 0.0, %v3305
      %v3307 = vpop.f32.mrb[0].mxu0
      %3308 = vmatprep.mubr.f32.mxu0 0.0
      %3309 = vmatmul.mubr.f32.gmra.mrb[0].mxu0 %v3116
      %v3310 = vpop.f32.mrb[0].mxu0
      %v3311 = vadd.f32 0.0, %v3310
      %v3312 = vpop.f32.mrb[0].mxu0
      %3313 = vmatprep.mubr.f32.mxu0 0.0
      %3314 = vmatmul.mubr.f32.gmra.mrb[0].mxu0 %v3119
      %v3315 = vpop.f32.mrb[0].mxu0
      %v3316 = vadd.f32 0.0, %v3315
      %v3317 = vpop.f32.mrb[0].mxu0
      %3318 = vmatprep.mubr.f32.mxu0 0.0
      %3319 = vmatmul.mubr.f32.gmra.mrb[0].mxu0 %v3122
      %v3320 = vpop.f32.mrb[0].mxu0
      %v3321 = vadd.f32 0.0, %v3320
      %v3322 = vpop.f32.mrb[0].mxu0
      %3323 = vmatprep.mubr.f32.mxu0 0.0
      %3324 = vmatmul.mubr.f32.gmra.mrb[0].mxu0 %v3125
      %v3325 = vpop.f32.mrb[0].mxu0
      %v3326 = vadd.f32 0.0, %v3325
      %v3327 = vpop.f32.mrb[0].mxu0
      %3328 = vmatprep.mubr.f32.mxu0 0.0
      %3329 = vmatmul.mubr.f32.gmra.mrb[0].mxu0 %v3128
      %v3330 = vpop.f32.mrb[0].mxu0
      %v3331 = vadd.f32 0.0, %v3330
      %v3332 = vpop.f32.mrb[0].mxu0
      %3333 = vmatprep.mubr.f32.mxu0 0.0
      %3334 = vmatmul.mubr.f32.gmra.mrb[0].mxu0 %v3131
      %v3335 = vpop.f32.mrb[0].mxu0
      %v3336 = vadd.f32 0.0, %v3335
      %v3337 = vpop.f32.mrb[0].mxu0
      %3338 = vmatprep.mubr.f32.mxu0 0.0
      %3339 = vmatmul.mubr.f32.gmra.mrb[0].mxu0 %v3134
      %v3340 = vpop.f32.mrb[0].mxu0
      %v3341 = vadd.f32 0.0, %v3340
      %v3342 = vpop.f32.mrb[0].mxu0
      %3343 = vmatprep.mubr.f32.mxu0 0.0
      %3344 = vmatmul.mubr.f32.gmra.mrb[0].mxu0 %v3137
      %v3345 = vpop.f32.mrb[0].mxu0
      %v3346 = vadd.f32 0.0, %v3345
      %v3347 = vpop.f32.mrb[0].mxu0
      %3348 = vmatprep.mubr.f32.mxu0 0.0
      %3349 = vmatmul.mubr.f32.gmra.mrb[0].mxu0 %v3140
      %v3350 = vpop.f32.mrb[0].mxu0
      %v3351 = vadd.f32 0.0, %v3350
      %v3352 = vpop.f32.mrb[0].mxu0
      %3353 = vmatprep.mubr.f32.mxu0 0.0
      %3354 = vmatmul.mubr.f32.gmra.mrb[0].mxu0 %v3143
      %v3355 = vpop.f32.mrb[0].mxu0
      %v3356 = vadd.f32 0.0, %v3355
      %v3357 = vpop.f32.mrb[0].mxu0
      %3358 = vmatprep.mubr.f32.mxu0 0.0
      %3359 = vmatmul.mubr.f32.gmra.mrb[0].mxu0 %v3146
      %v3360 = vpop.f32.mrb[0].mxu0
      %v3361 = vadd.f32 0.0, %v3360
      %v3362 = vpop.f32.mrb[0].mxu0
      %3363 = vmatprep.mubr.f32.mxu0 0.0
      %3364 = vmatmul.mubr.f32.gmra.mrb[0].mxu0 %v3149
      %v3365 = vpop.f32.mrb[0].mxu0
      %v3366 = vadd.f32 0.0, %v3365
      %v3367 = vpop.f32.mrb[0].mxu0
      %3368 = vmatprep.mubr.f32.mxu0 0.0
      %3369 = vmatmul.mubr.f32.gmra.mrb[0].mxu0 %v3152
      %v3370 = vpop.f32.mrb[0].mxu0
      %v3371 = vadd.f32 0.0, %v3370
      %v3372 = vpop.f32.mrb[0].mxu0
      %3373 = vmatprep.mubr.f32.mxu0 0.0
      %3374 = vmatmul.mubr.f32.gmra.mrb[0].mxu0 %v3155
      %v3375 = vpop.f32.mrb[0].mxu0
      %v3376 = vadd.f32 0.0, %v3375
      %v3377 = vpop.f32.mrb[0].mxu0
      %3378 = vmatprep.mubr.f32.mxu0 0.0
      %3379 = vmatmul.mubr.f32.gmra.mrb[0].mxu0 %v3158
      %v3380 = vpop.f32.mrb[0].mxu0
      %v3381 = vadd.f32 0.0, %v3380
      %v3382 = vpop.f32.mrb[0].mxu0
      %3383 = vmatprep.mubr.f32.mxu0 0.0
      %3384 = vmatmul.mubr.f32.gmra.mrb[0].mxu0 %v3161
      %v3385 = vpop.f32.mrb[0].mxu0
      %v3386 = vadd.f32 0.0, %v3385
      %v3387 = vpop.f32.mrb[0].mxu0
      %3388 = vmatprep.mubr.f32.mxu0 0.0
      %3389 = vmatmul.mubr.f32.gmra.mrb[0].mxu0 %v3164
      %v3390 = vpop.f32.mrb[0].mxu0
      %v3391 = vadd.f32 0.0, %v3390
      %v3392 = vpop.f32.mrb[0].mxu0
      %3393 = vdwg.mxu0
      %v3394 = vadd.f32 %v3004, %v3236
      %v3395 = vadd.f32 %v3005, %v3241
      %v3396 = vadd.f32 %v3006, %v3246
      %v3397 = vadd.f32 %v3007, %v3251
      %v3398 = vadd.f32 %v3008, %v3256
      %v3399 = vadd.f32 %v3009, %v3261
      %v3400 = vadd.f32 %v3010, %v3266
      %v3401 = vadd.f32 %v3011, %v3271
      %v3402 = vadd.f32 %v3012, %v3276
      %v3403 = vadd.f32 %v3013, %v3281
      %v3404 = vadd.f32 %v3014, %v3286
      %v3405 = vadd.f32 %v3015, %v3291
      %v3406 = vadd.f32 %v3016, %v3296
      %v3407 = vadd.f32 %v3017, %v3301
      %v3408 = vadd.f32 %v3018, %v3306
      %v3409 = vadd.f32 %v3019, %v3311
      %v3410 = vadd.f32 %v3020, %v3316
      %v3411 = vadd.f32 %v3021, %v3321
      %v3412 = vadd.f32 %v3022, %v3326
      %v3413 = vadd.f32 %v3023, %v3331
      %v3414 = vadd.f32 %v3024, %v3336
      %v3415 = vadd.f32 %v3025, %v3341
      %v3416 = vadd.f32 %v3026, %v3346
      %v3417 = vadd.f32 %v3027, %v3351
      %v3418 = vadd.f32 %v3028, %v3356
      %v3419 = vadd.f32 %v3029, %v3361
      %v3420 = vadd.f32 %v3030, %v3366
      %v3421 = vadd.f32 %v3031, %v3371
      %v3422 = vadd.f32 %v3032, %v3376
      %v3423 = vadd.f32 %v3033, %v3381
      %v3424 = vadd.f32 %v3034, %v3386
      %v3425 = vadd.f32 %v3035, %v3391
      %v3426 = vld [vmem:[%s2645 + $0x2] sm:$0xff]
      %v3427 = vld [vmem:[%s2645 + $0xa] sm:$0xff]
      %v3428 = vld [vmem:[%s2645 + $0x1a] sm:$0xff]
      %v3429 = vld [vmem:[%s2645 + $0x22] sm:$0xff]
      %v3430 = vld [vmem:[%s2645 + $0x32] sm:$0xff]
      %v3431 = vld [vmem:[%s2645 + $0x3a] sm:$0xff]
      %v3432 = vld [vmem:[%s2645 + $0x4a] sm:$0xff]
      %v3433 = vld [vmem:[%s2645 + $0x52] sm:$0xff]
      %v3434 = vld [vmem:[%s2645 + $0x62] sm:$0xff]
      %v3435 = vld [vmem:[%s2645 + $0x6a] sm:$0xff]
      %v3436 = vld [vmem:[%s2645 + $0x7a] sm:$0xff]
      %v3437 = vld [vmem:[%s2645 + $0x82] sm:$0xff]
      %v3438 = vld [vmem:[%s2645 + $0x92] sm:$0xff]
      %v3439 = vld [vmem:[%s2645 + $0x9a] sm:$0xff]
      %v3440 = vld [vmem:[%s2645 + $0xaa] sm:$0xff]
      %v3441 = vld [vmem:[%s2645 + $0xb2] sm:$0xff]
      %v3442 = vld [vmem:[%s2645 + $0xc2] sm:$0xff]
      %v3443 = vld [vmem:[%s2645 + $0xca] sm:$0xff]
      %v3444 = vld [vmem:[%s2645 + $0xda] sm:$0xff]
      %v3445 = vld [vmem:[%s2645 + $0xe2] sm:$0xff]
      %v3446 = vld [vmem:[%s2645 + $0xf2] sm:$0xff]
      %v3447 = vld [vmem:[%s2645 + $0xfa] sm:$0xff]
      %v3448 = vld [vmem:[%s2645 + $0x10a] sm:$0xff]
      %v3449 = vld [vmem:[%s2645 + $0x112] sm:$0xff]
      %v3450 = vld [vmem:[%s2645 + $0x122] sm:$0xff]
      %v3451 = vld [vmem:[%s2645 + $0x12a] sm:$0xff]
      %v3452 = vld [vmem:[%s2645 + $0x13a] sm:$0xff]
      %v3453 = vld [vmem:[%s2645 + $0x142] sm:$0xff]
      %v3454 = vld [vmem:[%s2645 + $0x152] sm:$0xff]
      %v3455 = vld [vmem:[%s2645 + $0x15a] sm:$0xff]
      %v3456 = vld [vmem:[%s2645 + $0x16a] sm:$0xff]
      %v3457 = vld [vmem:[%s2645 + $0x172] sm:$0xff]
      %s3458 = scalar_lea.vmem %s1, 32
      %v3459 = vld [vmem:[%s3458] sm:$0xf]
      %v3461 = vsel %vm258, %v3426, 0
      %v3464 = vsel %vm258, %v3427, 0
      %v3467 = vsel %vm258, %v3428, 0
      %v3470 = vsel %vm258, %v3429, 0
      %v3473 = vsel %vm258, %v3430, 0
      %v3476 = vsel %vm258, %v3431, 0
      %v3479 = vsel %vm258, %v3432, 0
      %v3482 = vsel %vm258, %v3433, 0
      %v3485 = vsel %vm258, %v3434, 0
      %v3488 = vsel %vm258, %v3435, 0
      %v3491 = vsel %vm258, %v3436, 0
      %v3494 = vsel %vm258, %v3437, 0
      %v3497 = vsel %vm258, %v3438, 0
      %v3500 = vsel %vm258, %v3439, 0
      %v3503 = vsel %vm258, %v3440, 0
      %v3506 = vsel %vm258, %v3441, 0
      %v3509 = vsel %vm258, %v3442, 0
      %v3512 = vsel %vm258, %v3443, 0
      %v3515 = vsel %vm258, %v3444, 0
      %v3518 = vsel %vm258, %v3445, 0
      %v3521 = vsel %vm258, %v3446, 0
      %v3524 = vsel %vm258, %v3447, 0
      %v3527 = vsel %vm258, %v3448, 0
      %v3530 = vsel %vm258, %v3449, 0
      %v3533 = vsel %vm258, %v3450, 0
      %v3536 = vsel %vm258, %v3451, 0
      %v3539 = vsel %vm258, %v3452, 0
      %v3542 = vsel %vm258, %v3453, 0
      %v3545 = vsel %vm258, %v3454, 0
      %v3548 = vsel %vm258, %v3455, 0
      %v3551 = vsel %vm258, %v3456, 0
      %v3554 = vsel %vm258, %v3457, 0
      %v3557 = vsel %vm532, %v3459, 0
      %3559 = vmatprep.subr.mxu0 0.0
      %3560 = vmatpush1.msra.mxu0 %v3557
      %3561 = vmatprep.subr.mxu0 0.0
      %3562 = vmatpush1.msra.mxu0 0.0
      %3563 = vmatprep.subr.mxu0 0.0
      %3564 = vmatpush1.msra.mxu0 0.0
      %3565 = vmatprep.subr.mxu0 0.0
      %3566 = vmatpush1.msra.mxu0 0.0
      %3567 = vmatprep.subr.mxu0 0.0
      %3568 = vmatpush1.msra.mxu0 0.0
      %3569 = vmatprep.subr.mxu0 0.0
      %3570 = vmatpush1.msra.mxu0 0.0
      %3571 = vmatprep.subr.mxu0 0.0
      %3572 = vmatpush1.msra.mxu0 0.0
      %3573 = vmatprep.subr.mxu0 0.0
      %3574 = vmatpush1.msra.mxu0 0.0
      %3575 = vmatprep.subr.mxu0 0.0
      %3576 = vmatpush1.msra.mxu0 0.0
      %3577 = vmatprep.subr.mxu0 0.0
      %3578 = vmatpush1.msra.mxu0 0.0
      %3579 = vmatprep.subr.mxu0 0.0
      %3580 = vmatpush1.msra.mxu0 0.0
      %3581 = vmatprep.subr.mxu0 0.0
      %3582 = vmatpush1.msra.mxu0 0.0
      %3583 = vmatprep.subr.mxu0 0.0
      %3584 = vmatpush1.msra.mxu0 0.0
      %3585 = vmatprep.subr.mxu0 0.0
      %3586 = vmatpush1.msra.mxu0 0.0
      %3587 = vmatprep.subr.mxu0 0.0
      %3588 = vmatpush1.msra.mxu0 0.0
      %3589 = vmatprep.subr.mxu0 0.0
      %3590 = vmatpush1.msra.mxu0 0.0
      %3591 = vmatprep.subr.mxu0 0.0
      %3592 = vmatpush1.msra.mxu0 0.0
      %3593 = vmatprep.subr.mxu0 0.0
      %3594 = vmatpush1.msra.mxu0 0.0
      %3595 = vmatprep.subr.mxu0 0.0
      %3596 = vmatpush1.msra.mxu0 0.0
      %3597 = vmatprep.subr.mxu0 0.0
      %3598 = vmatpush1.msra.mxu0 0.0
      %3599 = vmatprep.subr.mxu0 0.0
      %3600 = vmatpush1.msra.mxu0 0.0
      %3601 = vmatprep.subr.mxu0 0.0
      %3602 = vmatpush1.msra.mxu0 0.0
      %3603 = vmatprep.subr.mxu0 0.0
      %3604 = vmatpush1.msra.mxu0 0.0
      %3605 = vmatprep.subr.mxu0 0.0
      %3606 = vmatpush1.msra.mxu0 0.0
      %3607 = vmatprep.subr.mxu0 0.0
      %3608 = vmatpush1.msra.mxu0 0.0
      %3609 = vmatprep.subr.mxu0 0.0
      %3610 = vmatpush1.msra.mxu0 0.0
      %3611 = vmatprep.subr.mxu0 0.0
      %3612 = vmatpush1.msra.mxu0 0.0
      %3613 = vmatprep.subr.mxu0 0.0
      %3614 = vmatpush1.msra.mxu0 0.0
      %3615 = vmatprep.subr.mxu0 0.0
      %3616 = vmatpush1.msra.mxu0 0.0
      %3617 = vmatprep.subr.mxu0 0.0
      %3618 = vmatpush1.msra.mxu0 0.0
      %3619 = vmatprep.subr.mxu0 0.0
      %3620 = vmatpush1.msra.mxu0 0.0
      %3621 = vmatprep.subr.mxu0 0.0
      %3622 = vmatpush1.msra.mxu0 0.0
      %3623 = vmatprep.mubr.f32.mxu0 0.0
      %3624 = vmatmul.mubr.f32.gmra.mrb[0].mxu0 %v3461
      %v3625 = vpop.f32.mrb[0].mxu0
      %v3626 = vadd.f32 0.0, %v3625
      %v3627 = vpop.f32.mrb[0].mxu0
      %3628 = vmatprep.mubr.f32.mxu0 0.0
      %3629 = vmatmul.mubr.f32.gmra.mrb[0].mxu0 %v3464
      %v3630 = vpop.f32.mrb[0].mxu0
      %v3631 = vadd.f32 0.0, %v3630
      %v3632 = vpop.f32.mrb[0].mxu0
      %3633 = vmatprep.mubr.f32.mxu0 0.0
      %3634 = vmatmul.mubr.f32.gmra.mrb[0].mxu0 %v3467
      %v3635 = vpop.f32.mrb[0].mxu0
      %v3636 = vadd.f32 0.0, %v3635
      %v3637 = vpop.f32.mrb[0].mxu0
      %3638 = vmatprep.mubr.f32.mxu0 0.0
      %3639 = vmatmul.mubr.f32.gmra.mrb[0].mxu0 %v3470
      %v3640 = vpop.f32.mrb[0].mxu0
      %v3641 = vadd.f32 0.0, %v3640
      %v3642 = vpop.f32.mrb[0].mxu0
      %3643 = vmatprep.mubr.f32.mxu0 0.0
      %3644 = vmatmul.mubr.f32.gmra.mrb[0].mxu0 %v3473
      %v3645 = vpop.f32.mrb[0].mxu0
      %v3646 = vadd.f32 0.0, %v3645
      %v3647 = vpop.f32.mrb[0].mxu0
      %3648 = vmatprep.mubr.f32.mxu0 0.0
      %3649 = vmatmul.mubr.f32.gmra.mrb[0].mxu0 %v3476
      %v3650 = vpop.f32.mrb[0].mxu0
      %v3651 = vadd.f32 0.0, %v3650
      %v3652 = vpop.f32.mrb[0].mxu0
      %3653 = vmatprep.mubr.f32.mxu0 0.0
      %3654 = vmatmul.mubr.f32.gmra.mrb[0].mxu0 %v3479
      %v3655 = vpop.f32.mrb[0].mxu0
      %v3656 = vadd.f32 0.0, %v3655
      %v3657 = vpop.f32.mrb[0].mxu0
      %3658 = vmatprep.mubr.f32.mxu0 0.0
      %3659 = vmatmul.mubr.f32.gmra.mrb[0].mxu0 %v3482
      %v3660 = vpop.f32.mrb[0].mxu0
      %v3661 = vadd.f32 0.0, %v3660
      %v3662 = vpop.f32.mrb[0].mxu0
      %3663 = vmatprep.mubr.f32.mxu0 0.0
      %3664 = vmatmul.mubr.f32.gmra.mrb[0].mxu0 %v3485
      %v3665 = vpop.f32.mrb[0].mxu0
      %v3666 = vadd.f32 0.0, %v3665
      %v3667 = vpop.f32.mrb[0].mxu0
      %3668 = vmatprep.mubr.f32.mxu0 0.0
      %3669 = vmatmul.mubr.f32.gmra.mrb[0].mxu0 %v3488
      %v3670 = vpop.f32.mrb[0].mxu0
      %v3671 = vadd.f32 0.0, %v3670
      %v3672 = vpop.f32.mrb[0].mxu0
      %3673 = vmatprep.mubr.f32.mxu0 0.0
      %3674 = vmatmul.mubr.f32.gmra.mrb[0].mxu0 %v3491
      %v3675 = vpop.f32.mrb[0].mxu0
      %v3676 = vadd.f32 0.0, %v3675
      %v3677 = vpop.f32.mrb[0].mxu0
      %3678 = vmatprep.mubr.f32.mxu0 0.0
      %3679 = vmatmul.mubr.f32.gmra.mrb[0].mxu0 %v3494
      %v3680 = vpop.f32.mrb[0].mxu0
      %v3681 = vadd.f32 0.0, %v3680
      %v3682 = vpop.f32.mrb[0].mxu0
      %3683 = vmatprep.mubr.f32.mxu0 0.0
      %3684 = vmatmul.mubr.f32.gmra.mrb[0].mxu0 %v3497
      %v3685 = vpop.f32.mrb[0].mxu0
      %v3686 = vadd.f32 0.0, %v3685
      %v3687 = vpop.f32.mrb[0].mxu0
      %3688 = vmatprep.mubr.f32.mxu0 0.0
      %3689 = vmatmul.mubr.f32.gmra.mrb[0].mxu0 %v3500
      %v3690 = vpop.f32.mrb[0].mxu0
      %v3691 = vadd.f32 0.0, %v3690
      %v3692 = vpop.f32.mrb[0].mxu0
      %3693 = vmatprep.mubr.f32.mxu0 0.0
      %3694 = vmatmul.mubr.f32.gmra.mrb[0].mxu0 %v3503
      %v3695 = vpop.f32.mrb[0].mxu0
      %v3696 = vadd.f32 0.0, %v3695
      %v3697 = vpop.f32.mrb[0].mxu0
      %3698 = vmatprep.mubr.f32.mxu0 0.0
      %3699 = vmatmul.mubr.f32.gmra.mrb[0].mxu0 %v3506
      %v3700 = vpop.f32.mrb[0].mxu0
      %v3701 = vadd.f32 0.0, %v3700
      %v3702 = vpop.f32.mrb[0].mxu0
      %3703 = vmatprep.mubr.f32.mxu0 0.0
      %3704 = vmatmul.mubr.f32.gmra.mrb[0].mxu0 %v3509
      %v3705 = vpop.f32.mrb[0].mxu0
      %v3706 = vadd.f32 0.0, %v3705
      %v3707 = vpop.f32.mrb[0].mxu0
      %3708 = vmatprep.mubr.f32.mxu0 0.0
      %3709 = vmatmul.mubr.f32.gmra.mrb[0].mxu0 %v3512
      %v3710 = vpop.f32.mrb[0].mxu0
      %v3711 = vadd.f32 0.0, %v3710
      %v3712 = vpop.f32.mrb[0].mxu0
      %3713 = vmatprep.mubr.f32.mxu0 0.0
      %3714 = vmatmul.mubr.f32.gmra.mrb[0].mxu0 %v3515
      %v3715 = vpop.f32.mrb[0].mxu0
      %v3716 = vadd.f32 0.0, %v3715
      %v3717 = vpop.f32.mrb[0].mxu0
      %3718 = vmatprep.mubr.f32.mxu0 0.0
      %3719 = vmatmul.mubr.f32.gmra.mrb[0].mxu0 %v3518
      %v3720 = vpop.f32.mrb[0].mxu0
      %v3721 = vadd.f32 0.0, %v3720
      %v3722 = vpop.f32.mrb[0].mxu0
      %3723 = vmatprep.mubr.f32.mxu0 0.0
      %3724 = vmatmul.mubr.f32.gmra.mrb[0].mxu0 %v3521
      %v3725 = vpop.f32.mrb[0].mxu0
      %v3726 = vadd.f32 0.0, %v3725
      %v3727 = vpop.f32.mrb[0].mxu0
      %3728 = vmatprep.mubr.f32.mxu0 0.0
      %3729 = vmatmul.mubr.f32.gmra.mrb[0].mxu0 %v3524
      %v3730 = vpop.f32.mrb[0].mxu0
      %v3731 = vadd.f32 0.0, %v3730
      %v3732 = vpop.f32.mrb[0].mxu0
      %3733 = vmatprep.mubr.f32.mxu0 0.0
      %3734 = vmatmul.mubr.f32.gmra.mrb[0].mxu0 %v3527
      %v3735 = vpop.f32.mrb[0].mxu0
      %v3736 = vadd.f32 0.0, %v3735
      %v3737 = vpop.f32.mrb[0].mxu0
      %3738 = vmatprep.mubr.f32.mxu0 0.0
      %3739 = vmatmul.mubr.f32.gmra.mrb[0].mxu0 %v3530
      %v3740 = vpop.f32.mrb[0].mxu0
      %v3741 = vadd.f32 0.0, %v3740
      %v3742 = vpop.f32.mrb[0].mxu0
      %3743 = vmatprep.mubr.f32.mxu0 0.0
      %3744 = vmatmul.mubr.f32.gmra.mrb[0].mxu0 %v3533
      %v3745 = vpop.f32.mrb[0].mxu0
      %v3746 = vadd.f32 0.0, %v3745
      %v3747 = vpop.f32.mrb[0].mxu0
      %3748 = vmatprep.mubr.f32.mxu0 0.0
      %3749 = vmatmul.mubr.f32.gmra.mrb[0].mxu0 %v3536
      %v3750 = vpop.f32.mrb[0].mxu0
      %v3751 = vadd.f32 0.0, %v3750
      %v3752 = vpop.f32.mrb[0].mxu0
      %3753 = vmatprep.mubr.f32.mxu0 0.0
      %3754 = vmatmul.mubr.f32.gmra.mrb[0].mxu0 %v3539
      %v3755 = vpop.f32.mrb[0].mxu0
      %v3756 = vadd.f32 0.0, %v3755
      %v3757 = vpop.f32.mrb[0].mxu0
      %3758 = vmatprep.mubr.f32.mxu0 0.0
      %3759 = vmatmul.mubr.f32.gmra.mrb[0].mxu0 %v3542
      %v3760 = vpop.f32.mrb[0].mxu0
      %v3761 = vadd.f32 0.0, %v3760
      %v3762 = vpop.f32.mrb[0].mxu0
      %3763 = vmatprep.mubr.f32.mxu0 0.0
      %3764 = vmatmul.mubr.f32.gmra.mrb[0].mxu0 %v3545
      %v3765 = vpop.f32.mrb[0].mxu0
      %v3766 = vadd.f32 0.0, %v3765
      %v3767 = vpop.f32.mrb[0].mxu0
      %3768 = vmatprep.mubr.f32.mxu0 0.0
      %3769 = vmatmul.mubr.f32.gmra.mrb[0].mxu0 %v3548
      %v3770 = vpop.f32.mrb[0].mxu0
      %v3771 = vadd.f32 0.0, %v3770
      %v3772 = vpop.f32.mrb[0].mxu0
      %3773 = vmatprep.mubr.f32.mxu0 0.0
      %3774 = vmatmul.mubr.f32.gmra.mrb[0].mxu0 %v3551
      %v3775 = vpop.f32.mrb[0].mxu0
      %v3776 = vadd.f32 0.0, %v3775
      %v3777 = vpop.f32.mrb[0].mxu0
      %3778 = vmatprep.mubr.f32.mxu0 0.0
      %3779 = vmatmul.mubr.f32.gmra.mrb[0].mxu0 %v3554
      %v3780 = vpop.f32.mrb[0].mxu0
      %v3781 = vadd.f32 0.0, %v3780
      %v3782 = vpop.f32.mrb[0].mxu0
      %3783 = vdwg.mxu0
      %v3784 = vadd.f32 %v3394, %v3626
      %v3785 = vadd.f32 %v3395, %v3631
      %v3786 = vadd.f32 %v3396, %v3636
      %v3787 = vadd.f32 %v3397, %v3641
      %v3788 = vadd.f32 %v3398, %v3646
      %v3789 = vadd.f32 %v3399, %v3651
      %v3790 = vadd.f32 %v3400, %v3656
      %v3791 = vadd.f32 %v3401, %v3661
      %v3792 = vadd.f32 %v3402, %v3666
      %v3793 = vadd.f32 %v3403, %v3671
      %v3794 = vadd.f32 %v3404, %v3676
      %v3795 = vadd.f32 %v3405, %v3681
      %v3796 = vadd.f32 %v3406, %v3686
      %v3797 = vadd.f32 %v3407, %v3691
      %v3798 = vadd.f32 %v3408, %v3696
      %v3799 = vadd.f32 %v3409, %v3701
      %v3800 = vadd.f32 %v3410, %v3706
      %v3801 = vadd.f32 %v3411, %v3711
      %v3802 = vadd.f32 %v3412, %v3716
      %v3803 = vadd.f32 %v3413, %v3721
      %v3804 = vadd.f32 %v3414, %v3726
      %v3805 = vadd.f32 %v3415, %v3731
      %v3806 = vadd.f32 %v3416, %v3736
      %v3807 = vadd.f32 %v3417, %v3741
      %v3808 = vadd.f32 %v3418, %v3746
      %v3809 = vadd.f32 %v3419, %v3751
      %v3810 = vadd.f32 %v3420, %v3756
      %v3811 = vadd.f32 %v3421, %v3761
      %v3812 = vadd.f32 %v3422, %v3766
      %v3813 = vadd.f32 %v3423, %v3771
      %v3814 = vadd.f32 %v3424, %v3776
      %v3815 = vadd.f32 %v3425, %v3781
      %v3816 = vld [vmem:[%s2] sm:$0x1]
      %v3818 = vlaneseq
      %v3819 = vshrl.u32 %v3818, 7
      %v3820 = vsub.s32 0, %v3819
      %v3821 = vrot.slane %v3816, %v3820
      %v3823 = vadd.f32 %v3784, %v3821
      %v3824 = vadd.f32 %v3785, %v3821
      %v3825 = vadd.f32 %v3786, %v3821
      %v3826 = vadd.f32 %v3787, %v3821
      %v3827 = vadd.f32 %v3788, %v3821
      %v3828 = vadd.f32 %v3789, %v3821
      %v3829 = vadd.f32 %v3790, %v3821
      %v3830 = vadd.f32 %v3791, %v3821
      %v3831 = vadd.f32 %v3792, %v3821
      %v3832 = vadd.f32 %v3793, %v3821
      %v3833 = vadd.f32 %v3794, %v3821
      %v3834 = vadd.f32 %v3795, %v3821
      %v3835 = vadd.f32 %v3796, %v3821
      %v3836 = vadd.f32 %v3797, %v3821
      %v3837 = vadd.f32 %v3798, %v3821
      %v3838 = vadd.f32 %v3799, %v3821
      %v3839 = vadd.f32 %v3800, %v3821
      %v3840 = vadd.f32 %v3801, %v3821
      %v3841 = vadd.f32 %v3802, %v3821
      %v3842 = vadd.f32 %v3803, %v3821
      %v3843 = vadd.f32 %v3804, %v3821
      %v3844 = vadd.f32 %v3805, %v3821
      %v3845 = vadd.f32 %v3806, %v3821
      %v3846 = vadd.f32 %v3807, %v3821
      %v3847 = vadd.f32 %v3808, %v3821
      %v3848 = vadd.f32 %v3809, %v3821
      %v3849 = vadd.f32 %v3810, %v3821
      %v3850 = vadd.f32 %v3811, %v3821
      %v3851 = vadd.f32 %v3812, %v3821
      %v3852 = vadd.f32 %v3813, %v3821
      %v3853 = vadd.f32 %v3814, %v3821
      %v3854 = vadd.f32 %v3815, %v3821
      %v3855 = vsel %vm258, %v3823, 0.0
      %v3856 = vsel %vm258, %v3824, 0.0
      %v3857 = vadd.f32 %v3855, %v3856
      %v3858 = vsel %vm258, %v3825, 0.0
      %v3859 = vadd.f32 %v3857, %v3858
      %v3860 = vsel %vm258, %v3826, 0.0
      %v3861 = vadd.f32 %v3859, %v3860
      %v3862 = vsel %vm258, %v3827, 0.0
      %v3863 = vadd.f32 %v3861, %v3862
      %v3864 = vsel %vm258, %v3828, 0.0
      %v3865 = vadd.f32 %v3863, %v3864
      %v3866 = vsel %vm258, %v3829, 0.0
      %v3867 = vadd.f32 %v3865, %v3866
      %v3868 = vsel %vm258, %v3830, 0.0
      %v3869 = vadd.f32 %v3867, %v3868
      %v3870 = vsel %vm258, %v3831, 0.0
      %v3871 = vadd.f32 %v3869, %v3870
      %v3872 = vsel %vm258, %v3832, 0.0
      %v3873 = vadd.f32 %v3871, %v3872
      %v3874 = vsel %vm258, %v3833, 0.0
      %v3875 = vadd.f32 %v3873, %v3874
      %v3876 = vsel %vm258, %v3834, 0.0
      %v3877 = vadd.f32 %v3875, %v3876
      %v3878 = vsel %vm258, %v3835, 0.0
      %v3879 = vadd.f32 %v3877, %v3878
      %v3880 = vsel %vm258, %v3836, 0.0
      %v3881 = vadd.f32 %v3879, %v3880
      %v3882 = vsel %vm258, %v3837, 0.0
      %v3883 = vadd.f32 %v3881, %v3882
      %v3884 = vsel %vm258, %v3838, 0.0
      %v3885 = vadd.f32 %v3883, %v3884
      %v3886 = vsel %vm258, %v3839, 0.0
      %v3887 = vadd.f32 %v3885, %v3886
      %v3888 = vsel %vm258, %v3840, 0.0
      %v3889 = vadd.f32 %v3887, %v3888
      %v3890 = vsel %vm258, %v3841, 0.0
      %v3891 = vadd.f32 %v3889, %v3890
      %v3892 = vsel %vm258, %v3842, 0.0
      %v3893 = vadd.f32 %v3891, %v3892
      %v3894 = vsel %vm258, %v3843, 0.0
      %v3895 = vadd.f32 %v3893, %v3894
      %v3896 = vsel %vm258, %v3844, 0.0
      %v3897 = vadd.f32 %v3895, %v3896
      %v3898 = vsel %vm258, %v3845, 0.0
      %v3899 = vadd.f32 %v3897, %v3898
      %v3900 = vsel %vm258, %v3846, 0.0
      %v3901 = vadd.f32 %v3899, %v3900
      %v3902 = vsel %vm258, %v3847, 0.0
      %v3903 = vadd.f32 %v3901, %v3902
      %v3904 = vsel %vm258, %v3848, 0.0
      %v3905 = vadd.f32 %v3903, %v3904
      %v3906 = vsel %vm258, %v3849, 0.0
      %v3907 = vadd.f32 %v3905, %v3906
      %v3908 = vsel %vm258, %v3850, 0.0
      %v3909 = vadd.f32 %v3907, %v3908
      %v3910 = vsel %vm258, %v3851, 0.0
      %v3911 = vadd.f32 %v3909, %v3910
      %v3912 = vsel %vm258, %v3852, 0.0
      %v3913 = vadd.f32 %v3911, %v3912
      %v3914 = vsel %vm258, %v3853, 0.0
      %v3915 = vadd.f32 %v3913, %v3914
      %v3916 = vsel %vm258, %v3854, 0.0
      %v3917 = vadd.f32 %v3915, %v3916
      %v3918 = vrot.slane %v3917, 4
      %v3919 = vadd.f32 %v3917, %v3918
      %v3920 = vrot.slane %v3919, 2
      %v3921 = vadd.f32 %v3919, %v3920
      %v3922 = vrot.slane %v3921, 1
      %v3923 = vadd.f32 %v3921, %v3922
      %v3924 = vmul.f32 %v3823, %v3823
      %v3925 = vmul.f32 %v3824, %v3824
      %v3926 = vmul.f32 %v3825, %v3825
      %v3927 = vmul.f32 %v3826, %v3826
      %v3928 = vmul.f32 %v3827, %v3827
      %v3929 = vmul.f32 %v3828, %v3828
      %v3930 = vmul.f32 %v3829, %v3829
      %v3931 = vmul.f32 %v3830, %v3830
      %v3932 = vmul.f32 %v3831, %v3831
      %v3933 = vmul.f32 %v3832, %v3832
      %v3934 = vmul.f32 %v3833, %v3833
      %v3935 = vmul.f32 %v3834, %v3834
      %v3936 = vmul.f32 %v3835, %v3835
      %v3937 = vmul.f32 %v3836, %v3836
      %v3938 = vmul.f32 %v3837, %v3837
      %v3939 = vmul.f32 %v3838, %v3838
      %v3940 = vmul.f32 %v3839, %v3839
      %v3941 = vmul.f32 %v3840, %v3840
      %v3942 = vmul.f32 %v3841, %v3841
      %v3943 = vmul.f32 %v3842, %v3842
      %v3944 = vmul.f32 %v3843, %v3843
      %v3945 = vmul.f32 %v3844, %v3844
      %v3946 = vmul.f32 %v3845, %v3845
      %v3947 = vmul.f32 %v3846, %v3846
      %v3948 = vmul.f32 %v3847, %v3847
      %v3949 = vmul.f32 %v3848, %v3848
      %v3950 = vmul.f32 %v3849, %v3849
      %v3951 = vmul.f32 %v3850, %v3850
      %v3952 = vmul.f32 %v3851, %v3851
      %v3953 = vmul.f32 %v3852, %v3852
      %v3954 = vmul.f32 %v3853, %v3853
      %v3955 = vmul.f32 %v3854, %v3854
      %v3956 = vsel %vm258, %v3924, 0.0
      %v3957 = vsel %vm258, %v3925, 0.0
      %v3958 = vadd.f32 %v3956, %v3957
      %v3959 = vsel %vm258, %v3926, 0.0
      %v3960 = vadd.f32 %v3958, %v3959
      %v3961 = vsel %vm258, %v3927, 0.0
      %v3962 = vadd.f32 %v3960, %v3961
      %v3963 = vsel %vm258, %v3928, 0.0
      %v3964 = vadd.f32 %v3962, %v3963
      %v3965 = vsel %vm258, %v3929, 0.0
      %v3966 = vadd.f32 %v3964, %v3965
      %v3967 = vsel %vm258, %v3930, 0.0
      %v3968 = vadd.f32 %v3966, %v3967
      %v3969 = vsel %vm258, %v3931, 0.0
      %v3970 = vadd.f32 %v3968, %v3969
      %v3971 = vsel %vm258, %v3932, 0.0
      %v3972 = vadd.f32 %v3970, %v3971
      %v3973 = vsel %vm258, %v3933, 0.0
      %v3974 = vadd.f32 %v3972, %v3973
      %v3975 = vsel %vm258, %v3934, 0.0
      %v3976 = vadd.f32 %v3974, %v3975
      %v3977 = vsel %vm258, %v3935, 0.0
      %v3978 = vadd.f32 %v3976, %v3977
      %v3979 = vsel %vm258, %v3936, 0.0
      %v3980 = vadd.f32 %v3978, %v3979
      %v3981 = vsel %vm258, %v3937, 0.0
      %v3982 = vadd.f32 %v3980, %v3981
      %v3983 = vsel %vm258, %v3938, 0.0
      %v3984 = vadd.f32 %v3982, %v3983
      %v3985 = vsel %vm258, %v3939, 0.0
      %v3986 = vadd.f32 %v3984, %v3985
      %v3987 = vsel %vm258, %v3940, 0.0
      %v3988 = vadd.f32 %v3986, %v3987
      %v3989 = vsel %vm258, %v3941, 0.0
      %v3990 = vadd.f32 %v3988, %v3989
      %v3991 = vsel %vm258, %v3942, 0.0
      %v3992 = vadd.f32 %v3990, %v3991
      %v3993 = vsel %vm258, %v3943, 0.0
      %v3994 = vadd.f32 %v3992, %v3993
      %v3995 = vsel %vm258, %v3944, 0.0
      %v3996 = vadd.f32 %v3994, %v3995
      %v3997 = vsel %vm258, %v3945, 0.0
      %v3998 = vadd.f32 %v3996, %v3997
      %v3999 = vsel %vm258, %v3946, 0.0
      %v4000 = vadd.f32 %v3998, %v3999
      %v4001 = vsel %vm258, %v3947, 0.0
      %v4002 = vadd.f32 %v4000, %v4001
      %v4003 = vsel %vm258, %v3948, 0.0
      %v4004 = vadd.f32 %v4002, %v4003
      %v4005 = vsel %vm258, %v3949, 0.0
      %v4006 = vadd.f32 %v4004, %v4005
      %v4007 = vsel %vm258, %v3950, 0.0
      %v4008 = vadd.f32 %v4006, %v4007
      %v4009 = vsel %vm258, %v3951, 0.0
      %v4010 = vadd.f32 %v4008, %v4009
      %v4011 = vsel %vm258, %v3952, 0.0
      %v4012 = vadd.f32 %v4010, %v4011
      %v4013 = vsel %vm258, %v3953, 0.0
      %v4014 = vadd.f32 %v4012, %v4013
      %v4015 = vsel %vm258, %v3954, 0.0
      %v4016 = vadd.f32 %v4014, %v4015
      %v4017 = vsel %vm258, %v3955, 0.0
      %v4018 = vadd.f32 %v4016, %v4017
      %v4019 = vrot.slane %v4018, 4
      %v4020 = vadd.f32 %v4018, %v4019
      %v4021 = vrot.slane %v4020, 2
      %v4022 = vadd.f32 %v4020, %v4021
      %v4023 = vrot.slane %v4022, 1
      %v4024 = vadd.f32 %v4022, %v4023
      %v4025 = vmul.f32 %v3923, 0.00390625
      %v4026 = vmul.f32 %v4024, 0.00390625
      %v4027 = vmul.f32 %v4025, %v4025
      %v4028 = vsub.f32 %v4026, %v4027
      %v4029 = vsub.f32 %v3823, %v4025
      %v4030 = vsub.f32 %v3824, %v4025
      %v4031 = vsub.f32 %v3825, %v4025
      %v4032 = vsub.f32 %v3826, %v4025
      %v4033 = vsub.f32 %v3827, %v4025
      %v4034 = vsub.f32 %v3828, %v4025
      %v4035 = vsub.f32 %v3829, %v4025
      %v4036 = vsub.f32 %v3830, %v4025
      %v4037 = vsub.f32 %v3831, %v4025
      %v4038 = vsub.f32 %v3832, %v4025
      %v4039 = vsub.f32 %v3833, %v4025
      %v4040 = vsub.f32 %v3834, %v4025
      %v4041 = vsub.f32 %v3835, %v4025
      %v4042 = vsub.f32 %v3836, %v4025
      %v4043 = vsub.f32 %v3837, %v4025
      %v4044 = vsub.f32 %v3838, %v4025
      %v4045 = vsub.f32 %v3839, %v4025
      %v4046 = vsub.f32 %v3840, %v4025
      %v4047 = vsub.f32 %v3841, %v4025
      %v4048 = vsub.f32 %v3842, %v4025
      %v4049 = vsub.f32 %v3843, %v4025
      %v4050 = vsub.f32 %v3844, %v4025
      %v4051 = vsub.f32 %v3845, %v4025
      %v4052 = vsub.f32 %v3846, %v4025
      %v4053 = vsub.f32 %v3847, %v4025
      %v4054 = vsub.f32 %v3848, %v4025
      %v4055 = vsub.f32 %v3849, %v4025
      %v4056 = vsub.f32 %v3850, %v4025
      %v4057 = vsub.f32 %v3851, %v4025
      %v4058 = vsub.f32 %v3852, %v4025
      %v4059 = vsub.f32 %v3853, %v4025
      %v4060 = vsub.f32 %v3854, %v4025
      %v4061 = vadd.f32 %v4028, 1e-05
      %v4062 = vrsqrt.pop %v4061
      %v4063 = vmul.f32 %v4029, %v4062
      %v4064 = vmul.f32 %v4030, %v4062
      %v4065 = vmul.f32 %v4031, %v4062
      %v4066 = vmul.f32 %v4032, %v4062
      %v4067 = vmul.f32 %v4033, %v4062
      %v4068 = vmul.f32 %v4034, %v4062
      %v4069 = vmul.f32 %v4035, %v4062
      %v4070 = vmul.f32 %v4036, %v4062
      %v4071 = vmul.f32 %v4037, %v4062
      %v4072 = vmul.f32 %v4038, %v4062
      %v4073 = vmul.f32 %v4039, %v4062
      %v4074 = vmul.f32 %v4040, %v4062
      %v4075 = vmul.f32 %v4041, %v4062
      %v4076 = vmul.f32 %v4042, %v4062
      %v4077 = vmul.f32 %v4043, %v4062
      %v4078 = vmul.f32 %v4044, %v4062
      %v4079 = vmul.f32 %v4045, %v4062
      %v4080 = vmul.f32 %v4046, %v4062
      %v4081 = vmul.f32 %v4047, %v4062
      %v4082 = vmul.f32 %v4048, %v4062
      %v4083 = vmul.f32 %v4049, %v4062
      %v4084 = vmul.f32 %v4050, %v4062
      %v4085 = vmul.f32 %v4051, %v4062
      %v4086 = vmul.f32 %v4052, %v4062
      %v4087 = vmul.f32 %v4053, %v4062
      %v4088 = vmul.f32 %v4054, %v4062
      %v4089 = vmul.f32 %v4055, %v4062
      %v4090 = vmul.f32 %v4056, %v4062
      %v4091 = vmul.f32 %v4057, %v4062
      %v4092 = vmul.f32 %v4058, %v4062
      %v4093 = vmul.f32 %v4059, %v4062
      %v4094 = vmul.f32 %v4060, %v4062
      %v4095 = vmax.f32 %v4063, 0.0
      %v4096 = vmax.f32 %v4064, 0.0
      %v4097 = vmax.f32 %v4065, 0.0
      %v4098 = vmax.f32 %v4066, 0.0
      %v4099 = vmax.f32 %v4067, 0.0
      %v4100 = vmax.f32 %v4068, 0.0
      %v4101 = vmax.f32 %v4069, 0.0
      %v4102 = vmax.f32 %v4070, 0.0
      %v4103 = vmax.f32 %v4071, 0.0
      %v4104 = vmax.f32 %v4072, 0.0
      %v4105 = vmax.f32 %v4073, 0.0
      %v4106 = vmax.f32 %v4074, 0.0
      %v4107 = vmax.f32 %v4075, 0.0
      %v4108 = vmax.f32 %v4076, 0.0
      %v4109 = vmax.f32 %v4077, 0.0
      %v4110 = vmax.f32 %v4078, 0.0
      %v4111 = vmax.f32 %v4079, 0.0
      %v4112 = vmax.f32 %v4080, 0.0
      %v4113 = vmax.f32 %v4081, 0.0
      %v4114 = vmax.f32 %v4082, 0.0
      %v4115 = vmax.f32 %v4083, 0.0
      %v4116 = vmax.f32 %v4084, 0.0
      %v4117 = vmax.f32 %v4085, 0.0
      %v4118 = vmax.f32 %v4086, 0.0
      %v4119 = vmax.f32 %v4087, 0.0
      %v4120 = vmax.f32 %v4088, 0.0
      %v4121 = vmax.f32 %v4089, 0.0
      %v4122 = vmax.f32 %v4090, 0.0
      %v4123 = vmax.f32 %v4091, 0.0
      %v4124 = vmax.f32 %v4092, 0.0
      %v4125 = vmax.f32 %v4093, 0.0
      %v4126 = vmax.f32 %v4094, 0.0
      %s4127 = scalar_lea.vmem [#allocation3], 24
      %4128 = vst.msk [vmem:[%s4127 + $0x1] sm:$0xff] %vm258, %v4095
      %4129 = vst.msk [vmem:[%s4127 + $0x9] sm:$0xff] %vm258, %v4096
      %4130 = vst.msk [vmem:[%s4127 + $0x19] sm:$0xff] %vm258, %v4097
      %4131 = vst.msk [vmem:[%s4127 + $0x21] sm:$0xff] %vm258, %v4098
      %4132 = vst.msk [vmem:[%s4127 + $0x31] sm:$0xff] %vm258, %v4099
      %4133 = vst.msk [vmem:[%s4127 + $0x39] sm:$0xff] %vm258, %v4100
      %4134 = vst.msk [vmem:[%s4127 + $0x49] sm:$0xff] %vm258, %v4101
      %4135 = vst.msk [vmem:[%s4127 + $0x51] sm:$0xff] %vm258, %v4102
      %4136 = vst.msk [vmem:[%s4127 + $0x61] sm:$0xff] %vm258, %v4103
      %4137 = vst.msk [vmem:[%s4127 + $0x69] sm:$0xff] %vm258, %v4104
      %4138 = vst.msk [vmem:[%s4127 + $0x79] sm:$0xff] %vm258, %v4105
      %4139 = vst.msk [vmem:[%s4127 + $0x81] sm:$0xff] %vm258, %v4106
      %4140 = vst.msk [vmem:[%s4127 + $0x91] sm:$0xff] %vm258, %v4107
      %4141 = vst.msk [vmem:[%s4127 + $0x99] sm:$0xff] %vm258, %v4108
      %4142 = vst.msk [vmem:[%s4127 + $0xa9] sm:$0xff] %vm258, %v4109
      %4143 = vst.msk [vmem:[%s4127 + $0xb1] sm:$0xff] %vm258, %v4110
      %4144 = vst.msk [vmem:[%s4127 + $0xc1] sm:$0xff] %vm258, %v4111
      %4145 = vst.msk [vmem:[%s4127 + $0xc9] sm:$0xff] %vm258, %v4112
      %4146 = vst.msk [vmem:[%s4127 + $0xd9] sm:$0xff] %vm258, %v4113
      %4147 = vst.msk [vmem:[%s4127 + $0xe1] sm:$0xff] %vm258, %v4114
      %4148 = vst.msk [vmem:[%s4127 + $0xf1] sm:$0xff] %vm258, %v4115
      %4149 = vst.msk [vmem:[%s4127 + $0xf9] sm:$0xff] %vm258, %v4116
      %4150 = vst.msk [vmem:[%s4127 + $0x109] sm:$0xff] %vm258, %v4117
      %4151 = vst.msk [vmem:[%s4127 + $0x111] sm:$0xff] %vm258, %v4118
      %4152 = vst.msk [vmem:[%s4127 + $0x121] sm:$0xff] %vm258, %v4119
      %4153 = vst.msk [vmem:[%s4127 + $0x129] sm:$0xff] %vm258, %v4120
      %4154 = vst.msk [vmem:[%s4127 + $0x139] sm:$0xff] %vm258, %v4121
      %4155 = vst.msk [vmem:[%s4127 + $0x141] sm:$0xff] %vm258, %v4122
      %4156 = vst.msk [vmem:[%s4127 + $0x151] sm:$0xff] %vm258, %v4123
      %4157 = vst.msk [vmem:[%s4127 + $0x159] sm:$0xff] %vm258, %v4124
      %4158 = vst.msk [vmem:[%s4127 + $0x169] sm:$0xff] %vm258, %v4125
      %4159 = vst.msk [vmem:[%s4127 + $0x171] sm:$0xff] %vm258, %v4126
      %4160 = vst.msk [vmem:[#allocation3 + $0x1] sm:$0xff] %vm258, %v4097
      %4161 = vst.msk [vmem:[#allocation3 + $0x9] sm:$0xff] %vm258, %v4098
      %s4162 = scalar_lea.vmem [#allocation3], 408
      %4163 = vst.msk [vmem:[%s4162 + $0x1] sm:$0xff] %vm258, %v4123
      %4164 = vst.msk [vmem:[%s4162 + $0x9] sm:$0xff] %vm258, %v4124
      %v4165 = vld [vmem:[#allocation3 + $0x2] sm:$0x1]
      %v4166 = vld [vmem:[#allocation3 + $0x1a] sm:$0x1]
      %v4167 = vld [vmem:[#allocation3 + $0x32] sm:$0x1]
      %v4168 = vld [vmem:[#allocation3 + $0x4a] sm:$0x1]
      %v4169 = vld [vmem:[#allocation3 + $0x62] sm:$0x1]
      %v4170 = vld [vmem:[#allocation3 + $0x7a] sm:$0x1]
      %v4171 = vld [vmem:[#allocation3 + $0x92] sm:$0x1]
      %v4172 = vld [vmem:[#allocation3 + $0xaa] sm:$0x1]
      %v4173 = vld [vmem:[#allocation3 + $0xc2] sm:$0x1]
      %v4174 = vld [vmem:[#allocation3 + $0xda] sm:$0x1]
      %v4175 = vld [vmem:[#allocation3 + $0xf2] sm:$0x1]
      %v4176 = vld [vmem:[#allocation3 + $0x10a] sm:$0x1]
      %v4177 = vld [vmem:[#allocation3 + $0x122] sm:$0x1]
      %v4178 = vld [vmem:[#allocation3 + $0x13a] sm:$0x1]
      %v4179 = vld [vmem:[#allocation3 + $0x152] sm:$0x1]
      %v4180 = vld [vmem:[#allocation3 + $0x16a] sm:$0x1]
      %v4181 = vld [vmem:[#allocation3 + $0x182] sm:$0x1]
      %v4182 = vld [vmem:[#allocation3 + $0x19a] sm:$0x1]
      %4183 = vst.msk [vmem:[#allocation3] sm:$0x1] %vm314, %v4165
      %4184 = vst.msk [vmem:[#allocation3 + $0x18] sm:$0x1] %vm314, %v4166
      %4185 = vst.msk [vmem:[#allocation3 + $0x30] sm:$0x1] %vm314, %v4167
      %4186 = vst.msk [vmem:[#allocation3 + $0x48] sm:$0x1] %vm314, %v4168
      %4187 = vst.msk [vmem:[#allocation3 + $0x60] sm:$0x1] %vm314, %v4169
      %4188 = vst.msk [vmem:[#allocation3 + $0x78] sm:$0x1] %vm314, %v4170
      %4189 = vst.msk [vmem:[#allocation3 + $0x90] sm:$0x1] %vm314, %v4171
      %4190 = vst.msk [vmem:[#allocation3 + $0xa8] sm:$0x1] %vm314, %v4172
      %4191 = vst.msk [vmem:[#allocation3 + $0xc0] sm:$0x1] %vm314, %v4173
      %4192 = vst.msk [vmem:[#allocation3 + $0xd8] sm:$0x1] %vm314, %v4174
      %4193 = vst.msk [vmem:[#allocation3 + $0xf0] sm:$0x1] %vm314, %v4175
      %4194 = vst.msk [vmem:[#allocation3 + $0x108] sm:$0x1] %vm314, %v4176
      %4195 = vst.msk [vmem:[#allocation3 + $0x120] sm:$0x1] %vm314, %v4177
      %4196 = vst.msk [vmem:[#allocation3 + $0x138] sm:$0x1] %vm314, %v4178
      %4197 = vst.msk [vmem:[#allocation3 + $0x150] sm:$0x1] %vm314, %v4179
      %4198 = vst.msk [vmem:[#allocation3 + $0x168] sm:$0x1] %vm314, %v4180
      %4199 = vst.msk [vmem:[#allocation3 + $0x180] sm:$0x1] %vm314, %v4181
      %4200 = vst.msk [vmem:[#allocation3 + $0x198] sm:$0x1] %vm314, %v4182
      %v4201 = vld [vmem:[#allocation3 + $0xf] sm:$0x1]
      %v4202 = vld [vmem:[#allocation3 + $0x27] sm:$0x1]
      %v4203 = vld [vmem:[#allocation3 + $0x3f] sm:$0x1]
      %v4204 = vld [vmem:[#allocation3 + $0x57] sm:$0x1]
      %v4205 = vld [vmem:[#allocation3 + $0x6f] sm:$0x1]
      %v4206 = vld [vmem:[#allocation3 + $0x87] sm:$0x1]
      %v4207 = vld [vmem:[#allocation3 + $0x9f] sm:$0x1]
      %v4208 = vld [vmem:[#allocation3 + $0xb7] sm:$0x1]
      %v4209 = vld [vmem:[#allocation3 + $0xcf] sm:$0x1]
      %v4210 = vld [vmem:[#allocation3 + $0xe7] sm:$0x1]
      %v4211 = vld [vmem:[#allocation3 + $0xff] sm:$0x1]
      %v4212 = vld [vmem:[#allocation3 + $0x117] sm:$0x1]
      %v4213 = vld [vmem:[#allocation3 + $0x12f] sm:$0x1]
      %v4214 = vld [vmem:[#allocation3 + $0x147] sm:$0x1]
      %v4215 = vld [vmem:[#allocation3 + $0x15f] sm:$0x1]
      %v4216 = vld [vmem:[#allocation3 + $0x177] sm:$0x1]
      %v4217 = vld [vmem:[#allocation3 + $0x18f] sm:$0x1]
      %v4218 = vld [vmem:[#allocation3 + $0x1a7] sm:$0x1]
      %4219 = vst.msk [vmem:[#allocation3 + $0x11] sm:$0x1] %vm314, %v4201
      %4220 = vst.msk [vmem:[#allocation3 + $0x29] sm:$0x1] %vm314, %v4202
      %4221 = vst.msk [vmem:[#allocation3 + $0x41] sm:$0x1] %vm314, %v4203
      %4222 = vst.msk [vmem:[#allocation3 + $0x59] sm:$0x1] %vm314, %v4204
      %4223 = vst.msk [vmem:[#allocation3 + $0x71] sm:$0x1] %vm314, %v4205
      %4224 = vst.msk [vmem:[#allocation3 + $0x89] sm:$0x1] %vm314, %v4206
      %4225 = vst.msk [vmem:[#allocation3 + $0xa1] sm:$0x1] %vm314, %v4207
      %4226 = vst.msk [vmem:[#allocation3 + $0xb9] sm:$0x1] %vm314, %v4208
      %4227 = vst.msk [vmem:[#allocation3 + $0xd1] sm:$0x1] %vm314, %v4209
      %4228 = vst.msk [vmem:[#allocation3 + $0xe9] sm:$0x1] %vm314, %v4210
      %4229 = vst.msk [vmem:[#allocation3 + $0x101] sm:$0x1] %vm314, %v4211
      %4230 = vst.msk [vmem:[#allocation3 + $0x119] sm:$0x1] %vm314, %v4212
      %4231 = vst.msk [vmem:[#allocation3 + $0x131] sm:$0x1] %vm314, %v4213
      %4232 = vst.msk [vmem:[#allocation3 + $0x149] sm:$0x1] %vm314, %v4214
      %4233 = vst.msk [vmem:[#allocation3 + $0x161] sm:$0x1] %vm314, %v4215
      %4234 = vst.msk [vmem:[#allocation3 + $0x179] sm:$0x1] %vm314, %v4216
      %4235 = vst.msk [vmem:[#allocation3 + $0x191] sm:$0x1] %vm314, %v4217
      %4236 = vst.msk [vmem:[#allocation3 + $0x1a9] sm:$0x1] %vm314, %v4218
      %v4237 = vld [vmem:[#allocation3] sm:$0xff]
      %v4238 = vld [vmem:[#allocation3 + $0x8] sm:$0xff]
      %v4239 = vld [vmem:[#allocation3 + $0x18] sm:$0xff]
      %v4240 = vld [vmem:[#allocation3 + $0x20] sm:$0xff]
      %v4241 = vld [vmem:[#allocation3 + $0x30] sm:$0xff]
      %v4242 = vld [vmem:[#allocation3 + $0x38] sm:$0xff]
      %v4243 = vld [vmem:[#allocation3 + $0x48] sm:$0xff]
      %v4244 = vld [vmem:[#allocation3 + $0x50] sm:$0xff]
      %v4245 = vld [vmem:[#allocation3 + $0x60] sm:$0xff]
      %v4246 = vld [vmem:[#allocation3 + $0x68] sm:$0xff]
      %v4247 = vld [vmem:[#allocation3 + $0x78] sm:$0xff]
      %v4248 = vld [vmem:[#allocation3 + $0x80] sm:$0xff]
      %v4249 = vld [vmem:[#allocation3 + $0x90] sm:$0xff]
      %v4250 = vld [vmem:[#allocation3 + $0x98] sm:$0xff]
      %v4251 = vld [vmem:[#allocation3 + $0xa8] sm:$0xff]
      %v4252 = vld [vmem:[#allocation3 + $0xb0] sm:$0xff]
      %v4253 = vld [vmem:[#allocation3 + $0xc0] sm:$0xff]
      %v4254 = vld [vmem:[#allocation3 + $0xc8] sm:$0xff]
      %v4255 = vld [vmem:[#allocation3 + $0xd8] sm:$0xff]
      %v4256 = vld [vmem:[#allocation3 + $0xe0] sm:$0xff]
      %v4257 = vld [vmem:[#allocation3 + $0xf0] sm:$0xff]
      %v4258 = vld [vmem:[#allocation3 + $0xf8] sm:$0xff]
      %v4259 = vld [vmem:[#allocation3 + $0x108] sm:$0xff]
      %v4260 = vld [vmem:[#allocation3 + $0x110] sm:$0xff]
      %v4261 = vld [vmem:[#allocation3 + $0x120] sm:$0xff]
      %v4262 = vld [vmem:[#allocation3 + $0x128] sm:$0xff]
      %v4263 = vld [vmem:[#allocation3 + $0x138] sm:$0xff]
      %v4264 = vld [vmem:[#allocation3 + $0x140] sm:$0xff]
      %v4265 = vld [vmem:[#allocation3 + $0x150] sm:$0xff]
      %v4266 = vld [vmem:[#allocation3 + $0x158] sm:$0xff]
      %v4267 = vld [vmem:[#allocation3 + $0x168] sm:$0xff]
      %v4268 = vld [vmem:[#allocation3 + $0x170] sm:$0xff]
      %v4269 = vld [vmem:[%s3] sm:$0xf]
      %v4270 = vld [vmem:[#allocation3 + $0x1] sm:$0xff]
      %v4271 = vld [vmem:[#allocation3 + $0x9] sm:$0xff]
      %v4272 = vld [vmem:[#allocation3 + $0x19] sm:$0xff]
      %v4273 = vld [vmem:[#allocation3 + $0x21] sm:$0xff]
      %v4274 = vld [vmem:[#allocation3 + $0x31] sm:$0xff]
      %v4275 = vld [vmem:[#allocation3 + $0x39] sm:$0xff]
      %v4276 = vld [vmem:[#allocation3 + $0x49] sm:$0xff]
      %v4277 = vld [vmem:[#allocation3 + $0x51] sm:$0xff]
      %v4278 = vld [vmem:[#allocation3 + $0x61] sm:$0xff]
      %v4279 = vld [vmem:[#allocation3 + $0x69] sm:$0xff]
      %v4280 = vld [vmem:[#allocation3 + $0x79] sm:$0xff]
      %v4281 = vld [vmem:[#allocation3 + $0x81] sm:$0xff]
      %v4282 = vld [vmem:[#allocation3 + $0x91] sm:$0xff]
      %v4283 = vld [vmem:[#allocation3 + $0x99] sm:$0xff]
      %v4284 = vld [vmem:[#allocation3 + $0xa9] sm:$0xff]
      %v4285 = vld [vmem:[#allocation3 + $0xb1] sm:$0xff]
      %v4286 = vld [vmem:[#allocation3 + $0xc1] sm:$0xff]
      %v4287 = vld [vmem:[#allocation3 + $0xc9] sm:$0xff]
      %v4288 = vld [vmem:[#allocation3 + $0xd9] sm:$0xff]
      %v4289 = vld [vmem:[#allocation3 + $0xe1] sm:$0xff]
      %v4290 = vld [vmem:[#allocation3 + $0xf1] sm:$0xff]
      %v4291 = vld [vmem:[#allocation3 + $0xf9] sm:$0xff]
      %v4292 = vld [vmem:[#allocation3 + $0x109] sm:$0xff]
      %v4293 = vld [vmem:[#allocation3 + $0x111] sm:$0xff]
      %v4294 = vld [vmem:[#allocation3 + $0x121] sm:$0xff]
      %v4295 = vld [vmem:[#allocation3 + $0x129] sm:$0xff]
      %v4296 = vld [vmem:[#allocation3 + $0x139] sm:$0xff]
      %v4297 = vld [vmem:[#allocation3 + $0x141] sm:$0xff]
      %v4298 = vld [vmem:[#allocation3 + $0x151] sm:$0xff]
      %v4299 = vld [vmem:[#allocation3 + $0x159] sm:$0xff]
      %v4300 = vld [vmem:[#allocation3 + $0x169] sm:$0xff]
      %v4301 = vld [vmem:[#allocation3 + $0x171] sm:$0xff]
      %s4302 = scalar_lea.vmem %s3, 4
      %v4303 = vld [vmem:[%s4302] sm:$0xf]
      %v4305 = vsel %vm258, %v4270, 0
      %v4308 = vsel %vm258, %v4271, 0
      %v4311 = vsel %vm258, %v4272, 0
      %v4314 = vsel %vm258, %v4273, 0
      %v4317 = vsel %vm258, %v4274, 0
      %v4320 = vsel %vm258, %v4275, 0
      %v4323 = vsel %vm258, %v4276, 0
      %v4326 = vsel %vm258, %v4277, 0
      %v4329 = vsel %vm258, %v4278, 0
      %v4332 = vsel %vm258, %v4279, 0
      %v4335 = vsel %vm258, %v4280, 0
      %v4338 = vsel %vm258, %v4281, 0
      %v4341 = vsel %vm258, %v4282, 0
      %v4344 = vsel %vm258, %v4283, 0
      %v4347 = vsel %vm258, %v4284, 0
      %v4350 = vsel %vm258, %v4285, 0
      %v4353 = vsel %vm258, %v4286, 0
      %v4356 = vsel %vm258, %v4287, 0
      %v4359 = vsel %vm258, %v4288, 0
      %v4362 = vsel %vm258, %v4289, 0
      %v4365 = vsel %vm258, %v4290, 0
      %v4368 = vsel %vm258, %v4291, 0
      %v4371 = vsel %vm258, %v4292, 0
      %v4374 = vsel %vm258, %v4293, 0
      %v4377 = vsel %vm258, %v4294, 0
      %v4380 = vsel %vm258, %v4295, 0
      %v4383 = vsel %vm258, %v4296, 0
      %v4386 = vsel %vm258, %v4297, 0
      %v4389 = vsel %vm258, %v4298, 0
      %v4392 = vsel %vm258, %v4299, 0
      %v4395 = vsel %vm258, %v4300, 0
      %v4398 = vsel %vm258, %v4301, 0
      %v4401 = vsel %vm532, %v4303, 0
      %4403 = vmatprep.subr.mxu0 0.0
      %4404 = vmatpush1.msra.mxu0 %v4401
      %4405 = vmatprep.subr.mxu0 0.0
      %4406 = vmatpush1.msra.mxu0 0.0
      %4407 = vmatprep.subr.mxu0 0.0
      %4408 = vmatpush1.msra.mxu0 0.0
      %4409 = vmatprep.subr.mxu0 0.0
      %4410 = vmatpush1.msra.mxu0 0.0
      %4411 = vmatprep.subr.mxu0 0.0
      %4412 = vmatpush1.msra.mxu0 0.0
      %4413 = vmatprep.subr.mxu0 0.0
      %4414 = vmatpush1.msra.mxu0 0.0
      %4415 = vmatprep.subr.mxu0 0.0
      %4416 = vmatpush1.msra.mxu0 0.0
      %4417 = vmatprep.subr.mxu0 0.0
      %4418 = vmatpush1.msra.mxu0 0.0
      %4419 = vmatprep.subr.mxu0 0.0
      %4420 = vmatpush1.msra.mxu0 0.0
      %4421 = vmatprep.subr.mxu0 0.0
      %4422 = vmatpush1.msra.mxu0 0.0
      %4423 = vmatprep.subr.mxu0 0.0
      %4424 = vmatpush1.msra.mxu0 0.0
      %4425 = vmatprep.subr.mxu0 0.0
      %4426 = vmatpush1.msra.mxu0 0.0
      %4427 = vmatprep.subr.mxu0 0.0
      %4428 = vmatpush1.msra.mxu0 0.0
      %4429 = vmatprep.subr.mxu0 0.0
      %4430 = vmatpush1.msra.mxu0 0.0
      %4431 = vmatprep.subr.mxu0 0.0
      %4432 = vmatpush1.msra.mxu0 0.0
      %4433 = vmatprep.subr.mxu0 0.0
      %4434 = vmatpush1.msra.mxu0 0.0
      %4435 = vmatprep.subr.mxu0 0.0
      %4436 = vmatpush1.msra.mxu0 0.0
      %4437 = vmatprep.subr.mxu0 0.0
      %4438 = vmatpush1.msra.mxu0 0.0
      %4439 = vmatprep.subr.mxu0 0.0
      %4440 = vmatpush1.msra.mxu0 0.0
      %4441 = vmatprep.subr.mxu0 0.0
      %4442 = vmatpush1.msra.mxu0 0.0
      %4443 = vmatprep.subr.mxu0 0.0
      %4444 = vmatpush1.msra.mxu0 0.0
      %4445 = vmatprep.subr.mxu0 0.0
      %4446 = vmatpush1.msra.mxu0 0.0
      %4447 = vmatprep.subr.mxu0 0.0
      %4448 = vmatpush1.msra.mxu0 0.0
      %4449 = vmatprep.subr.mxu0 0.0
      %4450 = vmatpush1.msra.mxu0 0.0
      %4451 = vmatprep.subr.mxu0 0.0
      %4452 = vmatpush1.msra.mxu0 0.0
      %4453 = vmatprep.subr.mxu0 0.0
      %4454 = vmatpush1.msra.mxu0 0.0
      %4455 = vmatprep.subr.mxu0 0.0
      %4456 = vmatpush1.msra.mxu0 0.0
      %4457 = vmatprep.subr.mxu0 0.0
      %4458 = vmatpush1.msra.mxu0 0.0
      %4459 = vmatprep.subr.mxu0 0.0
      %4460 = vmatpush1.msra.mxu0 0.0
      %4461 = vmatprep.subr.mxu0 0.0
      %4462 = vmatpush1.msra.mxu0 0.0
      %4463 = vmatprep.subr.mxu0 0.0
      %4464 = vmatpush1.msra.mxu0 0.0
      %4465 = vmatprep.subr.mxu0 0.0
      %4466 = vmatpush1.msra.mxu0 0.0
      %4467 = vmatprep.mubr.f32.mxu0 0.0
      %4468 = vmatmul.mubr.f32.gmra.mrb[0].mxu0 %v4305
      %v4469 = vpop.f32.mrb[0].mxu0
      %v4470 = vadd.f32 0.0, %v4469
      %v4471 = vpop.f32.mrb[0].mxu0
      %4472 = vmatprep.mubr.f32.mxu0 0.0
      %4473 = vmatmul.mubr.f32.gmra.mrb[0].mxu0 %v4308
      %v4474 = vpop.f32.mrb[0].mxu0
      %v4475 = vadd.f32 0.0, %v4474
      %v4476 = vpop.f32.mrb[0].mxu0
      %4477 = vmatprep.mubr.f32.mxu0 0.0
      %4478 = vmatmul.mubr.f32.gmra.mrb[0].mxu0 %v4311
      %v4479 = vpop.f32.mrb[0].mxu0
      %v4480 = vadd.f32 0.0, %v4479
      %v4481 = vpop.f32.mrb[0].mxu0
      %4482 = vmatprep.mubr.f32.mxu0 0.0
      %4483 = vmatmul.mubr.f32.gmra.mrb[0].mxu0 %v4314
      %v4484 = vpop.f32.mrb[0].mxu0
      %v4485 = vadd.f32 0.0, %v4484
      %v4486 = vpop.f32.mrb[0].mxu0
      %4487 = vmatprep.mubr.f32.mxu0 0.0
      %4488 = vmatmul.mubr.f32.gmra.mrb[0].mxu0 %v4317
      %v4489 = vpop.f32.mrb[0].mxu0
      %v4490 = vadd.f32 0.0, %v4489
      %v4491 = vpop.f32.mrb[0].mxu0
      %4492 = vmatprep.mubr.f32.mxu0 0.0
      %4493 = vmatmul.mubr.f32.gmra.mrb[0].mxu0 %v4320
      %v4494 = vpop.f32.mrb[0].mxu0
      %v4495 = vadd.f32 0.0, %v4494
      %v4496 = vpop.f32.mrb[0].mxu0
      %4497 = vmatprep.mubr.f32.mxu0 0.0
      %4498 = vmatmul.mubr.f32.gmra.mrb[0].mxu0 %v4323
      %v4499 = vpop.f32.mrb[0].mxu0
      %v4500 = vadd.f32 0.0, %v4499
      %v4501 = vpop.f32.mrb[0].mxu0
      %4502 = vmatprep.mubr.f32.mxu0 0.0
      %4503 = vmatmul.mubr.f32.gmra.mrb[0].mxu0 %v4326
      %v4504 = vpop.f32.mrb[0].mxu0
      %v4505 = vadd.f32 0.0, %v4504
      %v4506 = vpop.f32.mrb[0].mxu0
      %4507 = vmatprep.mubr.f32.mxu0 0.0
      %4508 = vmatmul.mubr.f32.gmra.mrb[0].mxu0 %v4329
      %v4509 = vpop.f32.mrb[0].mxu0
      %v4510 = vadd.f32 0.0, %v4509
      %v4511 = vpop.f32.mrb[0].mxu0
      %4512 = vmatprep.mubr.f32.mxu0 0.0
      %4513 = vmatmul.mubr.f32.gmra.mrb[0].mxu0 %v4332
      %v4514 = vpop.f32.mrb[0].mxu0
      %v4515 = vadd.f32 0.0, %v4514
      %v4516 = vpop.f32.mrb[0].mxu0
      %4517 = vmatprep.mubr.f32.mxu0 0.0
      %4518 = vmatmul.mubr.f32.gmra.mrb[0].mxu0 %v4335
      %v4519 = vpop.f32.mrb[0].mxu0
      %v4520 = vadd.f32 0.0, %v4519
      %v4521 = vpop.f32.mrb[0].mxu0
      %4522 = vmatprep.mubr.f32.mxu0 0.0
      %4523 = vmatmul.mubr.f32.gmra.mrb[0].mxu0 %v4338
      %v4524 = vpop.f32.mrb[0].mxu0
      %v4525 = vadd.f32 0.0, %v4524
      %v4526 = vpop.f32.mrb[0].mxu0
      %4527 = vmatprep.mubr.f32.mxu0 0.0
      %4528 = vmatmul.mubr.f32.gmra.mrb[0].mxu0 %v4341
      %v4529 = vpop.f32.mrb[0].mxu0
      %v4530 = vadd.f32 0.0, %v4529
      %v4531 = vpop.f32.mrb[0].mxu0
      %4532 = vmatprep.mubr.f32.mxu0 0.0
      %4533 = vmatmul.mubr.f32.gmra.mrb[0].mxu0 %v4344
      %v4534 = vpop.f32.mrb[0].mxu0
      %v4535 = vadd.f32 0.0, %v4534
      %v4536 = vpop.f32.mrb[0].mxu0
      %4537 = vmatprep.mubr.f32.mxu0 0.0
      %4538 = vmatmul.mubr.f32.gmra.mrb[0].mxu0 %v4347
      %v4539 = vpop.f32.mrb[0].mxu0
      %v4540 = vadd.f32 0.0, %v4539
      %v4541 = vpop.f32.mrb[0].mxu0
      %4542 = vmatprep.mubr.f32.mxu0 0.0
      %4543 = vmatmul.mubr.f32.gmra.mrb[0].mxu0 %v4350
      %v4544 = vpop.f32.mrb[0].mxu0
      %v4545 = vadd.f32 0.0, %v4544
      %v4546 = vpop.f32.mrb[0].mxu0
      %4547 = vmatprep.mubr.f32.mxu0 0.0
      %4548 = vmatmul.mubr.f32.gmra.mrb[0].mxu0 %v4353
      %v4549 = vpop.f32.mrb[0].mxu0
      %v4550 = vadd.f32 0.0, %v4549
      %v4551 = vpop.f32.mrb[0].mxu0
      %4552 = vmatprep.mubr.f32.mxu0 0.0
      %4553 = vmatmul.mubr.f32.gmra.mrb[0].mxu0 %v4356
      %v4554 = vpop.f32.mrb[0].mxu0
      %v4555 = vadd.f32 0.0, %v4554
      %v4556 = vpop.f32.mrb[0].mxu0
      %4557 = vmatprep.mubr.f32.mxu0 0.0
      %4558 = vmatmul.mubr.f32.gmra.mrb[0].mxu0 %v4359
      %v4559 = vpop.f32.mrb[0].mxu0
      %v4560 = vadd.f32 0.0, %v4559
      %v4561 = vpop.f32.mrb[0].mxu0
      %4562 = vmatprep.mubr.f32.mxu0 0.0
      %4563 = vmatmul.mubr.f32.gmra.mrb[0].mxu0 %v4362
      %v4564 = vpop.f32.mrb[0].mxu0
      %v4565 = vadd.f32 0.0, %v4564
      %v4566 = vpop.f32.mrb[0].mxu0
      %4567 = vmatprep.mubr.f32.mxu0 0.0
      %4568 = vmatmul.mubr.f32.gmra.mrb[0].mxu0 %v4365
      %v4569 = vpop.f32.mrb[0].mxu0
      %v4570 = vadd.f32 0.0, %v4569
      %v4571 = vpop.f32.mrb[0].mxu0
      %4572 = vmatprep.mubr.f32.mxu0 0.0
      %4573 = vmatmul.mubr.f32.gmra.mrb[0].mxu0 %v4368
      %v4574 = vpop.f32.mrb[0].mxu0
      %v4575 = vadd.f32 0.0, %v4574
      %v4576 = vpop.f32.mrb[0].mxu0
      %4577 = vmatprep.mubr.f32.mxu0 0.0
      %4578 = vmatmul.mubr.f32.gmra.mrb[0].mxu0 %v4371
      %v4579 = vpop.f32.mrb[0].mxu0
      %v4580 = vadd.f32 0.0, %v4579
      %v4581 = vpop.f32.mrb[0].mxu0
      %4582 = vmatprep.mubr.f32.mxu0 0.0
      %4583 = vmatmul.mubr.f32.gmra.mrb[0].mxu0 %v4374
      %v4584 = vpop.f32.mrb[0].mxu0
      %v4585 = vadd.f32 0.0, %v4584
      %v4586 = vpop.f32.mrb[0].mxu0
      %4587 = vmatprep.mubr.f32.mxu0 0.0
      %4588 = vmatmul.mubr.f32.gmra.mrb[0].mxu0 %v4377
      %v4589 = vpop.f32.mrb[0].mxu0
      %v4590 = vadd.f32 0.0, %v4589
      %v4591 = vpop.f32.mrb[0].mxu0
      %4592 = vmatprep.mubr.f32.mxu0 0.0
      %4593 = vmatmul.mubr.f32.gmra.mrb[0].mxu0 %v4380
      %v4594 = vpop.f32.mrb[0].mxu0
      %v4595 = vadd.f32 0.0, %v4594
      %v4596 = vpop.f32.mrb[0].mxu0
      %4597 = vmatprep.mubr.f32.mxu0 0.0
      %4598 = vmatmul.mubr.f32.gmra.mrb[0].mxu0 %v4383
      %v4599 = vpop.f32.mrb[0].mxu0
      %v4600 = vadd.f32 0.0, %v4599
      %v4601 = vpop.f32.mrb[0].mxu0
      %4602 = vmatprep.mubr.f32.mxu0 0.0
      %4603 = vmatmul.mubr.f32.gmra.mrb[0].mxu0 %v4386
      %v4604 = vpop.f32.mrb[0].mxu0
      %v4605 = vadd.f32 0.0, %v4604
      %v4606 = vpop.f32.mrb[0].mxu0
      %4607 = vmatprep.mubr.f32.mxu0 0.0
      %4608 = vmatmul.mubr.f32.gmra.mrb[0].mxu0 %v4389
      %v4609 = vpop.f32.mrb[0].mxu0
      %v4610 = vadd.f32 0.0, %v4609
      %v4611 = vpop.f32.mrb[0].mxu0
      %4612 = vmatprep.mubr.f32.mxu0 0.0
      %4613 = vmatmul.mubr.f32.gmra.mrb[0].mxu0 %v4392
      %v4614 = vpop.f32.mrb[0].mxu0
      %v4615 = vadd.f32 0.0, %v4614
      %v4616 = vpop.f32.mrb[0].mxu0
      %4617 = vmatprep.mubr.f32.mxu0 0.0
      %4618 = vmatmul.mubr.f32.gmra.mrb[0].mxu0 %v4395
      %v4619 = vpop.f32.mrb[0].mxu0
      %v4620 = vadd.f32 0.0, %v4619
      %v4621 = vpop.f32.mrb[0].mxu0
      %4622 = vmatprep.mubr.f32.mxu0 0.0
      %4623 = vmatmul.mubr.f32.gmra.mrb[0].mxu0 %v4398
      %v4624 = vpop.f32.mrb[0].mxu0
      %v4625 = vadd.f32 0.0, %v4624
      %v4626 = vpop.f32.mrb[0].mxu0
      %4627 = vdwg.mxu0
      %v4629 = vsel %vm258, %v4237, 0
      %v4632 = vsel %vm258, %v4238, 0
      %v4635 = vsel %vm258, %v4239, 0
      %v4638 = vsel %vm258, %v4240, 0
      %v4641 = vsel %vm258, %v4241, 0
      %v4644 = vsel %vm258, %v4242, 0
      %v4647 = vsel %vm258, %v4243, 0
      %v4650 = vsel %vm258, %v4244, 0
      %v4653 = vsel %vm258, %v4245, 0
      %v4656 = vsel %vm258, %v4246, 0
      %v4659 = vsel %vm258, %v4247, 0
      %v4662 = vsel %vm258, %v4248, 0
      %v4665 = vsel %vm258, %v4249, 0
      %v4668 = vsel %vm258, %v4250, 0
      %v4671 = vsel %vm258, %v4251, 0
      %v4674 = vsel %vm258, %v4252, 0
      %v4677 = vsel %vm258, %v4253, 0
      %v4680 = vsel %vm258, %v4254, 0
      %v4683 = vsel %vm258, %v4255, 0
      %v4686 = vsel %vm258, %v4256, 0
      %v4689 = vsel %vm258, %v4257, 0
      %v4692 = vsel %vm258, %v4258, 0
      %v4695 = vsel %vm258, %v4259, 0
      %v4698 = vsel %vm258, %v4260, 0
      %v4701 = vsel %vm258, %v4261, 0
      %v4704 = vsel %vm258, %v4262, 0
      %v4707 = vsel %vm258, %v4263, 0
      %v4710 = vsel %vm258, %v4264, 0
      %v4713 = vsel %vm258, %v4265, 0
      %v4716 = vsel %vm258, %v4266, 0
      %v4719 = vsel %vm258, %v4267, 0
      %v4722 = vsel %vm258, %v4268, 0
      %v4725 = vsel %vm532, %v4269, 0
      %4727 = vmatprep.subr.mxu0 0.0
      %4728 = vmatpush1.msra.mxu0 %v4725
      %4729 = vmatprep.subr.mxu0 0.0
      %4730 = vmatpush1.msra.mxu0 0.0
      %4731 = vmatprep.subr.mxu0 0.0
      %4732 = vmatpush1.msra.mxu0 0.0
      %4733 = vmatprep.subr.mxu0 0.0
      %4734 = vmatpush1.msra.mxu0 0.0
      %4735 = vmatprep.subr.mxu0 0.0
      %4736 = vmatpush1.msra.mxu0 0.0
      %4737 = vmatprep.subr.mxu0 0.0
      %4738 = vmatpush1.msra.mxu0 0.0
      %4739 = vmatprep.subr.mxu0 0.0
      %4740 = vmatpush1.msra.mxu0 0.0
      %4741 = vmatprep.subr.mxu0 0.0
      %4742 = vmatpush1.msra.mxu0 0.0
      %4743 = vmatprep.subr.mxu0 0.0
      %4744 = vmatpush1.msra.mxu0 0.0
      %4745 = vmatprep.subr.mxu0 0.0
      %4746 = vmatpush1.msra.mxu0 0.0
      %4747 = vmatprep.subr.mxu0 0.0
      %4748 = vmatpush1.msra.mxu0 0.0
      %4749 = vmatprep.subr.mxu0 0.0
      %4750 = vmatpush1.msra.mxu0 0.0
      %4751 = vmatprep.subr.mxu0 0.0
      %4752 = vmatpush1.msra.mxu0 0.0
      %4753 = vmatprep.subr.mxu0 0.0
      %4754 = vmatpush1.msra.mxu0 0.0
      %4755 = vmatprep.subr.mxu0 0.0
      %4756 = vmatpush1.msra.mxu0 0.0
      %4757 = vmatprep.subr.mxu0 0.0
      %4758 = vmatpush1.msra.mxu0 0.0
      %4759 = vmatprep.subr.mxu0 0.0
      %4760 = vmatpush1.msra.mxu0 0.0
      %4761 = vmatprep.subr.mxu0 0.0
      %4762 = vmatpush1.msra.mxu0 0.0
      %4763 = vmatprep.subr.mxu0 0.0
      %4764 = vmatpush1.msra.mxu0 0.0
      %4765 = vmatprep.subr.mxu0 0.0
      %4766 = vmatpush1.msra.mxu0 0.0
      %4767 = vmatprep.subr.mxu0 0.0
      %4768 = vmatpush1.msra.mxu0 0.0
      %4769 = vmatprep.subr.mxu0 0.0
      %4770 = vmatpush1.msra.mxu0 0.0
      %4771 = vmatprep.subr.mxu0 0.0
      %4772 = vmatpush1.msra.mxu0 0.0
      %4773 = vmatprep.subr.mxu0 0.0
      %4774 = vmatpush1.msra.mxu0 0.0
      %4775 = vmatprep.subr.mxu0 0.0
      %4776 = vmatpush1.msra.mxu0 0.0
      %4777 = vmatprep.subr.mxu0 0.0
      %4778 = vmatpush1.msra.mxu0 0.0
      %4779 = vmatprep.subr.mxu0 0.0
      %4780 = vmatpush1.msra.mxu0 0.0
      %4781 = vmatprep.subr.mxu0 0.0
      %4782 = vmatpush1.msra.mxu0 0.0
      %4783 = vmatprep.subr.mxu0 0.0
      %4784 = vmatpush1.msra.mxu0 0.0
      %4785 = vmatprep.subr.mxu0 0.0
      %4786 = vmatpush1.msra.mxu0 0.0
      %4787 = vmatprep.subr.mxu0 0.0
      %4788 = vmatpush1.msra.mxu0 0.0
      %4789 = vmatprep.subr.mxu0 0.0
      %4790 = vmatpush1.msra.mxu0 0.0
      %4791 = vmatprep.mubr.f32.mxu0 0.0
      %4792 = vmatmul.mubr.f32.gmra.mrb[0].mxu0 %v4629
      %v4793 = vpop.f32.mrb[0].mxu0
      %v4794 = vadd.f32 %v4470, %v4793
      %v4795 = vpop.f32.mrb[0].mxu0
      %4796 = vmatprep.mubr.f32.mxu0 0.0
      %4797 = vmatmul.mubr.f32.gmra.mrb[0].mxu0 %v4632
      %v4798 = vpop.f32.mrb[0].mxu0
      %v4799 = vadd.f32 %v4475, %v4798
      %v4800 = vpop.f32.mrb[0].mxu0
      %4801 = vmatprep.mubr.f32.mxu0 0.0
      %4802 = vmatmul.mubr.f32.gmra.mrb[0].mxu0 %v4635
      %v4803 = vpop.f32.mrb[0].mxu0
      %v4804 = vadd.f32 %v4480, %v4803
      %v4805 = vpop.f32.mrb[0].mxu0
      %4806 = vmatprep.mubr.f32.mxu0 0.0
      %4807 = vmatmul.mubr.f32.gmra.mrb[0].mxu0 %v4638
      %v4808 = vpop.f32.mrb[0].mxu0
      %v4809 = vadd.f32 %v4485, %v4808
      %v4810 = vpop.f32.mrb[0].mxu0
      %4811 = vmatprep.mubr.f32.mxu0 0.0
      %4812 = vmatmul.mubr.f32.gmra.mrb[0].mxu0 %v4641
      %v4813 = vpop.f32.mrb[0].mxu0
      %v4814 = vadd.f32 %v4490, %v4813
      %v4815 = vpop.f32.mrb[0].mxu0
      %4816 = vmatprep.mubr.f32.mxu0 0.0
      %4817 = vmatmul.mubr.f32.gmra.mrb[0].mxu0 %v4644
      %v4818 = vpop.f32.mrb[0].mxu0
      %v4819 = vadd.f32 %v4495, %v4818
      %v4820 = vpop.f32.mrb[0].mxu0
      %4821 = vmatprep.mubr.f32.mxu0 0.0
      %4822 = vmatmul.mubr.f32.gmra.mrb[0].mxu0 %v4647
      %v4823 = vpop.f32.mrb[0].mxu0
      %v4824 = vadd.f32 %v4500, %v4823
      %v4825 = vpop.f32.mrb[0].mxu0
      %4826 = vmatprep.mubr.f32.mxu0 0.0
      %4827 = vmatmul.mubr.f32.gmra.mrb[0].mxu0 %v4650
      %v4828 = vpop.f32.mrb[0].mxu0
      %v4829 = vadd.f32 %v4505, %v4828
      %v4830 = vpop.f32.mrb[0].mxu0
      %4831 = vmatprep.mubr.f32.mxu0 0.0
      %4832 = vmatmul.mubr.f32.gmra.mrb[0].mxu0 %v4653
      %v4833 = vpop.f32.mrb[0].mxu0
      %v4834 = vadd.f32 %v4510, %v4833
      %v4835 = vpop.f32.mrb[0].mxu0
      %4836 = vmatprep.mubr.f32.mxu0 0.0
      %4837 = vmatmul.mubr.f32.gmra.mrb[0].mxu0 %v4656
      %v4838 = vpop.f32.mrb[0].mxu0
      %v4839 = vadd.f32 %v4515, %v4838
      %v4840 = vpop.f32.mrb[0].mxu0
      %4841 = vmatprep.mubr.f32.mxu0 0.0
      %4842 = vmatmul.mubr.f32.gmra.mrb[0].mxu0 %v4659
      %v4843 = vpop.f32.mrb[0].mxu0
      %v4844 = vadd.f32 %v4520, %v4843
      %v4845 = vpop.f32.mrb[0].mxu0
      %4846 = vmatprep.mubr.f32.mxu0 0.0
      %4847 = vmatmul.mubr.f32.gmra.mrb[0].mxu0 %v4662
      %v4848 = vpop.f32.mrb[0].mxu0
      %v4849 = vadd.f32 %v4525, %v4848
      %v4850 = vpop.f32.mrb[0].mxu0
      %4851 = vmatprep.mubr.f32.mxu0 0.0
      %4852 = vmatmul.mubr.f32.gmra.mrb[0].mxu0 %v4665
      %v4853 = vpop.f32.mrb[0].mxu0
      %v4854 = vadd.f32 %v4530, %v4853
      %v4855 = vpop.f32.mrb[0].mxu0
      %4856 = vmatprep.mubr.f32.mxu0 0.0
      %4857 = vmatmul.mubr.f32.gmra.mrb[0].mxu0 %v4668
      %v4858 = vpop.f32.mrb[0].mxu0
      %v4859 = vadd.f32 %v4535, %v4858
      %v4860 = vpop.f32.mrb[0].mxu0
      %4861 = vmatprep.mubr.f32.mxu0 0.0
      %4862 = vmatmul.mubr.f32.gmra.mrb[0].mxu0 %v4671
      %v4863 = vpop.f32.mrb[0].mxu0
      %v4864 = vadd.f32 %v4540, %v4863
      %v4865 = vpop.f32.mrb[0].mxu0
      %4866 = vmatprep.mubr.f32.mxu0 0.0
      %4867 = vmatmul.mubr.f32.gmra.mrb[0].mxu0 %v4674
      %v4868 = vpop.f32.mrb[0].mxu0
      %v4869 = vadd.f32 %v4545, %v4868
      %v4870 = vpop.f32.mrb[0].mxu0
      %4871 = vmatprep.mubr.f32.mxu0 0.0
      %4872 = vmatmul.mubr.f32.gmra.mrb[0].mxu0 %v4677
      %v4873 = vpop.f32.mrb[0].mxu0
      %v4874 = vadd.f32 %v4550, %v4873
      %v4875 = vpop.f32.mrb[0].mxu0
      %4876 = vmatprep.mubr.f32.mxu0 0.0
      %4877 = vmatmul.mubr.f32.gmra.mrb[0].mxu0 %v4680
      %v4878 = vpop.f32.mrb[0].mxu0
      %v4879 = vadd.f32 %v4555, %v4878
      %v4880 = vpop.f32.mrb[0].mxu0
      %4881 = vmatprep.mubr.f32.mxu0 0.0
      %4882 = vmatmul.mubr.f32.gmra.mrb[0].mxu0 %v4683
      %v4883 = vpop.f32.mrb[0].mxu0
      %v4884 = vadd.f32 %v4560, %v4883
      %v4885 = vpop.f32.mrb[0].mxu0
      %4886 = vmatprep.mubr.f32.mxu0 0.0
      %4887 = vmatmul.mubr.f32.gmra.mrb[0].mxu0 %v4686
      %v4888 = vpop.f32.mrb[0].mxu0
      %v4889 = vadd.f32 %v4565, %v4888
      %v4890 = vpop.f32.mrb[0].mxu0
      %4891 = vmatprep.mubr.f32.mxu0 0.0
      %4892 = vmatmul.mubr.f32.gmra.mrb[0].mxu0 %v4689
      %v4893 = vpop.f32.mrb[0].mxu0
      %v4894 = vadd.f32 %v4570, %v4893
      %v4895 = vpop.f32.mrb[0].mxu0
      %4896 = vmatprep.mubr.f32.mxu0 0.0
      %4897 = vmatmul.mubr.f32.gmra.mrb[0].mxu0 %v4692
      %v4898 = vpop.f32.mrb[0].mxu0
      %v4899 = vadd.f32 %v4575, %v4898
      %v4900 = vpop.f32.mrb[0].mxu0
      %4901 = vmatprep.mubr.f32.mxu0 0.0
      %4902 = vmatmul.mubr.f32.gmra.mrb[0].mxu0 %v4695
      %v4903 = vpop.f32.mrb[0].mxu0
      %v4904 = vadd.f32 %v4580, %v4903
      %v4905 = vpop.f32.mrb[0].mxu0
      %4906 = vmatprep.mubr.f32.mxu0 0.0
      %4907 = vmatmul.mubr.f32.gmra.mrb[0].mxu0 %v4698
      %v4908 = vpop.f32.mrb[0].mxu0
      %v4909 = vadd.f32 %v4585, %v4908
      %v4910 = vpop.f32.mrb[0].mxu0
      %4911 = vmatprep.mubr.f32.mxu0 0.0
      %4912 = vmatmul.mubr.f32.gmra.mrb[0].mxu0 %v4701
      %v4913 = vpop.f32.mrb[0].mxu0
      %v4914 = vadd.f32 %v4590, %v4913
      %v4915 = vpop.f32.mrb[0].mxu0
      %4916 = vmatprep.mubr.f32.mxu0 0.0
      %4917 = vmatmul.mubr.f32.gmra.mrb[0].mxu0 %v4704
      %v4918 = vpop.f32.mrb[0].mxu0
      %v4919 = vadd.f32 %v4595, %v4918
      %v4920 = vpop.f32.mrb[0].mxu0
      %4921 = vmatprep.mubr.f32.mxu0 0.0
      %4922 = vmatmul.mubr.f32.gmra.mrb[0].mxu0 %v4707
      %v4923 = vpop.f32.mrb[0].mxu0
      %v4924 = vadd.f32 %v4600, %v4923
      %v4925 = vpop.f32.mrb[0].mxu0
      %4926 = vmatprep.mubr.f32.mxu0 0.0
      %4927 = vmatmul.mubr.f32.gmra.mrb[0].mxu0 %v4710
      %v4928 = vpop.f32.mrb[0].mxu0
      %v4929 = vadd.f32 %v4605, %v4928
      %v4930 = vpop.f32.mrb[0].mxu0
      %4931 = vmatprep.mubr.f32.mxu0 0.0
      %4932 = vmatmul.mubr.f32.gmra.mrb[0].mxu0 %v4713
      %v4933 = vpop.f32.mrb[0].mxu0
      %v4934 = vadd.f32 %v4610, %v4933
      %v4935 = vpop.f32.mrb[0].mxu0
      %4936 = vmatprep.mubr.f32.mxu0 0.0
      %4937 = vmatmul.mubr.f32.gmra.mrb[0].mxu0 %v4716
      %v4938 = vpop.f32.mrb[0].mxu0
      %v4939 = vadd.f32 %v4615, %v4938
      %v4940 = vpop.f32.mrb[0].mxu0
      %4941 = vmatprep.mubr.f32.mxu0 0.0
      %4942 = vmatmul.mubr.f32.gmra.mrb[0].mxu0 %v4719
      %v4943 = vpop.f32.mrb[0].mxu0
      %v4944 = vadd.f32 %v4620, %v4943
      %v4945 = vpop.f32.mrb[0].mxu0
      %4946 = vmatprep.mubr.f32.mxu0 0.0
      %4947 = vmatmul.mubr.f32.gmra.mrb[0].mxu0 %v4722
      %v4948 = vpop.f32.mrb[0].mxu0
      %v4949 = vadd.f32 %v4625, %v4948
      %v4950 = vpop.f32.mrb[0].mxu0
      %4951 = vdwg.mxu0
      %v4952 = vld [vmem:[#allocation3 + $0x2] sm:$0xff]
      %v4953 = vld [vmem:[#allocation3 + $0xa] sm:$0xff]
      %v4954 = vld [vmem:[#allocation3 + $0x1a] sm:$0xff]
      %v4955 = vld [vmem:[#allocation3 + $0x22] sm:$0xff]
      %v4956 = vld [vmem:[#allocation3 + $0x32] sm:$0xff]
      %v4957 = vld [vmem:[#allocation3 + $0x3a] sm:$0xff]
      %v4958 = vld [vmem:[#allocation3 + $0x4a] sm:$0xff]
      %v4959 = vld [vmem:[#allocation3 + $0x52] sm:$0xff]
      %v4960 = vld [vmem:[#allocation3 + $0x62] sm:$0xff]
      %v4961 = vld [vmem:[#allocation3 + $0x6a] sm:$0xff]
      %v4962 = vld [vmem:[#allocation3 + $0x7a] sm:$0xff]
      %v4963 = vld [vmem:[#allocation3 + $0x82] sm:$0xff]
      %v4964 = vld [vmem:[#allocation3 + $0x92] sm:$0xff]
      %v4965 = vld [vmem:[#allocation3 + $0x9a] sm:$0xff]
      %v4966 = vld [vmem:[#allocation3 + $0xaa] sm:$0xff]
      %v4967 = vld [vmem:[#allocation3 + $0xb2] sm:$0xff]
      %v4968 = vld [vmem:[#allocation3 + $0xc2] sm:$0xff]
      %v4969 = vld [vmem:[#allocation3 + $0xca] sm:$0xff]
      %v4970 = vld [vmem:[#allocation3 + $0xda] sm:$0xff]
      %v4971 = vld [vmem:[#allocation3 + $0xe2] sm:$0xff]
      %v4972 = vld [vmem:[#allocation3 + $0xf2] sm:$0xff]
      %v4973 = vld [vmem:[#allocation3 + $0xfa] sm:$0xff]
      %v4974 = vld [vmem:[#allocation3 + $0x10a] sm:$0xff]
      %v4975 = vld [vmem:[#allocation3 + $0x112] sm:$0xff]
      %v4976 = vld [vmem:[#allocation3 + $0x122] sm:$0xff]
      %v4977 = vld [vmem:[#allocation3 + $0x12a] sm:$0xff]
      %v4978 = vld [vmem:[#allocation3 + $0x13a] sm:$0xff]
      %v4979 = vld [vmem:[#allocation3 + $0x142] sm:$0xff]
      %v4980 = vld [vmem:[#allocation3 + $0x152] sm:$0xff]
      %v4981 = vld [vmem:[#allocation3 + $0x15a] sm:$0xff]
      %v4982 = vld [vmem:[#allocation3 + $0x16a] sm:$0xff]
      %v4983 = vld [vmem:[#allocation3 + $0x172] sm:$0xff]
      %s4984 = scalar_lea.vmem %s3, 8
      %v4985 = vld [vmem:[%s4984] sm:$0xf]
      %v4987 = vsel %vm258, %v4952, 0
      %v4990 = vsel %vm258, %v4953, 0
      %v4993 = vsel %vm258, %v4954, 0
      %v4996 = vsel %vm258, %v4955, 0
      %v4999 = vsel %vm258, %v4956, 0
      %v5002 = vsel %vm258, %v4957, 0
      %v5005 = vsel %vm258, %v4958, 0
      %v5008 = vsel %vm258, %v4959, 0
      %v5011 = vsel %vm258, %v4960, 0
      %v5014 = vsel %vm258, %v4961, 0
      %v5017 = vsel %vm258, %v4962, 0
      %v5020 = vsel %vm258, %v4963, 0
      %v5023 = vsel %vm258, %v4964, 0
      %v5026 = vsel %vm258, %v4965, 0
      %v5029 = vsel %vm258, %v4966, 0
      %v5032 = vsel %vm258, %v4967, 0
      %v5035 = vsel %vm258, %v4968, 0
      %v5038 = vsel %vm258, %v4969, 0
      %v5041 = vsel %vm258, %v4970, 0
      %v5044 = vsel %vm258, %v4971, 0
      %v5047 = vsel %vm258, %v4972, 0
      %v5050 = vsel %vm258, %v4973, 0
      %v5053 = vsel %vm258, %v4974, 0
      %v5056 = vsel %vm258, %v4975, 0
      %v5059 = vsel %vm258, %v4976, 0
      %v5062 = vsel %vm258, %v4977, 0
      %v5065 = vsel %vm258, %v4978, 0
      %v5068 = vsel %vm258, %v4979, 0
      %v5071 = vsel %vm258, %v4980, 0
      %v5074 = vsel %vm258, %v4981, 0
      %v5077 = vsel %vm258, %v4982, 0
      %v5080 = vsel %vm258, %v4983, 0
      %v5083 = vsel %vm532, %v4985, 0
      %5085 = vmatprep.subr.mxu0 0.0
      %5086 = vmatpush1.msra.mxu0 %v5083
      %5087 = vmatprep.subr.mxu0 0.0
      %5088 = vmatpush1.msra.mxu0 0.0
      %5089 = vmatprep.subr.mxu0 0.0
      %5090 = vmatpush1.msra.mxu0 0.0
      %5091 = vmatprep.subr.mxu0 0.0
      %5092 = vmatpush1.msra.mxu0 0.0
      %5093 = vmatprep.subr.mxu0 0.0
      %5094 = vmatpush1.msra.mxu0 0.0
      %5095 = vmatprep.subr.mxu0 0.0
      %5096 = vmatpush1.msra.mxu0 0.0
      %5097 = vmatprep.subr.mxu0 0.0
      %5098 = vmatpush1.msra.mxu0 0.0
      %5099 = vmatprep.subr.mxu0 0.0
      %5100 = vmatpush1.msra.mxu0 0.0
      %5101 = vmatprep.subr.mxu0 0.0
      %5102 = vmatpush1.msra.mxu0 0.0
      %5103 = vmatprep.subr.mxu0 0.0
      %5104 = vmatpush1.msra.mxu0 0.0
      %5105 = vmatprep.subr.mxu0 0.0
      %5106 = vmatpush1.msra.mxu0 0.0
      %5107 = vmatprep.subr.mxu0 0.0
      %5108 = vmatpush1.msra.mxu0 0.0
      %5109 = vmatprep.subr.mxu0 0.0
      %5110 = vmatpush1.msra.mxu0 0.0
      %5111 = vmatprep.subr.mxu0 0.0
      %5112 = vmatpush1.msra.mxu0 0.0
      %5113 = vmatprep.subr.mxu0 0.0
      %5114 = vmatpush1.msra.mxu0 0.0
      %5115 = vmatprep.subr.mxu0 0.0
      %5116 = vmatpush1.msra.mxu0 0.0
      %5117 = vmatprep.subr.mxu0 0.0
      %5118 = vmatpush1.msra.mxu0 0.0
      %5119 = vmatprep.subr.mxu0 0.0
      %5120 = vmatpush1.msra.mxu0 0.0
      %5121 = vmatprep.subr.mxu0 0.0
      %5122 = vmatpush1.msra.mxu0 0.0
      %5123 = vmatprep.subr.mxu0 0.0
      %5124 = vmatpush1.msra.mxu0 0.0
      %5125 = vmatprep.subr.mxu0 0.0
      %5126 = vmatpush1.msra.mxu0 0.0
      %5127 = vmatprep.subr.mxu0 0.0
      %5128 = vmatpush1.msra.mxu0 0.0
      %5129 = vmatprep.subr.mxu0 0.0
      %5130 = vmatpush1.msra.mxu0 0.0
      %5131 = vmatprep.subr.mxu0 0.0
      %5132 = vmatpush1.msra.mxu0 0.0
      %5133 = vmatprep.subr.mxu0 0.0
      %5134 = vmatpush1.msra.mxu0 0.0
      %5135 = vmatprep.subr.mxu0 0.0
      %5136 = vmatpush1.msra.mxu0 0.0
      %5137 = vmatprep.subr.mxu0 0.0
      %5138 = vmatpush1.msra.mxu0 0.0
      %5139 = vmatprep.subr.mxu0 0.0
      %5140 = vmatpush1.msra.mxu0 0.0
      %5141 = vmatprep.subr.mxu0 0.0
      %5142 = vmatpush1.msra.mxu0 0.0
      %5143 = vmatprep.subr.mxu0 0.0
      %5144 = vmatpush1.msra.mxu0 0.0
      %5145 = vmatprep.subr.mxu0 0.0
      %5146 = vmatpush1.msra.mxu0 0.0
      %5147 = vmatprep.subr.mxu0 0.0
      %5148 = vmatpush1.msra.mxu0 0.0
      %5149 = vmatprep.mubr.f32.mxu0 0.0
      %5150 = vmatmul.mubr.f32.gmra.mrb[0].mxu0 %v4987
      %v5151 = vpop.f32.mrb[0].mxu0
      %v5152 = vadd.f32 0.0, %v5151
      %v5153 = vpop.f32.mrb[0].mxu0
      %5154 = vmatprep.mubr.f32.mxu0 0.0
      %5155 = vmatmul.mubr.f32.gmra.mrb[0].mxu0 %v4990
      %v5156 = vpop.f32.mrb[0].mxu0
      %v5157 = vadd.f32 0.0, %v5156
      %v5158 = vpop.f32.mrb[0].mxu0
      %5159 = vmatprep.mubr.f32.mxu0 0.0
      %5160 = vmatmul.mubr.f32.gmra.mrb[0].mxu0 %v4993
      %v5161 = vpop.f32.mrb[0].mxu0
      %v5162 = vadd.f32 0.0, %v5161
      %v5163 = vpop.f32.mrb[0].mxu0
      %5164 = vmatprep.mubr.f32.mxu0 0.0
      %5165 = vmatmul.mubr.f32.gmra.mrb[0].mxu0 %v4996
      %v5166 = vpop.f32.mrb[0].mxu0
      %v5167 = vadd.f32 0.0, %v5166
      %v5168 = vpop.f32.mrb[0].mxu0
      %5169 = vmatprep.mubr.f32.mxu0 0.0
      %5170 = vmatmul.mubr.f32.gmra.mrb[0].mxu0 %v4999
      %v5171 = vpop.f32.mrb[0].mxu0
      %v5172 = vadd.f32 0.0, %v5171
      %v5173 = vpop.f32.mrb[0].mxu0
      %5174 = vmatprep.mubr.f32.mxu0 0.0
      %5175 = vmatmul.mubr.f32.gmra.mrb[0].mxu0 %v5002
      %v5176 = vpop.f32.mrb[0].mxu0
      %v5177 = vadd.f32 0.0, %v5176
      %v5178 = vpop.f32.mrb[0].mxu0
      %5179 = vmatprep.mubr.f32.mxu0 0.0
      %5180 = vmatmul.mubr.f32.gmra.mrb[0].mxu0 %v5005
      %v5181 = vpop.f32.mrb[0].mxu0
      %v5182 = vadd.f32 0.0, %v5181
      %v5183 = vpop.f32.mrb[0].mxu0
      %5184 = vmatprep.mubr.f32.mxu0 0.0
      %5185 = vmatmul.mubr.f32.gmra.mrb[0].mxu0 %v5008
      %v5186 = vpop.f32.mrb[0].mxu0
      %v5187 = vadd.f32 0.0, %v5186
      %v5188 = vpop.f32.mrb[0].mxu0
      %5189 = vmatprep.mubr.f32.mxu0 0.0
      %5190 = vmatmul.mubr.f32.gmra.mrb[0].mxu0 %v5011
      %v5191 = vpop.f32.mrb[0].mxu0
      %v5192 = vadd.f32 0.0, %v5191
      %v5193 = vpop.f32.mrb[0].mxu0
      %5194 = vmatprep.mubr.f32.mxu0 0.0
      %5195 = vmatmul.mubr.f32.gmra.mrb[0].mxu0 %v5014
      %v5196 = vpop.f32.mrb[0].mxu0
      %v5197 = vadd.f32 0.0, %v5196
      %v5198 = vpop.f32.mrb[0].mxu0
      %5199 = vmatprep.mubr.f32.mxu0 0.0
      %5200 = vmatmul.mubr.f32.gmra.mrb[0].mxu0 %v5017
      %v5201 = vpop.f32.mrb[0].mxu0
      %v5202 = vadd.f32 0.0, %v5201
      %v5203 = vpop.f32.mrb[0].mxu0
      %5204 = vmatprep.mubr.f32.mxu0 0.0
      %5205 = vmatmul.mubr.f32.gmra.mrb[0].mxu0 %v5020
      %v5206 = vpop.f32.mrb[0].mxu0
      %v5207 = vadd.f32 0.0, %v5206
      %v5208 = vpop.f32.mrb[0].mxu0
      %5209 = vmatprep.mubr.f32.mxu0 0.0
      %5210 = vmatmul.mubr.f32.gmra.mrb[0].mxu0 %v5023
      %v5211 = vpop.f32.mrb[0].mxu0
      %v5212 = vadd.f32 0.0, %v5211
      %v5213 = vpop.f32.mrb[0].mxu0
      %5214 = vmatprep.mubr.f32.mxu0 0.0
      %5215 = vmatmul.mubr.f32.gmra.mrb[0].mxu0 %v5026
      %v5216 = vpop.f32.mrb[0].mxu0
      %v5217 = vadd.f32 0.0, %v5216
      %v5218 = vpop.f32.mrb[0].mxu0
      %5219 = vmatprep.mubr.f32.mxu0 0.0
      %5220 = vmatmul.mubr.f32.gmra.mrb[0].mxu0 %v5029
      %v5221 = vpop.f32.mrb[0].mxu0
      %v5222 = vadd.f32 0.0, %v5221
      %v5223 = vpop.f32.mrb[0].mxu0
      %5224 = vmatprep.mubr.f32.mxu0 0.0
      %5225 = vmatmul.mubr.f32.gmra.mrb[0].mxu0 %v5032
      %v5226 = vpop.f32.mrb[0].mxu0
      %v5227 = vadd.f32 0.0, %v5226
      %v5228 = vpop.f32.mrb[0].mxu0
      %5229 = vmatprep.mubr.f32.mxu0 0.0
      %5230 = vmatmul.mubr.f32.gmra.mrb[0].mxu0 %v5035
      %v5231 = vpop.f32.mrb[0].mxu0
      %v5232 = vadd.f32 0.0, %v5231
      %v5233 = vpop.f32.mrb[0].mxu0
      %5234 = vmatprep.mubr.f32.mxu0 0.0
      %5235 = vmatmul.mubr.f32.gmra.mrb[0].mxu0 %v5038
      %v5236 = vpop.f32.mrb[0].mxu0
      %v5237 = vadd.f32 0.0, %v5236
      %v5238 = vpop.f32.mrb[0].mxu0
      %5239 = vmatprep.mubr.f32.mxu0 0.0
      %5240 = vmatmul.mubr.f32.gmra.mrb[0].mxu0 %v5041
      %v5241 = vpop.f32.mrb[0].mxu0
      %v5242 = vadd.f32 0.0, %v5241
      %v5243 = vpop.f32.mrb[0].mxu0
      %5244 = vmatprep.mubr.f32.mxu0 0.0
      %5245 = vmatmul.mubr.f32.gmra.mrb[0].mxu0 %v5044
      %v5246 = vpop.f32.mrb[0].mxu0
      %v5247 = vadd.f32 0.0, %v5246
      %v5248 = vpop.f32.mrb[0].mxu0
      %5249 = vmatprep.mubr.f32.mxu0 0.0
      %5250 = vmatmul.mubr.f32.gmra.mrb[0].mxu0 %v5047
      %v5251 = vpop.f32.mrb[0].mxu0
      %v5252 = vadd.f32 0.0, %v5251
      %v5253 = vpop.f32.mrb[0].mxu0
      %5254 = vmatprep.mubr.f32.mxu0 0.0
      %5255 = vmatmul.mubr.f32.gmra.mrb[0].mxu0 %v5050
      %v5256 = vpop.f32.mrb[0].mxu0
      %v5257 = vadd.f32 0.0, %v5256
      %v5258 = vpop.f32.mrb[0].mxu0
      %5259 = vmatprep.mubr.f32.mxu0 0.0
      %5260 = vmatmul.mubr.f32.gmra.mrb[0].mxu0 %v5053
      %v5261 = vpop.f32.mrb[0].mxu0
      %v5262 = vadd.f32 0.0, %v5261
      %v5263 = vpop.f32.mrb[0].mxu0
      %5264 = vmatprep.mubr.f32.mxu0 0.0
      %5265 = vmatmul.mubr.f32.gmra.mrb[0].mxu0 %v5056
      %v5266 = vpop.f32.mrb[0].mxu0
      %v5267 = vadd.f32 0.0, %v5266
      %v5268 = vpop.f32.mrb[0].mxu0
      %5269 = vmatprep.mubr.f32.mxu0 0.0
      %5270 = vmatmul.mubr.f32.gmra.mrb[0].mxu0 %v5059
      %v5271 = vpop.f32.mrb[0].mxu0
      %v5272 = vadd.f32 0.0, %v5271
      %v5273 = vpop.f32.mrb[0].mxu0
      %5274 = vmatprep.mubr.f32.mxu0 0.0
      %5275 = vmatmul.mubr.f32.gmra.mrb[0].mxu0 %v5062
      %v5276 = vpop.f32.mrb[0].mxu0
      %v5277 = vadd.f32 0.0, %v5276
      %v5278 = vpop.f32.mrb[0].mxu0
      %5279 = vmatprep.mubr.f32.mxu0 0.0
      %5280 = vmatmul.mubr.f32.gmra.mrb[0].mxu0 %v5065
      %v5281 = vpop.f32.mrb[0].mxu0
      %v5282 = vadd.f32 0.0, %v5281
      %v5283 = vpop.f32.mrb[0].mxu0
      %5284 = vmatprep.mubr.f32.mxu0 0.0
      %5285 = vmatmul.mubr.f32.gmra.mrb[0].mxu0 %v5068
      %v5286 = vpop.f32.mrb[0].mxu0
      %v5287 = vadd.f32 0.0, %v5286
      %v5288 = vpop.f32.mrb[0].mxu0
      %5289 = vmatprep.mubr.f32.mxu0 0.0
      %5290 = vmatmul.mubr.f32.gmra.mrb[0].mxu0 %v5071
      %v5291 = vpop.f32.mrb[0].mxu0
      %v5292 = vadd.f32 0.0, %v5291
      %v5293 = vpop.f32.mrb[0].mxu0
      %5294 = vmatprep.mubr.f32.mxu0 0.0
      %5295 = vmatmul.mubr.f32.gmra.mrb[0].mxu0 %v5074
      %v5296 = vpop.f32.mrb[0].mxu0
      %v5297 = vadd.f32 0.0, %v5296
      %v5298 = vpop.f32.mrb[0].mxu0
      %5299 = vmatprep.mubr.f32.mxu0 0.0
      %5300 = vmatmul.mubr.f32.gmra.mrb[0].mxu0 %v5077
      %v5301 = vpop.f32.mrb[0].mxu0
      %v5302 = vadd.f32 0.0, %v5301
      %v5303 = vpop.f32.mrb[0].mxu0
      %5304 = vmatprep.mubr.f32.mxu0 0.0
      %5305 = vmatmul.mubr.f32.gmra.mrb[0].mxu0 %v5080
      %v5306 = vpop.f32.mrb[0].mxu0
      %v5307 = vadd.f32 0.0, %v5306
      %v5308 = vpop.f32.mrb[0].mxu0
      %5309 = vdwg.mxu0
      %v5310 = vadd.f32 %v4794, %v5152
      %v5311 = vadd.f32 %v4799, %v5157
      %v5312 = vadd.f32 %v4804, %v5162
      %v5313 = vadd.f32 %v4809, %v5167
      %v5314 = vadd.f32 %v4814, %v5172
      %v5315 = vadd.f32 %v4819, %v5177
      %v5316 = vadd.f32 %v4824, %v5182
      %v5317 = vadd.f32 %v4829, %v5187
      %v5318 = vadd.f32 %v4834, %v5192
      %v5319 = vadd.f32 %v4839, %v5197
      %v5320 = vadd.f32 %v4844, %v5202
      %v5321 = vadd.f32 %v4849, %v5207
      %v5322 = vadd.f32 %v4854, %v5212
      %v5323 = vadd.f32 %v4859, %v5217
      %v5324 = vadd.f32 %v4864, %v5222
      %v5325 = vadd.f32 %v4869, %v5227
      %v5326 = vadd.f32 %v4874, %v5232
      %v5327 = vadd.f32 %v4879, %v5237
      %v5328 = vadd.f32 %v4884, %v5242
      %v5329 = vadd.f32 %v4889, %v5247
      %v5330 = vadd.f32 %v4894, %v5252
      %v5331 = vadd.f32 %v4899, %v5257
      %v5332 = vadd.f32 %v4904, %v5262
      %v5333 = vadd.f32 %v4909, %v5267
      %v5334 = vadd.f32 %v4914, %v5272
      %v5335 = vadd.f32 %v4919, %v5277
      %v5336 = vadd.f32 %v4924, %v5282
      %v5337 = vadd.f32 %v4929, %v5287
      %v5338 = vadd.f32 %v4934, %v5292
      %v5339 = vadd.f32 %v4939, %v5297
      %v5340 = vadd.f32 %v4944, %v5302
      %v5341 = vadd.f32 %v4949, %v5307
      %v5342 = vld [vmem:[%s4127] sm:$0xff]
      %v5343 = vld [vmem:[%s4127 + $0x8] sm:$0xff]
      %v5344 = vld [vmem:[%s4127 + $0x18] sm:$0xff]
      %v5345 = vld [vmem:[%s4127 + $0x20] sm:$0xff]
      %v5346 = vld [vmem:[%s4127 + $0x30] sm:$0xff]
      %v5347 = vld [vmem:[%s4127 + $0x38] sm:$0xff]
      %v5348 = vld [vmem:[%s4127 + $0x48] sm:$0xff]
      %v5349 = vld [vmem:[%s4127 + $0x50] sm:$0xff]
      %v5350 = vld [vmem:[%s4127 + $0x60] sm:$0xff]
      %v5351 = vld [vmem:[%s4127 + $0x68] sm:$0xff]
      %v5352 = vld [vmem:[%s4127 + $0x78] sm:$0xff]
      %v5353 = vld [vmem:[%s4127 + $0x80] sm:$0xff]
      %v5354 = vld [vmem:[%s4127 + $0x90] sm:$0xff]
      %v5355 = vld [vmem:[%s4127 + $0x98] sm:$0xff]
      %v5356 = vld [vmem:[%s4127 + $0xa8] sm:$0xff]
      %v5357 = vld [vmem:[%s4127 + $0xb0] sm:$0xff]
      %v5358 = vld [vmem:[%s4127 + $0xc0] sm:$0xff]
      %v5359 = vld [vmem:[%s4127 + $0xc8] sm:$0xff]
      %v5360 = vld [vmem:[%s4127 + $0xd8] sm:$0xff]
      %v5361 = vld [vmem:[%s4127 + $0xe0] sm:$0xff]
      %v5362 = vld [vmem:[%s4127 + $0xf0] sm:$0xff]
      %v5363 = vld [vmem:[%s4127 + $0xf8] sm:$0xff]
      %v5364 = vld [vmem:[%s4127 + $0x108] sm:$0xff]
      %v5365 = vld [vmem:[%s4127 + $0x110] sm:$0xff]
      %v5366 = vld [vmem:[%s4127 + $0x120] sm:$0xff]
      %v5367 = vld [vmem:[%s4127 + $0x128] sm:$0xff]
      %v5368 = vld [vmem:[%s4127 + $0x138] sm:$0xff]
      %v5369 = vld [vmem:[%s4127 + $0x140] sm:$0xff]
      %v5370 = vld [vmem:[%s4127 + $0x150] sm:$0xff]
      %v5371 = vld [vmem:[%s4127 + $0x158] sm:$0xff]
      %v5372 = vld [vmem:[%s4127 + $0x168] sm:$0xff]
      %v5373 = vld [vmem:[%s4127 + $0x170] sm:$0xff]
      %s5374 = scalar_lea.vmem %s3, 12
      %v5375 = vld [vmem:[%s5374] sm:$0xf]
      %v5377 = vsel %vm258, %v5342, 0
      %v5380 = vsel %vm258, %v5343, 0
      %v5383 = vsel %vm258, %v5344, 0
      %v5386 = vsel %vm258, %v5345, 0
      %v5389 = vsel %vm258, %v5346, 0
      %v5392 = vsel %vm258, %v5347, 0
      %v5395 = vsel %vm258, %v5348, 0
      %v5398 = vsel %vm258, %v5349, 0
      %v5401 = vsel %vm258, %v5350, 0
      %v5404 = vsel %vm258, %v5351, 0
      %v5407 = vsel %vm258, %v5352, 0
      %v5410 = vsel %vm258, %v5353, 0
      %v5413 = vsel %vm258, %v5354, 0
      %v5416 = vsel %vm258, %v5355, 0
      %v5419 = vsel %vm258, %v5356, 0
      %v5422 = vsel %vm258, %v5357, 0
      %v5425 = vsel %vm258, %v5358, 0
      %v5428 = vsel %vm258, %v5359, 0
      %v5431 = vsel %vm258, %v5360, 0
      %v5434 = vsel %vm258, %v5361, 0
      %v5437 = vsel %vm258, %v5362, 0
      %v5440 = vsel %vm258, %v5363, 0
      %v5443 = vsel %vm258, %v5364, 0
      %v5446 = vsel %vm258, %v5365, 0
      %v5449 = vsel %vm258, %v5366, 0
      %v5452 = vsel %vm258, %v5367, 0
      %v5455 = vsel %vm258, %v5368, 0
      %v5458 = vsel %vm258, %v5369, 0
      %v5461 = vsel %vm258, %v5370, 0
      %v5464 = vsel %vm258, %v5371, 0
      %v5467 = vsel %vm258, %v5372, 0
      %v5470 = vsel %vm258, %v5373, 0
      %v5473 = vsel %vm532, %v5375, 0
      %5475 = vmatprep.subr.mxu0 0.0
      %5476 = vmatpush1.msra.mxu0 %v5473
      %5477 = vmatprep.subr.mxu0 0.0
      %5478 = vmatpush1.msra.mxu0 0.0
      %5479 = vmatprep.subr.mxu0 0.0
      %5480 = vmatpush1.msra.mxu0 0.0
      %5481 = vmatprep.subr.mxu0 0.0
      %5482 = vmatpush1.msra.mxu0 0.0
      %5483 = vmatprep.subr.mxu0 0.0
      %5484 = vmatpush1.msra.mxu0 0.0
      %5485 = vmatprep.subr.mxu0 0.0
      %5486 = vmatpush1.msra.mxu0 0.0
      %5487 = vmatprep.subr.mxu0 0.0
      %5488 = vmatpush1.msra.mxu0 0.0
      %5489 = vmatprep.subr.mxu0 0.0
      %5490 = vmatpush1.msra.mxu0 0.0
      %5491 = vmatprep.subr.mxu0 0.0
      %5492 = vmatpush1.msra.mxu0 0.0
      %5493 = vmatprep.subr.mxu0 0.0
      %5494 = vmatpush1.msra.mxu0 0.0
      %5495 = vmatprep.subr.mxu0 0.0
      %5496 = vmatpush1.msra.mxu0 0.0
      %5497 = vmatprep.subr.mxu0 0.0
      %5498 = vmatpush1.msra.mxu0 0.0
      %5499 = vmatprep.subr.mxu0 0.0
      %5500 = vmatpush1.msra.mxu0 0.0
      %5501 = vmatprep.subr.mxu0 0.0
      %5502 = vmatpush1.msra.mxu0 0.0
      %5503 = vmatprep.subr.mxu0 0.0
      %5504 = vmatpush1.msra.mxu0 0.0
      %5505 = vmatprep.subr.mxu0 0.0
      %5506 = vmatpush1.msra.mxu0 0.0
      %5507 = vmatprep.subr.mxu0 0.0
      %5508 = vmatpush1.msra.mxu0 0.0
      %5509 = vmatprep.subr.mxu0 0.0
      %5510 = vmatpush1.msra.mxu0 0.0
      %5511 = vmatprep.subr.mxu0 0.0
      %5512 = vmatpush1.msra.mxu0 0.0
      %5513 = vmatprep.subr.mxu0 0.0
      %5514 = vmatpush1.msra.mxu0 0.0
      %5515 = vmatprep.subr.mxu0 0.0
      %5516 = vmatpush1.msra.mxu0 0.0
      %5517 = vmatprep.subr.mxu0 0.0
      %5518 = vmatpush1.msra.mxu0 0.0
      %5519 = vmatprep.subr.mxu0 0.0
      %5520 = vmatpush1.msra.mxu0 0.0
      %5521 = vmatprep.subr.mxu0 0.0
      %5522 = vmatpush1.msra.mxu0 0.0
      %5523 = vmatprep.subr.mxu0 0.0
      %5524 = vmatpush1.msra.mxu0 0.0
      %5525 = vmatprep.subr.mxu0 0.0
      %5526 = vmatpush1.msra.mxu0 0.0
      %5527 = vmatprep.subr.mxu0 0.0
      %5528 = vmatpush1.msra.mxu0 0.0
      %5529 = vmatprep.subr.mxu0 0.0
      %5530 = vmatpush1.msra.mxu0 0.0
      %5531 = vmatprep.subr.mxu0 0.0
      %5532 = vmatpush1.msra.mxu0 0.0
      %5533 = vmatprep.subr.mxu0 0.0
      %5534 = vmatpush1.msra.mxu0 0.0
      %5535 = vmatprep.subr.mxu0 0.0
      %5536 = vmatpush1.msra.mxu0 0.0
      %5537 = vmatprep.subr.mxu0 0.0
      %5538 = vmatpush1.msra.mxu0 0.0
      %5539 = vmatprep.mubr.f32.mxu0 0.0
      %5540 = vmatmul.mubr.f32.gmra.mrb[0].mxu0 %v5377
      %v5541 = vpop.f32.mrb[0].mxu0
      %v5542 = vadd.f32 0.0, %v5541
      %v5543 = vpop.f32.mrb[0].mxu0
      %5544 = vmatprep.mubr.f32.mxu0 0.0
      %5545 = vmatmul.mubr.f32.gmra.mrb[0].mxu0 %v5380
      %v5546 = vpop.f32.mrb[0].mxu0
      %v5547 = vadd.f32 0.0, %v5546
      %v5548 = vpop.f32.mrb[0].mxu0
      %5549 = vmatprep.mubr.f32.mxu0 0.0
      %5550 = vmatmul.mubr.f32.gmra.mrb[0].mxu0 %v5383
      %v5551 = vpop.f32.mrb[0].mxu0
      %v5552 = vadd.f32 0.0, %v5551
      %v5553 = vpop.f32.mrb[0].mxu0
      %5554 = vmatprep.mubr.f32.mxu0 0.0
      %5555 = vmatmul.mubr.f32.gmra.mrb[0].mxu0 %v5386
      %v5556 = vpop.f32.mrb[0].mxu0
      %v5557 = vadd.f32 0.0, %v5556
      %v5558 = vpop.f32.mrb[0].mxu0
      %5559 = vmatprep.mubr.f32.mxu0 0.0
      %5560 = vmatmul.mubr.f32.gmra.mrb[0].mxu0 %v5389
      %v5561 = vpop.f32.mrb[0].mxu0
      %v5562 = vadd.f32 0.0, %v5561
      %v5563 = vpop.f32.mrb[0].mxu0
      %5564 = vmatprep.mubr.f32.mxu0 0.0
      %5565 = vmatmul.mubr.f32.gmra.mrb[0].mxu0 %v5392
      %v5566 = vpop.f32.mrb[0].mxu0
      %v5567 = vadd.f32 0.0, %v5566
      %v5568 = vpop.f32.mrb[0].mxu0
      %5569 = vmatprep.mubr.f32.mxu0 0.0
      %5570 = vmatmul.mubr.f32.gmra.mrb[0].mxu0 %v5395
      %v5571 = vpop.f32.mrb[0].mxu0
      %v5572 = vadd.f32 0.0, %v5571
      %v5573 = vpop.f32.mrb[0].mxu0
      %5574 = vmatprep.mubr.f32.mxu0 0.0
      %5575 = vmatmul.mubr.f32.gmra.mrb[0].mxu0 %v5398
      %v5576 = vpop.f32.mrb[0].mxu0
      %v5577 = vadd.f32 0.0, %v5576
      %v5578 = vpop.f32.mrb[0].mxu0
      %5579 = vmatprep.mubr.f32.mxu0 0.0
      %5580 = vmatmul.mubr.f32.gmra.mrb[0].mxu0 %v5401
      %v5581 = vpop.f32.mrb[0].mxu0
      %v5582 = vadd.f32 0.0, %v5581
      %v5583 = vpop.f32.mrb[0].mxu0
      %5584 = vmatprep.mubr.f32.mxu0 0.0
      %5585 = vmatmul.mubr.f32.gmra.mrb[0].mxu0 %v5404
      %v5586 = vpop.f32.mrb[0].mxu0
      %v5587 = vadd.f32 0.0, %v5586
      %v5588 = vpop.f32.mrb[0].mxu0
      %5589 = vmatprep.mubr.f32.mxu0 0.0
      %5590 = vmatmul.mubr.f32.gmra.mrb[0].mxu0 %v5407
      %v5591 = vpop.f32.mrb[0].mxu0
      %v5592 = vadd.f32 0.0, %v5591
      %v5593 = vpop.f32.mrb[0].mxu0
      %5594 = vmatprep.mubr.f32.mxu0 0.0
      %5595 = vmatmul.mubr.f32.gmra.mrb[0].mxu0 %v5410
      %v5596 = vpop.f32.mrb[0].mxu0
      %v5597 = vadd.f32 0.0, %v5596
      %v5598 = vpop.f32.mrb[0].mxu0
      %5599 = vmatprep.mubr.f32.mxu0 0.0
      %5600 = vmatmul.mubr.f32.gmra.mrb[0].mxu0 %v5413
      %v5601 = vpop.f32.mrb[0].mxu0
      %v5602 = vadd.f32 0.0, %v5601
      %v5603 = vpop.f32.mrb[0].mxu0
      %5604 = vmatprep.mubr.f32.mxu0 0.0
      %5605 = vmatmul.mubr.f32.gmra.mrb[0].mxu0 %v5416
      %v5606 = vpop.f32.mrb[0].mxu0
      %v5607 = vadd.f32 0.0, %v5606
      %v5608 = vpop.f32.mrb[0].mxu0
      %5609 = vmatprep.mubr.f32.mxu0 0.0
      %5610 = vmatmul.mubr.f32.gmra.mrb[0].mxu0 %v5419
      %v5611 = vpop.f32.mrb[0].mxu0
      %v5612 = vadd.f32 0.0, %v5611
      %v5613 = vpop.f32.mrb[0].mxu0
      %5614 = vmatprep.mubr.f32.mxu0 0.0
      %5615 = vmatmul.mubr.f32.gmra.mrb[0].mxu0 %v5422
      %v5616 = vpop.f32.mrb[0].mxu0
      %v5617 = vadd.f32 0.0, %v5616
      %v5618 = vpop.f32.mrb[0].mxu0
      %5619 = vmatprep.mubr.f32.mxu0 0.0
      %5620 = vmatmul.mubr.f32.gmra.mrb[0].mxu0 %v5425
      %v5621 = vpop.f32.mrb[0].mxu0
      %v5622 = vadd.f32 0.0, %v5621
      %v5623 = vpop.f32.mrb[0].mxu0
      %5624 = vmatprep.mubr.f32.mxu0 0.0
      %5625 = vmatmul.mubr.f32.gmra.mrb[0].mxu0 %v5428
      %v5626 = vpop.f32.mrb[0].mxu0
      %v5627 = vadd.f32 0.0, %v5626
      %v5628 = vpop.f32.mrb[0].mxu0
      %5629 = vmatprep.mubr.f32.mxu0 0.0
      %5630 = vmatmul.mubr.f32.gmra.mrb[0].mxu0 %v5431
      %v5631 = vpop.f32.mrb[0].mxu0
      %v5632 = vadd.f32 0.0, %v5631
      %v5633 = vpop.f32.mrb[0].mxu0
      %5634 = vmatprep.mubr.f32.mxu0 0.0
      %5635 = vmatmul.mubr.f32.gmra.mrb[0].mxu0 %v5434
      %v5636 = vpop.f32.mrb[0].mxu0
      %v5637 = vadd.f32 0.0, %v5636
      %v5638 = vpop.f32.mrb[0].mxu0
      %5639 = vmatprep.mubr.f32.mxu0 0.0
      %5640 = vmatmul.mubr.f32.gmra.mrb[0].mxu0 %v5437
      %v5641 = vpop.f32.mrb[0].mxu0
      %v5642 = vadd.f32 0.0, %v5641
      %v5643 = vpop.f32.mrb[0].mxu0
      %5644 = vmatprep.mubr.f32.mxu0 0.0
      %5645 = vmatmul.mubr.f32.gmra.mrb[0].mxu0 %v5440
      %v5646 = vpop.f32.mrb[0].mxu0
      %v5647 = vadd.f32 0.0, %v5646
      %v5648 = vpop.f32.mrb[0].mxu0
      %5649 = vmatprep.mubr.f32.mxu0 0.0
      %5650 = vmatmul.mubr.f32.gmra.mrb[0].mxu0 %v5443
      %v5651 = vpop.f32.mrb[0].mxu0
      %v5652 = vadd.f32 0.0, %v5651
      %v5653 = vpop.f32.mrb[0].mxu0
      %5654 = vmatprep.mubr.f32.mxu0 0.0
      %5655 = vmatmul.mubr.f32.gmra.mrb[0].mxu0 %v5446
      %v5656 = vpop.f32.mrb[0].mxu0
      %v5657 = vadd.f32 0.0, %v5656
      %v5658 = vpop.f32.mrb[0].mxu0
      %5659 = vmatprep.mubr.f32.mxu0 0.0
      %5660 = vmatmul.mubr.f32.gmra.mrb[0].mxu0 %v5449
      %v5661 = vpop.f32.mrb[0].mxu0
      %v5662 = vadd.f32 0.0, %v5661
      %v5663 = vpop.f32.mrb[0].mxu0
      %5664 = vmatprep.mubr.f32.mxu0 0.0
      %5665 = vmatmul.mubr.f32.gmra.mrb[0].mxu0 %v5452
      %v5666 = vpop.f32.mrb[0].mxu0
      %v5667 = vadd.f32 0.0, %v5666
      %v5668 = vpop.f32.mrb[0].mxu0
      %5669 = vmatprep.mubr.f32.mxu0 0.0
      %5670 = vmatmul.mubr.f32.gmra.mrb[0].mxu0 %v5455
      %v5671 = vpop.f32.mrb[0].mxu0
      %v5672 = vadd.f32 0.0, %v5671
      %v5673 = vpop.f32.mrb[0].mxu0
      %5674 = vmatprep.mubr.f32.mxu0 0.0
      %5675 = vmatmul.mubr.f32.gmra.mrb[0].mxu0 %v5458
      %v5676 = vpop.f32.mrb[0].mxu0
      %v5677 = vadd.f32 0.0, %v5676
      %v5678 = vpop.f32.mrb[0].mxu0
      %5679 = vmatprep.mubr.f32.mxu0 0.0
      %5680 = vmatmul.mubr.f32.gmra.mrb[0].mxu0 %v5461
      %v5681 = vpop.f32.mrb[0].mxu0
      %v5682 = vadd.f32 0.0, %v5681
      %v5683 = vpop.f32.mrb[0].mxu0
      %5684 = vmatprep.mubr.f32.mxu0 0.0
      %5685 = vmatmul.mubr.f32.gmra.mrb[0].mxu0 %v5464
      %v5686 = vpop.f32.mrb[0].mxu0
      %v5687 = vadd.f32 0.0, %v5686
      %v5688 = vpop.f32.mrb[0].mxu0
      %5689 = vmatprep.mubr.f32.mxu0 0.0
      %5690 = vmatmul.mubr.f32.gmra.mrb[0].mxu0 %v5467
      %v5691 = vpop.f32.mrb[0].mxu0
      %v5692 = vadd.f32 0.0, %v5691
      %v5693 = vpop.f32.mrb[0].mxu0
      %5694 = vmatprep.mubr.f32.mxu0 0.0
      %5695 = vmatmul.mubr.f32.gmra.mrb[0].mxu0 %v5470
      %v5696 = vpop.f32.mrb[0].mxu0
      %v5697 = vadd.f32 0.0, %v5696
      %v5698 = vpop.f32.mrb[0].mxu0
      %5699 = vdwg.mxu0
      %v5700 = vadd.f32 %v5310, %v5542
      %v5701 = vadd.f32 %v5311, %v5547
      %v5702 = vadd.f32 %v5312, %v5552
      %v5703 = vadd.f32 %v5313, %v5557
      %v5704 = vadd.f32 %v5314, %v5562
      %v5705 = vadd.f32 %v5315, %v5567
      %v5706 = vadd.f32 %v5316, %v5572
      %v5707 = vadd.f32 %v5317, %v5577
      %v5708 = vadd.f32 %v5318, %v5582
      %v5709 = vadd.f32 %v5319, %v5587
      %v5710 = vadd.f32 %v5320, %v5592
      %v5711 = vadd.f32 %v5321, %v5597
      %v5712 = vadd.f32 %v5322, %v5602
      %v5713 = vadd.f32 %v5323, %v5607
      %v5714 = vadd.f32 %v5324, %v5612
      %v5715 = vadd.f32 %v5325, %v5617
      %v5716 = vadd.f32 %v5326, %v5622
      %v5717 = vadd.f32 %v5327, %v5627
      %v5718 = vadd.f32 %v5328, %v5632
      %v5719 = vadd.f32 %v5329, %v5637
      %v5720 = vadd.f32 %v5330, %v5642
      %v5721 = vadd.f32 %v5331, %v5647
      %v5722 = vadd.f32 %v5332, %v5652
      %v5723 = vadd.f32 %v5333, %v5657
      %v5724 = vadd.f32 %v5334, %v5662
      %v5725 = vadd.f32 %v5335, %v5667
      %v5726 = vadd.f32 %v5336, %v5672
      %v5727 = vadd.f32 %v5337, %v5677
      %v5728 = vadd.f32 %v5338, %v5682
      %v5729 = vadd.f32 %v5339, %v5687
      %v5730 = vadd.f32 %v5340, %v5692
      %v5731 = vadd.f32 %v5341, %v5697
      %v5732 = vld [vmem:[%s4127 + $0x1] sm:$0xff]
      %v5733 = vld [vmem:[%s4127 + $0x9] sm:$0xff]
      %v5734 = vld [vmem:[%s4127 + $0x19] sm:$0xff]
      %v5735 = vld [vmem:[%s4127 + $0x21] sm:$0xff]
      %v5736 = vld [vmem:[%s4127 + $0x31] sm:$0xff]
      %v5737 = vld [vmem:[%s4127 + $0x39] sm:$0xff]
      %v5738 = vld [vmem:[%s4127 + $0x49] sm:$0xff]
      %v5739 = vld [vmem:[%s4127 + $0x51] sm:$0xff]
      %v5740 = vld [vmem:[%s4127 + $0x61] sm:$0xff]
      %v5741 = vld [vmem:[%s4127 + $0x69] sm:$0xff]
      %v5742 = vld [vmem:[%s4127 + $0x79] sm:$0xff]
      %v5743 = vld [vmem:[%s4127 + $0x81] sm:$0xff]
      %v5744 = vld [vmem:[%s4127 + $0x91] sm:$0xff]
      %v5745 = vld [vmem:[%s4127 + $0x99] sm:$0xff]
      %v5746 = vld [vmem:[%s4127 + $0xa9] sm:$0xff]
      %v5747 = vld [vmem:[%s4127 + $0xb1] sm:$0xff]
      %v5748 = vld [vmem:[%s4127 + $0xc1] sm:$0xff]
      %v5749 = vld [vmem:[%s4127 + $0xc9] sm:$0xff]
      %v5750 = vld [vmem:[%s4127 + $0xd9] sm:$0xff]
      %v5751 = vld [vmem:[%s4127 + $0xe1] sm:$0xff]
      %v5752 = vld [vmem:[%s4127 + $0xf1] sm:$0xff]
      %v5753 = vld [vmem:[%s4127 + $0xf9] sm:$0xff]
      %v5754 = vld [vmem:[%s4127 + $0x109] sm:$0xff]
      %v5755 = vld [vmem:[%s4127 + $0x111] sm:$0xff]
      %v5756 = vld [vmem:[%s4127 + $0x121] sm:$0xff]
      %v5757 = vld [vmem:[%s4127 + $0x129] sm:$0xff]
      %v5758 = vld [vmem:[%s4127 + $0x139] sm:$0xff]
      %v5759 = vld [vmem:[%s4127 + $0x141] sm:$0xff]
      %v5760 = vld [vmem:[%s4127 + $0x151] sm:$0xff]
      %v5761 = vld [vmem:[%s4127 + $0x159] sm:$0xff]
      %v5762 = vld [vmem:[%s4127 + $0x169] sm:$0xff]
      %v5763 = vld [vmem:[%s4127 + $0x171] sm:$0xff]
      %s5764 = scalar_lea.vmem %s3, 16
      %v5765 = vld [vmem:[%s5764] sm:$0xf]
      %v5767 = vsel %vm258, %v5732, 0
      %v5770 = vsel %vm258, %v5733, 0
      %v5773 = vsel %vm258, %v5734, 0
      %v5776 = vsel %vm258, %v5735, 0
      %v5779 = vsel %vm258, %v5736, 0
      %v5782 = vsel %vm258, %v5737, 0
      %v5785 = vsel %vm258, %v5738, 0
      %v5788 = vsel %vm258, %v5739, 0
      %v5791 = vsel %vm258, %v5740, 0
      %v5794 = vsel %vm258, %v5741, 0
      %v5797 = vsel %vm258, %v5742, 0
      %v5800 = vsel %vm258, %v5743, 0
      %v5803 = vsel %vm258, %v5744, 0
      %v5806 = vsel %vm258, %v5745, 0
      %v5809 = vsel %vm258, %v5746, 0
      %v5812 = vsel %vm258, %v5747, 0
      %v5815 = vsel %vm258, %v5748, 0
      %v5818 = vsel %vm258, %v5749, 0
      %v5821 = vsel %vm258, %v5750, 0
      %v5824 = vsel %vm258, %v5751, 0
      %v5827 = vsel %vm258, %v5752, 0
      %v5830 = vsel %vm258, %v5753, 0
      %v5833 = vsel %vm258, %v5754, 0
      %v5836 = vsel %vm258, %v5755, 0
      %v5839 = vsel %vm258, %v5756, 0
      %v5842 = vsel %vm258, %v5757, 0
      %v5845 = vsel %vm258, %v5758, 0
      %v5848 = vsel %vm258, %v5759, 0
      %v5851 = vsel %vm258, %v5760, 0
      %v5854 = vsel %vm258, %v5761, 0
      %v5857 = vsel %vm258, %v5762, 0
      %v5860 = vsel %vm258, %v5763, 0
      %v5863 = vsel %vm532, %v5765, 0
      %5865 = vmatprep.subr.mxu0 0.0
      %5866 = vmatpush1.msra.mxu0 %v5863
      %5867 = vmatprep.subr.mxu0 0.0
      %5868 = vmatpush1.msra.mxu0 0.0
      %5869 = vmatprep.subr.mxu0 0.0
      %5870 = vmatpush1.msra.mxu0 0.0
      %5871 = vmatprep.subr.mxu0 0.0
      %5872 = vmatpush1.msra.mxu0 0.0
      %5873 = vmatprep.subr.mxu0 0.0
      %5874 = vmatpush1.msra.mxu0 0.0
      %5875 = vmatprep.subr.mxu0 0.0
      %5876 = vmatpush1.msra.mxu0 0.0
      %5877 = vmatprep.subr.mxu0 0.0
      %5878 = vmatpush1.msra.mxu0 0.0
      %5879 = vmatprep.subr.mxu0 0.0
      %5880 = vmatpush1.msra.mxu0 0.0
      %5881 = vmatprep.subr.mxu0 0.0
      %5882 = vmatpush1.msra.mxu0 0.0
      %5883 = vmatprep.subr.mxu0 0.0
      %5884 = vmatpush1.msra.mxu0 0.0
      %5885 = vmatprep.subr.mxu0 0.0
      %5886 = vmatpush1.msra.mxu0 0.0
      %5887 = vmatprep.subr.mxu0 0.0
      %5888 = vmatpush1.msra.mxu0 0.0
      %5889 = vmatprep.subr.mxu0 0.0
      %5890 = vmatpush1.msra.mxu0 0.0
      %5891 = vmatprep.subr.mxu0 0.0
      %5892 = vmatpush1.msra.mxu0 0.0
      %5893 = vmatprep.subr.mxu0 0.0
      %5894 = vmatpush1.msra.mxu0 0.0
      %5895 = vmatprep.subr.mxu0 0.0
      %5896 = vmatpush1.msra.mxu0 0.0
      %5897 = vmatprep.subr.mxu0 0.0
      %5898 = vmatpush1.msra.mxu0 0.0
      %5899 = vmatprep.subr.mxu0 0.0
      %5900 = vmatpush1.msra.mxu0 0.0
      %5901 = vmatprep.subr.mxu0 0.0
      %5902 = vmatpush1.msra.mxu0 0.0
      %5903 = vmatprep.subr.mxu0 0.0
      %5904 = vmatpush1.msra.mxu0 0.0
      %5905 = vmatprep.subr.mxu0 0.0
      %5906 = vmatpush1.msra.mxu0 0.0
      %5907 = vmatprep.subr.mxu0 0.0
      %5908 = vmatpush1.msra.mxu0 0.0
      %5909 = vmatprep.subr.mxu0 0.0
      %5910 = vmatpush1.msra.mxu0 0.0
      %5911 = vmatprep.subr.mxu0 0.0
      %5912 = vmatpush1.msra.mxu0 0.0
      %5913 = vmatprep.subr.mxu0 0.0
      %5914 = vmatpush1.msra.mxu0 0.0
      %5915 = vmatprep.subr.mxu0 0.0
      %5916 = vmatpush1.msra.mxu0 0.0
      %5917 = vmatprep.subr.mxu0 0.0
      %5918 = vmatpush1.msra.mxu0 0.0
      %5919 = vmatprep.subr.mxu0 0.0
      %5920 = vmatpush1.msra.mxu0 0.0
      %5921 = vmatprep.subr.mxu0 0.0
      %5922 = vmatpush1.msra.mxu0 0.0
      %5923 = vmatprep.subr.mxu0 0.0
      %5924 = vmatpush1.msra.mxu0 0.0
      %5925 = vmatprep.subr.mxu0 0.0
      %5926 = vmatpush1.msra.mxu0 0.0
      %5927 = vmatprep.subr.mxu0 0.0
      %5928 = vmatpush1.msra.mxu0 0.0
      %5929 = vmatprep.mubr.f32.mxu0 0.0
      %5930 = vmatmul.mubr.f32.gmra.mrb[0].mxu0 %v5767
      %v5931 = vpop.f32.mrb[0].mxu0
      %v5932 = vadd.f32 0.0, %v5931
      %v5933 = vpop.f32.mrb[0].mxu0
      %5934 = vmatprep.mubr.f32.mxu0 0.0
      %5935 = vmatmul.mubr.f32.gmra.mrb[0].mxu0 %v5770
      %v5936 = vpop.f32.mrb[0].mxu0
      %v5937 = vadd.f32 0.0, %v5936
      %v5938 = vpop.f32.mrb[0].mxu0
      %5939 = vmatprep.mubr.f32.mxu0 0.0
      %5940 = vmatmul.mubr.f32.gmra.mrb[0].mxu0 %v5773
      %v5941 = vpop.f32.mrb[0].mxu0
      %v5942 = vadd.f32 0.0, %v5941
      %v5943 = vpop.f32.mrb[0].mxu0
      %5944 = vmatprep.mubr.f32.mxu0 0.0
      %5945 = vmatmul.mubr.f32.gmra.mrb[0].mxu0 %v5776
      %v5946 = vpop.f32.mrb[0].mxu0
      %v5947 = vadd.f32 0.0, %v5946
      %v5948 = vpop.f32.mrb[0].mxu0
      %5949 = vmatprep.mubr.f32.mxu0 0.0
      %5950 = vmatmul.mubr.f32.gmra.mrb[0].mxu0 %v5779
      %v5951 = vpop.f32.mrb[0].mxu0
      %v5952 = vadd.f32 0.0, %v5951
      %v5953 = vpop.f32.mrb[0].mxu0
      %5954 = vmatprep.mubr.f32.mxu0 0.0
      %5955 = vmatmul.mubr.f32.gmra.mrb[0].mxu0 %v5782
      %v5956 = vpop.f32.mrb[0].mxu0
      %v5957 = vadd.f32 0.0, %v5956
      %v5958 = vpop.f32.mrb[0].mxu0
      %5959 = vmatprep.mubr.f32.mxu0 0.0
      %5960 = vmatmul.mubr.f32.gmra.mrb[0].mxu0 %v5785
      %v5961 = vpop.f32.mrb[0].mxu0
      %v5962 = vadd.f32 0.0, %v5961
      %v5963 = vpop.f32.mrb[0].mxu0
      %5964 = vmatprep.mubr.f32.mxu0 0.0
      %5965 = vmatmul.mubr.f32.gmra.mrb[0].mxu0 %v5788
      %v5966 = vpop.f32.mrb[0].mxu0
      %v5967 = vadd.f32 0.0, %v5966
      %v5968 = vpop.f32.mrb[0].mxu0
      %5969 = vmatprep.mubr.f32.mxu0 0.0
      %5970 = vmatmul.mubr.f32.gmra.mrb[0].mxu0 %v5791
      %v5971 = vpop.f32.mrb[0].mxu0
      %v5972 = vadd.f32 0.0, %v5971
      %v5973 = vpop.f32.mrb[0].mxu0
      %5974 = vmatprep.mubr.f32.mxu0 0.0
      %5975 = vmatmul.mubr.f32.gmra.mrb[0].mxu0 %v5794
      %v5976 = vpop.f32.mrb[0].mxu0
      %v5977 = vadd.f32 0.0, %v5976
      %v5978 = vpop.f32.mrb[0].mxu0
      %5979 = vmatprep.mubr.f32.mxu0 0.0
      %5980 = vmatmul.mubr.f32.gmra.mrb[0].mxu0 %v5797
      %v5981 = vpop.f32.mrb[0].mxu0
      %v5982 = vadd.f32 0.0, %v5981
      %v5983 = vpop.f32.mrb[0].mxu0
      %5984 = vmatprep.mubr.f32.mxu0 0.0
      %5985 = vmatmul.mubr.f32.gmra.mrb[0].mxu0 %v5800
      %v5986 = vpop.f32.mrb[0].mxu0
      %v5987 = vadd.f32 0.0, %v5986
      %v5988 = vpop.f32.mrb[0].mxu0
      %5989 = vmatprep.mubr.f32.mxu0 0.0
      %5990 = vmatmul.mubr.f32.gmra.mrb[0].mxu0 %v5803
      %v5991 = vpop.f32.mrb[0].mxu0
      %v5992 = vadd.f32 0.0, %v5991
      %v5993 = vpop.f32.mrb[0].mxu0
      %5994 = vmatprep.mubr.f32.mxu0 0.0
      %5995 = vmatmul.mubr.f32.gmra.mrb[0].mxu0 %v5806
      %v5996 = vpop.f32.mrb[0].mxu0
      %v5997 = vadd.f32 0.0, %v5996
      %v5998 = vpop.f32.mrb[0].mxu0
      %5999 = vmatprep.mubr.f32.mxu0 0.0
      %6000 = vmatmul.mubr.f32.gmra.mrb[0].mxu0 %v5809
      %v6001 = vpop.f32.mrb[0].mxu0
      %v6002 = vadd.f32 0.0, %v6001
      %v6003 = vpop.f32.mrb[0].mxu0
      %6004 = vmatprep.mubr.f32.mxu0 0.0
      %6005 = vmatmul.mubr.f32.gmra.mrb[0].mxu0 %v5812
      %v6006 = vpop.f32.mrb[0].mxu0
      %v6007 = vadd.f32 0.0, %v6006
      %v6008 = vpop.f32.mrb[0].mxu0
      %6009 = vmatprep.mubr.f32.mxu0 0.0
      %6010 = vmatmul.mubr.f32.gmra.mrb[0].mxu0 %v5815
      %v6011 = vpop.f32.mrb[0].mxu0
      %v6012 = vadd.f32 0.0, %v6011
      %v6013 = vpop.f32.mrb[0].mxu0
      %6014 = vmatprep.mubr.f32.mxu0 0.0
      %6015 = vmatmul.mubr.f32.gmra.mrb[0].mxu0 %v5818
      %v6016 = vpop.f32.mrb[0].mxu0
      %v6017 = vadd.f32 0.0, %v6016
      %v6018 = vpop.f32.mrb[0].mxu0
      %6019 = vmatprep.mubr.f32.mxu0 0.0
      %6020 = vmatmul.mubr.f32.gmra.mrb[0].mxu0 %v5821
      %v6021 = vpop.f32.mrb[0].mxu0
      %v6022 = vadd.f32 0.0, %v6021
      %v6023 = vpop.f32.mrb[0].mxu0
      %6024 = vmatprep.mubr.f32.mxu0 0.0
      %6025 = vmatmul.mubr.f32.gmra.mrb[0].mxu0 %v5824
      %v6026 = vpop.f32.mrb[0].mxu0
      %v6027 = vadd.f32 0.0, %v6026
      %v6028 = vpop.f32.mrb[0].mxu0
      %6029 = vmatprep.mubr.f32.mxu0 0.0
      %6030 = vmatmul.mubr.f32.gmra.mrb[0].mxu0 %v5827
      %v6031 = vpop.f32.mrb[0].mxu0
      %v6032 = vadd.f32 0.0, %v6031
      %v6033 = vpop.f32.mrb[0].mxu0
      %6034 = vmatprep.mubr.f32.mxu0 0.0
      %6035 = vmatmul.mubr.f32.gmra.mrb[0].mxu0 %v5830
      %v6036 = vpop.f32.mrb[0].mxu0
      %v6037 = vadd.f32 0.0, %v6036
      %v6038 = vpop.f32.mrb[0].mxu0
      %6039 = vmatprep.mubr.f32.mxu0 0.0
      %6040 = vmatmul.mubr.f32.gmra.mrb[0].mxu0 %v5833
      %v6041 = vpop.f32.mrb[0].mxu0
      %v6042 = vadd.f32 0.0, %v6041
      %v6043 = vpop.f32.mrb[0].mxu0
      %6044 = vmatprep.mubr.f32.mxu0 0.0
      %6045 = vmatmul.mubr.f32.gmra.mrb[0].mxu0 %v5836
      %v6046 = vpop.f32.mrb[0].mxu0
      %v6047 = vadd.f32 0.0, %v6046
      %v6048 = vpop.f32.mrb[0].mxu0
      %6049 = vmatprep.mubr.f32.mxu0 0.0
      %6050 = vmatmul.mubr.f32.gmra.mrb[0].mxu0 %v5839
      %v6051 = vpop.f32.mrb[0].mxu0
      %v6052 = vadd.f32 0.0, %v6051
      %v6053 = vpop.f32.mrb[0].mxu0
      %6054 = vmatprep.mubr.f32.mxu0 0.0
      %6055 = vmatmul.mubr.f32.gmra.mrb[0].mxu0 %v5842
      %v6056 = vpop.f32.mrb[0].mxu0
      %v6057 = vadd.f32 0.0, %v6056
      %v6058 = vpop.f32.mrb[0].mxu0
      %6059 = vmatprep.mubr.f32.mxu0 0.0
      %6060 = vmatmul.mubr.f32.gmra.mrb[0].mxu0 %v5845
      %v6061 = vpop.f32.mrb[0].mxu0
      %v6062 = vadd.f32 0.0, %v6061
      %v6063 = vpop.f32.mrb[0].mxu0
      %6064 = vmatprep.mubr.f32.mxu0 0.0
      %6065 = vmatmul.mubr.f32.gmra.mrb[0].mxu0 %v5848
      %v6066 = vpop.f32.mrb[0].mxu0
      %v6067 = vadd.f32 0.0, %v6066
      %v6068 = vpop.f32.mrb[0].mxu0
      %6069 = vmatprep.mubr.f32.mxu0 0.0
      %6070 = vmatmul.mubr.f32.gmra.mrb[0].mxu0 %v5851
      %v6071 = vpop.f32.mrb[0].mxu0
      %v6072 = vadd.f32 0.0, %v6071
      %v6073 = vpop.f32.mrb[0].mxu0
      %6074 = vmatprep.mubr.f32.mxu0 0.0
      %6075 = vmatmul.mubr.f32.gmra.mrb[0].mxu0 %v5854
      %v6076 = vpop.f32.mrb[0].mxu0
      %v6077 = vadd.f32 0.0, %v6076
      %v6078 = vpop.f32.mrb[0].mxu0
      %6079 = vmatprep.mubr.f32.mxu0 0.0
      %6080 = vmatmul.mubr.f32.gmra.mrb[0].mxu0 %v5857
      %v6081 = vpop.f32.mrb[0].mxu0
      %v6082 = vadd.f32 0.0, %v6081
      %v6083 = vpop.f32.mrb[0].mxu0
      %6084 = vmatprep.mubr.f32.mxu0 0.0
      %6085 = vmatmul.mubr.f32.gmra.mrb[0].mxu0 %v5860
      %v6086 = vpop.f32.mrb[0].mxu0
      %v6087 = vadd.f32 0.0, %v6086
      %v6088 = vpop.f32.mrb[0].mxu0
      %6089 = vdwg.mxu0
      %v6090 = vadd.f32 %v5700, %v5932
      %v6091 = vadd.f32 %v5701, %v5937
      %v6092 = vadd.f32 %v5702, %v5942
      %v6093 = vadd.f32 %v5703, %v5947
      %v6094 = vadd.f32 %v5704, %v5952
      %v6095 = vadd.f32 %v5705, %v5957
      %v6096 = vadd.f32 %v5706, %v5962
      %v6097 = vadd.f32 %v5707, %v5967
      %v6098 = vadd.f32 %v5708, %v5972
      %v6099 = vadd.f32 %v5709, %v5977
      %v6100 = vadd.f32 %v5710, %v5982
      %v6101 = vadd.f32 %v5711, %v5987
      %v6102 = vadd.f32 %v5712, %v5992
      %v6103 = vadd.f32 %v5713, %v5997
      %v6104 = vadd.f32 %v5714, %v6002
      %v6105 = vadd.f32 %v5715, %v6007
      %v6106 = vadd.f32 %v5716, %v6012
      %v6107 = vadd.f32 %v5717, %v6017
      %v6108 = vadd.f32 %v5718, %v6022
      %v6109 = vadd.f32 %v5719, %v6027
      %v6110 = vadd.f32 %v5720, %v6032
      %v6111 = vadd.f32 %v5721, %v6037
      %v6112 = vadd.f32 %v5722, %v6042
      %v6113 = vadd.f32 %v5723, %v6047
      %v6114 = vadd.f32 %v5724, %v6052
      %v6115 = vadd.f32 %v5725, %v6057
      %v6116 = vadd.f32 %v5726, %v6062
      %v6117 = vadd.f32 %v5727, %v6067
      %v6118 = vadd.f32 %v5728, %v6072
      %v6119 = vadd.f32 %v5729, %v6077
      %v6120 = vadd.f32 %v5730, %v6082
      %v6121 = vadd.f32 %v5731, %v6087
      %v6122 = vld [vmem:[%s4127 + $0x2] sm:$0xff]
      %v6123 = vld [vmem:[%s4127 + $0xa] sm:$0xff]
      %v6124 = vld [vmem:[%s4127 + $0x1a] sm:$0xff]
      %v6125 = vld [vmem:[%s4127 + $0x22] sm:$0xff]
      %v6126 = vld [vmem:[%s4127 + $0x32] sm:$0xff]
      %v6127 = vld [vmem:[%s4127 + $0x3a] sm:$0xff]
      %v6128 = vld [vmem:[%s4127 + $0x4a] sm:$0xff]
      %v6129 = vld [vmem:[%s4127 + $0x52] sm:$0xff]
      %v6130 = vld [vmem:[%s4127 + $0x62] sm:$0xff]
      %v6131 = vld [vmem:[%s4127 + $0x6a] sm:$0xff]
      %v6132 = vld [vmem:[%s4127 + $0x7a] sm:$0xff]
      %v6133 = vld [vmem:[%s4127 + $0x82] sm:$0xff]
      %v6134 = vld [vmem:[%s4127 + $0x92] sm:$0xff]
      %v6135 = vld [vmem:[%s4127 + $0x9a] sm:$0xff]
      %v6136 = vld [vmem:[%s4127 + $0xaa] sm:$0xff]
      %v6137 = vld [vmem:[%s4127 + $0xb2] sm:$0xff]
      %v6138 = vld [vmem:[%s4127 + $0xc2] sm:$0xff]
      %v6139 = vld [vmem:[%s4127 + $0xca] sm:$0xff]
      %v6140 = vld [vmem:[%s4127 + $0xda] sm:$0xff]
      %v6141 = vld [vmem:[%s4127 + $0xe2] sm:$0xff]
      %v6142 = vld [vmem:[%s4127 + $0xf2] sm:$0xff]
      %v6143 = vld [vmem:[%s4127 + $0xfa] sm:$0xff]
      %v6144 = vld [vmem:[%s4127 + $0x10a] sm:$0xff]
      %v6145 = vld [vmem:[%s4127 + $0x112] sm:$0xff]
      %v6146 = vld [vmem:[%s4127 + $0x122] sm:$0xff]
      %v6147 = vld [vmem:[%s4127 + $0x12a] sm:$0xff]
      %v6148 = vld [vmem:[%s4127 + $0x13a] sm:$0xff]
      %v6149 = vld [vmem:[%s4127 + $0x142] sm:$0xff]
      %v6150 = vld [vmem:[%s4127 + $0x152] sm:$0xff]
      %v6151 = vld [vmem:[%s4127 + $0x15a] sm:$0xff]
      %v6152 = vld [vmem:[%s4127 + $0x16a] sm:$0xff]
      %v6153 = vld [vmem:[%s4127 + $0x172] sm:$0xff]
      %s6154 = scalar_lea.vmem %s3, 20
      %v6155 = vld [vmem:[%s6154] sm:$0xf]
      %v6157 = vsel %vm258, %v6122, 0
      %v6160 = vsel %vm258, %v6123, 0
      %v6163 = vsel %vm258, %v6124, 0
      %v6166 = vsel %vm258, %v6125, 0
      %v6169 = vsel %vm258, %v6126, 0
      %v6172 = vsel %vm258, %v6127, 0
      %v6175 = vsel %vm258, %v6128, 0
      %v6178 = vsel %vm258, %v6129, 0
      %v6181 = vsel %vm258, %v6130, 0
      %v6184 = vsel %vm258, %v6131, 0
      %v6187 = vsel %vm258, %v6132, 0
      %v6190 = vsel %vm258, %v6133, 0
      %v6193 = vsel %vm258, %v6134, 0
      %v6196 = vsel %vm258, %v6135, 0
      %v6199 = vsel %vm258, %v6136, 0
      %v6202 = vsel %vm258, %v6137, 0
      %v6205 = vsel %vm258, %v6138, 0
      %v6208 = vsel %vm258, %v6139, 0
      %v6211 = vsel %vm258, %v6140, 0
      %v6214 = vsel %vm258, %v6141, 0
      %v6217 = vsel %vm258, %v6142, 0
      %v6220 = vsel %vm258, %v6143, 0
      %v6223 = vsel %vm258, %v6144, 0
      %v6226 = vsel %vm258, %v6145, 0
      %v6229 = vsel %vm258, %v6146, 0
      %v6232 = vsel %vm258, %v6147, 0
      %v6235 = vsel %vm258, %v6148, 0
      %v6238 = vsel %vm258, %v6149, 0
      %v6241 = vsel %vm258, %v6150, 0
      %v6244 = vsel %vm258, %v6151, 0
      %v6247 = vsel %vm258, %v6152, 0
      %v6250 = vsel %vm258, %v6153, 0
      %v6253 = vsel %vm532, %v6155, 0
      %6255 = vmatprep.subr.mxu0 0.0
      %6256 = vmatpush1.msra.mxu0 %v6253
      %6257 = vmatprep.subr.mxu0 0.0
      %6258 = vmatpush1.msra.mxu0 0.0
      %6259 = vmatprep.subr.mxu0 0.0
      %6260 = vmatpush1.msra.mxu0 0.0
      %6261 = vmatprep.subr.mxu0 0.0
      %6262 = vmatpush1.msra.mxu0 0.0
      %6263 = vmatprep.subr.mxu0 0.0
      %6264 = vmatpush1.msra.mxu0 0.0
      %6265 = vmatprep.subr.mxu0 0.0
      %6266 = vmatpush1.msra.mxu0 0.0
      %6267 = vmatprep.subr.mxu0 0.0
      %6268 = vmatpush1.msra.mxu0 0.0
      %6269 = vmatprep.subr.mxu0 0.0
      %6270 = vmatpush1.msra.mxu0 0.0
      %6271 = vmatprep.subr.mxu0 0.0
      %6272 = vmatpush1.msra.mxu0 0.0
      %6273 = vmatprep.subr.mxu0 0.0
      %6274 = vmatpush1.msra.mxu0 0.0
      %6275 = vmatprep.subr.mxu0 0.0
      %6276 = vmatpush1.msra.mxu0 0.0
      %6277 = vmatprep.subr.mxu0 0.0
      %6278 = vmatpush1.msra.mxu0 0.0
      %6279 = vmatprep.subr.mxu0 0.0
      %6280 = vmatpush1.msra.mxu0 0.0
      %6281 = vmatprep.subr.mxu0 0.0
      %6282 = vmatpush1.msra.mxu0 0.0
      %6283 = vmatprep.subr.mxu0 0.0
      %6284 = vmatpush1.msra.mxu0 0.0
      %6285 = vmatprep.subr.mxu0 0.0
      %6286 = vmatpush1.msra.mxu0 0.0
      %6287 = vmatprep.subr.mxu0 0.0
      %6288 = vmatpush1.msra.mxu0 0.0
      %6289 = vmatprep.subr.mxu0 0.0
      %6290 = vmatpush1.msra.mxu0 0.0
      %6291 = vmatprep.subr.mxu0 0.0
      %6292 = vmatpush1.msra.mxu0 0.0
      %6293 = vmatprep.subr.mxu0 0.0
      %6294 = vmatpush1.msra.mxu0 0.0
      %6295 = vmatprep.subr.mxu0 0.0
      %6296 = vmatpush1.msra.mxu0 0.0
      %6297 = vmatprep.subr.mxu0 0.0
      %6298 = vmatpush1.msra.mxu0 0.0
      %6299 = vmatprep.subr.mxu0 0.0
      %6300 = vmatpush1.msra.mxu0 0.0
      %6301 = vmatprep.subr.mxu0 0.0
      %6302 = vmatpush1.msra.mxu0 0.0
      %6303 = vmatprep.subr.mxu0 0.0
      %6304 = vmatpush1.msra.mxu0 0.0
      %6305 = vmatprep.subr.mxu0 0.0
      %6306 = vmatpush1.msra.mxu0 0.0
      %6307 = vmatprep.subr.mxu0 0.0
      %6308 = vmatpush1.msra.mxu0 0.0
      %6309 = vmatprep.subr.mxu0 0.0
      %6310 = vmatpush1.msra.mxu0 0.0
      %6311 = vmatprep.subr.mxu0 0.0
      %6312 = vmatpush1.msra.mxu0 0.0
      %6313 = vmatprep.subr.mxu0 0.0
      %6314 = vmatpush1.msra.mxu0 0.0
      %6315 = vmatprep.subr.mxu0 0.0
      %6316 = vmatpush1.msra.mxu0 0.0
      %6317 = vmatprep.subr.mxu0 0.0
      %6318 = vmatpush1.msra.mxu0 0.0
      %6319 = vmatprep.mubr.f32.mxu0 0.0
      %6320 = vmatmul.mubr.f32.gmra.mrb[0].mxu0 %v6157
      %v6321 = vpop.f32.mrb[0].mxu0
      %v6322 = vadd.f32 0.0, %v6321
      %v6323 = vpop.f32.mrb[0].mxu0
      %6324 = vmatprep.mubr.f32.mxu0 0.0
      %6325 = vmatmul.mubr.f32.gmra.mrb[0].mxu0 %v6160
      %v6326 = vpop.f32.mrb[0].mxu0
      %v6327 = vadd.f32 0.0, %v6326
      %v6328 = vpop.f32.mrb[0].mxu0
      %6329 = vmatprep.mubr.f32.mxu0 0.0
      %6330 = vmatmul.mubr.f32.gmra.mrb[0].mxu0 %v6163
      %v6331 = vpop.f32.mrb[0].mxu0
      %v6332 = vadd.f32 0.0, %v6331
      %v6333 = vpop.f32.mrb[0].mxu0
      %6334 = vmatprep.mubr.f32.mxu0 0.0
      %6335 = vmatmul.mubr.f32.gmra.mrb[0].mxu0 %v6166
      %v6336 = vpop.f32.mrb[0].mxu0
      %v6337 = vadd.f32 0.0, %v6336
      %v6338 = vpop.f32.mrb[0].mxu0
      %6339 = vmatprep.mubr.f32.mxu0 0.0
      %6340 = vmatmul.mubr.f32.gmra.mrb[0].mxu0 %v6169
      %v6341 = vpop.f32.mrb[0].mxu0
      %v6342 = vadd.f32 0.0, %v6341
      %v6343 = vpop.f32.mrb[0].mxu0
      %6344 = vmatprep.mubr.f32.mxu0 0.0
      %6345 = vmatmul.mubr.f32.gmra.mrb[0].mxu0 %v6172
      %v6346 = vpop.f32.mrb[0].mxu0
      %v6347 = vadd.f32 0.0, %v6346
      %v6348 = vpop.f32.mrb[0].mxu0
      %6349 = vmatprep.mubr.f32.mxu0 0.0
      %6350 = vmatmul.mubr.f32.gmra.mrb[0].mxu0 %v6175
      %v6351 = vpop.f32.mrb[0].mxu0
      %v6352 = vadd.f32 0.0, %v6351
      %v6353 = vpop.f32.mrb[0].mxu0
      %6354 = vmatprep.mubr.f32.mxu0 0.0
      %6355 = vmatmul.mubr.f32.gmra.mrb[0].mxu0 %v6178
      %v6356 = vpop.f32.mrb[0].mxu0
      %v6357 = vadd.f32 0.0, %v6356
      %v6358 = vpop.f32.mrb[0].mxu0
      %6359 = vmatprep.mubr.f32.mxu0 0.0
      %6360 = vmatmul.mubr.f32.gmra.mrb[0].mxu0 %v6181
      %v6361 = vpop.f32.mrb[0].mxu0
      %v6362 = vadd.f32 0.0, %v6361
      %v6363 = vpop.f32.mrb[0].mxu0
      %6364 = vmatprep.mubr.f32.mxu0 0.0
      %6365 = vmatmul.mubr.f32.gmra.mrb[0].mxu0 %v6184
      %v6366 = vpop.f32.mrb[0].mxu0
      %v6367 = vadd.f32 0.0, %v6366
      %v6368 = vpop.f32.mrb[0].mxu0
      %6369 = vmatprep.mubr.f32.mxu0 0.0
      %6370 = vmatmul.mubr.f32.gmra.mrb[0].mxu0 %v6187
      %v6371 = vpop.f32.mrb[0].mxu0
      %v6372 = vadd.f32 0.0, %v6371
      %v6373 = vpop.f32.mrb[0].mxu0
      %6374 = vmatprep.mubr.f32.mxu0 0.0
      %6375 = vmatmul.mubr.f32.gmra.mrb[0].mxu0 %v6190
      %v6376 = vpop.f32.mrb[0].mxu0
      %v6377 = vadd.f32 0.0, %v6376
      %v6378 = vpop.f32.mrb[0].mxu0
      %6379 = vmatprep.mubr.f32.mxu0 0.0
      %6380 = vmatmul.mubr.f32.gmra.mrb[0].mxu0 %v6193
      %v6381 = vpop.f32.mrb[0].mxu0
      %v6382 = vadd.f32 0.0, %v6381
      %v6383 = vpop.f32.mrb[0].mxu0
      %6384 = vmatprep.mubr.f32.mxu0 0.0
      %6385 = vmatmul.mubr.f32.gmra.mrb[0].mxu0 %v6196
      %v6386 = vpop.f32.mrb[0].mxu0
      %v6387 = vadd.f32 0.0, %v6386
      %v6388 = vpop.f32.mrb[0].mxu0
      %6389 = vmatprep.mubr.f32.mxu0 0.0
      %6390 = vmatmul.mubr.f32.gmra.mrb[0].mxu0 %v6199
      %v6391 = vpop.f32.mrb[0].mxu0
      %v6392 = vadd.f32 0.0, %v6391
      %v6393 = vpop.f32.mrb[0].mxu0
      %6394 = vmatprep.mubr.f32.mxu0 0.0
      %6395 = vmatmul.mubr.f32.gmra.mrb[0].mxu0 %v6202
      %v6396 = vpop.f32.mrb[0].mxu0
      %v6397 = vadd.f32 0.0, %v6396
      %v6398 = vpop.f32.mrb[0].mxu0
      %6399 = vmatprep.mubr.f32.mxu0 0.0
      %6400 = vmatmul.mubr.f32.gmra.mrb[0].mxu0 %v6205
      %v6401 = vpop.f32.mrb[0].mxu0
      %v6402 = vadd.f32 0.0, %v6401
      %v6403 = vpop.f32.mrb[0].mxu0
      %6404 = vmatprep.mubr.f32.mxu0 0.0
      %6405 = vmatmul.mubr.f32.gmra.mrb[0].mxu0 %v6208
      %v6406 = vpop.f32.mrb[0].mxu0
      %v6407 = vadd.f32 0.0, %v6406
      %v6408 = vpop.f32.mrb[0].mxu0
      %6409 = vmatprep.mubr.f32.mxu0 0.0
      %6410 = vmatmul.mubr.f32.gmra.mrb[0].mxu0 %v6211
      %v6411 = vpop.f32.mrb[0].mxu0
      %v6412 = vadd.f32 0.0, %v6411
      %v6413 = vpop.f32.mrb[0].mxu0
      %6414 = vmatprep.mubr.f32.mxu0 0.0
      %6415 = vmatmul.mubr.f32.gmra.mrb[0].mxu0 %v6214
      %v6416 = vpop.f32.mrb[0].mxu0
      %v6417 = vadd.f32 0.0, %v6416
      %v6418 = vpop.f32.mrb[0].mxu0
      %6419 = vmatprep.mubr.f32.mxu0 0.0
      %6420 = vmatmul.mubr.f32.gmra.mrb[0].mxu0 %v6217
      %v6421 = vpop.f32.mrb[0].mxu0
      %v6422 = vadd.f32 0.0, %v6421
      %v6423 = vpop.f32.mrb[0].mxu0
      %6424 = vmatprep.mubr.f32.mxu0 0.0
      %6425 = vmatmul.mubr.f32.gmra.mrb[0].mxu0 %v6220
      %v6426 = vpop.f32.mrb[0].mxu0
      %v6427 = vadd.f32 0.0, %v6426
      %v6428 = vpop.f32.mrb[0].mxu0
      %6429 = vmatprep.mubr.f32.mxu0 0.0
      %6430 = vmatmul.mubr.f32.gmra.mrb[0].mxu0 %v6223
      %v6431 = vpop.f32.mrb[0].mxu0
      %v6432 = vadd.f32 0.0, %v6431
      %v6433 = vpop.f32.mrb[0].mxu0
      %6434 = vmatprep.mubr.f32.mxu0 0.0
      %6435 = vmatmul.mubr.f32.gmra.mrb[0].mxu0 %v6226
      %v6436 = vpop.f32.mrb[0].mxu0
      %v6437 = vadd.f32 0.0, %v6436
      %v6438 = vpop.f32.mrb[0].mxu0
      %6439 = vmatprep.mubr.f32.mxu0 0.0
      %6440 = vmatmul.mubr.f32.gmra.mrb[0].mxu0 %v6229
      %v6441 = vpop.f32.mrb[0].mxu0
      %v6442 = vadd.f32 0.0, %v6441
      %v6443 = vpop.f32.mrb[0].mxu0
      %6444 = vmatprep.mubr.f32.mxu0 0.0
      %6445 = vmatmul.mubr.f32.gmra.mrb[0].mxu0 %v6232
      %v6446 = vpop.f32.mrb[0].mxu0
      %v6447 = vadd.f32 0.0, %v6446
      %v6448 = vpop.f32.mrb[0].mxu0
      %6449 = vmatprep.mubr.f32.mxu0 0.0
      %6450 = vmatmul.mubr.f32.gmra.mrb[0].mxu0 %v6235
      %v6451 = vpop.f32.mrb[0].mxu0
      %v6452 = vadd.f32 0.0, %v6451
      %v6453 = vpop.f32.mrb[0].mxu0
      %6454 = vmatprep.mubr.f32.mxu0 0.0
      %6455 = vmatmul.mubr.f32.gmra.mrb[0].mxu0 %v6238
      %v6456 = vpop.f32.mrb[0].mxu0
      %v6457 = vadd.f32 0.0, %v6456
      %v6458 = vpop.f32.mrb[0].mxu0
      %6459 = vmatprep.mubr.f32.mxu0 0.0
      %6460 = vmatmul.mubr.f32.gmra.mrb[0].mxu0 %v6241
      %v6461 = vpop.f32.mrb[0].mxu0
      %v6462 = vadd.f32 0.0, %v6461
      %v6463 = vpop.f32.mrb[0].mxu0
      %6464 = vmatprep.mubr.f32.mxu0 0.0
      %6465 = vmatmul.mubr.f32.gmra.mrb[0].mxu0 %v6244
      %v6466 = vpop.f32.mrb[0].mxu0
      %v6467 = vadd.f32 0.0, %v6466
      %v6468 = vpop.f32.mrb[0].mxu0
      %6469 = vmatprep.mubr.f32.mxu0 0.0
      %6470 = vmatmul.mubr.f32.gmra.mrb[0].mxu0 %v6247
      %v6471 = vpop.f32.mrb[0].mxu0
      %v6472 = vadd.f32 0.0, %v6471
      %v6473 = vpop.f32.mrb[0].mxu0
      %6474 = vmatprep.mubr.f32.mxu0 0.0
      %6475 = vmatmul.mubr.f32.gmra.mrb[0].mxu0 %v6250
      %v6476 = vpop.f32.mrb[0].mxu0
      %v6477 = vadd.f32 0.0, %v6476
      %v6478 = vpop.f32.mrb[0].mxu0
      %6479 = vdwg.mxu0
      %v6480 = vadd.f32 %v6090, %v6322
      %v6481 = vadd.f32 %v6091, %v6327
      %v6482 = vadd.f32 %v6092, %v6332
      %v6483 = vadd.f32 %v6093, %v6337
      %v6484 = vadd.f32 %v6094, %v6342
      %v6485 = vadd.f32 %v6095, %v6347
      %v6486 = vadd.f32 %v6096, %v6352
      %v6487 = vadd.f32 %v6097, %v6357
      %v6488 = vadd.f32 %v6098, %v6362
      %v6489 = vadd.f32 %v6099, %v6367
      %v6490 = vadd.f32 %v6100, %v6372
      %v6491 = vadd.f32 %v6101, %v6377
      %v6492 = vadd.f32 %v6102, %v6382
      %v6493 = vadd.f32 %v6103, %v6387
      %v6494 = vadd.f32 %v6104, %v6392
      %v6495 = vadd.f32 %v6105, %v6397
      %v6496 = vadd.f32 %v6106, %v6402
      %v6497 = vadd.f32 %v6107, %v6407
      %v6498 = vadd.f32 %v6108, %v6412
      %v6499 = vadd.f32 %v6109, %v6417
      %v6500 = vadd.f32 %v6110, %v6422
      %v6501 = vadd.f32 %v6111, %v6427
      %v6502 = vadd.f32 %v6112, %v6432
      %v6503 = vadd.f32 %v6113, %v6437
      %v6504 = vadd.f32 %v6114, %v6442
      %v6505 = vadd.f32 %v6115, %v6447
      %v6506 = vadd.f32 %v6116, %v6452
      %v6507 = vadd.f32 %v6117, %v6457
      %v6508 = vadd.f32 %v6118, %v6462
      %v6509 = vadd.f32 %v6119, %v6467
      %v6510 = vadd.f32 %v6120, %v6472
      %v6511 = vadd.f32 %v6121, %v6477
      %s6512 = scalar_lea.vmem [#allocation3], 48
      %v6513 = vld [vmem:[%s6512] sm:$0xff]
      %v6514 = vld [vmem:[%s6512 + $0x8] sm:$0xff]
      %v6515 = vld [vmem:[%s6512 + $0x18] sm:$0xff]
      %v6516 = vld [vmem:[%s6512 + $0x20] sm:$0xff]
      %v6517 = vld [vmem:[%s6512 + $0x30] sm:$0xff]
      %v6518 = vld [vmem:[%s6512 + $0x38] sm:$0xff]
      %v6519 = vld [vmem:[%s6512 + $0x48] sm:$0xff]
      %v6520 = vld [vmem:[%s6512 + $0x50] sm:$0xff]
      %v6521 = vld [vmem:[%s6512 + $0x60] sm:$0xff]
      %v6522 = vld [vmem:[%s6512 + $0x68] sm:$0xff]
      %v6523 = vld [vmem:[%s6512 + $0x78] sm:$0xff]
      %v6524 = vld [vmem:[%s6512 + $0x80] sm:$0xff]
      %v6525 = vld [vmem:[%s6512 + $0x90] sm:$0xff]
      %v6526 = vld [vmem:[%s6512 + $0x98] sm:$0xff]
      %v6527 = vld [vmem:[%s6512 + $0xa8] sm:$0xff]
      %v6528 = vld [vmem:[%s6512 + $0xb0] sm:$0xff]
      %v6529 = vld [vmem:[%s6512 + $0xc0] sm:$0xff]
      %v6530 = vld [vmem:[%s6512 + $0xc8] sm:$0xff]
      %v6531 = vld [vmem:[%s6512 + $0xd8] sm:$0xff]
      %v6532 = vld [vmem:[%s6512 + $0xe0] sm:$0xff]
      %v6533 = vld [vmem:[%s6512 + $0xf0] sm:$0xff]
      %v6534 = vld [vmem:[%s6512 + $0xf8] sm:$0xff]
      %v6535 = vld [vmem:[%s6512 + $0x108] sm:$0xff]
      %v6536 = vld [vmem:[%s6512 + $0x110] sm:$0xff]
      %v6537 = vld [vmem:[%s6512 + $0x120] sm:$0xff]
      %v6538 = vld [vmem:[%s6512 + $0x128] sm:$0xff]
      %v6539 = vld [vmem:[%s6512 + $0x138] sm:$0xff]
      %v6540 = vld [vmem:[%s6512 + $0x140] sm:$0xff]
      %v6541 = vld [vmem:[%s6512 + $0x150] sm:$0xff]
      %v6542 = vld [vmem:[%s6512 + $0x158] sm:$0xff]
      %v6543 = vld [vmem:[%s6512 + $0x168] sm:$0xff]
      %v6544 = vld [vmem:[%s6512 + $0x170] sm:$0xff]
      %s6545 = scalar_lea.vmem %s3, 24
      %v6546 = vld [vmem:[%s6545] sm:$0xf]
      %v6548 = vsel %vm258, %v6513, 0
      %v6551 = vsel %vm258, %v6514, 0
      %v6554 = vsel %vm258, %v6515, 0
      %v6557 = vsel %vm258, %v6516, 0
      %v6560 = vsel %vm258, %v6517, 0
      %v6563 = vsel %vm258, %v6518, 0
      %v6566 = vsel %vm258, %v6519, 0
      %v6569 = vsel %vm258, %v6520, 0
      %v6572 = vsel %vm258, %v6521, 0
      %v6575 = vsel %vm258, %v6522, 0
      %v6578 = vsel %vm258, %v6523, 0
      %v6581 = vsel %vm258, %v6524, 0
      %v6584 = vsel %vm258, %v6525, 0
      %v6587 = vsel %vm258, %v6526, 0
      %v6590 = vsel %vm258, %v6527, 0
      %v6593 = vsel %vm258, %v6528, 0
      %v6596 = vsel %vm258, %v6529, 0
      %v6599 = vsel %vm258, %v6530, 0
      %v6602 = vsel %vm258, %v6531, 0
      %v6605 = vsel %vm258, %v6532, 0
      %v6608 = vsel %vm258, %v6533, 0
      %v6611 = vsel %vm258, %v6534, 0
      %v6614 = vsel %vm258, %v6535, 0
      %v6617 = vsel %vm258, %v6536, 0
      %v6620 = vsel %vm258, %v6537, 0
      %v6623 = vsel %vm258, %v6538, 0
      %v6626 = vsel %vm258, %v6539, 0
      %v6629 = vsel %vm258, %v6540, 0
      %v6632 = vsel %vm258, %v6541, 0
      %v6635 = vsel %vm258, %v6542, 0
      %v6638 = vsel %vm258, %v6543, 0
      %v6641 = vsel %vm258, %v6544, 0
      %v6644 = vsel %vm532, %v6546, 0
      %6646 = vmatprep.subr.mxu0 0.0
      %6647 = vmatpush1.msra.mxu0 %v6644
      %6648 = vmatprep.subr.mxu0 0.0
      %6649 = vmatpush1.msra.mxu0 0.0
      %6650 = vmatprep.subr.mxu0 0.0
      %6651 = vmatpush1.msra.mxu0 0.0
      %6652 = vmatprep.subr.mxu0 0.0
      %6653 = vmatpush1.msra.mxu0 0.0
      %6654 = vmatprep.subr.mxu0 0.0
      %6655 = vmatpush1.msra.mxu0 0.0
      %6656 = vmatprep.subr.mxu0 0.0
      %6657 = vmatpush1.msra.mxu0 0.0
      %6658 = vmatprep.subr.mxu0 0.0
      %6659 = vmatpush1.msra.mxu0 0.0
      %6660 = vmatprep.subr.mxu0 0.0
      %6661 = vmatpush1.msra.mxu0 0.0
      %6662 = vmatprep.subr.mxu0 0.0
      %6663 = vmatpush1.msra.mxu0 0.0
      %6664 = vmatprep.subr.mxu0 0.0
      %6665 = vmatpush1.msra.mxu0 0.0
      %6666 = vmatprep.subr.mxu0 0.0
      %6667 = vmatpush1.msra.mxu0 0.0
      %6668 = vmatprep.subr.mxu0 0.0
      %6669 = vmatpush1.msra.mxu0 0.0
      %6670 = vmatprep.subr.mxu0 0.0
      %6671 = vmatpush1.msra.mxu0 0.0
      %6672 = vmatprep.subr.mxu0 0.0
      %6673 = vmatpush1.msra.mxu0 0.0
      %6674 = vmatprep.subr.mxu0 0.0
      %6675 = vmatpush1.msra.mxu0 0.0
      %6676 = vmatprep.subr.mxu0 0.0
      %6677 = vmatpush1.msra.mxu0 0.0
      %6678 = vmatprep.subr.mxu0 0.0
      %6679 = vmatpush1.msra.mxu0 0.0
      %6680 = vmatprep.subr.mxu0 0.0
      %6681 = vmatpush1.msra.mxu0 0.0
      %6682 = vmatprep.subr.mxu0 0.0
      %6683 = vmatpush1.msra.mxu0 0.0
      %6684 = vmatprep.subr.mxu0 0.0
      %6685 = vmatpush1.msra.mxu0 0.0
      %6686 = vmatprep.subr.mxu0 0.0
      %6687 = vmatpush1.msra.mxu0 0.0
      %6688 = vmatprep.subr.mxu0 0.0
      %6689 = vmatpush1.msra.mxu0 0.0
      %6690 = vmatprep.subr.mxu0 0.0
      %6691 = vmatpush1.msra.mxu0 0.0
      %6692 = vmatprep.subr.mxu0 0.0
      %6693 = vmatpush1.msra.mxu0 0.0
      %6694 = vmatprep.subr.mxu0 0.0
      %6695 = vmatpush1.msra.mxu0 0.0
      %6696 = vmatprep.subr.mxu0 0.0
      %6697 = vmatpush1.msra.mxu0 0.0
      %6698 = vmatprep.subr.mxu0 0.0
      %6699 = vmatpush1.msra.mxu0 0.0
      %6700 = vmatprep.subr.mxu0 0.0
      %6701 = vmatpush1.msra.mxu0 0.0
      %6702 = vmatprep.subr.mxu0 0.0
      %6703 = vmatpush1.msra.mxu0 0.0
      %6704 = vmatprep.subr.mxu0 0.0
      %6705 = vmatpush1.msra.mxu0 0.0
      %6706 = vmatprep.subr.mxu0 0.0
      %6707 = vmatpush1.msra.mxu0 0.0
      %6708 = vmatprep.subr.mxu0 0.0
      %6709 = vmatpush1.msra.mxu0 0.0
      %6710 = vmatprep.mubr.f32.mxu0 0.0
      %6711 = vmatmul.mubr.f32.gmra.mrb[0].mxu0 %v6548
      %v6712 = vpop.f32.mrb[0].mxu0
      %v6713 = vadd.f32 0.0, %v6712
      %v6714 = vpop.f32.mrb[0].mxu0
      %6715 = vmatprep.mubr.f32.mxu0 0.0
      %6716 = vmatmul.mubr.f32.gmra.mrb[0].mxu0 %v6551
      %v6717 = vpop.f32.mrb[0].mxu0
      %v6718 = vadd.f32 0.0, %v6717
      %v6719 = vpop.f32.mrb[0].mxu0
      %6720 = vmatprep.mubr.f32.mxu0 0.0
      %6721 = vmatmul.mubr.f32.gmra.mrb[0].mxu0 %v6554
      %v6722 = vpop.f32.mrb[0].mxu0
      %v6723 = vadd.f32 0.0, %v6722
      %v6724 = vpop.f32.mrb[0].mxu0
      %6725 = vmatprep.mubr.f32.mxu0 0.0
      %6726 = vmatmul.mubr.f32.gmra.mrb[0].mxu0 %v6557
      %v6727 = vpop.f32.mrb[0].mxu0
      %v6728 = vadd.f32 0.0, %v6727
      %v6729 = vpop.f32.mrb[0].mxu0
      %6730 = vmatprep.mubr.f32.mxu0 0.0
      %6731 = vmatmul.mubr.f32.gmra.mrb[0].mxu0 %v6560
      %v6732 = vpop.f32.mrb[0].mxu0
      %v6733 = vadd.f32 0.0, %v6732
      %v6734 = vpop.f32.mrb[0].mxu0
      %6735 = vmatprep.mubr.f32.mxu0 0.0
      %6736 = vmatmul.mubr.f32.gmra.mrb[0].mxu0 %v6563
      %v6737 = vpop.f32.mrb[0].mxu0
      %v6738 = vadd.f32 0.0, %v6737
      %v6739 = vpop.f32.mrb[0].mxu0
      %6740 = vmatprep.mubr.f32.mxu0 0.0
      %6741 = vmatmul.mubr.f32.gmra.mrb[0].mxu0 %v6566
      %v6742 = vpop.f32.mrb[0].mxu0
      %v6743 = vadd.f32 0.0, %v6742
      %v6744 = vpop.f32.mrb[0].mxu0
      %6745 = vmatprep.mubr.f32.mxu0 0.0
      %6746 = vmatmul.mubr.f32.gmra.mrb[0].mxu0 %v6569
      %v6747 = vpop.f32.mrb[0].mxu0
      %v6748 = vadd.f32 0.0, %v6747
      %v6749 = vpop.f32.mrb[0].mxu0
      %6750 = vmatprep.mubr.f32.mxu0 0.0
      %6751 = vmatmul.mubr.f32.gmra.mrb[0].mxu0 %v6572
      %v6752 = vpop.f32.mrb[0].mxu0
      %v6753 = vadd.f32 0.0, %v6752
      %v6754 = vpop.f32.mrb[0].mxu0
      %6755 = vmatprep.mubr.f32.mxu0 0.0
      %6756 = vmatmul.mubr.f32.gmra.mrb[0].mxu0 %v6575
      %v6757 = vpop.f32.mrb[0].mxu0
      %v6758 = vadd.f32 0.0, %v6757
      %v6759 = vpop.f32.mrb[0].mxu0
      %6760 = vmatprep.mubr.f32.mxu0 0.0
      %6761 = vmatmul.mubr.f32.gmra.mrb[0].mxu0 %v6578
      %v6762 = vpop.f32.mrb[0].mxu0
      %v6763 = vadd.f32 0.0, %v6762
      %v6764 = vpop.f32.mrb[0].mxu0
      %6765 = vmatprep.mubr.f32.mxu0 0.0
      %6766 = vmatmul.mubr.f32.gmra.mrb[0].mxu0 %v6581
      %v6767 = vpop.f32.mrb[0].mxu0
      %v6768 = vadd.f32 0.0, %v6767
      %v6769 = vpop.f32.mrb[0].mxu0
      %6770 = vmatprep.mubr.f32.mxu0 0.0
      %6771 = vmatmul.mubr.f32.gmra.mrb[0].mxu0 %v6584
      %v6772 = vpop.f32.mrb[0].mxu0
      %v6773 = vadd.f32 0.0, %v6772
      %v6774 = vpop.f32.mrb[0].mxu0
      %6775 = vmatprep.mubr.f32.mxu0 0.0
      %6776 = vmatmul.mubr.f32.gmra.mrb[0].mxu0 %v6587
      %v6777 = vpop.f32.mrb[0].mxu0
      %v6778 = vadd.f32 0.0, %v6777
      %v6779 = vpop.f32.mrb[0].mxu0
      %6780 = vmatprep.mubr.f32.mxu0 0.0
      %6781 = vmatmul.mubr.f32.gmra.mrb[0].mxu0 %v6590
      %v6782 = vpop.f32.mrb[0].mxu0
      %v6783 = vadd.f32 0.0, %v6782
      %v6784 = vpop.f32.mrb[0].mxu0
      %6785 = vmatprep.mubr.f32.mxu0 0.0
      %6786 = vmatmul.mubr.f32.gmra.mrb[0].mxu0 %v6593
      %v6787 = vpop.f32.mrb[0].mxu0
      %v6788 = vadd.f32 0.0, %v6787
      %v6789 = vpop.f32.mrb[0].mxu0
      %6790 = vmatprep.mubr.f32.mxu0 0.0
      %6791 = vmatmul.mubr.f32.gmra.mrb[0].mxu0 %v6596
      %v6792 = vpop.f32.mrb[0].mxu0
      %v6793 = vadd.f32 0.0, %v6792
      %v6794 = vpop.f32.mrb[0].mxu0
      %6795 = vmatprep.mubr.f32.mxu0 0.0
      %6796 = vmatmul.mubr.f32.gmra.mrb[0].mxu0 %v6599
      %v6797 = vpop.f32.mrb[0].mxu0
      %v6798 = vadd.f32 0.0, %v6797
      %v6799 = vpop.f32.mrb[0].mxu0
      %6800 = vmatprep.mubr.f32.mxu0 0.0
      %6801 = vmatmul.mubr.f32.gmra.mrb[0].mxu0 %v6602
      %v6802 = vpop.f32.mrb[0].mxu0
      %v6803 = vadd.f32 0.0, %v6802
      %v6804 = vpop.f32.mrb[0].mxu0
      %6805 = vmatprep.mubr.f32.mxu0 0.0
      %6806 = vmatmul.mubr.f32.gmra.mrb[0].mxu0 %v6605
      %v6807 = vpop.f32.mrb[0].mxu0
      %v6808 = vadd.f32 0.0, %v6807
      %v6809 = vpop.f32.mrb[0].mxu0
      %6810 = vmatprep.mubr.f32.mxu0 0.0
      %6811 = vmatmul.mubr.f32.gmra.mrb[0].mxu0 %v6608
      %v6812 = vpop.f32.mrb[0].mxu0
      %v6813 = vadd.f32 0.0, %v6812
      %v6814 = vpop.f32.mrb[0].mxu0
      %6815 = vmatprep.mubr.f32.mxu0 0.0
      %6816 = vmatmul.mubr.f32.gmra.mrb[0].mxu0 %v6611
      %v6817 = vpop.f32.mrb[0].mxu0
      %v6818 = vadd.f32 0.0, %v6817
      %v6819 = vpop.f32.mrb[0].mxu0
      %6820 = vmatprep.mubr.f32.mxu0 0.0
      %6821 = vmatmul.mubr.f32.gmra.mrb[0].mxu0 %v6614
      %v6822 = vpop.f32.mrb[0].mxu0
      %v6823 = vadd.f32 0.0, %v6822
      %v6824 = vpop.f32.mrb[0].mxu0
      %6825 = vmatprep.mubr.f32.mxu0 0.0
      %6826 = vmatmul.mubr.f32.gmra.mrb[0].mxu0 %v6617
      %v6827 = vpop.f32.mrb[0].mxu0
      %v6828 = vadd.f32 0.0, %v6827
      %v6829 = vpop.f32.mrb[0].mxu0
      %6830 = vmatprep.mubr.f32.mxu0 0.0
      %6831 = vmatmul.mubr.f32.gmra.mrb[0].mxu0 %v6620
      %v6832 = vpop.f32.mrb[0].mxu0
      %v6833 = vadd.f32 0.0, %v6832
      %v6834 = vpop.f32.mrb[0].mxu0
      %6835 = vmatprep.mubr.f32.mxu0 0.0
      %6836 = vmatmul.mubr.f32.gmra.mrb[0].mxu0 %v6623
      %v6837 = vpop.f32.mrb[0].mxu0
      %v6838 = vadd.f32 0.0, %v6837
      %v6839 = vpop.f32.mrb[0].mxu0
      %6840 = vmatprep.mubr.f32.mxu0 0.0
      %6841 = vmatmul.mubr.f32.gmra.mrb[0].mxu0 %v6626
      %v6842 = vpop.f32.mrb[0].mxu0
      %v6843 = vadd.f32 0.0, %v6842
      %v6844 = vpop.f32.mrb[0].mxu0
      %6845 = vmatprep.mubr.f32.mxu0 0.0
      %6846 = vmatmul.mubr.f32.gmra.mrb[0].mxu0 %v6629
      %v6847 = vpop.f32.mrb[0].mxu0
      %v6848 = vadd.f32 0.0, %v6847
      %v6849 = vpop.f32.mrb[0].mxu0
      %6850 = vmatprep.mubr.f32.mxu0 0.0
      %6851 = vmatmul.mubr.f32.gmra.mrb[0].mxu0 %v6632
      %v6852 = vpop.f32.mrb[0].mxu0
      %v6853 = vadd.f32 0.0, %v6852
      %v6854 = vpop.f32.mrb[0].mxu0
      %6855 = vmatprep.mubr.f32.mxu0 0.0
      %6856 = vmatmul.mubr.f32.gmra.mrb[0].mxu0 %v6635
      %v6857 = vpop.f32.mrb[0].mxu0
      %v6858 = vadd.f32 0.0, %v6857
      %v6859 = vpop.f32.mrb[0].mxu0
      %6860 = vmatprep.mubr.f32.mxu0 0.0
      %6861 = vmatmul.mubr.f32.gmra.mrb[0].mxu0 %v6638
      %v6862 = vpop.f32.mrb[0].mxu0
      %v6863 = vadd.f32 0.0, %v6862
      %v6864 = vpop.f32.mrb[0].mxu0
      %6865 = vmatprep.mubr.f32.mxu0 0.0
      %6866 = vmatmul.mubr.f32.gmra.mrb[0].mxu0 %v6641
      %v6867 = vpop.f32.mrb[0].mxu0
      %v6868 = vadd.f32 0.0, %v6867
      %v6869 = vpop.f32.mrb[0].mxu0
      %6870 = vdwg.mxu0
      %v6871 = vadd.f32 %v6480, %v6713
      %v6872 = vadd.f32 %v6481, %v6718
      %v6873 = vadd.f32 %v6482, %v6723
      %v6874 = vadd.f32 %v6483, %v6728
      %v6875 = vadd.f32 %v6484, %v6733
      %v6876 = vadd.f32 %v6485, %v6738
      %v6877 = vadd.f32 %v6486, %v6743
      %v6878 = vadd.f32 %v6487, %v6748
      %v6879 = vadd.f32 %v6488, %v6753
      %v6880 = vadd.f32 %v6489, %v6758
      %v6881 = vadd.f32 %v6490, %v6763
      %v6882 = vadd.f32 %v6491, %v6768
      %v6883 = vadd.f32 %v6492, %v6773
      %v6884 = vadd.f32 %v6493, %v6778
      %v6885 = vadd.f32 %v6494, %v6783
      %v6886 = vadd.f32 %v6495, %v6788
      %v6887 = vadd.f32 %v6496, %v6793
      %v6888 = vadd.f32 %v6497, %v6798
      %v6889 = vadd.f32 %v6498, %v6803
      %v6890 = vadd.f32 %v6499, %v6808
      %v6891 = vadd.f32 %v6500, %v6813
      %v6892 = vadd.f32 %v6501, %v6818
      %v6893 = vadd.f32 %v6502, %v6823
      %v6894 = vadd.f32 %v6503, %v6828
      %v6895 = vadd.f32 %v6504, %v6833
      %v6896 = vadd.f32 %v6505, %v6838
      %v6897 = vadd.f32 %v6506, %v6843
      %v6898 = vadd.f32 %v6507, %v6848
      %v6899 = vadd.f32 %v6508, %v6853
      %v6900 = vadd.f32 %v6509, %v6858
      %v6901 = vadd.f32 %v6510, %v6863
      %v6902 = vadd.f32 %v6511, %v6868
      %v6903 = vld [vmem:[%s6512 + $0x1] sm:$0xff]
      %v6904 = vld [vmem:[%s6512 + $0x9] sm:$0xff]
      %v6905 = vld [vmem:[%s6512 + $0x19] sm:$0xff]
      %v6906 = vld [vmem:[%s6512 + $0x21] sm:$0xff]
      %v6907 = vld [vmem:[%s6512 + $0x31] sm:$0xff]
      %v6908 = vld [vmem:[%s6512 + $0x39] sm:$0xff]
      %v6909 = vld [vmem:[%s6512 + $0x49] sm:$0xff]
      %v6910 = vld [vmem:[%s6512 + $0x51] sm:$0xff]
      %v6911 = vld [vmem:[%s6512 + $0x61] sm:$0xff]
      %v6912 = vld [vmem:[%s6512 + $0x69] sm:$0xff]
      %v6913 = vld [vmem:[%s6512 + $0x79] sm:$0xff]
      %v6914 = vld [vmem:[%s6512 + $0x81] sm:$0xff]
      %v6915 = vld [vmem:[%s6512 + $0x91] sm:$0xff]
      %v6916 = vld [vmem:[%s6512 + $0x99] sm:$0xff]
      %v6917 = vld [vmem:[%s6512 + $0xa9] sm:$0xff]
      %v6918 = vld [vmem:[%s6512 + $0xb1] sm:$0xff]
      %v6919 = vld [vmem:[%s6512 + $0xc1] sm:$0xff]
      %v6920 = vld [vmem:[%s6512 + $0xc9] sm:$0xff]
      %v6921 = vld [vmem:[%s6512 + $0xd9] sm:$0xff]
      %v6922 = vld [vmem:[%s6512 + $0xe1] sm:$0xff]
      %v6923 = vld [vmem:[%s6512 + $0xf1] sm:$0xff]
      %v6924 = vld [vmem:[%s6512 + $0xf9] sm:$0xff]
      %v6925 = vld [vmem:[%s6512 + $0x109] sm:$0xff]
      %v6926 = vld [vmem:[%s6512 + $0x111] sm:$0xff]
      %v6927 = vld [vmem:[%s6512 + $0x121] sm:$0xff]
      %v6928 = vld [vmem:[%s6512 + $0x129] sm:$0xff]
      %v6929 = vld [vmem:[%s6512 + $0x139] sm:$0xff]
      %v6930 = vld [vmem:[%s6512 + $0x141] sm:$0xff]
      %v6931 = vld [vmem:[%s6512 + $0x151] sm:$0xff]
      %v6932 = vld [vmem:[%s6512 + $0x159] sm:$0xff]
      %v6933 = vld [vmem:[%s6512 + $0x169] sm:$0xff]
      %v6934 = vld [vmem:[%s6512 + $0x171] sm:$0xff]
      %s6935 = scalar_lea.vmem %s3, 28
      %v6936 = vld [vmem:[%s6935] sm:$0xf]
      %v6938 = vsel %vm258, %v6903, 0
      %v6941 = vsel %vm258, %v6904, 0
      %v6944 = vsel %vm258, %v6905, 0
      %v6947 = vsel %vm258, %v6906, 0
      %v6950 = vsel %vm258, %v6907, 0
      %v6953 = vsel %vm258, %v6908, 0
      %v6956 = vsel %vm258, %v6909, 0
      %v6959 = vsel %vm258, %v6910, 0
      %v6962 = vsel %vm258, %v6911, 0
      %v6965 = vsel %vm258, %v6912, 0
      %v6968 = vsel %vm258, %v6913, 0
      %v6971 = vsel %vm258, %v6914, 0
      %v6974 = vsel %vm258, %v6915, 0
      %v6977 = vsel %vm258, %v6916, 0
      %v6980 = vsel %vm258, %v6917, 0
      %v6983 = vsel %vm258, %v6918, 0
      %v6986 = vsel %vm258, %v6919, 0
      %v6989 = vsel %vm258, %v6920, 0
      %v6992 = vsel %vm258, %v6921, 0
      %v6995 = vsel %vm258, %v6922, 0
      %v6998 = vsel %vm258, %v6923, 0
      %v7001 = vsel %vm258, %v6924, 0
      %v7004 = vsel %vm258, %v6925, 0
      %v7007 = vsel %vm258, %v6926, 0
      %v7010 = vsel %vm258, %v6927, 0
      %v7013 = vsel %vm258, %v6928, 0
      %v7016 = vsel %vm258, %v6929, 0
      %v7019 = vsel %vm258, %v6930, 0
      %v7022 = vsel %vm258, %v6931, 0
      %v7025 = vsel %vm258, %v6932, 0
      %v7028 = vsel %vm258, %v6933, 0
      %v7031 = vsel %vm258, %v6934, 0
      %v7034 = vsel %vm532, %v6936, 0
      %7036 = vmatprep.subr.mxu0 0.0
      %7037 = vmatpush1.msra.mxu0 %v7034
      %7038 = vmatprep.subr.mxu0 0.0
      %7039 = vmatpush1.msra.mxu0 0.0
      %7040 = vmatprep.subr.mxu0 0.0
      %7041 = vmatpush1.msra.mxu0 0.0
      %7042 = vmatprep.subr.mxu0 0.0
      %7043 = vmatpush1.msra.mxu0 0.0
      %7044 = vmatprep.subr.mxu0 0.0
      %7045 = vmatpush1.msra.mxu0 0.0
      %7046 = vmatprep.subr.mxu0 0.0
      %7047 = vmatpush1.msra.mxu0 0.0
      %7048 = vmatprep.subr.mxu0 0.0
      %7049 = vmatpush1.msra.mxu0 0.0
      %7050 = vmatprep.subr.mxu0 0.0
      %7051 = vmatpush1.msra.mxu0 0.0
      %7052 = vmatprep.subr.mxu0 0.0
      %7053 = vmatpush1.msra.mxu0 0.0
      %7054 = vmatprep.subr.mxu0 0.0
      %7055 = vmatpush1.msra.mxu0 0.0
      %7056 = vmatprep.subr.mxu0 0.0
      %7057 = vmatpush1.msra.mxu0 0.0
      %7058 = vmatprep.subr.mxu0 0.0
      %7059 = vmatpush1.msra.mxu0 0.0
      %7060 = vmatprep.subr.mxu0 0.0
      %7061 = vmatpush1.msra.mxu0 0.0
      %7062 = vmatprep.subr.mxu0 0.0
      %7063 = vmatpush1.msra.mxu0 0.0
      %7064 = vmatprep.subr.mxu0 0.0
      %7065 = vmatpush1.msra.mxu0 0.0
      %7066 = vmatprep.subr.mxu0 0.0
      %7067 = vmatpush1.msra.mxu0 0.0
      %7068 = vmatprep.subr.mxu0 0.0
      %7069 = vmatpush1.msra.mxu0 0.0
      %7070 = vmatprep.subr.mxu0 0.0
      %7071 = vmatpush1.msra.mxu0 0.0
      %7072 = vmatprep.subr.mxu0 0.0
      %7073 = vmatpush1.msra.mxu0 0.0
      %7074 = vmatprep.subr.mxu0 0.0
      %7075 = vmatpush1.msra.mxu0 0.0
      %7076 = vmatprep.subr.mxu0 0.0
      %7077 = vmatpush1.msra.mxu0 0.0
      %7078 = vmatprep.subr.mxu0 0.0
      %7079 = vmatpush1.msra.mxu0 0.0
      %7080 = vmatprep.subr.mxu0 0.0
      %7081 = vmatpush1.msra.mxu0 0.0
      %7082 = vmatprep.subr.mxu0 0.0
      %7083 = vmatpush1.msra.mxu0 0.0
      %7084 = vmatprep.subr.mxu0 0.0
      %7085 = vmatpush1.msra.mxu0 0.0
      %7086 = vmatprep.subr.mxu0 0.0
      %7087 = vmatpush1.msra.mxu0 0.0
      %7088 = vmatprep.subr.mxu0 0.0
      %7089 = vmatpush1.msra.mxu0 0.0
      %7090 = vmatprep.subr.mxu0 0.0
      %7091 = vmatpush1.msra.mxu0 0.0
      %7092 = vmatprep.subr.mxu0 0.0
      %7093 = vmatpush1.msra.mxu0 0.0
      %7094 = vmatprep.subr.mxu0 0.0
      %7095 = vmatpush1.msra.mxu0 0.0
      %7096 = vmatprep.subr.mxu0 0.0
      %7097 = vmatpush1.msra.mxu0 0.0
      %7098 = vmatprep.subr.mxu0 0.0
      %7099 = vmatpush1.msra.mxu0 0.0
      %7100 = vmatprep.mubr.f32.mxu0 0.0
      %7101 = vmatmul.mubr.f32.gmra.mrb[0].mxu0 %v6938
      %v7102 = vpop.f32.mrb[0].mxu0
      %v7103 = vadd.f32 0.0, %v7102
      %v7104 = vpop.f32.mrb[0].mxu0
      %7105 = vmatprep.mubr.f32.mxu0 0.0
      %7106 = vmatmul.mubr.f32.gmra.mrb[0].mxu0 %v6941
      %v7107 = vpop.f32.mrb[0].mxu0
      %v7108 = vadd.f32 0.0, %v7107
      %v7109 = vpop.f32.mrb[0].mxu0
      %7110 = vmatprep.mubr.f32.mxu0 0.0
      %7111 = vmatmul.mubr.f32.gmra.mrb[0].mxu0 %v6944
      %v7112 = vpop.f32.mrb[0].mxu0
      %v7113 = vadd.f32 0.0, %v7112
      %v7114 = vpop.f32.mrb[0].mxu0
      %7115 = vmatprep.mubr.f32.mxu0 0.0
      %7116 = vmatmul.mubr.f32.gmra.mrb[0].mxu0 %v6947
      %v7117 = vpop.f32.mrb[0].mxu0
      %v7118 = vadd.f32 0.0, %v7117
      %v7119 = vpop.f32.mrb[0].mxu0
      %7120 = vmatprep.mubr.f32.mxu0 0.0
      %7121 = vmatmul.mubr.f32.gmra.mrb[0].mxu0 %v6950
      %v7122 = vpop.f32.mrb[0].mxu0
      %v7123 = vadd.f32 0.0, %v7122
      %v7124 = vpop.f32.mrb[0].mxu0
      %7125 = vmatprep.mubr.f32.mxu0 0.0
      %7126 = vmatmul.mubr.f32.gmra.mrb[0].mxu0 %v6953
      %v7127 = vpop.f32.mrb[0].mxu0
      %v7128 = vadd.f32 0.0, %v7127
      %v7129 = vpop.f32.mrb[0].mxu0
      %7130 = vmatprep.mubr.f32.mxu0 0.0
      %7131 = vmatmul.mubr.f32.gmra.mrb[0].mxu0 %v6956
      %v7132 = vpop.f32.mrb[0].mxu0
      %v7133 = vadd.f32 0.0, %v7132
      %v7134 = vpop.f32.mrb[0].mxu0
      %7135 = vmatprep.mubr.f32.mxu0 0.0
      %7136 = vmatmul.mubr.f32.gmra.mrb[0].mxu0 %v6959
      %v7137 = vpop.f32.mrb[0].mxu0
      %v7138 = vadd.f32 0.0, %v7137
      %v7139 = vpop.f32.mrb[0].mxu0
      %7140 = vmatprep.mubr.f32.mxu0 0.0
      %7141 = vmatmul.mubr.f32.gmra.mrb[0].mxu0 %v6962
      %v7142 = vpop.f32.mrb[0].mxu0
      %v7143 = vadd.f32 0.0, %v7142
      %v7144 = vpop.f32.mrb[0].mxu0
      %7145 = vmatprep.mubr.f32.mxu0 0.0
      %7146 = vmatmul.mubr.f32.gmra.mrb[0].mxu0 %v6965
      %v7147 = vpop.f32.mrb[0].mxu0
      %v7148 = vadd.f32 0.0, %v7147
      %v7149 = vpop.f32.mrb[0].mxu0
      %7150 = vmatprep.mubr.f32.mxu0 0.0
      %7151 = vmatmul.mubr.f32.gmra.mrb[0].mxu0 %v6968
      %v7152 = vpop.f32.mrb[0].mxu0
      %v7153 = vadd.f32 0.0, %v7152
      %v7154 = vpop.f32.mrb[0].mxu0
      %7155 = vmatprep.mubr.f32.mxu0 0.0
      %7156 = vmatmul.mubr.f32.gmra.mrb[0].mxu0 %v6971
      %v7157 = vpop.f32.mrb[0].mxu0
      %v7158 = vadd.f32 0.0, %v7157
      %v7159 = vpop.f32.mrb[0].mxu0
      %7160 = vmatprep.mubr.f32.mxu0 0.0
      %7161 = vmatmul.mubr.f32.gmra.mrb[0].mxu0 %v6974
      %v7162 = vpop.f32.mrb[0].mxu0
      %v7163 = vadd.f32 0.0, %v7162
      %v7164 = vpop.f32.mrb[0].mxu0
      %7165 = vmatprep.mubr.f32.mxu0 0.0
      %7166 = vmatmul.mubr.f32.gmra.mrb[0].mxu0 %v6977
      %v7167 = vpop.f32.mrb[0].mxu0
      %v7168 = vadd.f32 0.0, %v7167
      %v7169 = vpop.f32.mrb[0].mxu0
      %7170 = vmatprep.mubr.f32.mxu0 0.0
      %7171 = vmatmul.mubr.f32.gmra.mrb[0].mxu0 %v6980
      %v7172 = vpop.f32.mrb[0].mxu0
      %v7173 = vadd.f32 0.0, %v7172
      %v7174 = vpop.f32.mrb[0].mxu0
      %7175 = vmatprep.mubr.f32.mxu0 0.0
      %7176 = vmatmul.mubr.f32.gmra.mrb[0].mxu0 %v6983
      %v7177 = vpop.f32.mrb[0].mxu0
      %v7178 = vadd.f32 0.0, %v7177
      %v7179 = vpop.f32.mrb[0].mxu0
      %7180 = vmatprep.mubr.f32.mxu0 0.0
      %7181 = vmatmul.mubr.f32.gmra.mrb[0].mxu0 %v6986
      %v7182 = vpop.f32.mrb[0].mxu0
      %v7183 = vadd.f32 0.0, %v7182
      %v7184 = vpop.f32.mrb[0].mxu0
      %7185 = vmatprep.mubr.f32.mxu0 0.0
      %7186 = vmatmul.mubr.f32.gmra.mrb[0].mxu0 %v6989
      %v7187 = vpop.f32.mrb[0].mxu0
      %v7188 = vadd.f32 0.0, %v7187
      %v7189 = vpop.f32.mrb[0].mxu0
      %7190 = vmatprep.mubr.f32.mxu0 0.0
      %7191 = vmatmul.mubr.f32.gmra.mrb[0].mxu0 %v6992
      %v7192 = vpop.f32.mrb[0].mxu0
      %v7193 = vadd.f32 0.0, %v7192
      %v7194 = vpop.f32.mrb[0].mxu0
      %7195 = vmatprep.mubr.f32.mxu0 0.0
      %7196 = vmatmul.mubr.f32.gmra.mrb[0].mxu0 %v6995
      %v7197 = vpop.f32.mrb[0].mxu0
      %v7198 = vadd.f32 0.0, %v7197
      %v7199 = vpop.f32.mrb[0].mxu0
      %7200 = vmatprep.mubr.f32.mxu0 0.0
      %7201 = vmatmul.mubr.f32.gmra.mrb[0].mxu0 %v6998
      %v7202 = vpop.f32.mrb[0].mxu0
      %v7203 = vadd.f32 0.0, %v7202
      %v7204 = vpop.f32.mrb[0].mxu0
      %7205 = vmatprep.mubr.f32.mxu0 0.0
      %7206 = vmatmul.mubr.f32.gmra.mrb[0].mxu0 %v7001
      %v7207 = vpop.f32.mrb[0].mxu0
      %v7208 = vadd.f32 0.0, %v7207
      %v7209 = vpop.f32.mrb[0].mxu0
      %7210 = vmatprep.mubr.f32.mxu0 0.0
      %7211 = vmatmul.mubr.f32.gmra.mrb[0].mxu0 %v7004
      %v7212 = vpop.f32.mrb[0].mxu0
      %v7213 = vadd.f32 0.0, %v7212
      %v7214 = vpop.f32.mrb[0].mxu0
      %7215 = vmatprep.mubr.f32.mxu0 0.0
      %7216 = vmatmul.mubr.f32.gmra.mrb[0].mxu0 %v7007
      %v7217 = vpop.f32.mrb[0].mxu0
      %v7218 = vadd.f32 0.0, %v7217
      %v7219 = vpop.f32.mrb[0].mxu0
      %7220 = vmatprep.mubr.f32.mxu0 0.0
      %7221 = vmatmul.mubr.f32.gmra.mrb[0].mxu0 %v7010
      %v7222 = vpop.f32.mrb[0].mxu0
      %v7223 = vadd.f32 0.0, %v7222
      %v7224 = vpop.f32.mrb[0].mxu0
      %7225 = vmatprep.mubr.f32.mxu0 0.0
      %7226 = vmatmul.mubr.f32.gmra.mrb[0].mxu0 %v7013
      %v7227 = vpop.f32.mrb[0].mxu0
      %v7228 = vadd.f32 0.0, %v7227
      %v7229 = vpop.f32.mrb[0].mxu0
      %7230 = vmatprep.mubr.f32.mxu0 0.0
      %7231 = vmatmul.mubr.f32.gmra.mrb[0].mxu0 %v7016
      %v7232 = vpop.f32.mrb[0].mxu0
      %v7233 = vadd.f32 0.0, %v7232
      %v7234 = vpop.f32.mrb[0].mxu0
      %7235 = vmatprep.mubr.f32.mxu0 0.0
      %7236 = vmatmul.mubr.f32.gmra.mrb[0].mxu0 %v7019
      %v7237 = vpop.f32.mrb[0].mxu0
      %v7238 = vadd.f32 0.0, %v7237
      %v7239 = vpop.f32.mrb[0].mxu0
      %7240 = vmatprep.mubr.f32.mxu0 0.0
      %7241 = vmatmul.mubr.f32.gmra.mrb[0].mxu0 %v7022
      %v7242 = vpop.f32.mrb[0].mxu0
      %v7243 = vadd.f32 0.0, %v7242
      %v7244 = vpop.f32.mrb[0].mxu0
      %7245 = vmatprep.mubr.f32.mxu0 0.0
      %7246 = vmatmul.mubr.f32.gmra.mrb[0].mxu0 %v7025
      %v7247 = vpop.f32.mrb[0].mxu0
      %v7248 = vadd.f32 0.0, %v7247
      %v7249 = vpop.f32.mrb[0].mxu0
      %7250 = vmatprep.mubr.f32.mxu0 0.0
      %7251 = vmatmul.mubr.f32.gmra.mrb[0].mxu0 %v7028
      %v7252 = vpop.f32.mrb[0].mxu0
      %v7253 = vadd.f32 0.0, %v7252
      %v7254 = vpop.f32.mrb[0].mxu0
      %7255 = vmatprep.mubr.f32.mxu0 0.0
      %7256 = vmatmul.mubr.f32.gmra.mrb[0].mxu0 %v7031
      %v7257 = vpop.f32.mrb[0].mxu0
      %v7258 = vadd.f32 0.0, %v7257
      %v7259 = vpop.f32.mrb[0].mxu0
      %7260 = vdwg.mxu0
      %v7261 = vadd.f32 %v6871, %v7103
      %v7262 = vadd.f32 %v6872, %v7108
      %v7263 = vadd.f32 %v6873, %v7113
      %v7264 = vadd.f32 %v6874, %v7118
      %v7265 = vadd.f32 %v6875, %v7123
      %v7266 = vadd.f32 %v6876, %v7128
      %v7267 = vadd.f32 %v6877, %v7133
      %v7268 = vadd.f32 %v6878, %v7138
      %v7269 = vadd.f32 %v6879, %v7143
      %v7270 = vadd.f32 %v6880, %v7148
      %v7271 = vadd.f32 %v6881, %v7153
      %v7272 = vadd.f32 %v6882, %v7158
      %v7273 = vadd.f32 %v6883, %v7163
      %v7274 = vadd.f32 %v6884, %v7168
      %v7275 = vadd.f32 %v6885, %v7173
      %v7276 = vadd.f32 %v6886, %v7178
      %v7277 = vadd.f32 %v6887, %v7183
      %v7278 = vadd.f32 %v6888, %v7188
      %v7279 = vadd.f32 %v6889, %v7193
      %v7280 = vadd.f32 %v6890, %v7198
      %v7281 = vadd.f32 %v6891, %v7203
      %v7282 = vadd.f32 %v6892, %v7208
      %v7283 = vadd.f32 %v6893, %v7213
      %v7284 = vadd.f32 %v6894, %v7218
      %v7285 = vadd.f32 %v6895, %v7223
      %v7286 = vadd.f32 %v6896, %v7228
      %v7287 = vadd.f32 %v6897, %v7233
      %v7288 = vadd.f32 %v6898, %v7238
      %v7289 = vadd.f32 %v6899, %v7243
      %v7290 = vadd.f32 %v6900, %v7248
      %v7291 = vadd.f32 %v6901, %v7253
      %v7292 = vadd.f32 %v6902, %v7258
      %v7293 = vld [vmem:[%s6512 + $0x2] sm:$0xff]
      %v7294 = vld [vmem:[%s6512 + $0xa] sm:$0xff]
      %v7295 = vld [vmem:[%s6512 + $0x1a] sm:$0xff]
      %v7296 = vld [vmem:[%s6512 + $0x22] sm:$0xff]
      %v7297 = vld [vmem:[%s6512 + $0x32] sm:$0xff]
      %v7298 = vld [vmem:[%s6512 + $0x3a] sm:$0xff]
      %v7299 = vld [vmem:[%s6512 + $0x4a] sm:$0xff]
      %v7300 = vld [vmem:[%s6512 + $0x52] sm:$0xff]
      %v7301 = vld [vmem:[%s6512 + $0x62] sm:$0xff]
      %v7302 = vld [vmem:[%s6512 + $0x6a] sm:$0xff]
      %v7303 = vld [vmem:[%s6512 + $0x7a] sm:$0xff]
      %v7304 = vld [vmem:[%s6512 + $0x82] sm:$0xff]
      %v7305 = vld [vmem:[%s6512 + $0x92] sm:$0xff]
      %v7306 = vld [vmem:[%s6512 + $0x9a] sm:$0xff]
      %v7307 = vld [vmem:[%s6512 + $0xaa] sm:$0xff]
      %v7308 = vld [vmem:[%s6512 + $0xb2] sm:$0xff]
      %v7309 = vld [vmem:[%s6512 + $0xc2] sm:$0xff]
      %v7310 = vld [vmem:[%s6512 + $0xca] sm:$0xff]
      %v7311 = vld [vmem:[%s6512 + $0xda] sm:$0xff]
      %v7312 = vld [vmem:[%s6512 + $0xe2] sm:$0xff]
      %v7313 = vld [vmem:[%s6512 + $0xf2] sm:$0xff]
      %v7314 = vld [vmem:[%s6512 + $0xfa] sm:$0xff]
      %v7315 = vld [vmem:[%s6512 + $0x10a] sm:$0xff]
      %v7316 = vld [vmem:[%s6512 + $0x112] sm:$0xff]
      %v7317 = vld [vmem:[%s6512 + $0x122] sm:$0xff]
      %v7318 = vld [vmem:[%s6512 + $0x12a] sm:$0xff]
      %v7319 = vld [vmem:[%s6512 + $0x13a] sm:$0xff]
      %v7320 = vld [vmem:[%s6512 + $0x142] sm:$0xff]
      %v7321 = vld [vmem:[%s6512 + $0x152] sm:$0xff]
      %v7322 = vld [vmem:[%s6512 + $0x15a] sm:$0xff]
      %v7323 = vld [vmem:[%s6512 + $0x16a] sm:$0xff]
      %v7324 = vld [vmem:[%s6512 + $0x172] sm:$0xff]
      %s7325 = scalar_lea.vmem %s3, 32
      %v7326 = vld [vmem:[%s7325] sm:$0xf]
      %v7328 = vsel %vm258, %v7293, 0
      %v7331 = vsel %vm258, %v7294, 0
      %v7334 = vsel %vm258, %v7295, 0
      %v7337 = vsel %vm258, %v7296, 0
      %v7340 = vsel %vm258, %v7297, 0
      %v7343 = vsel %vm258, %v7298, 0
      %v7346 = vsel %vm258, %v7299, 0
      %v7349 = vsel %vm258, %v7300, 0
      %v7352 = vsel %vm258, %v7301, 0
      %v7355 = vsel %vm258, %v7302, 0
      %v7358 = vsel %vm258, %v7303, 0
      %v7361 = vsel %vm258, %v7304, 0
      %v7364 = vsel %vm258, %v7305, 0
      %v7367 = vsel %vm258, %v7306, 0
      %v7370 = vsel %vm258, %v7307, 0
      %v7373 = vsel %vm258, %v7308, 0
      %v7376 = vsel %vm258, %v7309, 0
      %v7379 = vsel %vm258, %v7310, 0
      %v7382 = vsel %vm258, %v7311, 0
      %v7385 = vsel %vm258, %v7312, 0
      %v7388 = vsel %vm258, %v7313, 0
      %v7391 = vsel %vm258, %v7314, 0
      %v7394 = vsel %vm258, %v7315, 0
      %v7397 = vsel %vm258, %v7316, 0
      %v7400 = vsel %vm258, %v7317, 0
      %v7403 = vsel %vm258, %v7318, 0
      %v7406 = vsel %vm258, %v7319, 0
      %v7409 = vsel %vm258, %v7320, 0
      %v7412 = vsel %vm258, %v7321, 0
      %v7415 = vsel %vm258, %v7322, 0
      %v7418 = vsel %vm258, %v7323, 0
      %v7421 = vsel %vm258, %v7324, 0
      %v7424 = vsel %vm532, %v7326, 0
      %7426 = vmatprep.subr.mxu0 0.0
      %7427 = vmatpush1.msra.mxu0 %v7424
      %7428 = vmatprep.subr.mxu0 0.0
      %7429 = vmatpush1.msra.mxu0 0.0
      %7430 = vmatprep.subr.mxu0 0.0
      %7431 = vmatpush1.msra.mxu0 0.0
      %7432 = vmatprep.subr.mxu0 0.0
      %7433 = vmatpush1.msra.mxu0 0.0
      %7434 = vmatprep.subr.mxu0 0.0
      %7435 = vmatpush1.msra.mxu0 0.0
      %7436 = vmatprep.subr.mxu0 0.0
      %7437 = vmatpush1.msra.mxu0 0.0
      %7438 = vmatprep.subr.mxu0 0.0
      %7439 = vmatpush1.msra.mxu0 0.0
      %7440 = vmatprep.subr.mxu0 0.0
      %7441 = vmatpush1.msra.mxu0 0.0
      %7442 = vmatprep.subr.mxu0 0.0
      %7443 = vmatpush1.msra.mxu0 0.0
      %7444 = vmatprep.subr.mxu0 0.0
      %7445 = vmatpush1.msra.mxu0 0.0
      %7446 = vmatprep.subr.mxu0 0.0
      %7447 = vmatpush1.msra.mxu0 0.0
      %7448 = vmatprep.subr.mxu0 0.0
      %7449 = vmatpush1.msra.mxu0 0.0
      %7450 = vmatprep.subr.mxu0 0.0
      %7451 = vmatpush1.msra.mxu0 0.0
      %7452 = vmatprep.subr.mxu0 0.0
      %7453 = vmatpush1.msra.mxu0 0.0
      %7454 = vmatprep.subr.mxu0 0.0
      %7455 = vmatpush1.msra.mxu0 0.0
      %7456 = vmatprep.subr.mxu0 0.0
      %7457 = vmatpush1.msra.mxu0 0.0
      %7458 = vmatprep.subr.mxu0 0.0
      %7459 = vmatpush1.msra.mxu0 0.0
      %7460 = vmatprep.subr.mxu0 0.0
      %7461 = vmatpush1.msra.mxu0 0.0
      %7462 = vmatprep.subr.mxu0 0.0
      %7463 = vmatpush1.msra.mxu0 0.0
      %7464 = vmatprep.subr.mxu0 0.0
      %7465 = vmatpush1.msra.mxu0 0.0
      %7466 = vmatprep.subr.mxu0 0.0
      %7467 = vmatpush1.msra.mxu0 0.0
      %7468 = vmatprep.subr.mxu0 0.0
      %7469 = vmatpush1.msra.mxu0 0.0
      %7470 = vmatprep.subr.mxu0 0.0
      %7471 = vmatpush1.msra.mxu0 0.0
      %7472 = vmatprep.subr.mxu0 0.0
      %7473 = vmatpush1.msra.mxu0 0.0
      %7474 = vmatprep.subr.mxu0 0.0
      %7475 = vmatpush1.msra.mxu0 0.0
      %7476 = vmatprep.subr.mxu0 0.0
      %7477 = vmatpush1.msra.mxu0 0.0
      %7478 = vmatprep.subr.mxu0 0.0
      %7479 = vmatpush1.msra.mxu0 0.0
      %7480 = vmatprep.subr.mxu0 0.0
      %7481 = vmatpush1.msra.mxu0 0.0
      %7482 = vmatprep.subr.mxu0 0.0
      %7483 = vmatpush1.msra.mxu0 0.0
      %7484 = vmatprep.subr.mxu0 0.0
      %7485 = vmatpush1.msra.mxu0 0.0
      %7486 = vmatprep.subr.mxu0 0.0
      %7487 = vmatpush1.msra.mxu0 0.0
      %7488 = vmatprep.subr.mxu0 0.0
      %7489 = vmatpush1.msra.mxu0 0.0
      %7490 = vmatprep.mubr.f32.mxu0 0.0
      %7491 = vmatmul.mubr.f32.gmra.mrb[0].mxu0 %v7328
      %v7492 = vpop.f32.mrb[0].mxu0
      %v7493 = vadd.f32 0.0, %v7492
      %v7494 = vpop.f32.mrb[0].mxu0
      %7495 = vmatprep.mubr.f32.mxu0 0.0
      %7496 = vmatmul.mubr.f32.gmra.mrb[0].mxu0 %v7331
      %v7497 = vpop.f32.mrb[0].mxu0
      %v7498 = vadd.f32 0.0, %v7497
      %v7499 = vpop.f32.mrb[0].mxu0
      %7500 = vmatprep.mubr.f32.mxu0 0.0
      %7501 = vmatmul.mubr.f32.gmra.mrb[0].mxu0 %v7334
      %v7502 = vpop.f32.mrb[0].mxu0
      %v7503 = vadd.f32 0.0, %v7502
      %v7504 = vpop.f32.mrb[0].mxu0
      %7505 = vmatprep.mubr.f32.mxu0 0.0
      %7506 = vmatmul.mubr.f32.gmra.mrb[0].mxu0 %v7337
      %v7507 = vpop.f32.mrb[0].mxu0
      %v7508 = vadd.f32 0.0, %v7507
      %v7509 = vpop.f32.mrb[0].mxu0
      %7510 = vmatprep.mubr.f32.mxu0 0.0
      %7511 = vmatmul.mubr.f32.gmra.mrb[0].mxu0 %v7340
      %v7512 = vpop.f32.mrb[0].mxu0
      %v7513 = vadd.f32 0.0, %v7512
      %v7514 = vpop.f32.mrb[0].mxu0
      %7515 = vmatprep.mubr.f32.mxu0 0.0
      %7516 = vmatmul.mubr.f32.gmra.mrb[0].mxu0 %v7343
      %v7517 = vpop.f32.mrb[0].mxu0
      %v7518 = vadd.f32 0.0, %v7517
      %v7519 = vpop.f32.mrb[0].mxu0
      %7520 = vmatprep.mubr.f32.mxu0 0.0
      %7521 = vmatmul.mubr.f32.gmra.mrb[0].mxu0 %v7346
      %v7522 = vpop.f32.mrb[0].mxu0
      %v7523 = vadd.f32 0.0, %v7522
      %v7524 = vpop.f32.mrb[0].mxu0
      %7525 = vmatprep.mubr.f32.mxu0 0.0
      %7526 = vmatmul.mubr.f32.gmra.mrb[0].mxu0 %v7349
      %v7527 = vpop.f32.mrb[0].mxu0
      %v7528 = vadd.f32 0.0, %v7527
      %v7529 = vpop.f32.mrb[0].mxu0
      %7530 = vmatprep.mubr.f32.mxu0 0.0
      %7531 = vmatmul.mubr.f32.gmra.mrb[0].mxu0 %v7352
      %v7532 = vpop.f32.mrb[0].mxu0
      %v7533 = vadd.f32 0.0, %v7532
      %v7534 = vpop.f32.mrb[0].mxu0
      %7535 = vmatprep.mubr.f32.mxu0 0.0
      %7536 = vmatmul.mubr.f32.gmra.mrb[0].mxu0 %v7355
      %v7537 = vpop.f32.mrb[0].mxu0
      %v7538 = vadd.f32 0.0, %v7537
      %v7539 = vpop.f32.mrb[0].mxu0
      %7540 = vmatprep.mubr.f32.mxu0 0.0
      %7541 = vmatmul.mubr.f32.gmra.mrb[0].mxu0 %v7358
      %v7542 = vpop.f32.mrb[0].mxu0
      %v7543 = vadd.f32 0.0, %v7542
      %v7544 = vpop.f32.mrb[0].mxu0
      %7545 = vmatprep.mubr.f32.mxu0 0.0
      %7546 = vmatmul.mubr.f32.gmra.mrb[0].mxu0 %v7361
      %v7547 = vpop.f32.mrb[0].mxu0
      %v7548 = vadd.f32 0.0, %v7547
      %v7549 = vpop.f32.mrb[0].mxu0
      %7550 = vmatprep.mubr.f32.mxu0 0.0
      %7551 = vmatmul.mubr.f32.gmra.mrb[0].mxu0 %v7364
      %v7552 = vpop.f32.mrb[0].mxu0
      %v7553 = vadd.f32 0.0, %v7552
      %v7554 = vpop.f32.mrb[0].mxu0
      %7555 = vmatprep.mubr.f32.mxu0 0.0
      %7556 = vmatmul.mubr.f32.gmra.mrb[0].mxu0 %v7367
      %v7557 = vpop.f32.mrb[0].mxu0
      %v7558 = vadd.f32 0.0, %v7557
      %v7559 = vpop.f32.mrb[0].mxu0
      %7560 = vmatprep.mubr.f32.mxu0 0.0
      %7561 = vmatmul.mubr.f32.gmra.mrb[0].mxu0 %v7370
      %v7562 = vpop.f32.mrb[0].mxu0
      %v7563 = vadd.f32 0.0, %v7562
      %v7564 = vpop.f32.mrb[0].mxu0
      %7565 = vmatprep.mubr.f32.mxu0 0.0
      %7566 = vmatmul.mubr.f32.gmra.mrb[0].mxu0 %v7373
      %v7567 = vpop.f32.mrb[0].mxu0
      %v7568 = vadd.f32 0.0, %v7567
      %v7569 = vpop.f32.mrb[0].mxu0
      %7570 = vmatprep.mubr.f32.mxu0 0.0
      %7571 = vmatmul.mubr.f32.gmra.mrb[0].mxu0 %v7376
      %v7572 = vpop.f32.mrb[0].mxu0
      %v7573 = vadd.f32 0.0, %v7572
      %v7574 = vpop.f32.mrb[0].mxu0
      %7575 = vmatprep.mubr.f32.mxu0 0.0
      %7576 = vmatmul.mubr.f32.gmra.mrb[0].mxu0 %v7379
      %v7577 = vpop.f32.mrb[0].mxu0
      %v7578 = vadd.f32 0.0, %v7577
      %v7579 = vpop.f32.mrb[0].mxu0
      %7580 = vmatprep.mubr.f32.mxu0 0.0
      %7581 = vmatmul.mubr.f32.gmra.mrb[0].mxu0 %v7382
      %v7582 = vpop.f32.mrb[0].mxu0
      %v7583 = vadd.f32 0.0, %v7582
      %v7584 = vpop.f32.mrb[0].mxu0
      %7585 = vmatprep.mubr.f32.mxu0 0.0
      %7586 = vmatmul.mubr.f32.gmra.mrb[0].mxu0 %v7385
      %v7587 = vpop.f32.mrb[0].mxu0
      %v7588 = vadd.f32 0.0, %v7587
      %v7589 = vpop.f32.mrb[0].mxu0
      %7590 = vmatprep.mubr.f32.mxu0 0.0
      %7591 = vmatmul.mubr.f32.gmra.mrb[0].mxu0 %v7388
      %v7592 = vpop.f32.mrb[0].mxu0
      %v7593 = vadd.f32 0.0, %v7592
      %v7594 = vpop.f32.mrb[0].mxu0
      %7595 = vmatprep.mubr.f32.mxu0 0.0
      %7596 = vmatmul.mubr.f32.gmra.mrb[0].mxu0 %v7391
      %v7597 = vpop.f32.mrb[0].mxu0
      %v7598 = vadd.f32 0.0, %v7597
      %v7599 = vpop.f32.mrb[0].mxu0
      %7600 = vmatprep.mubr.f32.mxu0 0.0
      %7601 = vmatmul.mubr.f32.gmra.mrb[0].mxu0 %v7394
      %v7602 = vpop.f32.mrb[0].mxu0
      %v7603 = vadd.f32 0.0, %v7602
      %v7604 = vpop.f32.mrb[0].mxu0
      %7605 = vmatprep.mubr.f32.mxu0 0.0
      %7606 = vmatmul.mubr.f32.gmra.mrb[0].mxu0 %v7397
      %v7607 = vpop.f32.mrb[0].mxu0
      %v7608 = vadd.f32 0.0, %v7607
      %v7609 = vpop.f32.mrb[0].mxu0
      %7610 = vmatprep.mubr.f32.mxu0 0.0
      %7611 = vmatmul.mubr.f32.gmra.mrb[0].mxu0 %v7400
      %v7612 = vpop.f32.mrb[0].mxu0
      %v7613 = vadd.f32 0.0, %v7612
      %v7614 = vpop.f32.mrb[0].mxu0
      %7615 = vmatprep.mubr.f32.mxu0 0.0
      %7616 = vmatmul.mubr.f32.gmra.mrb[0].mxu0 %v7403
      %v7617 = vpop.f32.mrb[0].mxu0
      %v7618 = vadd.f32 0.0, %v7617
      %v7619 = vpop.f32.mrb[0].mxu0
      %7620 = vmatprep.mubr.f32.mxu0 0.0
      %7621 = vmatmul.mubr.f32.gmra.mrb[0].mxu0 %v7406
      %v7622 = vpop.f32.mrb[0].mxu0
      %v7623 = vadd.f32 0.0, %v7622
      %v7624 = vpop.f32.mrb[0].mxu0
      %7625 = vmatprep.mubr.f32.mxu0 0.0
      %7626 = vmatmul.mubr.f32.gmra.mrb[0].mxu0 %v7409
      %v7627 = vpop.f32.mrb[0].mxu0
      %v7628 = vadd.f32 0.0, %v7627
      %v7629 = vpop.f32.mrb[0].mxu0
      %7630 = vmatprep.mubr.f32.mxu0 0.0
      %7631 = vmatmul.mubr.f32.gmra.mrb[0].mxu0 %v7412
      %v7632 = vpop.f32.mrb[0].mxu0
      %v7633 = vadd.f32 0.0, %v7632
      %v7634 = vpop.f32.mrb[0].mxu0
      %7635 = vmatprep.mubr.f32.mxu0 0.0
      %7636 = vmatmul.mubr.f32.gmra.mrb[0].mxu0 %v7415
      %v7637 = vpop.f32.mrb[0].mxu0
      %v7638 = vadd.f32 0.0, %v7637
      %v7639 = vpop.f32.mrb[0].mxu0
      %7640 = vmatprep.mubr.f32.mxu0 0.0
      %7641 = vmatmul.mubr.f32.gmra.mrb[0].mxu0 %v7418
      %v7642 = vpop.f32.mrb[0].mxu0
      %v7643 = vadd.f32 0.0, %v7642
      %v7644 = vpop.f32.mrb[0].mxu0
      %7645 = vmatprep.mubr.f32.mxu0 0.0
      %7646 = vmatmul.mubr.f32.gmra.mrb[0].mxu0 %v7421
      %v7647 = vpop.f32.mrb[0].mxu0
      %v7648 = vadd.f32 0.0, %v7647
      %v7649 = vpop.f32.mrb[0].mxu0
      %7650 = vdwg.mxu0
      %v7651 = vadd.f32 %v7261, %v7493
      %v7652 = vadd.f32 %v7262, %v7498
      %v7653 = vadd.f32 %v7263, %v7503
      %v7654 = vadd.f32 %v7264, %v7508
      %v7655 = vadd.f32 %v7265, %v7513
      %v7656 = vadd.f32 %v7266, %v7518
      %v7657 = vadd.f32 %v7267, %v7523
      %v7658 = vadd.f32 %v7268, %v7528
      %v7659 = vadd.f32 %v7269, %v7533
      %v7660 = vadd.f32 %v7270, %v7538
      %v7661 = vadd.f32 %v7271, %v7543
      %v7662 = vadd.f32 %v7272, %v7548
      %v7663 = vadd.f32 %v7273, %v7553
      %v7664 = vadd.f32 %v7274, %v7558
      %v7665 = vadd.f32 %v7275, %v7563
      %v7666 = vadd.f32 %v7276, %v7568
      %v7667 = vadd.f32 %v7277, %v7573
      %v7668 = vadd.f32 %v7278, %v7578
      %v7669 = vadd.f32 %v7279, %v7583
      %v7670 = vadd.f32 %v7280, %v7588
      %v7671 = vadd.f32 %v7281, %v7593
      %v7672 = vadd.f32 %v7282, %v7598
      %v7673 = vadd.f32 %v7283, %v7603
      %v7674 = vadd.f32 %v7284, %v7608
      %v7675 = vadd.f32 %v7285, %v7613
      %v7676 = vadd.f32 %v7286, %v7618
      %v7677 = vadd.f32 %v7287, %v7623
      %v7678 = vadd.f32 %v7288, %v7628
      %v7679 = vadd.f32 %v7289, %v7633
      %v7680 = vadd.f32 %v7290, %v7638
      %v7681 = vadd.f32 %v7291, %v7643
      %v7682 = vadd.f32 %v7292, %v7648
      %v7683 = vld [vmem:[%s4] sm:$0x1]
      %v7685 = vlaneseq
      %v7686 = vshrl.u32 %v7685, 7
      %v7687 = vsub.s32 0, %v7686
      %v7688 = vrot.slane %v7683, %v7687
      %v7690 = vadd.f32 %v7651, %v7688
      %v7691 = vadd.f32 %v7652, %v7688
      %v7692 = vadd.f32 %v7653, %v7688
      %v7693 = vadd.f32 %v7654, %v7688
      %v7694 = vadd.f32 %v7655, %v7688
      %v7695 = vadd.f32 %v7656, %v7688
      %v7696 = vadd.f32 %v7657, %v7688
      %v7697 = vadd.f32 %v7658, %v7688
      %v7698 = vadd.f32 %v7659, %v7688
      %v7699 = vadd.f32 %v7660, %v7688
      %v7700 = vadd.f32 %v7661, %v7688
      %v7701 = vadd.f32 %v7662, %v7688
      %v7702 = vadd.f32 %v7663, %v7688
      %v7703 = vadd.f32 %v7664, %v7688
      %v7704 = vadd.f32 %v7665, %v7688
      %v7705 = vadd.f32 %v7666, %v7688
      %v7706 = vadd.f32 %v7667, %v7688
      %v7707 = vadd.f32 %v7668, %v7688
      %v7708 = vadd.f32 %v7669, %v7688
      %v7709 = vadd.f32 %v7670, %v7688
      %v7710 = vadd.f32 %v7671, %v7688
      %v7711 = vadd.f32 %v7672, %v7688
      %v7712 = vadd.f32 %v7673, %v7688
      %v7713 = vadd.f32 %v7674, %v7688
      %v7714 = vadd.f32 %v7675, %v7688
      %v7715 = vadd.f32 %v7676, %v7688
      %v7716 = vadd.f32 %v7677, %v7688
      %v7717 = vadd.f32 %v7678, %v7688
      %v7718 = vadd.f32 %v7679, %v7688
      %v7719 = vadd.f32 %v7680, %v7688
      %v7720 = vadd.f32 %v7681, %v7688
      %v7721 = vadd.f32 %v7682, %v7688
      %v7722 = vsel %vm258, %v7690, 0.0
      %v7723 = vsel %vm258, %v7691, 0.0
      %v7724 = vadd.f32 %v7722, %v7723
      %v7725 = vsel %vm258, %v7692, 0.0
      %v7726 = vadd.f32 %v7724, %v7725
      %v7727 = vsel %vm258, %v7693, 0.0
      %v7728 = vadd.f32 %v7726, %v7727
      %v7729 = vsel %vm258, %v7694, 0.0
      %v7730 = vadd.f32 %v7728, %v7729
      %v7731 = vsel %vm258, %v7695, 0.0
      %v7732 = vadd.f32 %v7730, %v7731
      %v7733 = vsel %vm258, %v7696, 0.0
      %v7734 = vadd.f32 %v7732, %v7733
      %v7735 = vsel %vm258, %v7697, 0.0
      %v7736 = vadd.f32 %v7734, %v7735
      %v7737 = vsel %vm258, %v7698, 0.0
      %v7738 = vadd.f32 %v7736, %v7737
      %v7739 = vsel %vm258, %v7699, 0.0
      %v7740 = vadd.f32 %v7738, %v7739
      %v7741 = vsel %vm258, %v7700, 0.0
      %v7742 = vadd.f32 %v7740, %v7741
      %v7743 = vsel %vm258, %v7701, 0.0
      %v7744 = vadd.f32 %v7742, %v7743
      %v7745 = vsel %vm258, %v7702, 0.0
      %v7746 = vadd.f32 %v7744, %v7745
      %v7747 = vsel %vm258, %v7703, 0.0
      %v7748 = vadd.f32 %v7746, %v7747
      %v7749 = vsel %vm258, %v7704, 0.0
      %v7750 = vadd.f32 %v7748, %v7749
      %v7751 = vsel %vm258, %v7705, 0.0
      %v7752 = vadd.f32 %v7750, %v7751
      %v7753 = vsel %vm258, %v7706, 0.0
      %v7754 = vadd.f32 %v7752, %v7753
      %v7755 = vsel %vm258, %v7707, 0.0
      %v7756 = vadd.f32 %v7754, %v7755
      %v7757 = vsel %vm258, %v7708, 0.0
      %v7758 = vadd.f32 %v7756, %v7757
      %v7759 = vsel %vm258, %v7709, 0.0
      %v7760 = vadd.f32 %v7758, %v7759
      %v7761 = vsel %vm258, %v7710, 0.0
      %v7762 = vadd.f32 %v7760, %v7761
      %v7763 = vsel %vm258, %v7711, 0.0
      %v7764 = vadd.f32 %v7762, %v7763
      %v7765 = vsel %vm258, %v7712, 0.0
      %v7766 = vadd.f32 %v7764, %v7765
      %v7767 = vsel %vm258, %v7713, 0.0
      %v7768 = vadd.f32 %v7766, %v7767
      %v7769 = vsel %vm258, %v7714, 0.0
      %v7770 = vadd.f32 %v7768, %v7769
      %v7771 = vsel %vm258, %v7715, 0.0
      %v7772 = vadd.f32 %v7770, %v7771
      %v7773 = vsel %vm258, %v7716, 0.0
      %v7774 = vadd.f32 %v7772, %v7773
      %v7775 = vsel %vm258, %v7717, 0.0
      %v7776 = vadd.f32 %v7774, %v7775
      %v7777 = vsel %vm258, %v7718, 0.0
      %v7778 = vadd.f32 %v7776, %v7777
      %v7779 = vsel %vm258, %v7719, 0.0
      %v7780 = vadd.f32 %v7778, %v7779
      %v7781 = vsel %vm258, %v7720, 0.0
      %v7782 = vadd.f32 %v7780, %v7781
      %v7783 = vsel %vm258, %v7721, 0.0
      %v7784 = vadd.f32 %v7782, %v7783
      %v7785 = vrot.slane %v7784, 4
      %v7786 = vadd.f32 %v7784, %v7785
      %v7787 = vrot.slane %v7786, 2
      %v7788 = vadd.f32 %v7786, %v7787
      %v7789 = vrot.slane %v7788, 1
      %v7790 = vadd.f32 %v7788, %v7789
      %v7791 = vmul.f32 %v7690, %v7690
      %v7792 = vmul.f32 %v7691, %v7691
      %v7793 = vmul.f32 %v7692, %v7692
      %v7794 = vmul.f32 %v7693, %v7693
      %v7795 = vmul.f32 %v7694, %v7694
      %v7796 = vmul.f32 %v7695, %v7695
      %v7797 = vmul.f32 %v7696, %v7696
      %v7798 = vmul.f32 %v7697, %v7697
      %v7799 = vmul.f32 %v7698, %v7698
      %v7800 = vmul.f32 %v7699, %v7699
      %v7801 = vmul.f32 %v7700, %v7700
      %v7802 = vmul.f32 %v7701, %v7701
      %v7803 = vmul.f32 %v7702, %v7702
      %v7804 = vmul.f32 %v7703, %v7703
      %v7805 = vmul.f32 %v7704, %v7704
      %v7806 = vmul.f32 %v7705, %v7705
      %v7807 = vmul.f32 %v7706, %v7706
      %v7808 = vmul.f32 %v7707, %v7707
      %v7809 = vmul.f32 %v7708, %v7708
      %v7810 = vmul.f32 %v7709, %v7709
      %v7811 = vmul.f32 %v7710, %v7710
      %v7812 = vmul.f32 %v7711, %v7711
      %v7813 = vmul.f32 %v7712, %v7712
      %v7814 = vmul.f32 %v7713, %v7713
      %v7815 = vmul.f32 %v7714, %v7714
      %v7816 = vmul.f32 %v7715, %v7715
      %v7817 = vmul.f32 %v7716, %v7716
      %v7818 = vmul.f32 %v7717, %v7717
      %v7819 = vmul.f32 %v7718, %v7718
      %v7820 = vmul.f32 %v7719, %v7719
      %v7821 = vmul.f32 %v7720, %v7720
      %v7822 = vmul.f32 %v7721, %v7721
      %v7823 = vsel %vm258, %v7791, 0.0
      %v7824 = vsel %vm258, %v7792, 0.0
      %v7825 = vadd.f32 %v7823, %v7824
      %v7826 = vsel %vm258, %v7793, 0.0
      %v7827 = vadd.f32 %v7825, %v7826
      %v7828 = vsel %vm258, %v7794, 0.0
      %v7829 = vadd.f32 %v7827, %v7828
      %v7830 = vsel %vm258, %v7795, 0.0
      %v7831 = vadd.f32 %v7829, %v7830
      %v7832 = vsel %vm258, %v7796, 0.0
      %v7833 = vadd.f32 %v7831, %v7832
      %v7834 = vsel %vm258, %v7797, 0.0
      %v7835 = vadd.f32 %v7833, %v7834
      %v7836 = vsel %vm258, %v7798, 0.0
      %v7837 = vadd.f32 %v7835, %v7836
      %v7838 = vsel %vm258, %v7799, 0.0
      %v7839 = vadd.f32 %v7837, %v7838
      %v7840 = vsel %vm258, %v7800, 0.0
      %v7841 = vadd.f32 %v7839, %v7840
      %v7842 = vsel %vm258, %v7801, 0.0
      %v7843 = vadd.f32 %v7841, %v7842
      %v7844 = vsel %vm258, %v7802, 0.0
      %v7845 = vadd.f32 %v7843, %v7844
      %v7846 = vsel %vm258, %v7803, 0.0
      %v7847 = vadd.f32 %v7845, %v7846
      %v7848 = vsel %vm258, %v7804, 0.0
      %v7849 = vadd.f32 %v7847, %v7848
      %v7850 = vsel %vm258, %v7805, 0.0
      %v7851 = vadd.f32 %v7849, %v7850
      %v7852 = vsel %vm258, %v7806, 0.0
      %v7853 = vadd.f32 %v7851, %v7852
      %v7854 = vsel %vm258, %v7807, 0.0
      %v7855 = vadd.f32 %v7853, %v7854
      %v7856 = vsel %vm258, %v7808, 0.0
      %v7857 = vadd.f32 %v7855, %v7856
      %v7858 = vsel %vm258, %v7809, 0.0
      %v7859 = vadd.f32 %v7857, %v7858
      %v7860 = vsel %vm258, %v7810, 0.0
      %v7861 = vadd.f32 %v7859, %v7860
      %v7862 = vsel %vm258, %v7811, 0.0
      %v7863 = vadd.f32 %v7861, %v7862
      %v7864 = vsel %vm258, %v7812, 0.0
      %v7865 = vadd.f32 %v7863, %v7864
      %v7866 = vsel %vm258, %v7813, 0.0
      %v7867 = vadd.f32 %v7865, %v7866
      %v7868 = vsel %vm258, %v7814, 0.0
      %v7869 = vadd.f32 %v7867, %v7868
      %v7870 = vsel %vm258, %v7815, 0.0
      %v7871 = vadd.f32 %v7869, %v7870
      %v7872 = vsel %vm258, %v7816, 0.0
      %v7873 = vadd.f32 %v7871, %v7872
      %v7874 = vsel %vm258, %v7817, 0.0
      %v7875 = vadd.f32 %v7873, %v7874
      %v7876 = vsel %vm258, %v7818, 0.0
      %v7877 = vadd.f32 %v7875, %v7876
      %v7878 = vsel %vm258, %v7819, 0.0
      %v7879 = vadd.f32 %v7877, %v7878
      %v7880 = vsel %vm258, %v7820, 0.0
      %v7881 = vadd.f32 %v7879, %v7880
      %v7882 = vsel %vm258, %v7821, 0.0
      %v7883 = vadd.f32 %v7881, %v7882
      %v7884 = vsel %vm258, %v7822, 0.0
      %v7885 = vadd.f32 %v7883, %v7884
      %v7886 = vrot.slane %v7885, 4
      %v7887 = vadd.f32 %v7885, %v7886
      %v7888 = vrot.slane %v7887, 2
      %v7889 = vadd.f32 %v7887, %v7888
      %v7890 = vrot.slane %v7889, 1
      %v7891 = vadd.f32 %v7889, %v7890
      %v7892 = vmul.f32 %v7790, 0.00390625
      %v7893 = vmul.f32 %v7891, 0.00390625
      %v7894 = vmul.f32 %v7892, %v7892
      %v7895 = vsub.f32 %v7893, %v7894
      %v7896 = vsub.f32 %v7690, %v7892
      %v7897 = vsub.f32 %v7691, %v7892
      %v7898 = vsub.f32 %v7692, %v7892
      %v7899 = vsub.f32 %v7693, %v7892
      %v7900 = vsub.f32 %v7694, %v7892
      %v7901 = vsub.f32 %v7695, %v7892
      %v7902 = vsub.f32 %v7696, %v7892
      %v7903 = vsub.f32 %v7697, %v7892
      %v7904 = vsub.f32 %v7698, %v7892
      %v7905 = vsub.f32 %v7699, %v7892
      %v7906 = vsub.f32 %v7700, %v7892
      %v7907 = vsub.f32 %v7701, %v7892
      %v7908 = vsub.f32 %v7702, %v7892
      %v7909 = vsub.f32 %v7703, %v7892
      %v7910 = vsub.f32 %v7704, %v7892
      %v7911 = vsub.f32 %v7705, %v7892
      %v7912 = vsub.f32 %v7706, %v7892
      %v7913 = vsub.f32 %v7707, %v7892
      %v7914 = vsub.f32 %v7708, %v7892
      %v7915 = vsub.f32 %v7709, %v7892
      %v7916 = vsub.f32 %v7710, %v7892
      %v7917 = vsub.f32 %v7711, %v7892
      %v7918 = vsub.f32 %v7712, %v7892
      %v7919 = vsub.f32 %v7713, %v7892
      %v7920 = vsub.f32 %v7714, %v7892
      %v7921 = vsub.f32 %v7715, %v7892
      %v7922 = vsub.f32 %v7716, %v7892
      %v7923 = vsub.f32 %v7717, %v7892
      %v7924 = vsub.f32 %v7718, %v7892
      %v7925 = vsub.f32 %v7719, %v7892
      %v7926 = vsub.f32 %v7720, %v7892
      %v7927 = vsub.f32 %v7721, %v7892
      %v7928 = vadd.f32 %v7895, 1e-05
      %v7929 = vrsqrt.pop %v7928
      %v7930 = vmul.f32 %v7896, %v7929
      %v7931 = vmul.f32 %v7897, %v7929
      %v7932 = vmul.f32 %v7898, %v7929
      %v7933 = vmul.f32 %v7899, %v7929
      %v7934 = vmul.f32 %v7900, %v7929
      %v7935 = vmul.f32 %v7901, %v7929
      %v7936 = vmul.f32 %v7902, %v7929
      %v7937 = vmul.f32 %v7903, %v7929
      %v7938 = vmul.f32 %v7904, %v7929
      %v7939 = vmul.f32 %v7905, %v7929
      %v7940 = vmul.f32 %v7906, %v7929
      %v7941 = vmul.f32 %v7907, %v7929
      %v7942 = vmul.f32 %v7908, %v7929
      %v7943 = vmul.f32 %v7909, %v7929
      %v7944 = vmul.f32 %v7910, %v7929
      %v7945 = vmul.f32 %v7911, %v7929
      %v7946 = vmul.f32 %v7912, %v7929
      %v7947 = vmul.f32 %v7913, %v7929
      %v7948 = vmul.f32 %v7914, %v7929
      %v7949 = vmul.f32 %v7915, %v7929
      %v7950 = vmul.f32 %v7916, %v7929
      %v7951 = vmul.f32 %v7917, %v7929
      %v7952 = vmul.f32 %v7918, %v7929
      %v7953 = vmul.f32 %v7919, %v7929
      %v7954 = vmul.f32 %v7920, %v7929
      %v7955 = vmul.f32 %v7921, %v7929
      %v7956 = vmul.f32 %v7922, %v7929
      %v7957 = vmul.f32 %v7923, %v7929
      %v7958 = vmul.f32 %v7924, %v7929
      %v7959 = vmul.f32 %v7925, %v7929
      %v7960 = vmul.f32 %v7926, %v7929
      %v7961 = vmul.f32 %v7927, %v7929
      %v7962 = vadd.f32 %v225, %v7930
      %v7963 = vadd.f32 %v226, %v7931
      %v7964 = vadd.f32 %v227, %v7932
      %v7965 = vadd.f32 %v228, %v7933
      %v7966 = vadd.f32 %v229, %v7934
      %v7967 = vadd.f32 %v230, %v7935
      %v7968 = vadd.f32 %v231, %v7936
      %v7969 = vadd.f32 %v232, %v7937
      %v7970 = vadd.f32 %v233, %v7938
      %v7971 = vadd.f32 %v234, %v7939
      %v7972 = vadd.f32 %v235, %v7940
      %v7973 = vadd.f32 %v236, %v7941
      %v7974 = vadd.f32 %v237, %v7942
      %v7975 = vadd.f32 %v238, %v7943
      %v7976 = vadd.f32 %v239, %v7944
      %v7977 = vadd.f32 %v240, %v7945
      %v7978 = vadd.f32 %v241, %v7946
      %v7979 = vadd.f32 %v242, %v7947
      %v7980 = vadd.f32 %v243, %v7948
      %v7981 = vadd.f32 %v244, %v7949
      %v7982 = vadd.f32 %v245, %v7950
      %v7983 = vadd.f32 %v246, %v7951
      %v7984 = vadd.f32 %v247, %v7952
      %v7985 = vadd.f32 %v248, %v7953
      %v7986 = vadd.f32 %v249, %v7954
      %v7987 = vadd.f32 %v250, %v7955
      %v7988 = vadd.f32 %v251, %v7956
      %v7989 = vadd.f32 %v252, %v7957
      %v7990 = vadd.f32 %v253, %v7958
      %v7991 = vadd.f32 %v254, %v7959
      %v7992 = vadd.f32 %v255, %v7960
      %v7993 = vadd.f32 %v256, %v7961
      %7994 = vst.msk [vmem:[%s224] sm:$0xff] %vm258, %v7962
      %7995 = vst.msk [vmem:[%s224 + $0x8] sm:$0xff] %vm258, %v7963
      %7996 = vst.msk [vmem:[%s224 + $0x10] sm:$0xff] %vm258, %v7964
      %7997 = vst.msk [vmem:[%s224 + $0x18] sm:$0xff] %vm258, %v7965
      %7998 = vst.msk [vmem:[%s224 + $0x20] sm:$0xff] %vm258, %v7966
      %7999 = vst.msk [vmem:[%s224 + $0x28] sm:$0xff] %vm258, %v7967
      %8000 = vst.msk [vmem:[%s224 + $0x30] sm:$0xff] %vm258, %v7968
      %8001 = vst.msk [vmem:[%s224 + $0x38] sm:$0xff] %vm258, %v7969
      %8002 = vst.msk [vmem:[%s224 + $0x40] sm:$0xff] %vm258, %v7970
      %8003 = vst.msk [vmem:[%s224 + $0x48] sm:$0xff] %vm258, %v7971
      %8004 = vst.msk [vmem:[%s224 + $0x50] sm:$0xff] %vm258, %v7972
      %8005 = vst.msk [vmem:[%s224 + $0x58] sm:$0xff] %vm258, %v7973
      %8006 = vst.msk [vmem:[%s224 + $0x60] sm:$0xff] %vm258, %v7974
      %8007 = vst.msk [vmem:[%s224 + $0x68] sm:$0xff] %vm258, %v7975
      %8008 = vst.msk [vmem:[%s224 + $0x70] sm:$0xff] %vm258, %v7976
      %8009 = vst.msk [vmem:[%s224 + $0x78] sm:$0xff] %vm258, %v7977
      %8010 = vst.msk [vmem:[%s224 + $0x80] sm:$0xff] %vm258, %v7978
      %8011 = vst.msk [vmem:[%s224 + $0x88] sm:$0xff] %vm258, %v7979
      %8012 = vst.msk [vmem:[%s224 + $0x90] sm:$0xff] %vm258, %v7980
      %8013 = vst.msk [vmem:[%s224 + $0x98] sm:$0xff] %vm258, %v7981
      %8014 = vst.msk [vmem:[%s224 + $0xa0] sm:$0xff] %vm258, %v7982
      %8015 = vst.msk [vmem:[%s224 + $0xa8] sm:$0xff] %vm258, %v7983
      %8016 = vst.msk [vmem:[%s224 + $0xb0] sm:$0xff] %vm258, %v7984
      %8017 = vst.msk [vmem:[%s224 + $0xb8] sm:$0xff] %vm258, %v7985
      %8018 = vst.msk [vmem:[%s224 + $0xc0] sm:$0xff] %vm258, %v7986
      %8019 = vst.msk [vmem:[%s224 + $0xc8] sm:$0xff] %vm258, %v7987
      %8020 = vst.msk [vmem:[%s224 + $0xd0] sm:$0xff] %vm258, %v7988
      %8021 = vst.msk [vmem:[%s224 + $0xd8] sm:$0xff] %vm258, %v7989
      %8022 = vst.msk [vmem:[%s224 + $0xe0] sm:$0xff] %vm258, %v7990
      %8023 = vst.msk [vmem:[%s224 + $0xe8] sm:$0xff] %vm258, %v7991
      %8024 = vst.msk [vmem:[%s224 + $0xf0] sm:$0xff] %vm258, %v7992
      %8025 = vst.msk [vmem:[%s224 + $0xf8] sm:$0xff] %vm258, %v7993
      %p8026 = scmp.lt.s32.totalorder %s16, 1
      %s8027 = scalar_select %p8026, %s16, 1
      %s8028 = smul.addr %s8027, 32
      %s8029 = smul.addr %s8028, 8
      %s8030 = scalar_lea.vmem %s5, %s8029
      // Predicated region
      $region41: #{tpu_custom_call.1} parent=39 // pred_check
        %p8031 = pneg %p144
      $region42: #{tpu_custom_call.1} parent=39 // pred_check_branch
        %8033 = sbr.rel (%p8031) target = $region44
      $region43: #{tpu_custom_call.1} parent=39 // pred_region
        _
      $region44: #{tpu_custom_call.1} parent=39 // pred_fallthru
        _
    $region40: #{tpu_custom_call.1} parent=5 // pred_fallthru
      _
    %p8034 = scmp.le.s32.totalorder 2, %s11
    // Predicated region
    $region45: #{tpu_custom_call.1} parent=5 // pred_check
      %p8035 = pneg %p8034
    $region46: #{tpu_custom_call.1} parent=5 // pred_check_branch
      %8037 = sbr.rel (%p8035) target = $region48
    $region47: #{tpu_custom_call.1} parent=5 // pred_region
      %s8038 = ssub.s32 %s11, 2
      // Predicated region
      $region49: #{tpu_custom_call.1} parent=47 // pred_check
        %p8039 = pneg %p150
      $region50: #{tpu_custom_call.1} parent=47 // pred_check_branch
        %8041 = sbr.rel (%p8039) target = $region52
      $region51: #{tpu_custom_call.1} parent=47 // pred_region
        %p8042 = scmp.lt.s32.totalorder %s17, 1
        %s8043 = scalar_select %p8042, %s17, 1
        %s8044 = smul.addr %s8043, 32
        %s8045 = smul.addr %s8044, 8
        %s8046 = scalar_lea.vmem %s5, %s8045
      $region52: #{tpu_custom_call.1} parent=47 // pred_fallthru
        _
    $region48: #{tpu_custom_call.1} parent=5 // pred_fallthru
      _
  $region6: #{tpu_custom_call.1} parent=0 // loop_footer
    %s15 = sadd.s32 1, %s11
  $region7: #{tpu_custom_call.1} parent=0 // loop_footer_branch
    %10 = sbr.rel target = $region3
  $region8: #{tpu_custom_call.1} parent=0 // loop_exit
    _

</llo_original>
